<compile_context>
chip_gen: v7x
topology: tpu7x:2x2x1
jax: 0.10.0
libtpu: 0.0.40
codegen_flags: <defaults>
</compile_context>

<pallas_src>
import functools

import jax
import jax.numpy as jnp
from jax.experimental import pallas as pl
from jax.experimental.pallas import tpu as pltpu

BN_EPS = 1e-5
LANE = 128  # lane width -> channel padding target


def _round_up(x, m):
    return ((x + m - 1) // m) * m


def _vmem_limit_bytes():
    # Generation-aware scoped-VMEM limit (v7x: 64 MiB/TC, v5e/v6e: 128 MiB).
    try:
        return int(pltpu.get_tpu_info().vmem_capacity_bytes * 3 // 4)
    except Exception:
        return 32 * 1024 * 1024


# ----------------------------- fused Pallas kernel ----------------------------- #
def _residual_block_kernel(x_ref, w1_ref, b1_ref, w2_ref, b2_ref, *rest,
                           k1, k2, stride, pad1, pad2, Ho, Wo, identity_skip):
    """One image: relu(BN1(conv1(x))) -> relu(BN2(conv2(.))) + skip(x).

    x_ref : (1, Hp, Wp, Cin_p)     bf16, spatially pre-padded (conv1 'same' halo)
    w1_ref: (k1*k1, Cin_p, Cmid_p) bf16 (BN1 folded)   b1_ref: (1, Cmid_p) f32
    w2_ref: (k2*k2, Cmid_p, Cout_p) bf16 (BN2 folded)  b2_ref: (1, Cout_p) f32
    [ws_ref: (Cin_p, Cout_p) bf16, bs_ref: (1, Cout_p) f32]  only if projection skip
    o_ref : (1, Ho, Wo, Cout_p)    bf16
    ys_ref: (Ho+2*pad2, Wo+2*pad2, Cmid_p) bf16 scratch (conv1 act, conv2 halo)
    """
    if identity_skip:
        o_ref, ys_ref = rest
    else:
        ws_ref, bs_ref, o_ref, ys_ref = rest

    cin = w1_ref.shape[1]
    cmid = w1_ref.shape[2]
    cout = w2_ref.shape[2]
    m = Ho * Wo

    # ---- conv1 + BN1 + ReLU (im2col fused over taps; bf16 windows -> MXU) ----
    acc1 = jnp.zeros((m, cmid), jnp.float32)
    t = 0
    for i in range(k1):
        for j in range(k1):
            if stride == 1:
                win = x_ref[0, i:i + Ho, j:j + Wo, :]
            else:
                # TODO(synk): strided tap loads (stride > 1) untested by the demo.
                win = x_ref[0, pl.ds(i, Ho, stride), pl.ds(j, Wo, stride), :]
            acc1 = acc1 + jnp.dot(win.reshape(m, cin), w1_ref[t],
                                  preferred_element_type=jnp.float32)
            t += 1
    y1 = jnp.maximum(acc1 + b1_ref[...], 0.0)

    # Keep conv1's activation resident in VMEM with conv2's zero 'same' halo.
    ys_ref[...] = jnp.zeros_like(ys_ref)
    ys_ref[pad2:pad2 + Ho, pad2:pad2 + Wo, :] = (
        y1.reshape(Ho, Wo, cmid).astype(ys_ref.dtype))

    # ---- conv2 + BN2 + ReLU ----
    acc2 = jnp.zeros((m, cout), jnp.float32)
    t = 0
    for i in range(k2):
        for j in range(k2):
            win = ys_ref[i:i + Ho, j:j + Wo, :]
            acc2 = acc2 + jnp.dot(win.reshape(m, cmid), w2_ref[t],
                                  preferred_element_type=jnp.float32)
            t += 1
    # ReLU before the residual add, matching the PyTorch Sequential (ends in ReLU).
    y2 = jnp.maximum(acc2 + b2_ref[...], 0.0)

    # ---- skip path + residual add ----
    if identity_skip:
        # nn.Identity: plain VPU add of the (un-haloed) input window, no matmul.
        skip = x_ref[0, pad1:pad1 + Ho, pad1:pad1 + Wo, :].astype(
            jnp.float32).reshape(m, cout)
    else:
        if stride == 1:
            xs = x_ref[0, pad1:pad1 + Ho, pad1:pad1 + Wo, :]
        else:
            xs = x_ref[0, pl.ds(pad1, Ho, stride), pl.ds(pad1, Wo, stride), :]
        skip = jnp.dot(xs.reshape(m, cin), ws_ref[...],
                       preferred_element_type=jnp.float32) + bs_ref[...]

    o_ref[0] = (y2 + skip).reshape(Ho, Wo, cout).astype(o_ref.dtype)


# ------------------------------ pallas_call wrapper ----------------------------- #
def _residual_block_call(xp, w1m, b1v, w2m, b2v, wsm, bsv, *,
                         k1, k2, stride, pad1, pad2, Ho, Wo, identity_skip):
    n, hp, wp, cpi = xp.shape
    cmid = w1m.shape[2]
    cpo = w2m.shape[2]
    hp2, wp2 = Ho + 2 * pad2, Wo + 2 * pad2

    kernel = functools.partial(
        _residual_block_kernel, k1=k1, k2=k2, stride=stride,
        pad1=pad1, pad2=pad2, Ho=Ho, Wo=Wo, identity_skip=identity_skip)

    in_specs = [
        pl.BlockSpec((1, hp, wp, cpi), lambda b: (b, 0, 0, 0)),
        pl.BlockSpec((k1 * k1, cpi, cmid), lambda b: (0, 0, 0)),
        pl.BlockSpec((1, cmid), lambda b: (0, 0)),
        pl.BlockSpec((k2 * k2, cmid, cpo), lambda b: (0, 0, 0)),
        pl.BlockSpec((1, cpo), lambda b: (0, 0)),
    ]
    operands = [xp, w1m, b1v, w2m, b2v]
    if not identity_skip:
        in_specs += [pl.BlockSpec((cpi, cpo), lambda b: (0, 0)),
                     pl.BlockSpec((1, cpo), lambda b: (0, 0))]
        operands += [wsm, bsv]

    return pl.pallas_call(
        kernel,
        out_shape=jax.ShapeDtypeStruct((n, Ho, Wo, cpo), jnp.bfloat16),
        grid_spec=pltpu.PrefetchScalarGridSpec(
            num_scalar_prefetch=0,
            grid=(n,),
            in_specs=in_specs,
            out_specs=pl.BlockSpec((1, Ho, Wo, cpo), lambda b: (b, 0, 0, 0)),
            scratch_shapes=[pltpu.VMEM((hp2, wp2, cmid), jnp.bfloat16)],
        ),
        compiler_params=pltpu.CompilerParams(
            dimension_semantics=("parallel",),
            vmem_limit_bytes=_vmem_limit_bytes()),
    )(*operands)


# ------------------------------------ JAX glue ---------------------------------- #
def _fold_conv_bn(w_oihw, conv_b, gamma, beta, mean, var, cpi, cpo):
    """Fold eval-mode BN into conv weights/bias; pad channels; cast weights bf16."""
    cout, cin, kh, kw = w_oihw.shape
    scale = gamma / jnp.sqrt(var + BN_EPS)
    wf = jnp.transpose(w_oihw, (2, 3, 1, 0)).reshape(kh * kw, cin, cout)  # (tap,cin,cout)
    wf = wf * scale[None, None, :]
    wf = jnp.pad(wf, ((0, 0), (0, cpi - cin), (0, cpo - cout))).astype(jnp.bfloat16)
    bf = (conv_b - mean) * scale + beta
    bf = jnp.pad(bf, (0, cpo - cout)).reshape(1, cpo).astype(jnp.float32)
    return wf, bf


def residual_block_apply(params, x_nchw, stride=1):
    """Forward pass of ResidualBlock.  Input/output are NCHW (PyTorch layout)."""
    p = params
    n, cin, h, w = x_nchw.shape
    outf, _, k1, _ = p["w1"].shape
    k2 = p["w2"].shape[2]
    pad1 = (k1 - 1) // 2
    pad2 = (k2 - 1) // 2
    ho = (h + 2 * pad1 - k1) // stride + 1
    wo = (w + 2 * pad1 - k1) // stride + 1

    cpi = _round_up(cin, LANE)
    cpo = _round_up(outf, LANE)

    # Single fused pad: NHWC bf16, channel pad to 128 lanes + conv1 'same' halo.
    x = jnp.transpose(x_nchw, (0, 2, 3, 1)).astype(jnp.bfloat16)
    xp = jnp.pad(x, ((0, 0), (pad1, pad1), (pad1, pad1), (0, cpi - cin)))

    w1m, b1v = _fold_conv_bn(p["w1"], p["b1"], p["g1"], p["bt1"], p["m1"], p["v1"], cpi, cpo)
    w2m, b2v = _fold_conv_bn(p["w2"], p["b2"], p["g2"], p["bt2"], p["m2"], p["v2"], cpo, cpo)

    identity_skip = "ws" not in p
    if identity_skip:
        assert cin == outf and stride == 1, "Identity skip needs inf == outf, stride == 1"
        wsm = bsv = None
    else:
        wsm, bsv = _fold_conv_bn(p["ws"], p["bs"], p["gs"], p["bts"], p["ms"], p["vs"], cpi, cpo)
        wsm = wsm[0]                                  # (Cin_p, Cout_p)

    z = _residual_block_call(xp, w1m, b1v, w2m, b2v, wsm, bsv,
                             k1=k1, k2=k2, stride=stride, pad1=pad1, pad2=pad2,
                             Ho=ho, Wo=wo, identity_skip=identity_skip)
    return jnp.transpose(z[:, :, :, :outf], (0, 3, 1, 2)).astype(jnp.float32)  # NCHW


def init_params(key, inf, outf, k1, k2):
    ks = jax.random.split(key, 6)

    def conv_w(k, cout, cin, kk):
        fan_in = cin * kk * kk
        return (jax.random.normal(k, (cout, cin, kk, kk), jnp.float32)
                / jnp.sqrt(jnp.float32(fan_in)))

    def bn(cout):
        return (jnp.ones((cout,), jnp.float32),   # gamma
                jnp.zeros((cout,), jnp.float32),  # beta
                jnp.zeros((cout,), jnp.float32),  # running mean
                jnp.ones((cout,), jnp.float32))   # running var

    p = {}
    p["w1"] = conv_w(ks[0], outf, inf, k1)
    p["b1"] = 0.01 * jax.random.normal(ks[1], (outf,), jnp.float32)
    p["g1"], p["bt1"], p["m1"], p["v1"] = bn(outf)
    p["w2"] = conv_w(ks[2], outf, outf, k2)
    p["b2"] = 0.01 * jax.random.normal(ks[3], (outf,), jnp.float32)
    p["g2"], p["bt2"], p["m2"], p["v2"] = bn(outf)
    if inf != outf:
        p["ws"] = conv_w(ks[4], outf, inf, 1)
        p["bs"] = 0.01 * jax.random.normal(ks[5], (outf,), jnp.float32)
        p["gs"], p["bts"], p["ms"], p["vs"] = bn(outf)
    return p


# --------------------------------- pure-JAX reference ---------------------------- #
def _ref_conv_bn(x, w, b, g, bt, m, v, stride, pad, relu):
    y = jax.lax.conv_general_dilated(
        x, w, (stride, stride), ((pad, pad), (pad, pad)),
        dimension_numbers=("NCHW", "OIHW", "NCHW"),
        precision=jax.lax.Precision.HIGHEST)
    y = y + b.reshape(1, -1, 1, 1)
    y = ((y - m.reshape(1, -1, 1, 1)) / jnp.sqrt(v.reshape(1, -1, 1, 1) + BN_EPS)
         * g.reshape(1, -1, 1, 1) + bt.reshape(1, -1, 1, 1))
    if relu:
        y = jnp.maximum(y, 0.0)
    return y


def residual_block_ref(p, x, stride=1):
    k1 = p["w1"].shape[2]
    k2 = p["w2"].shape[2]
    y = _ref_conv_bn(x, p["w1"], p["b1"], p["g1"], p["bt1"], p["m1"], p["v1"],
                     stride, (k1 - 1) // 2, True)
    y = _ref_conv_bn(y, p["w2"], p["b2"], p["g2"], p["bt2"], p["m2"], p["v2"],
                     1, (k2 - 1) // 2, True)
    if "ws" in p:
        s = _ref_conv_bn(x, p["ws"], p["bs"], p["gs"], p["bts"], p["ms"], p["vs"],
                         stride, 0, False)
    else:
        s = x
    return s + y


# ----------------------------------------- main ---------------------------------- #
if __name__ == "__main__":
    key = jax.random.PRNGKey(0)
    # Feed the MXU in bf16: snap inputs/weights to bf16-representable f32 values so
    # kernel-vs-f32-reference differences come only from bf16 intermediates.
    q = lambda a: a.astype(jnp.bfloat16).astype(jnp.float32)
    apply_fn = jax.jit(residual_block_apply, static_argnames=("stride",))

    # Case 1: projection skip (inf != outf -> 1x1 conv + BN fused into the kernel).
    kx, kp = jax.random.split(key)
    inf, outf = 4, 8
    x = q(jax.random.normal(kx, (2, inf, 16, 16), jnp.float32))     # NCHW like PyTorch
    params = jax.tree_util.tree_map(q, init_params(kp, inf, outf, 3, 3))
    out = jax.block_until_ready(apply_fn(params, x, stride=1))
    ref = residual_block_ref(params, x, stride=1)
    assert out.shape == ref.shape == (2, outf, 16, 16)
    assert jnp.allclose(out, ref, rtol=2e-2, atol=2e-2), (
        float(jnp.max(jnp.abs(out - ref))))

    # Case 2: identity skip (inf == outf -> in-kernel VPU residual add, no eye matmul).
    kx2, kp2 = jax.random.split(kp)
    x2 = q(jax.random.normal(kx2, (2, 8, 16, 16), jnp.float32))
    params2 = jax.tree_util.tree_map(q, init_params(kp2, 8, 8, 3, 3))
    out2 = jax.block_until_ready(apply_fn(params2, x2, stride=1))
    ref2 = residual_block_ref(params2, x2, stride=1)
    assert out2.shape == ref2.shape == (2, 8, 16, 16)
    assert jnp.allclose(out2, ref2, rtol=2e-2, atol=2e-2), (
        float(jnp.max(jnp.abs(out2 - ref2))))

    print("KERNEL_OK")
</pallas_src>

<mosaic_0001>
module attributes {stable_mosaic.version = 11 : i64} {
  func.func @_residual_block_kernel(%arg0: i32, %arg1: memref<1x18x18x128xbf16, #tpu.memory_space<vmem>>, %arg2: memref<9x128x128xbf16, #tpu.memory_space<vmem>>, %arg3: memref<1x128xf32, #tpu.memory_space<vmem>>, %arg4: memref<9x128x128xbf16, #tpu.memory_space<vmem>>, %arg5: memref<1x128xf32, #tpu.memory_space<vmem>>, %arg6: memref<128x128xbf16, #tpu.memory_space<vmem>>, %arg7: memref<1x128xf32, #tpu.memory_space<vmem>>, %arg8: memref<1x16x16x128xbf16, #tpu.memory_space<vmem>>, %arg9: memref<18x18x128xbf16, #tpu.memory_space<vmem>>) attributes {dimension_semantics = [#tpu.dimension_semantics<parallel>], iteration_bounds = array<i64: 2>, scalar_prefetch = 0 : i64, scratch_operands = 1 : i64, tpu.core_type = #tpu.core_type<tc>, window_params = [{transform_indices = @transform_0, window_bounds = array<i64: 1, 18, 18, 128>}, {pipeline_mode = #tpu.pipeline_mode<synchronous>, transform_indices = @transform_1, window_bounds = array<i64: 9, 128, 128>}, {pipeline_mode = #tpu.pipeline_mode<synchronous>, transform_indices = @transform_2, window_bounds = array<i64: 1, 128>}, {pipeline_mode = #tpu.pipeline_mode<synchronous>, transform_indices = @transform_3, window_bounds = array<i64: 9, 128, 128>}, {pipeline_mode = #tpu.pipeline_mode<synchronous>, transform_indices = @transform_4, window_bounds = array<i64: 1, 128>}, {pipeline_mode = #tpu.pipeline_mode<synchronous>, transform_indices = @transform_5, window_bounds = array<i64: 128, 128>}, {pipeline_mode = #tpu.pipeline_mode<synchronous>, transform_indices = @transform_6, window_bounds = array<i64: 1, 128>}, {transform_indices = @transform_7, window_bounds = array<i64: 1, 16, 16, 128>}]} {
    %cst = arith.constant 0.000000e+00 : f32
    %0 = vector.broadcast %cst : f32 to vector<256x128xf32>
    %c0 = arith.constant 0 : index
    %c0_0 = arith.constant 0 : index
    %c0_1 = arith.constant 0 : index
    %c0_2 = arith.constant 0 : index
    %1 = vector.load %arg1[%c0, %c0_0, %c0_1, %c0_2] : memref<1x18x18x128xbf16, #tpu.memory_space<vmem>>, vector<1x16x16x128xbf16>
    %2 = vector.shape_cast %1 : vector<1x16x16x128xbf16> to vector<16x16x128xbf16>
    %3 = vector.shape_cast %2 : vector<16x16x128xbf16> to vector<256x128xbf16>
    %c0_3 = arith.constant 0 : index
    %c0_4 = arith.constant 0 : index
    %c0_5 = arith.constant 0 : index
    %4 = vector.load %arg2[%c0_3, %c0_4, %c0_5] : memref<9x128x128xbf16, #tpu.memory_space<vmem>>, vector<1x128x128xbf16>
    %5 = vector.shape_cast %4 : vector<1x128x128xbf16> to vector<128x128xbf16>
    %cst_6 = arith.constant dense<0.000000e+00> : vector<256x128xf32>
    %6 = tpu.matmul %3, %5, %cst_6 {dimension_numbers = #tpu.dot_dimension_numbers<[1], [0], [0], [1], [0, 0, 1, 1], [], []>} : vector<256x128xbf16>, vector<128x128xbf16>, vector<256x128xf32> -> vector<256x128xf32>
    %7 = arith.addf %0, %6 : vector<256x128xf32>
    %c0_7 = arith.constant 0 : index
    %c0_8 = arith.constant 0 : index
    %c1 = arith.constant 1 : index
    %c0_9 = arith.constant 0 : index
    %8 = vector.load %arg1[%c0_7, %c0_8, %c1, %c0_9] : memref<1x18x18x128xbf16, #tpu.memory_space<vmem>>, vector<1x16x16x128xbf16>
    %9 = vector.shape_cast %8 : vector<1x16x16x128xbf16> to vector<16x16x128xbf16>
    %10 = vector.shape_cast %9 : vector<16x16x128xbf16> to vector<256x128xbf16>
    %c1_10 = arith.constant 1 : index
    %c0_11 = arith.constant 0 : index
    %c0_12 = arith.constant 0 : index
    %11 = vector.load %arg2[%c1_10, %c0_11, %c0_12] : memref<9x128x128xbf16, #tpu.memory_space<vmem>>, vector<1x128x128xbf16>
    %12 = vector.shape_cast %11 : vector<1x128x128xbf16> to vector<128x128xbf16>
    %cst_13 = arith.constant dense<0.000000e+00> : vector<256x128xf32>
    %13 = tpu.matmul %10, %12, %cst_13 {dimension_numbers = #tpu.dot_dimension_numbers<[1], [0], [0], [1], [0, 0, 1, 1], [], []>} : vector<256x128xbf16>, vector<128x128xbf16>, vector<256x128xf32> -> vector<256x128xf32>
    %14 = arith.addf %7, %13 : vector<256x128xf32>
    %c0_14 = arith.constant 0 : index
    %c0_15 = arith.constant 0 : index
    %c2 = arith.constant 2 : index
    %c0_16 = arith.constant 0 : index
    %15 = vector.load %arg1[%c0_14, %c0_15, %c2, %c0_16] : memref<1x18x18x128xbf16, #tpu.memory_space<vmem>>, vector<1x16x16x128xbf16>
    %16 = vector.shape_cast %15 : vector<1x16x16x128xbf16> to vector<16x16x128xbf16>
    %17 = vector.shape_cast %16 : vector<16x16x128xbf16> to vector<256x128xbf16>
    %c2_17 = arith.constant 2 : index
    %c0_18 = arith.constant 0 : index
    %c0_19 = arith.constant 0 : index
    %18 = vector.load %arg2[%c2_17, %c0_18, %c0_19] : memref<9x128x128xbf16, #tpu.memory_space<vmem>>, vector<1x128x128xbf16>
    %19 = vector.shape_cast %18 : vector<1x128x128xbf16> to vector<128x128xbf16>
    %cst_20 = arith.constant dense<0.000000e+00> : vector<256x128xf32>
    %20 = tpu.matmul %17, %19, %cst_20 {dimension_numbers = #tpu.dot_dimension_numbers<[1], [0], [0], [1], [0, 0, 1, 1], [], []>} : vector<256x128xbf16>, vector<128x128xbf16>, vector<256x128xf32> -> vector<256x128xf32>
    %21 = arith.addf %14, %20 : vector<256x128xf32>
    %c0_21 = arith.constant 0 : index
    %c1_22 = arith.constant 1 : index
    %c0_23 = arith.constant 0 : index
    %c0_24 = arith.constant 0 : index
    %22 = vector.load %arg1[%c0_21, %c1_22, %c0_23, %c0_24] : memref<1x18x18x128xbf16, #tpu.memory_space<vmem>>, vector<1x16x16x128xbf16>
    %23 = vector.shape_cast %22 : vector<1x16x16x128xbf16> to vector<16x16x128xbf16>
    %24 = vector.shape_cast %23 : vector<16x16x128xbf16> to vector<256x128xbf16>
    %c3 = arith.constant 3 : index
    %c0_25 = arith.constant 0 : index
    %c0_26 = arith.constant 0 : index
    %25 = vector.load %arg2[%c3, %c0_25, %c0_26] : memref<9x128x128xbf16, #tpu.memory_space<vmem>>, vector<1x128x128xbf16>
    %26 = vector.shape_cast %25 : vector<1x128x128xbf16> to vector<128x128xbf16>
    %cst_27 = arith.constant dense<0.000000e+00> : vector<256x128xf32>
    %27 = tpu.matmul %24, %26, %cst_27 {dimension_numbers = #tpu.dot_dimension_numbers<[1], [0], [0], [1], [0, 0, 1, 1], [], []>} : vector<256x128xbf16>, vector<128x128xbf16>, vector<256x128xf32> -> vector<256x128xf32>
    %28 = arith.addf %21, %27 : vector<256x128xf32>
    %c0_28 = arith.constant 0 : index
    %c1_29 = arith.constant 1 : index
    %c1_30 = arith.constant 1 : index
    %c0_31 = arith.constant 0 : index
    %29 = vector.load %arg1[%c0_28, %c1_29, %c1_30, %c0_31] : memref<1x18x18x128xbf16, #tpu.memory_space<vmem>>, vector<1x16x16x128xbf16>
    %30 = vector.shape_cast %29 : vector<1x16x16x128xbf16> to vector<16x16x128xbf16>
    %31 = vector.shape_cast %30 : vector<16x16x128xbf16> to vector<256x128xbf16>
    %c4 = arith.constant 4 : index
    %c0_32 = arith.constant 0 : index
    %c0_33 = arith.constant 0 : index
    %32 = vector.load %arg2[%c4, %c0_32, %c0_33] : memref<9x128x128xbf16, #tpu.memory_space<vmem>>, vector<1x128x128xbf16>
    %33 = vector.shape_cast %32 : vector<1x128x128xbf16> to vector<128x128xbf16>
    %cst_34 = arith.constant dense<0.000000e+00> : vector<256x128xf32>
    %34 = tpu.matmul %31, %33, %cst_34 {dimension_numbers = #tpu.dot_dimension_numbers<[1], [0], [0], [1], [0, 0, 1, 1], [], []>} : vector<256x128xbf16>, vector<128x128xbf16>, vector<256x128xf32> -> vector<256x128xf32>
    %35 = arith.addf %28, %34 : vector<256x128xf32>
    %c0_35 = arith.constant 0 : index
    %c1_36 = arith.constant 1 : index
    %c2_37 = arith.constant 2 : index
    %c0_38 = arith.constant 0 : index
    %36 = vector.load %arg1[%c0_35, %c1_36, %c2_37, %c0_38] : memref<1x18x18x128xbf16, #tpu.memory_space<vmem>>, vector<1x16x16x128xbf16>
    %37 = vector.shape_cast %36 : vector<1x16x16x128xbf16> to vector<16x16x128xbf16>
    %38 = vector.shape_cast %37 : vector<16x16x128xbf16> to vector<256x128xbf16>
    %c5 = arith.constant 5 : index
    %c0_39 = arith.constant 0 : index
    %c0_40 = arith.constant 0 : index
    %39 = vector.load %arg2[%c5, %c0_39, %c0_40] : memref<9x128x128xbf16, #tpu.memory_space<vmem>>, vector<1x128x128xbf16>
    %40 = vector.shape_cast %39 : vector<1x128x128xbf16> to vector<128x128xbf16>
    %cst_41 = arith.constant dense<0.000000e+00> : vector<256x128xf32>
    %41 = tpu.matmul %38, %40, %cst_41 {dimension_numbers = #tpu.dot_dimension_numbers<[1], [0], [0], [1], [0, 0, 1, 1], [], []>} : vector<256x128xbf16>, vector<128x128xbf16>, vector<256x128xf32> -> vector<256x128xf32>
    %42 = arith.addf %35, %41 : vector<256x128xf32>
    %c0_42 = arith.constant 0 : index
    %c2_43 = arith.constant 2 : index
    %c0_44 = arith.constant 0 : index
    %c0_45 = arith.constant 0 : index
    %43 = vector.load %arg1[%c0_42, %c2_43, %c0_44, %c0_45] : memref<1x18x18x128xbf16, #tpu.memory_space<vmem>>, vector<1x16x16x128xbf16>
    %44 = vector.shape_cast %43 : vector<1x16x16x128xbf16> to vector<16x16x128xbf16>
    %45 = vector.shape_cast %44 : vector<16x16x128xbf16> to vector<256x128xbf16>
    %c6 = arith.constant 6 : index
    %c0_46 = arith.constant 0 : index
    %c0_47 = arith.constant 0 : index
    %46 = vector.load %arg2[%c6, %c0_46, %c0_47] : memref<9x128x128xbf16, #tpu.memory_space<vmem>>, vector<1x128x128xbf16>
    %47 = vector.shape_cast %46 : vector<1x128x128xbf16> to vector<128x128xbf16>
    %cst_48 = arith.constant dense<0.000000e+00> : vector<256x128xf32>
    %48 = tpu.matmul %45, %47, %cst_48 {dimension_numbers = #tpu.dot_dimension_numbers<[1], [0], [0], [1], [0, 0, 1, 1], [], []>} : vector<256x128xbf16>, vector<128x128xbf16>, vector<256x128xf32> -> vector<256x128xf32>
    %49 = arith.addf %42, %48 : vector<256x128xf32>
    %c0_49 = arith.constant 0 : index
    %c2_50 = arith.constant 2 : index
    %c1_51 = arith.constant 1 : index
    %c0_52 = arith.constant 0 : index
    %50 = vector.load %arg1[%c0_49, %c2_50, %c1_51, %c0_52] : memref<1x18x18x128xbf16, #tpu.memory_space<vmem>>, vector<1x16x16x128xbf16>
    %51 = vector.shape_cast %50 : vector<1x16x16x128xbf16> to vector<16x16x128xbf16>
    %52 = vector.shape_cast %51 : vector<16x16x128xbf16> to vector<256x128xbf16>
    %c7 = arith.constant 7 : index
    %c0_53 = arith.constant 0 : index
    %c0_54 = arith.constant 0 : index
    %53 = vector.load %arg2[%c7, %c0_53, %c0_54] : memref<9x128x128xbf16, #tpu.memory_space<vmem>>, vector<1x128x128xbf16>
    %54 = vector.shape_cast %53 : vector<1x128x128xbf16> to vector<128x128xbf16>
    %cst_55 = arith.constant dense<0.000000e+00> : vector<256x128xf32>
    %55 = tpu.matmul %52, %54, %cst_55 {dimension_numbers = #tpu.dot_dimension_numbers<[1], [0], [0], [1], [0, 0, 1, 1], [], []>} : vector<256x128xbf16>, vector<128x128xbf16>, vector<256x128xf32> -> vector<256x128xf32>
    %56 = arith.addf %49, %55 : vector<256x128xf32>
    %c0_56 = arith.constant 0 : index
    %c2_57 = arith.constant 2 : index
    %c2_58 = arith.constant 2 : index
    %c0_59 = arith.constant 0 : index
    %57 = vector.load %arg1[%c0_56, %c2_57, %c2_58, %c0_59] : memref<1x18x18x128xbf16, #tpu.memory_space<vmem>>, vector<1x16x16x128xbf16>
    %58 = vector.shape_cast %57 : vector<1x16x16x128xbf16> to vector<16x16x128xbf16>
    %59 = vector.shape_cast %58 : vector<16x16x128xbf16> to vector<256x128xbf16>
    %c8 = arith.constant 8 : index
    %c0_60 = arith.constant 0 : index
    %c0_61 = arith.constant 0 : index
    %60 = vector.load %arg2[%c8, %c0_60, %c0_61] : memref<9x128x128xbf16, #tpu.memory_space<vmem>>, vector<1x128x128xbf16>
    %61 = vector.shape_cast %60 : vector<1x128x128xbf16> to vector<128x128xbf16>
    %cst_62 = arith.constant dense<0.000000e+00> : vector<256x128xf32>
    %62 = tpu.matmul %59, %61, %cst_62 {dimension_numbers = #tpu.dot_dimension_numbers<[1], [0], [0], [1], [0, 0, 1, 1], [], []>} : vector<256x128xbf16>, vector<128x128xbf16>, vector<256x128xf32> -> vector<256x128xf32>
    %63 = arith.addf %56, %62 : vector<256x128xf32>
    %c0_63 = arith.constant 0 : index
    %c0_64 = arith.constant 0 : index
    %64 = vector.load %arg3[%c0_63, %c0_64] : memref<1x128xf32, #tpu.memory_space<vmem>>, vector<1x128xf32>
    %65 = vector.broadcast %64 : vector<1x128xf32> to vector<256x128xf32>
    %66 = arith.addf %63, %65 : vector<256x128xf32>
    %cst_65 = arith.constant 0.000000e+00 : f32
    %67 = vector.broadcast %cst_65 : f32 to vector<256x128xf32>
    %68 = arith.maximumf %66, %67 : vector<256x128xf32>
    %cst_66 = arith.constant 0.000000e+00 : bf16
    %69 = vector.broadcast %cst_66 : bf16 to vector<18x18x128xbf16>
    %c0_67 = arith.constant 0 : index
    %c0_68 = arith.constant 0 : index
    %c0_69 = arith.constant 0 : index
    %70 = vector.load %arg9[%c0_67, %c0_68, %c0_69] : memref<18x18x128xbf16, #tpu.memory_space<vmem>>, vector<18x18x128xbf16>
    tpu.vector_store %arg9[%c0_67, %c0_68, %c0_69], %69 {strides = array<i32>} : memref<18x18x128xbf16, #tpu.memory_space<vmem>>, vector<18x18x128xbf16>,
    %71 = vector.shape_cast %68 : vector<256x128xf32> to vector<16x16x128xf32>
    %72 = arith.truncf %71 : vector<16x16x128xf32> to vector<16x16x128xbf16>
    %c1_70 = arith.constant 1 : index
    %c1_71 = arith.constant 1 : index
    %c0_72 = arith.constant 0 : index
    %73 = vector.load %arg9[%c1_70, %c1_71, %c0_72] : memref<18x18x128xbf16, #tpu.memory_space<vmem>>, vector<16x16x128xbf16>
    tpu.vector_store %arg9[%c1_70, %c1_71, %c0_72], %72 {strides = array<i32>} : memref<18x18x128xbf16, #tpu.memory_space<vmem>>, vector<16x16x128xbf16>,
    %cst_73 = arith.constant 0.000000e+00 : f32
    %74 = vector.broadcast %cst_73 : f32 to vector<256x128xf32>
    %c0_74 = arith.constant 0 : index
    %c0_75 = arith.constant 0 : index
    %c0_76 = arith.constant 0 : index
    %75 = vector.load %arg9[%c0_74, %c0_75, %c0_76] : memref<18x18x128xbf16, #tpu.memory_space<vmem>>, vector<16x16x128xbf16>
    %76 = vector.shape_cast %75 : vector<16x16x128xbf16> to vector<256x128xbf16>
    %c0_77 = arith.constant 0 : index
    %c0_78 = arith.constant 0 : index
    %c0_79 = arith.constant 0 : index
    %77 = vector.load %arg4[%c0_77, %c0_78, %c0_79] : memref<9x128x128xbf16, #tpu.memory_space<vmem>>, vector<1x128x128xbf16>
    %78 = vector.shape_cast %77 : vector<1x128x128xbf16> to vector<128x128xbf16>
    %cst_80 = arith.constant dense<0.000000e+00> : vector<256x128xf32>
    %79 = tpu.matmul %76, %78, %cst_80 {dimension_numbers = #tpu.dot_dimension_numbers<[1], [0], [0], [1], [0, 0, 1, 1], [], []>} : vector<256x128xbf16>, vector<128x128xbf16>, vector<256x128xf32> -> vector<256x128xf32>
    %80 = arith.addf %74, %79 : vector<256x128xf32>
    %c0_81 = arith.constant 0 : index
    %c1_82 = arith.constant 1 : index
    %c0_83 = arith.constant 0 : index
    %81 = vector.load %arg9[%c0_81, %c1_82, %c0_83] : memref<18x18x128xbf16, #tpu.memory_space<vmem>>, vector<16x16x128xbf16>
    %82 = vector.shape_cast %81 : vector<16x16x128xbf16> to vector<256x128xbf16>
    %c1_84 = arith.constant 1 : index
    %c0_85 = arith.constant 0 : index
    %c0_86 = arith.constant 0 : index
    %83 = vector.load %arg4[%c1_84, %c0_85, %c0_86] : memref<9x128x128xbf16, #tpu.memory_space<vmem>>, vector<1x128x128xbf16>
    %84 = vector.shape_cast %83 : vector<1x128x128xbf16> to vector<128x128xbf16>
    %cst_87 = arith.constant dense<0.000000e+00> : vector<256x128xf32>
    %85 = tpu.matmul %82, %84, %cst_87 {dimension_numbers = #tpu.dot_dimension_numbers<[1], [0], [0], [1], [0, 0, 1, 1], [], []>} : vector<256x128xbf16>, vector<128x128xbf16>, vector<256x128xf32> -> vector<256x128xf32>
    %86 = arith.addf %80, %85 : vector<256x128xf32>
    %c0_88 = arith.constant 0 : index
    %c2_89 = arith.constant 2 : index
    %c0_90 = arith.constant 0 : index
    %87 = vector.load %arg9[%c0_88, %c2_89, %c0_90] : memref<18x18x128xbf16, #tpu.memory_space<vmem>>, vector<16x16x128xbf16>
    %88 = vector.shape_cast %87 : vector<16x16x128xbf16> to vector<256x128xbf16>
    %c2_91 = arith.constant 2 : index
    %c0_92 = arith.constant 0 : index
    %c0_93 = arith.constant 0 : index
    %89 = vector.load %arg4[%c2_91, %c0_92, %c0_93] : memref<9x128x128xbf16, #tpu.memory_space<vmem>>, vector<1x128x128xbf16>
    %90 = vector.shape_cast %89 : vector<1x128x128xbf16> to vector<128x128xbf16>
    %cst_94 = arith.constant dense<0.000000e+00> : vector<256x128xf32>
    %91 = tpu.matmul %88, %90, %cst_94 {dimension_numbers = #tpu.dot_dimension_numbers<[1], [0], [0], [1], [0, 0, 1, 1], [], []>} : vector<256x128xbf16>, vector<128x128xbf16>, vector<256x128xf32> -> vector<256x128xf32>
    %92 = arith.addf %86, %91 : vector<256x128xf32>
    %c1_95 = arith.constant 1 : index
    %c0_96 = arith.constant 0 : index
    %c0_97 = arith.constant 0 : index
    %93 = vector.load %arg9[%c1_95, %c0_96, %c0_97] : memref<18x18x128xbf16, #tpu.memory_space<vmem>>, vector<16x16x128xbf16>
    %94 = vector.shape_cast %93 : vector<16x16x128xbf16> to vector<256x128xbf16>
    %c3_98 = arith.constant 3 : index
    %c0_99 = arith.constant 0 : index
    %c0_100 = arith.constant 0 : index
    %95 = vector.load %arg4[%c3_98, %c0_99, %c0_100] : memref<9x128x128xbf16, #tpu.memory_space<vmem>>, vector<1x128x128xbf16>
    %96 = vector.shape_cast %95 : vector<1x128x128xbf16> to vector<128x128xbf16>
    %cst_101 = arith.constant dense<0.000000e+00> : vector<256x128xf32>
    %97 = tpu.matmul %94, %96, %cst_101 {dimension_numbers = #tpu.dot_dimension_numbers<[1], [0], [0], [1], [0, 0, 1, 1], [], []>} : vector<256x128xbf16>, vector<128x128xbf16>, vector<256x128xf32> -> vector<256x128xf32>
    %98 = arith.addf %92, %97 : vector<256x128xf32>
    %c1_102 = arith.constant 1 : index
    %c1_103 = arith.constant 1 : index
    %c0_104 = arith.constant 0 : index
    %99 = vector.load %arg9[%c1_102, %c1_103, %c0_104] : memref<18x18x128xbf16, #tpu.memory_space<vmem>>, vector<16x16x128xbf16>
    %100 = vector.shape_cast %99 : vector<16x16x128xbf16> to vector<256x128xbf16>
    %c4_105 = arith.constant 4 : index
    %c0_106 = arith.constant 0 : index
    %c0_107 = arith.constant 0 : index
    %101 = vector.load %arg4[%c4_105, %c0_106, %c0_107] : memref<9x128x128xbf16, #tpu.memory_space<vmem>>, vector<1x128x128xbf16>
    %102 = vector.shape_cast %101 : vector<1x128x128xbf16> to vector<128x128xbf16>
    %cst_108 = arith.constant dense<0.000000e+00> : vector<256x128xf32>
    %103 = tpu.matmul %100, %102, %cst_108 {dimension_numbers = #tpu.dot_dimension_numbers<[1], [0], [0], [1], [0, 0, 1, 1], [], []>} : vector<256x128xbf16>, vector<128x128xbf16>, vector<256x128xf32> -> vector<256x128xf32>
    %104 = arith.addf %98, %103 : vector<256x128xf32>
    %c1_109 = arith.constant 1 : index
    %c2_110 = arith.constant 2 : index
    %c0_111 = arith.constant 0 : index
    %105 = vector.load %arg9[%c1_109, %c2_110, %c0_111] : memref<18x18x128xbf16, #tpu.memory_space<vmem>>, vector<16x16x128xbf16>
    %106 = vector.shape_cast %105 : vector<16x16x128xbf16> to vector<256x128xbf16>
    %c5_112 = arith.constant 5 : index
    %c0_113 = arith.constant 0 : index
    %c0_114 = arith.constant 0 : index
    %107 = vector.load %arg4[%c5_112, %c0_113, %c0_114] : memref<9x128x128xbf16, #tpu.memory_space<vmem>>, vector<1x128x128xbf16>
    %108 = vector.shape_cast %107 : vector<1x128x128xbf16> to vector<128x128xbf16>
    %cst_115 = arith.constant dense<0.000000e+00> : vector<256x128xf32>
    %109 = tpu.matmul %106, %108, %cst_115 {dimension_numbers = #tpu.dot_dimension_numbers<[1], [0], [0], [1], [0, 0, 1, 1], [], []>} : vector<256x128xbf16>, vector<128x128xbf16>, vector<256x128xf32> -> vector<256x128xf32>
    %110 = arith.addf %104, %109 : vector<256x128xf32>
    %c2_116 = arith.constant 2 : index
    %c0_117 = arith.constant 0 : index
    %c0_118 = arith.constant 0 : index
    %111 = vector.load %arg9[%c2_116, %c0_117, %c0_118] : memref<18x18x128xbf16, #tpu.memory_space<vmem>>, vector<16x16x128xbf16>
    %112 = vector.shape_cast %111 : vector<16x16x128xbf16> to vector<256x128xbf16>
    %c6_119 = arith.constant 6 : index
    %c0_120 = arith.constant 0 : index
    %c0_121 = arith.constant 0 : index
    %113 = vector.load %arg4[%c6_119, %c0_120, %c0_121] : memref<9x128x128xbf16, #tpu.memory_space<vmem>>, vector<1x128x128xbf16>
    %114 = vector.shape_cast %113 : vector<1x128x128xbf16> to vector<128x128xbf16>
    %cst_122 = arith.constant dense<0.000000e+00> : vector<256x128xf32>
    %115 = tpu.matmul %112, %114, %cst_122 {dimension_numbers = #tpu.dot_dimension_numbers<[1], [0], [0], [1], [0, 0, 1, 1], [], []>} : vector<256x128xbf16>, vector<128x128xbf16>, vector<256x128xf32> -> vector<256x128xf32>
    %116 = arith.addf %110, %115 : vector<256x128xf32>
    %c2_123 = arith.constant 2 : index
    %c1_124 = arith.constant 1 : index
    %c0_125 = arith.constant 0 : index
    %117 = vector.load %arg9[%c2_123, %c1_124, %c0_125] : memref<18x18x128xbf16, #tpu.memory_space<vmem>>, vector<16x16x128xbf16>
    %118 = vector.shape_cast %117 : vector<16x16x128xbf16> to vector<256x128xbf16>
    %c7_126 = arith.constant 7 : index
    %c0_127 = arith.constant 0 : index
    %c0_128 = arith.constant 0 : index
    %119 = vector.load %arg4[%c7_126, %c0_127, %c0_128] : memref<9x128x128xbf16, #tpu.memory_space<vmem>>, vector<1x128x128xbf16>
    %120 = vector.shape_cast %119 : vector<1x128x128xbf16> to vector<128x128xbf16>
    %cst_129 = arith.constant dense<0.000000e+00> : vector<256x128xf32>
    %121 = tpu.matmul %118, %120, %cst_129 {dimension_numbers = #tpu.dot_dimension_numbers<[1], [0], [0], [1], [0, 0, 1, 1], [], []>} : vector<256x128xbf16>, vector<128x128xbf16>, vector<256x128xf32> -> vector<256x128xf32>
    %122 = arith.addf %116, %121 : vector<256x128xf32>
    %c2_130 = arith.constant 2 : index
    %c2_131 = arith.constant 2 : index
    %c0_132 = arith.constant 0 : index
    %123 = vector.load %arg9[%c2_130, %c2_131, %c0_132] : memref<18x18x128xbf16, #tpu.memory_space<vmem>>, vector<16x16x128xbf16>
    %124 = vector.shape_cast %123 : vector<16x16x128xbf16> to vector<256x128xbf16>
    %c8_133 = arith.constant 8 : index
    %c0_134 = arith.constant 0 : index
    %c0_135 = arith.constant 0 : index
    %125 = vector.load %arg4[%c8_133, %c0_134, %c0_135] : memref<9x128x128xbf16, #tpu.memory_space<vmem>>, vector<1x128x128xbf16>
    %126 = vector.shape_cast %125 : vector<1x128x128xbf16> to vector<128x128xbf16>
    %cst_136 = arith.constant dense<0.000000e+00> : vector<256x128xf32>
    %127 = tpu.matmul %124, %126, %cst_136 {dimension_numbers = #tpu.dot_dimension_numbers<[1], [0], [0], [1], [0, 0, 1, 1], [], []>} : vector<256x128xbf16>, vector<128x128xbf16>, vector<256x128xf32> -> vector<256x128xf32>
    %128 = arith.addf %122, %127 : vector<256x128xf32>
    %c0_137 = arith.constant 0 : index
    %c0_138 = arith.constant 0 : index
    %129 = vector.load %arg5[%c0_137, %c0_138] : memref<1x128xf32, #tpu.memory_space<vmem>>, vector<1x128xf32>
    %130 = vector.broadcast %129 : vector<1x128xf32> to vector<256x128xf32>
    %131 = arith.addf %128, %130 : vector<256x128xf32>
    %cst_139 = arith.constant 0.000000e+00 : f32
    %132 = vector.broadcast %cst_139 : f32 to vector<256x128xf32>
    %133 = arith.maximumf %131, %132 : vector<256x128xf32>
    %c0_140 = arith.constant 0 : index
    %c1_141 = arith.constant 1 : index
    %c1_142 = arith.constant 1 : index
    %c0_143 = arith.constant 0 : index
    %134 = vector.load %arg1[%c0_140, %c1_141, %c1_142, %c0_143] : memref<1x18x18x128xbf16, #tpu.memory_space<vmem>>, vector<1x16x16x128xbf16>
    %135 = vector.shape_cast %134 : vector<1x16x16x128xbf16> to vector<16x16x128xbf16>
    %136 = vector.shape_cast %135 : vector<16x16x128xbf16> to vector<256x128xbf16>
    %c0_144 = arith.constant 0 : index
    %c0_145 = arith.constant 0 : index
    %137 = vector.load %arg6[%c0_144, %c0_145] : memref<128x128xbf16, #tpu.memory_space<vmem>>, vector<128x128xbf16>
    %cst_146 = arith.constant dense<0.000000e+00> : vector<256x128xf32>
    %138 = tpu.matmul %136, %137, %cst_146 {dimension_numbers = #tpu.dot_dimension_numbers<[1], [0], [0], [1], [0, 0, 1, 1], [], []>} : vector<256x128xbf16>, vector<128x128xbf16>, vector<256x128xf32> -> vector<256x128xf32>
    %c0_147 = arith.constant 0 : index
    %c0_148 = arith.constant 0 : index
    %139 = vector.load %arg7[%c0_147, %c0_148] : memref<1x128xf32, #tpu.memory_space<vmem>>, vector<1x128xf32>
    %140 = vector.broadcast %139 : vector<1x128xf32> to vector<256x128xf32>
    %141 = arith.addf %138, %140 : vector<256x128xf32>
    %142 = arith.addf %133, %141 : vector<256x128xf32>
    %143 = vector.shape_cast %142 : vector<256x128xf32> to vector<16x16x128xf32>
    %144 = arith.truncf %143 : vector<16x16x128xf32> to vector<16x16x128xbf16>
    %c0_149 = arith.constant 0 : index
    %c0_150 = arith.constant 0 : index
    %c0_151 = arith.constant 0 : index
    %c0_152 = arith.constant 0 : index
    %145 = vector.load %arg8[%c0_149, %c0_150, %c0_151, %c0_152] : memref<1x16x16x128xbf16, #tpu.memory_space<vmem>>, vector<1x16x16x128xbf16>
    %146 = vector.shape_cast %145 : vector<1x16x16x128xbf16> to vector<16x16x128xbf16>
    %147 = vector.shape_cast %144 : vector<16x16x128xbf16> to vector<1x16x16x128xbf16>
    tpu.vector_store %arg8[%c0_149, %c0_150, %c0_151, %c0_152], %147 {strides = array<i32>} : memref<1x16x16x128xbf16, #tpu.memory_space<vmem>>, vector<1x16x16x128xbf16>,
    return
  }
  func.func @transform_0(%arg0: i32) -> (i32, i32, i32, i32) {
    %c0_i32 = arith.constant 0 : i32
    %c0_i32_0 = arith.constant 0 : i32
    %c0_i32_1 = arith.constant 0 : i32
    %c0_i32_2 = arith.constant 0 : i32
    return %arg0, %c0_i32, %c0_i32_0, %c0_i32_1 : i32, i32, i32, i32
  }
  func.func @transform_1(%arg0: i32) -> (i32, i32, i32) {
    %c0_i32 = arith.constant 0 : i32
    %c0_i32_0 = arith.constant 0 : i32
    %c0_i32_1 = arith.constant 0 : i32
    %c0_i32_2 = arith.constant 0 : i32
    return %c0_i32, %c0_i32_0, %c0_i32_1 : i32, i32, i32
  }
  func.func @transform_2(%arg0: i32) -> (i32, i32) {
    %c0_i32 = arith.constant 0 : i32
    %c0_i32_0 = arith.constant 0 : i32
    %c0_i32_1 = arith.constant 0 : i32
    return %c0_i32, %c0_i32_0 : i32, i32
  }
  func.func @transform_3(%arg0: i32) -> (i32, i32, i32) {
    %c0_i32 = arith.constant 0 : i32
    %c0_i32_0 = arith.constant 0 : i32
    %c0_i32_1 = arith.constant 0 : i32
    %c0_i32_2 = arith.constant 0 : i32
    return %c0_i32, %c0_i32_0, %c0_i32_1 : i32, i32, i32
  }
  func.func @transform_4(%arg0: i32) -> (i32, i32) {
    %c0_i32 = arith.constant 0 : i32
    %c0_i32_0 = arith.constant 0 : i32
    %c0_i32_1 = arith.constant 0 : i32
    return %c0_i32, %c0_i32_0 : i32, i32
  }
  func.func @transform_5(%arg0: i32) -> (i32, i32) {
    %c0_i32 = arith.constant 0 : i32
    %c0_i32_0 = arith.constant 0 : i32
    %c0_i32_1 = arith.constant 0 : i32
    return %c0_i32, %c0_i32_0 : i32, i32
  }
  func.func @transform_6(%arg0: i32) -> (i32, i32) {
    %c0_i32 = arith.constant 0 : i32
    %c0_i32_0 = arith.constant 0 : i32
    %c0_i32_1 = arith.constant 0 : i32
    return %c0_i32, %c0_i32_0 : i32, i32
  }
  func.func @transform_7(%arg0: i32) -> (i32, i32, i32, i32) {
    %c0_i32 = arith.constant 0 : i32
    %c0_i32_0 = arith.constant 0 : i32
    %c0_i32_1 = arith.constant 0 : i32
    %c0_i32_2 = arith.constant 0 : i32
    return %arg0, %c0_i32, %c0_i32_0, %c0_i32_1 : i32, i32, i32, i32
  }
}

</mosaic_0001>

<llo_original>
// kernel: residual_block_apply.1
$region0: #{residual_block_apply.1}
  #allocation0 [shape = 'u32[]', space=smem, size = 0x4, offset = 0x4, fixed_abs, tag = 'smem constant byte address 0x4 - core index']
  #allocation1 [shape = 'u32[144,128]{1,0:T(1,128)}', space=vmem, size = 0x12000, scoped, tag = 'internal scratch']
  #allocation2 [shape = 'bf16[18,18,128]{2,1,0:T(8,128)(2,1)}', space=vmem, size = 0x1b000, scoped, tag = 'scratch operand']
  %s0 = inlined_call_operand.vmem [shape: bf16[2,18,18,128], index: 0, kind: input, shape index: {}]
  %s1 = inlined_call_operand.vmem [shape: bf16[9,128,128], index: 1, kind: input, shape index: {}]
  %s2 = inlined_call_operand.vmem [shape: f32[1,128], index: 2, kind: input, shape index: {}]
  %s3 = inlined_call_operand.vmem [shape: bf16[9,128,128], index: 3, kind: input, shape index: {}]
  %s4 = inlined_call_operand.vmem [shape: f32[1,128], index: 4, kind: input, shape index: {}]
  %s5 = inlined_call_operand.vmem [shape: bf16[128,128], index: 5, kind: input, shape index: {}]
  %s6 = inlined_call_operand.vmem [shape: f32[1,128], index: 6, kind: input, shape index: {}]
  %s7 = inlined_call_operand.vmem [shape: bf16[2,16,16,128], index: 7, kind: output, shape index: {}]
  %s8 = sld [smem:[#allocation0]]
  $region61: #{residual_block_apply.1} parent=0
    _
  %s10 = ssub.s32 1, %s8
  %s11 = scalar_select 0, %s10, %s8
  loop: start=0, step=1, limit=4
  $region2: #{residual_block_apply.1} parent=0 // loop_pre_header
    _
  $region3: #{residual_block_apply.1} parent=0 // loop_header
    %s13 = sphi 0, %s17
    %p14 = scmp.ge.s32.totalorder %s13, 4
    %s23 = sphi 0, %s25
    %s26 = sphi 0, %s23
    %s27 = sphi 0, %s26
    %s43 = sphi 0, %s27
    %s47 = sphi 0, %s47
    %s49 = sphi 0, %s47
    %s50 = sphi 0, %s49
    %s64 = sphi 0, %s50
    %s68 = sphi 0, %s68
    %s70 = sphi 0, %s68
    %s71 = sphi 0, %s70
    %s85 = sphi 0, %s71
    %s89 = sphi 0, %s89
    %s91 = sphi 0, %s89
    %s92 = sphi 0, %s91
    %s106 = sphi 0, %s92
    %s110 = sphi 0, %s110
    %s112 = sphi 0, %s110
    %s113 = sphi 0, %s112
    %s127 = sphi 0, %s113
    %s131 = sphi 0, %s131
    %s133 = sphi 0, %s131
    %s134 = sphi 0, %s133
    %s148 = sphi 0, %s134
    %s152 = sphi 0, %s152
    %s154 = sphi 0, %s152
    %s155 = sphi 0, %s154
    %s169 = sphi 0, %s155
    %s175 = sphi 0, %s177
    %s178 = sphi 0, %s175
    %s179 = sphi 0, %s178
    %s195 = sphi 0, %s179
  $region4: #{residual_block_apply.1} parent=0 // loop_header_branch
    %16 = sbr.rel (%p14) target = $region8
  $region5: #{residual_block_apply.1} parent=0 // loop_body
    %s18 = ssub.s32 %s13, 1
    %s19 = ssub.s32 %s13, 2
    %s20 = sadd.s32 %s13, 1
    %s21 = ssub.s32 %s13, %s20
    %p22 = scmp.eq.s32.totalorder %s21, 0
    %s24 = sadd.s32 %s23, 1
    %s25 = scalar_select %p22, %s23, %s24
    %p28 = pneg %p22
    %p29 = scmp.eq.s32.totalorder %s13, 1
    %p30 = por %p28, %p29
    %p31 = scmp.ne.s32.totalorder %s23, %s26
    %p32 = scmp.eq.s32.totalorder %s13, 0
    %p33 = por %p31, %p32
    %p34 = scmp.ne.s32.totalorder %s23, %s26
    %p35 = scmp.eq.s32.totalorder %s18, 1
    %p36 = por %p34, %p35
    %p37 = scmp.ne.s32.totalorder %s26, %s27
    %p38 = scmp.eq.s32.totalorder %s18, 0
    %p39 = por %p37, %p38
    %p40 = scmp.ne.s32.totalorder %s26, %s27
    %p41 = scmp.eq.s32.totalorder %s19, 1
    %p42 = por %p40, %p41
    %p44 = scmp.ne.s32.totalorder %s27, %s43
    %p45 = scmp.eq.s32.totalorder %s19, 0
    %p46 = por %p44, %p45
    %s48 = sadd.s32 %s47, 1
    %p51 = scmp.eq.s32.totalorder %s13, 1
    %p52 = scmp.ne.s32.totalorder %s47, %s49
    %p53 = scmp.eq.s32.totalorder %s13, 0
    %p54 = por %p52, %p53
    %p55 = scmp.ne.s32.totalorder %s47, %s49
    %p56 = scmp.eq.s32.totalorder %s18, 1
    %p57 = por %p55, %p56
    %p58 = scmp.ne.s32.totalorder %s49, %s50
    %p59 = scmp.eq.s32.totalorder %s18, 0
    %p60 = por %p58, %p59
    %p61 = scmp.ne.s32.totalorder %s49, %s50
    %p62 = scmp.eq.s32.totalorder %s19, 1
    %p63 = por %p61, %p62
    %p65 = scmp.ne.s32.totalorder %s50, %s64
    %p66 = scmp.eq.s32.totalorder %s19, 0
    %p67 = por %p65, %p66
    %s69 = sadd.s32 %s68, 1
    %p72 = scmp.eq.s32.totalorder %s13, 1
    %p73 = scmp.ne.s32.totalorder %s68, %s70
    %p74 = scmp.eq.s32.totalorder %s13, 0
    %p75 = por %p73, %p74
    %p76 = scmp.ne.s32.totalorder %s68, %s70
    %p77 = scmp.eq.s32.totalorder %s18, 1
    %p78 = por %p76, %p77
    %p79 = scmp.ne.s32.totalorder %s70, %s71
    %p80 = scmp.eq.s32.totalorder %s18, 0
    %p81 = por %p79, %p80
    %p82 = scmp.ne.s32.totalorder %s70, %s71
    %p83 = scmp.eq.s32.totalorder %s19, 1
    %p84 = por %p82, %p83
    %p86 = scmp.ne.s32.totalorder %s71, %s85
    %p87 = scmp.eq.s32.totalorder %s19, 0
    %p88 = por %p86, %p87
    %s90 = sadd.s32 %s89, 1
    %p93 = scmp.eq.s32.totalorder %s13, 1
    %p94 = scmp.ne.s32.totalorder %s89, %s91
    %p95 = scmp.eq.s32.totalorder %s13, 0
    %p96 = por %p94, %p95
    %p97 = scmp.ne.s32.totalorder %s89, %s91
    %p98 = scmp.eq.s32.totalorder %s18, 1
    %p99 = por %p97, %p98
    %p100 = scmp.ne.s32.totalorder %s91, %s92
    %p101 = scmp.eq.s32.totalorder %s18, 0
    %p102 = por %p100, %p101
    %p103 = scmp.ne.s32.totalorder %s91, %s92
    %p104 = scmp.eq.s32.totalorder %s19, 1
    %p105 = por %p103, %p104
    %p107 = scmp.ne.s32.totalorder %s92, %s106
    %p108 = scmp.eq.s32.totalorder %s19, 0
    %p109 = por %p107, %p108
    %s111 = sadd.s32 %s110, 1
    %p114 = scmp.eq.s32.totalorder %s13, 1
    %p115 = scmp.ne.s32.totalorder %s110, %s112
    %p116 = scmp.eq.s32.totalorder %s13, 0
    %p117 = por %p115, %p116
    %p118 = scmp.ne.s32.totalorder %s110, %s112
    %p119 = scmp.eq.s32.totalorder %s18, 1
    %p120 = por %p118, %p119
    %p121 = scmp.ne.s32.totalorder %s112, %s113
    %p122 = scmp.eq.s32.totalorder %s18, 0
    %p123 = por %p121, %p122
    %p124 = scmp.ne.s32.totalorder %s112, %s113
    %p125 = scmp.eq.s32.totalorder %s19, 1
    %p126 = por %p124, %p125
    %p128 = scmp.ne.s32.totalorder %s113, %s127
    %p129 = scmp.eq.s32.totalorder %s19, 0
    %p130 = por %p128, %p129
    %s132 = sadd.s32 %s131, 1
    %p135 = scmp.eq.s32.totalorder %s13, 1
    %p136 = scmp.ne.s32.totalorder %s131, %s133
    %p137 = scmp.eq.s32.totalorder %s13, 0
    %p138 = por %p136, %p137
    %p139 = scmp.ne.s32.totalorder %s131, %s133
    %p140 = scmp.eq.s32.totalorder %s18, 1
    %p141 = por %p139, %p140
    %p142 = scmp.ne.s32.totalorder %s133, %s134
    %p143 = scmp.eq.s32.totalorder %s18, 0
    %p144 = por %p142, %p143
    %p145 = scmp.ne.s32.totalorder %s133, %s134
    %p146 = scmp.eq.s32.totalorder %s19, 1
    %p147 = por %p145, %p146
    %p149 = scmp.ne.s32.totalorder %s134, %s148
    %p150 = scmp.eq.s32.totalorder %s19, 0
    %p151 = por %p149, %p150
    %s153 = sadd.s32 %s152, 1
    %p156 = scmp.eq.s32.totalorder %s13, 1
    %p157 = scmp.ne.s32.totalorder %s152, %s154
    %p158 = scmp.eq.s32.totalorder %s13, 0
    %p159 = por %p157, %p158
    %p160 = scmp.ne.s32.totalorder %s152, %s154
    %p161 = scmp.eq.s32.totalorder %s18, 1
    %p162 = por %p160, %p161
    %p163 = scmp.ne.s32.totalorder %s154, %s155
    %p164 = scmp.eq.s32.totalorder %s18, 0
    %p165 = por %p163, %p164
    %p166 = scmp.ne.s32.totalorder %s154, %s155
    %p167 = scmp.eq.s32.totalorder %s19, 1
    %p168 = por %p166, %p167
    %p170 = scmp.ne.s32.totalorder %s155, %s169
    %p171 = scmp.eq.s32.totalorder %s19, 0
    %p172 = por %p170, %p171
    %s173 = ssub.s32 %s13, %s20
    %p174 = scmp.eq.s32.totalorder %s173, 0
    %s176 = sadd.s32 %s175, 1
    %s177 = scalar_select %p174, %s175, %s176
    %p180 = pneg %p174
    %p181 = scmp.eq.s32.totalorder %s13, 1
    %p182 = por %p180, %p181
    %p183 = scmp.ne.s32.totalorder %s175, %s178
    %p184 = scmp.eq.s32.totalorder %s13, 0
    %p185 = por %p183, %p184
    %p186 = scmp.ne.s32.totalorder %s175, %s178
    %p187 = scmp.eq.s32.totalorder %s18, 1
    %p188 = por %p186, %p187
    %p189 = scmp.ne.s32.totalorder %s178, %s179
    %p190 = scmp.eq.s32.totalorder %s18, 0
    %p191 = por %p189, %p190
    %p192 = scmp.ne.s32.totalorder %s178, %s179
    %p193 = scmp.eq.s32.totalorder %s19, 1
    %p194 = por %p192, %p193
    %p196 = scmp.ne.s32.totalorder %s179, %s195
    %p197 = scmp.eq.s32.totalorder %s19, 0
    %p198 = por %p196, %p197
    %p199 = scmp.le.s32.totalorder 1, %s13
    %p200 = scmp.lt.s32.totalorder %s13, 3
    %p201 = pnand %p199, %p200
    %p202 = pneg %p201
    // Predicated region
    $region9: #{residual_block_apply.1} parent=5 // pred_check
      _
    $region10: #{residual_block_apply.1} parent=5 // pred_check_branch
      %204 = sbr.rel (%p201) target = $region12
    $region11: #{residual_block_apply.1} parent=5 // pred_region
      %s205 = ssub.s32 %s13, 1
      // Predicated region
      $region13: #{residual_block_apply.1} parent=11 // pred_check
        %p206 = pneg %p60
      $region14: #{residual_block_apply.1} parent=11 // pred_check_branch
        %208 = sbr.rel (%p206) target = $region16
      $region15: #{residual_block_apply.1} parent=11 // pred_region
        _
      $region16: #{residual_block_apply.1} parent=11 // pred_fallthru
        _
      // Predicated region
      $region17: #{residual_block_apply.1} parent=11 // pred_check
        %p209 = pneg %p81
      $region18: #{residual_block_apply.1} parent=11 // pred_check_branch
        %211 = sbr.rel (%p209) target = $region20
      $region19: #{residual_block_apply.1} parent=11 // pred_region
        _
      $region20: #{residual_block_apply.1} parent=11 // pred_fallthru
        _
      // Predicated region
      $region21: #{residual_block_apply.1} parent=11 // pred_check
        %p212 = pneg %p102
      $region22: #{residual_block_apply.1} parent=11 // pred_check_branch
        %214 = sbr.rel (%p212) target = $region24
      $region23: #{residual_block_apply.1} parent=11 // pred_region
        _
      $region24: #{residual_block_apply.1} parent=11 // pred_fallthru
        _
      // Predicated region
      $region25: #{residual_block_apply.1} parent=11 // pred_check
        %p215 = pneg %p123
      $region26: #{residual_block_apply.1} parent=11 // pred_check_branch
        %217 = sbr.rel (%p215) target = $region28
      $region27: #{residual_block_apply.1} parent=11 // pred_region
        _
      $region28: #{residual_block_apply.1} parent=11 // pred_fallthru
        _
      // Predicated region
      $region29: #{residual_block_apply.1} parent=11 // pred_check
        %p218 = pneg %p144
      $region30: #{residual_block_apply.1} parent=11 // pred_check_branch
        %220 = sbr.rel (%p218) target = $region32
      $region31: #{residual_block_apply.1} parent=11 // pred_region
        _
      $region32: #{residual_block_apply.1} parent=11 // pred_fallthru
        _
      // Predicated region
      $region33: #{residual_block_apply.1} parent=11 // pred_check
        %p221 = pneg %p165
      $region34: #{residual_block_apply.1} parent=11 // pred_check_branch
        %223 = sbr.rel (%p221) target = $region36
      $region35: #{residual_block_apply.1} parent=11 // pred_region
        _
      $region36: #{residual_block_apply.1} parent=11 // pred_fallthru
        _
    $region12: #{residual_block_apply.1} parent=5 // pred_fallthru
      _
    %p224 = scmp.lt.s32.totalorder %s13, 2
    // Predicated region
    $region37: #{residual_block_apply.1} parent=5 // pred_check
      %p225 = pneg %p224
    $region38: #{residual_block_apply.1} parent=5 // pred_check_branch
      %227 = sbr.rel (%p225) target = $region40
    $region39: #{residual_block_apply.1} parent=5 // pred_region
      // Predicated region
      $region41: #{residual_block_apply.1} parent=39 // pred_check
        %p228 = pneg %p33
      $region42: #{residual_block_apply.1} parent=39 // pred_check_branch
        %230 = sbr.rel (%p228) target = $region44
      $region43: #{residual_block_apply.1} parent=39 // pred_region
        %p231 = scmp.lt.s32.totalorder %s13, 1
        %s232 = scalar_select %p231, %s13, 1
        %s233 = smul.addr %s232, 54
        %s234 = smul.addr %s233, 4
        %s235 = scalar_lea.vmem %s0, %s234
      $region44: #{residual_block_apply.1} parent=39 // pred_fallthru
        _
    $region40: #{residual_block_apply.1} parent=5 // pred_fallthru
      _
    %p236 = scmp.le.s32.totalorder 1, %s13
    %p237 = scmp.lt.s32.totalorder %s13, 3
    %p238 = pnand %p236, %p237
    %p239 = pneg %p238
    // Predicated region
    $region45: #{residual_block_apply.1} parent=5 // pred_check
      _
    $region46: #{residual_block_apply.1} parent=5 // pred_check_branch
      %241 = sbr.rel (%p238) target = $region48
    $region47: #{residual_block_apply.1} parent=5 // pred_region
      %s242 = ssub.s32 %s13, 1
      %p243 = scmp.lt.s32.totalorder %s18, 1
      %s244 = scalar_select %p243, %s18, 1
      %s245 = smul.addr %s244, 54
      %s246 = smul.addr %s245, 4
      %s247 = scalar_lea.vmem %s0, %s246
      %p248 = pneg %p39
      %p249 = pneg %p36
      %p250 = pneg %p60
      %p251 = pneg %p57
      %p252 = pneg %p81
      %p253 = pneg %p78
      %p254 = pneg %p102
      %p255 = pneg %p99
      %p256 = pneg %p123
      %p257 = pneg %p120
      %p258 = pneg %p144
      %p259 = pneg %p141
      %p260 = pneg %p165
      %p261 = pneg %p162
      %p262 = pneg %p191
      %p263 = pneg %p188
      %p264 = scmp.lt.s32.totalorder %s18, 1
      %s265 = scalar_select %p264, %s18, 1
      %s266 = smul.addr %s265, 32
      %s267 = smul.addr %s266, 4
      %s268 = scalar_lea.vmem %s7, %s267
      %p269 = scmp.lt.s32.totalorder %s18, 1
      %s270 = scalar_select %p269, %s18, 1
      %s271 = smul.addr %s270, 54
      %s272 = smul.addr %s271, 4
      %s273 = scalar_lea.vmem %s0, %s272
      %p274 = scmp.lt.s32.totalorder %s18, 1
      %s275 = scalar_select %p274, %s18, 1
      %s276 = smul.addr %s275, 32
      %s277 = smul.addr %s276, 4
      %s278 = scalar_lea.vmem %s7, %s277
      %v280 = vld [vmem:[%s273] sm:$0xf]
      %v281 = vld [vmem:[%s273 + $0x4] sm:$0xf]
      %v282 = vld [vmem:[%s273 + $0xc] sm:$0xf]
      %v283 = vld [vmem:[%s273 + $0x10] sm:$0xf]
      %v284 = vld [vmem:[%s273 + $0x18] sm:$0xf]
      %v285 = vld [vmem:[%s273 + $0x1c] sm:$0xf]
      %v286 = vld [vmem:[%s273 + $0x24] sm:$0xf]
      %v287 = vld [vmem:[%s273 + $0x28] sm:$0xf]
      %v288 = vld [vmem:[%s273 + $0x30] sm:$0xf]
      %v289 = vld [vmem:[%s273 + $0x34] sm:$0xf]
      %v290 = vld [vmem:[%s273 + $0x3c] sm:$0xf]
      %v291 = vld [vmem:[%s273 + $0x40] sm:$0xf]
      %v292 = vld [vmem:[%s273 + $0x48] sm:$0xf]
      %v293 = vld [vmem:[%s273 + $0x4c] sm:$0xf]
      %v294 = vld [vmem:[%s273 + $0x54] sm:$0xf]
      %v295 = vld [vmem:[%s273 + $0x58] sm:$0xf]
      %v296 = vld [vmem:[%s273 + $0x60] sm:$0xf]
      %v297 = vld [vmem:[%s273 + $0x64] sm:$0xf]
      %v298 = vld [vmem:[%s273 + $0x6c] sm:$0xf]
      %v299 = vld [vmem:[%s273 + $0x70] sm:$0xf]
      %v300 = vld [vmem:[%s273 + $0x78] sm:$0xf]
      %v301 = vld [vmem:[%s273 + $0x7c] sm:$0xf]
      %v302 = vld [vmem:[%s273 + $0x84] sm:$0xf]
      %v303 = vld [vmem:[%s273 + $0x88] sm:$0xf]
      %v304 = vld [vmem:[%s273 + $0x90] sm:$0xf]
      %v305 = vld [vmem:[%s273 + $0x94] sm:$0xf]
      %v306 = vld [vmem:[%s273 + $0x9c] sm:$0xf]
      %v307 = vld [vmem:[%s273 + $0xa0] sm:$0xf]
      %v308 = vld [vmem:[%s273 + $0xa8] sm:$0xf]
      %v309 = vld [vmem:[%s273 + $0xac] sm:$0xf]
      %v310 = vld [vmem:[%s273 + $0xb4] sm:$0xf]
      %v311 = vld [vmem:[%s273 + $0xb8] sm:$0xf]
      %v312 = vld [vmem:[%s1] sm:$0xf]
      %v313 = vld [vmem:[%s1 + $0x4] sm:$0xf]
      %v314 = vld [vmem:[%s1 + $0x8] sm:$0xf]
      %v315 = vld [vmem:[%s1 + $0xc] sm:$0xf]
      %v316 = vld [vmem:[%s1 + $0x10] sm:$0xf]
      %v317 = vld [vmem:[%s1 + $0x14] sm:$0xf]
      %v318 = vld [vmem:[%s1 + $0x18] sm:$0xf]
      %v319 = vld [vmem:[%s1 + $0x1c] sm:$0xf]
      %v320 = vld [vmem:[%s1 + $0x20] sm:$0xf]
      %v321 = vld [vmem:[%s1 + $0x24] sm:$0xf]
      %v322 = vld [vmem:[%s1 + $0x28] sm:$0xf]
      %v323 = vld [vmem:[%s1 + $0x2c] sm:$0xf]
      %v324 = vld [vmem:[%s1 + $0x30] sm:$0xf]
      %v325 = vld [vmem:[%s1 + $0x34] sm:$0xf]
      %v326 = vld [vmem:[%s1 + $0x38] sm:$0xf]
      %v327 = vld [vmem:[%s1 + $0x3c] sm:$0xf]
      %v328 = vld [vmem:[%s273 + $0x8] sm:$0x1]
      %v329 = vld [vmem:[%s273 + $0x14] sm:$0x1]
      %v330 = vld [vmem:[%s273 + $0x20] sm:$0x1]
      %v331 = vld [vmem:[%s273 + $0x2c] sm:$0x1]
      %v332 = vld [vmem:[%s273 + $0x38] sm:$0x1]
      %v333 = vld [vmem:[%s273 + $0x44] sm:$0x1]
      %v334 = vld [vmem:[%s273 + $0x50] sm:$0x1]
      %v335 = vld [vmem:[%s273 + $0x5c] sm:$0x1]
      %v336 = vld [vmem:[%s273 + $0x68] sm:$0x1]
      %v337 = vld [vmem:[%s273 + $0x74] sm:$0x1]
      %v338 = vld [vmem:[%s273 + $0x80] sm:$0x1]
      %v339 = vld [vmem:[%s273 + $0x8c] sm:$0x1]
      %v340 = vld [vmem:[%s273 + $0x98] sm:$0x1]
      %v341 = vld [vmem:[%s273 + $0xa4] sm:$0x1]
      %v342 = vld [vmem:[%s273 + $0xb0] sm:$0x1]
      %v343 = vld [vmem:[%s273 + $0xbc] sm:$0x1]
      %vm344 = vsmask.f32 3328
      %vm345 = vsmask.f32 7440
      %vm346 = vmor %vm344, %vm345
      %v348 = vshrl.u32 %v280, 16
      %v350 = vrot.slane %v348, 4
      %v351 = vshll.u32 %v280, 16
      %v353 = vrot.slane %v351, 5
      %v354 = vor.u32 %v350, %v353
      %v355 = vrot.slane %v354, 4
      %v357 = vshll.u32 %v281, 16
      %v359 = vrot.slane %v357, 5
      %v360 = vsel %vm346, %v355, %v359
      %v361 = vshrl.u32 %v281, 16
      %v363 = vrot.slane %v361, 4
      %v364 = vor.u32 %v363, %v359
      %v365 = vrot.slane %v364, 4
      %v367 = vshll.u32 %v328, 16
      %v369 = vrot.slane %v367, 5
      %v370 = vsel %vm346, %v365, %v369
      %v372 = vshrl.u32 %v282, 16
      %v374 = vrot.slane %v372, 4
      %v375 = vshll.u32 %v282, 16
      %v377 = vrot.slane %v375, 5
      %v378 = vor.u32 %v374, %v377
      %v379 = vrot.slane %v378, 4
      %v381 = vshll.u32 %v283, 16
      %v383 = vrot.slane %v381, 5
      %v384 = vsel %vm346, %v379, %v383
      %v385 = vshrl.u32 %v283, 16
      %v387 = vrot.slane %v385, 4
      %v388 = vor.u32 %v387, %v383
      %v389 = vrot.slane %v388, 4
      %v391 = vshll.u32 %v329, 16
      %v393 = vrot.slane %v391, 5
      %v394 = vsel %vm346, %v389, %v393
      %v396 = vshrl.u32 %v284, 16
      %v398 = vrot.slane %v396, 4
      %v399 = vshll.u32 %v284, 16
      %v401 = vrot.slane %v399, 5
      %v402 = vor.u32 %v398, %v401
      %v403 = vrot.slane %v402, 4
      %v405 = vshll.u32 %v285, 16
      %v407 = vrot.slane %v405, 5
      %v408 = vsel %vm346, %v403, %v407
      %v409 = vshrl.u32 %v285, 16
      %v411 = vrot.slane %v409, 4
      %v412 = vor.u32 %v411, %v407
      %v413 = vrot.slane %v412, 4
      %v415 = vshll.u32 %v330, 16
      %v417 = vrot.slane %v415, 5
      %v418 = vsel %vm346, %v413, %v417
      %v420 = vshrl.u32 %v286, 16
      %v422 = vrot.slane %v420, 4
      %v423 = vshll.u32 %v286, 16
      %v425 = vrot.slane %v423, 5
      %v426 = vor.u32 %v422, %v425
      %v427 = vrot.slane %v426, 4
      %v429 = vshll.u32 %v287, 16
      %v431 = vrot.slane %v429, 5
      %v432 = vsel %vm346, %v427, %v431
      %v433 = vshrl.u32 %v287, 16
      %v435 = vrot.slane %v433, 4
      %v436 = vor.u32 %v435, %v431
      %v437 = vrot.slane %v436, 4
      %v439 = vshll.u32 %v331, 16
      %v441 = vrot.slane %v439, 5
      %v442 = vsel %vm346, %v437, %v441
      %v444 = vshrl.u32 %v288, 16
      %v446 = vrot.slane %v444, 4
      %v447 = vshll.u32 %v288, 16
      %v449 = vrot.slane %v447, 5
      %v450 = vor.u32 %v446, %v449
      %v451 = vrot.slane %v450, 4
      %v453 = vshll.u32 %v289, 16
      %v455 = vrot.slane %v453, 5
      %v456 = vsel %vm346, %v451, %v455
      %v457 = vshrl.u32 %v289, 16
      %v459 = vrot.slane %v457, 4
      %v460 = vor.u32 %v459, %v455
      %v461 = vrot.slane %v460, 4
      %v463 = vshll.u32 %v332, 16
      %v465 = vrot.slane %v463, 5
      %v466 = vsel %vm346, %v461, %v465
      %v468 = vshrl.u32 %v290, 16
      %v470 = vrot.slane %v468, 4
      %v471 = vshll.u32 %v290, 16
      %v473 = vrot.slane %v471, 5
      %v474 = vor.u32 %v470, %v473
      %v475 = vrot.slane %v474, 4
      %v477 = vshll.u32 %v291, 16
      %v479 = vrot.slane %v477, 5
      %v480 = vsel %vm346, %v475, %v479
      %v481 = vshrl.u32 %v291, 16
      %v483 = vrot.slane %v481, 4
      %v484 = vor.u32 %v483, %v479
      %v485 = vrot.slane %v484, 4
      %v487 = vshll.u32 %v333, 16
      %v489 = vrot.slane %v487, 5
      %v490 = vsel %vm346, %v485, %v489
      %v492 = vshrl.u32 %v292, 16
      %v494 = vrot.slane %v492, 4
      %v495 = vshll.u32 %v292, 16
      %v497 = vrot.slane %v495, 5
      %v498 = vor.u32 %v494, %v497
      %v499 = vrot.slane %v498, 4
      %v501 = vshll.u32 %v293, 16
      %v503 = vrot.slane %v501, 5
      %v504 = vsel %vm346, %v499, %v503
      %v505 = vshrl.u32 %v293, 16
      %v507 = vrot.slane %v505, 4
      %v508 = vor.u32 %v507, %v503
      %v509 = vrot.slane %v508, 4
      %v511 = vshll.u32 %v334, 16
      %v513 = vrot.slane %v511, 5
      %v514 = vsel %vm346, %v509, %v513
      %v516 = vshrl.u32 %v294, 16
      %v518 = vrot.slane %v516, 4
      %v519 = vshll.u32 %v294, 16
      %v521 = vrot.slane %v519, 5
      %v522 = vor.u32 %v518, %v521
      %v523 = vrot.slane %v522, 4
      %v525 = vshll.u32 %v295, 16
      %v527 = vrot.slane %v525, 5
      %v528 = vsel %vm346, %v523, %v527
      %v529 = vshrl.u32 %v295, 16
      %v531 = vrot.slane %v529, 4
      %v532 = vor.u32 %v531, %v527
      %v533 = vrot.slane %v532, 4
      %v535 = vshll.u32 %v335, 16
      %v537 = vrot.slane %v535, 5
      %v538 = vsel %vm346, %v533, %v537
      %v540 = vshrl.u32 %v296, 16
      %v542 = vrot.slane %v540, 4
      %v543 = vshll.u32 %v296, 16
      %v545 = vrot.slane %v543, 5
      %v546 = vor.u32 %v542, %v545
      %v547 = vrot.slane %v546, 4
      %v549 = vshll.u32 %v297, 16
      %v551 = vrot.slane %v549, 5
      %v552 = vsel %vm346, %v547, %v551
      %v553 = vshrl.u32 %v297, 16
      %v555 = vrot.slane %v553, 4
      %v556 = vor.u32 %v555, %v551
      %v557 = vrot.slane %v556, 4
      %v559 = vshll.u32 %v336, 16
      %v561 = vrot.slane %v559, 5
      %v562 = vsel %vm346, %v557, %v561
      %v564 = vshrl.u32 %v298, 16
      %v566 = vrot.slane %v564, 4
      %v567 = vshll.u32 %v298, 16
      %v569 = vrot.slane %v567, 5
      %v570 = vor.u32 %v566, %v569
      %v571 = vrot.slane %v570, 4
      %v573 = vshll.u32 %v299, 16
      %v575 = vrot.slane %v573, 5
      %v576 = vsel %vm346, %v571, %v575
      %v577 = vshrl.u32 %v299, 16
      %v579 = vrot.slane %v577, 4
      %v580 = vor.u32 %v579, %v575
      %v581 = vrot.slane %v580, 4
      %v583 = vshll.u32 %v337, 16
      %v585 = vrot.slane %v583, 5
      %v586 = vsel %vm346, %v581, %v585
      %v588 = vshrl.u32 %v300, 16
      %v590 = vrot.slane %v588, 4
      %v591 = vshll.u32 %v300, 16
      %v593 = vrot.slane %v591, 5
      %v594 = vor.u32 %v590, %v593
      %v595 = vrot.slane %v594, 4
      %v597 = vshll.u32 %v301, 16
      %v599 = vrot.slane %v597, 5
      %v600 = vsel %vm346, %v595, %v599
      %v601 = vshrl.u32 %v301, 16
      %v603 = vrot.slane %v601, 4
      %v604 = vor.u32 %v603, %v599
      %v605 = vrot.slane %v604, 4
      %v607 = vshll.u32 %v338, 16
      %v609 = vrot.slane %v607, 5
      %v610 = vsel %vm346, %v605, %v609
      %v612 = vshrl.u32 %v302, 16
      %v614 = vrot.slane %v612, 4
      %v615 = vshll.u32 %v302, 16
      %v617 = vrot.slane %v615, 5
      %v618 = vor.u32 %v614, %v617
      %v619 = vrot.slane %v618, 4
      %v621 = vshll.u32 %v303, 16
      %v623 = vrot.slane %v621, 5
      %v624 = vsel %vm346, %v619, %v623
      %v625 = vshrl.u32 %v303, 16
      %v627 = vrot.slane %v625, 4
      %v628 = vor.u32 %v627, %v623
      %v629 = vrot.slane %v628, 4
      %v631 = vshll.u32 %v339, 16
      %v633 = vrot.slane %v631, 5
      %v634 = vsel %vm346, %v629, %v633
      %v636 = vshrl.u32 %v304, 16
      %v638 = vrot.slane %v636, 4
      %v639 = vshll.u32 %v304, 16
      %v641 = vrot.slane %v639, 5
      %v642 = vor.u32 %v638, %v641
      %v643 = vrot.slane %v642, 4
      %v645 = vshll.u32 %v305, 16
      %v647 = vrot.slane %v645, 5
      %v648 = vsel %vm346, %v643, %v647
      %v649 = vshrl.u32 %v305, 16
      %v651 = vrot.slane %v649, 4
      %v652 = vor.u32 %v651, %v647
      %v653 = vrot.slane %v652, 4
      %v655 = vshll.u32 %v340, 16
      %v657 = vrot.slane %v655, 5
      %v658 = vsel %vm346, %v653, %v657
      %v660 = vshrl.u32 %v306, 16
      %v662 = vrot.slane %v660, 4
      %v663 = vshll.u32 %v306, 16
      %v665 = vrot.slane %v663, 5
      %v666 = vor.u32 %v662, %v665
      %v667 = vrot.slane %v666, 4
      %v669 = vshll.u32 %v307, 16
      %v671 = vrot.slane %v669, 5
      %v672 = vsel %vm346, %v667, %v671
      %v673 = vshrl.u32 %v307, 16
      %v675 = vrot.slane %v673, 4
      %v676 = vor.u32 %v675, %v671
      %v677 = vrot.slane %v676, 4
      %v679 = vshll.u32 %v341, 16
      %v681 = vrot.slane %v679, 5
      %v682 = vsel %vm346, %v677, %v681
      %v684 = vshrl.u32 %v308, 16
      %v686 = vrot.slane %v684, 4
      %v687 = vshll.u32 %v308, 16
      %v689 = vrot.slane %v687, 5
      %v690 = vor.u32 %v686, %v689
      %v691 = vrot.slane %v690, 4
      %v693 = vshll.u32 %v309, 16
      %v695 = vrot.slane %v693, 5
      %v696 = vsel %vm346, %v691, %v695
      %v697 = vshrl.u32 %v309, 16
      %v699 = vrot.slane %v697, 4
      %v700 = vor.u32 %v699, %v695
      %v701 = vrot.slane %v700, 4
      %v703 = vshll.u32 %v342, 16
      %v705 = vrot.slane %v703, 5
      %v706 = vsel %vm346, %v701, %v705
      %v708 = vshrl.u32 %v310, 16
      %v710 = vrot.slane %v708, 4
      %v711 = vshll.u32 %v310, 16
      %v713 = vrot.slane %v711, 5
      %v714 = vor.u32 %v710, %v713
      %v715 = vrot.slane %v714, 4
      %v717 = vshll.u32 %v311, 16
      %v719 = vrot.slane %v717, 5
      %v720 = vsel %vm346, %v715, %v719
      %v721 = vshrl.u32 %v311, 16
      %v723 = vrot.slane %v721, 4
      %v724 = vor.u32 %v723, %v719
      %v725 = vrot.slane %v724, 4
      %v727 = vshll.u32 %v343, 16
      %v729 = vrot.slane %v727, 5
      %v730 = vsel %vm346, %v725, %v729
      %s731 = scalar_lea.vmem %s1, 64
      %v732 = vld [vmem:[%s731] sm:$0xf]
      %v733 = vld [vmem:[%s731 + $0x4] sm:$0xf]
      %v734 = vld [vmem:[%s731 + $0x8] sm:$0xf]
      %v735 = vld [vmem:[%s731 + $0xc] sm:$0xf]
      %v736 = vld [vmem:[%s731 + $0x10] sm:$0xf]
      %v737 = vld [vmem:[%s731 + $0x14] sm:$0xf]
      %v738 = vld [vmem:[%s731 + $0x18] sm:$0xf]
      %v739 = vld [vmem:[%s731 + $0x1c] sm:$0xf]
      %v740 = vld [vmem:[%s731 + $0x20] sm:$0xf]
      %v741 = vld [vmem:[%s731 + $0x24] sm:$0xf]
      %v742 = vld [vmem:[%s731 + $0x28] sm:$0xf]
      %v743 = vld [vmem:[%s731 + $0x2c] sm:$0xf]
      %v744 = vld [vmem:[%s731 + $0x30] sm:$0xf]
      %v745 = vld [vmem:[%s731 + $0x34] sm:$0xf]
      %v746 = vld [vmem:[%s731 + $0x38] sm:$0xf]
      %v747 = vld [vmem:[%s731 + $0x3c] sm:$0xf]
      %v748 = vunpack.c.l.b16 %v360
      %v749 = vunpack.c.l.b16 %v370
      %v750 = vunpack.c.l.b16 %v384
      %v751 = vunpack.c.l.b16 %v394
      %v752 = vunpack.c.l.b16 %v408
      %v753 = vunpack.c.l.b16 %v418
      %v754 = vunpack.c.l.b16 %v432
      %v755 = vunpack.c.l.b16 %v442
      %v756 = vunpack.c.l.b16 %v456
      %v757 = vunpack.c.l.b16 %v466
      %v758 = vunpack.c.l.b16 %v480
      %v759 = vunpack.c.l.b16 %v490
      %v760 = vunpack.c.l.b16 %v504
      %v761 = vunpack.c.l.b16 %v514
      %v762 = vunpack.c.l.b16 %v528
      %v763 = vunpack.c.l.b16 %v538
      %v764 = vunpack.c.l.b16 %v552
      %v765 = vunpack.c.l.b16 %v562
      %v766 = vunpack.c.l.b16 %v576
      %v767 = vunpack.c.l.b16 %v586
      %v768 = vunpack.c.l.b16 %v600
      %v769 = vunpack.c.l.b16 %v610
      %v770 = vunpack.c.l.b16 %v624
      %v771 = vunpack.c.l.b16 %v634
      %v772 = vunpack.c.l.b16 %v648
      %v773 = vunpack.c.l.b16 %v658
      %v774 = vunpack.c.l.b16 %v672
      %v775 = vunpack.c.l.b16 %v682
      %v776 = vunpack.c.l.b16 %v696
      %v777 = vunpack.c.l.b16 %v706
      %v778 = vunpack.c.l.b16 %v720
      %v779 = vunpack.c.l.b16 %v730
      %v780 = vpack.c.b16 %v749, %v748
      %v781 = vpack.c.b16 %v751, %v750
      %v782 = vpack.c.b16 %v753, %v752
      %v783 = vpack.c.b16 %v755, %v754
      %v784 = vpack.c.b16 %v757, %v756
      %v785 = vpack.c.b16 %v759, %v758
      %v786 = vpack.c.b16 %v761, %v760
      %v787 = vpack.c.b16 %v763, %v762
      %v788 = vpack.c.b16 %v765, %v764
      %v789 = vpack.c.b16 %v767, %v766
      %v790 = vpack.c.b16 %v769, %v768
      %v791 = vpack.c.b16 %v771, %v770
      %v792 = vpack.c.b16 %v773, %v772
      %v793 = vpack.c.b16 %v775, %v774
      %v794 = vpack.c.b16 %v777, %v776
      %v795 = vpack.c.b16 %v779, %v778
      %v828 = vunpack.c.l.b16 %v732
      %v829 = vunpack.c.l.b16 %v733
      %v830 = vunpack.c.l.b16 %v734
      %v831 = vunpack.c.l.b16 %v735
      %v832 = vunpack.c.l.b16 %v736
      %v833 = vunpack.c.l.b16 %v737
      %v834 = vunpack.c.l.b16 %v738
      %v835 = vunpack.c.l.b16 %v739
      %v836 = vunpack.c.l.b16 %v740
      %v837 = vunpack.c.l.b16 %v741
      %v838 = vunpack.c.l.b16 %v742
      %v839 = vunpack.c.l.b16 %v743
      %v840 = vunpack.c.l.b16 %v744
      %v841 = vunpack.c.l.b16 %v745
      %v842 = vunpack.c.l.b16 %v746
      %v843 = vunpack.c.l.b16 %v747
      %v844 = vpack.c.b16 %v829, %v828
      %v845 = vpack.c.b16 %v831, %v830
      %v846 = vpack.c.b16 %v833, %v832
      %v847 = vpack.c.b16 %v835, %v834
      %v848 = vpack.c.b16 %v837, %v836
      %v849 = vpack.c.b16 %v839, %v838
      %v850 = vpack.c.b16 %v841, %v840
      %v851 = vpack.c.b16 %v843, %v842
      %860 = vmatprep.subr.bf16.mxu0 0
      %861 = vmatpush1.bf16.msra.mxu0 %v844
      %862 = vmatprep.subr.bf16.mxu0 0
      %863 = vmatpush1.bf16.msra.mxu0 %v845
      %864 = vmatprep.subr.bf16.mxu0 0
      %865 = vmatpush1.bf16.msra.mxu0 %v846
      %866 = vmatprep.subr.bf16.mxu0 0
      %867 = vmatpush1.bf16.msra.mxu0 %v847
      %868 = vmatprep.subr.bf16.mxu0 0
      %869 = vmatpush1.bf16.msra.mxu0 %v848
      %870 = vmatprep.subr.bf16.mxu0 0
      %871 = vmatpush1.bf16.msra.mxu0 %v849
      %872 = vmatprep.subr.bf16.mxu0 0
      %873 = vmatpush1.bf16.msra.mxu0 %v850
      %874 = vmatprep.subr.bf16.mxu0 0
      %875 = vmatpush1.bf16.msra.mxu0 %v851
      %876 = vmatprep.subr.bf16.mxu0 0
      %877 = vmatpush1.bf16.msra.mxu0 0
      %878 = vmatprep.subr.bf16.mxu0 0
      %879 = vmatpush1.bf16.msra.mxu0 0
      %880 = vmatprep.subr.bf16.mxu0 0
      %881 = vmatpush1.bf16.msra.mxu0 0
      %882 = vmatprep.subr.bf16.mxu0 0
      %883 = vmatpush1.bf16.msra.mxu0 0
      %884 = vmatprep.subr.bf16.mxu0 0
      %885 = vmatpush1.bf16.msra.mxu0 0
      %886 = vmatprep.subr.bf16.mxu0 0
      %887 = vmatpush1.bf16.msra.mxu0 0
      %888 = vmatprep.subr.bf16.mxu0 0
      %889 = vmatpush1.bf16.msra.mxu0 0
      %890 = vmatprep.subr.bf16.mxu0 0
      %891 = vmatpush1.bf16.msra.mxu0 0
      %892 = vmatprep.mubr.bf16.mxu0 0
      %893 = vmatmul.mubr.bf16.gmra.mrb[0].mxu0 %v780
      %v894 = vpop.f32.mrb[0].mxu0
      %v895 = vadd.f32 0.0, %v894
      %v896 = vpop.f32.mrb[0].mxu0
      %v897 = vpop.f32.mrb[0].mxu0
      %v898 = vadd.f32 0.0, %v897
      %v899 = vpop.f32.mrb[0].mxu0
      %900 = vmatprep.mubr.bf16.mxu0 0
      %901 = vmatmul.mubr.bf16.gmra.mrb[0].mxu0 %v781
      %v902 = vpop.f32.mrb[0].mxu0
      %v903 = vadd.f32 0.0, %v902
      %v904 = vpop.f32.mrb[0].mxu0
      %v905 = vpop.f32.mrb[0].mxu0
      %v906 = vadd.f32 0.0, %v905
      %v907 = vpop.f32.mrb[0].mxu0
      %908 = vmatprep.mubr.bf16.mxu0 0
      %909 = vmatmul.mubr.bf16.gmra.mrb[0].mxu0 %v782
      %v910 = vpop.f32.mrb[0].mxu0
      %v911 = vadd.f32 0.0, %v910
      %v912 = vpop.f32.mrb[0].mxu0
      %v913 = vpop.f32.mrb[0].mxu0
      %v914 = vadd.f32 0.0, %v913
      %v915 = vpop.f32.mrb[0].mxu0
      %916 = vmatprep.mubr.bf16.mxu0 0
      %917 = vmatmul.mubr.bf16.gmra.mrb[0].mxu0 %v783
      %v918 = vpop.f32.mrb[0].mxu0
      %v919 = vadd.f32 0.0, %v918
      %v920 = vpop.f32.mrb[0].mxu0
      %v921 = vpop.f32.mrb[0].mxu0
      %v922 = vadd.f32 0.0, %v921
      %v923 = vpop.f32.mrb[0].mxu0
      %924 = vmatprep.mubr.bf16.mxu0 0
      %925 = vmatmul.mubr.bf16.gmra.mrb[0].mxu0 %v784
      %v926 = vpop.f32.mrb[0].mxu0
      %v927 = vadd.f32 0.0, %v926
      %v928 = vpop.f32.mrb[0].mxu0
      %v929 = vpop.f32.mrb[0].mxu0
      %v930 = vadd.f32 0.0, %v929
      %v931 = vpop.f32.mrb[0].mxu0
      %932 = vmatprep.mubr.bf16.mxu0 0
      %933 = vmatmul.mubr.bf16.gmra.mrb[0].mxu0 %v785
      %v934 = vpop.f32.mrb[0].mxu0
      %v935 = vadd.f32 0.0, %v934
      %v936 = vpop.f32.mrb[0].mxu0
      %v937 = vpop.f32.mrb[0].mxu0
      %v938 = vadd.f32 0.0, %v937
      %v939 = vpop.f32.mrb[0].mxu0
      %940 = vmatprep.mubr.bf16.mxu0 0
      %941 = vmatmul.mubr.bf16.gmra.mrb[0].mxu0 %v786
      %v942 = vpop.f32.mrb[0].mxu0
      %v943 = vadd.f32 0.0, %v942
      %v944 = vpop.f32.mrb[0].mxu0
      %v945 = vpop.f32.mrb[0].mxu0
      %v946 = vadd.f32 0.0, %v945
      %v947 = vpop.f32.mrb[0].mxu0
      %948 = vmatprep.mubr.bf16.mxu0 0
      %949 = vmatmul.mubr.bf16.gmra.mrb[0].mxu0 %v787
      %v950 = vpop.f32.mrb[0].mxu0
      %v951 = vadd.f32 0.0, %v950
      %v952 = vpop.f32.mrb[0].mxu0
      %v953 = vpop.f32.mrb[0].mxu0
      %v954 = vadd.f32 0.0, %v953
      %v955 = vpop.f32.mrb[0].mxu0
      %956 = vmatprep.mubr.bf16.mxu0 0
      %957 = vmatmul.mubr.bf16.gmra.mrb[0].mxu0 %v788
      %v958 = vpop.f32.mrb[0].mxu0
      %v959 = vadd.f32 0.0, %v958
      %v960 = vpop.f32.mrb[0].mxu0
      %v961 = vpop.f32.mrb[0].mxu0
      %v962 = vadd.f32 0.0, %v961
      %v963 = vpop.f32.mrb[0].mxu0
      %964 = vmatprep.mubr.bf16.mxu0 0
      %965 = vmatmul.mubr.bf16.gmra.mrb[0].mxu0 %v789
      %v966 = vpop.f32.mrb[0].mxu0
      %v967 = vadd.f32 0.0, %v966
      %v968 = vpop.f32.mrb[0].mxu0
      %v969 = vpop.f32.mrb[0].mxu0
      %v970 = vadd.f32 0.0, %v969
      %v971 = vpop.f32.mrb[0].mxu0
      %972 = vmatprep.mubr.bf16.mxu0 0
      %973 = vmatmul.mubr.bf16.gmra.mrb[0].mxu0 %v790
      %v974 = vpop.f32.mrb[0].mxu0
      %v975 = vadd.f32 0.0, %v974
      %v976 = vpop.f32.mrb[0].mxu0
      %v977 = vpop.f32.mrb[0].mxu0
      %v978 = vadd.f32 0.0, %v977
      %v979 = vpop.f32.mrb[0].mxu0
      %980 = vmatprep.mubr.bf16.mxu0 0
      %981 = vmatmul.mubr.bf16.gmra.mrb[0].mxu0 %v791
      %v982 = vpop.f32.mrb[0].mxu0
      %v983 = vadd.f32 0.0, %v982
      %v984 = vpop.f32.mrb[0].mxu0
      %v985 = vpop.f32.mrb[0].mxu0
      %v986 = vadd.f32 0.0, %v985
      %v987 = vpop.f32.mrb[0].mxu0
      %988 = vmatprep.mubr.bf16.mxu0 0
      %989 = vmatmul.mubr.bf16.gmra.mrb[0].mxu0 %v792
      %v990 = vpop.f32.mrb[0].mxu0
      %v991 = vadd.f32 0.0, %v990
      %v992 = vpop.f32.mrb[0].mxu0
      %v993 = vpop.f32.mrb[0].mxu0
      %v994 = vadd.f32 0.0, %v993
      %v995 = vpop.f32.mrb[0].mxu0
      %996 = vmatprep.mubr.bf16.mxu0 0
      %997 = vmatmul.mubr.bf16.gmra.mrb[0].mxu0 %v793
      %v998 = vpop.f32.mrb[0].mxu0
      %v999 = vadd.f32 0.0, %v998
      %v1000 = vpop.f32.mrb[0].mxu0
      %v1001 = vpop.f32.mrb[0].mxu0
      %v1002 = vadd.f32 0.0, %v1001
      %v1003 = vpop.f32.mrb[0].mxu0
      %1004 = vmatprep.mubr.bf16.mxu0 0
      %1005 = vmatmul.mubr.bf16.gmra.mrb[0].mxu0 %v794
      %v1006 = vpop.f32.mrb[0].mxu0
      %v1007 = vadd.f32 0.0, %v1006
      %v1008 = vpop.f32.mrb[0].mxu0
      %v1009 = vpop.f32.mrb[0].mxu0
      %v1010 = vadd.f32 0.0, %v1009
      %v1011 = vpop.f32.mrb[0].mxu0
      %1012 = vmatprep.mubr.bf16.mxu0 0
      %1013 = vmatmul.mubr.bf16.gmra.mrb[0].mxu0 %v795
      %v1014 = vpop.f32.mrb[0].mxu0
      %v1015 = vadd.f32 0.0, %v1014
      %v1016 = vpop.f32.mrb[0].mxu0
      %v1017 = vpop.f32.mrb[0].mxu0
      %v1018 = vadd.f32 0.0, %v1017
      %v1019 = vpop.f32.mrb[0].mxu0
      %1020 = vdwg.mxu0
      %v1053 = vunpack.c.l.b16 %v280
      %v1054 = vunpack.c.l.b16 %v281
      %v1055 = vunpack.c.l.b16 %v282
      %v1056 = vunpack.c.l.b16 %v283
      %v1057 = vunpack.c.l.b16 %v284
      %v1058 = vunpack.c.l.b16 %v285
      %v1059 = vunpack.c.l.b16 %v286
      %v1060 = vunpack.c.l.b16 %v287
      %v1061 = vunpack.c.l.b16 %v288
      %v1062 = vunpack.c.l.b16 %v289
      %v1063 = vunpack.c.l.b16 %v290
      %v1064 = vunpack.c.l.b16 %v291
      %v1065 = vunpack.c.l.b16 %v292
      %v1066 = vunpack.c.l.b16 %v293
      %v1067 = vunpack.c.l.b16 %v294
      %v1068 = vunpack.c.l.b16 %v295
      %v1069 = vunpack.c.l.b16 %v296
      %v1070 = vunpack.c.l.b16 %v297
      %v1071 = vunpack.c.l.b16 %v298
      %v1072 = vunpack.c.l.b16 %v299
      %v1073 = vunpack.c.l.b16 %v300
      %v1074 = vunpack.c.l.b16 %v301
      %v1075 = vunpack.c.l.b16 %v302
      %v1076 = vunpack.c.l.b16 %v303
      %v1077 = vunpack.c.l.b16 %v304
      %v1078 = vunpack.c.l.b16 %v305
      %v1079 = vunpack.c.l.b16 %v306
      %v1080 = vunpack.c.l.b16 %v307
      %v1081 = vunpack.c.l.b16 %v308
      %v1082 = vunpack.c.l.b16 %v309
      %v1083 = vunpack.c.l.b16 %v310
      %v1084 = vunpack.c.l.b16 %v311
      %v1085 = vpack.c.b16 %v1054, %v1053
      %v1086 = vpack.c.b16 %v1056, %v1055
      %v1087 = vpack.c.b16 %v1058, %v1057
      %v1088 = vpack.c.b16 %v1060, %v1059
      %v1089 = vpack.c.b16 %v1062, %v1061
      %v1090 = vpack.c.b16 %v1064, %v1063
      %v1091 = vpack.c.b16 %v1066, %v1065
      %v1092 = vpack.c.b16 %v1068, %v1067
      %v1093 = vpack.c.b16 %v1070, %v1069
      %v1094 = vpack.c.b16 %v1072, %v1071
      %v1095 = vpack.c.b16 %v1074, %v1073
      %v1096 = vpack.c.b16 %v1076, %v1075
      %v1097 = vpack.c.b16 %v1078, %v1077
      %v1098 = vpack.c.b16 %v1080, %v1079
      %v1099 = vpack.c.b16 %v1082, %v1081
      %v1100 = vpack.c.b16 %v1084, %v1083
      %v1133 = vunpack.c.l.b16 %v312
      %v1134 = vunpack.c.l.b16 %v313
      %v1135 = vunpack.c.l.b16 %v314
      %v1136 = vunpack.c.l.b16 %v315
      %v1137 = vunpack.c.l.b16 %v316
      %v1138 = vunpack.c.l.b16 %v317
      %v1139 = vunpack.c.l.b16 %v318
      %v1140 = vunpack.c.l.b16 %v319
      %v1141 = vunpack.c.l.b16 %v320
      %v1142 = vunpack.c.l.b16 %v321
      %v1143 = vunpack.c.l.b16 %v322
      %v1144 = vunpack.c.l.b16 %v323
      %v1145 = vunpack.c.l.b16 %v324
      %v1146 = vunpack.c.l.b16 %v325
      %v1147 = vunpack.c.l.b16 %v326
      %v1148 = vunpack.c.l.b16 %v327
      %v1149 = vpack.c.b16 %v1134, %v1133
      %v1150 = vpack.c.b16 %v1136, %v1135
      %v1151 = vpack.c.b16 %v1138, %v1137
      %v1152 = vpack.c.b16 %v1140, %v1139
      %v1153 = vpack.c.b16 %v1142, %v1141
      %v1154 = vpack.c.b16 %v1144, %v1143
      %v1155 = vpack.c.b16 %v1146, %v1145
      %v1156 = vpack.c.b16 %v1148, %v1147
      %1165 = vmatprep.subr.bf16.mxu0 0
      %1166 = vmatpush1.bf16.msra.mxu0 %v1149
      %1167 = vmatprep.subr.bf16.mxu0 0
      %1168 = vmatpush1.bf16.msra.mxu0 %v1150
      %1169 = vmatprep.subr.bf16.mxu0 0
      %1170 = vmatpush1.bf16.msra.mxu0 %v1151
      %1171 = vmatprep.subr.bf16.mxu0 0
      %1172 = vmatpush1.bf16.msra.mxu0 %v1152
      %1173 = vmatprep.subr.bf16.mxu0 0
      %1174 = vmatpush1.bf16.msra.mxu0 %v1153
      %1175 = vmatprep.subr.bf16.mxu0 0
      %1176 = vmatpush1.bf16.msra.mxu0 %v1154
      %1177 = vmatprep.subr.bf16.mxu0 0
      %1178 = vmatpush1.bf16.msra.mxu0 %v1155
      %1179 = vmatprep.subr.bf16.mxu0 0
      %1180 = vmatpush1.bf16.msra.mxu0 %v1156
      %1181 = vmatprep.subr.bf16.mxu0 0
      %1182 = vmatpush1.bf16.msra.mxu0 0
      %1183 = vmatprep.subr.bf16.mxu0 0
      %1184 = vmatpush1.bf16.msra.mxu0 0
      %1185 = vmatprep.subr.bf16.mxu0 0
      %1186 = vmatpush1.bf16.msra.mxu0 0
      %1187 = vmatprep.subr.bf16.mxu0 0
      %1188 = vmatpush1.bf16.msra.mxu0 0
      %1189 = vmatprep.subr.bf16.mxu0 0
      %1190 = vmatpush1.bf16.msra.mxu0 0
      %1191 = vmatprep.subr.bf16.mxu0 0
      %1192 = vmatpush1.bf16.msra.mxu0 0
      %1193 = vmatprep.subr.bf16.mxu0 0
      %1194 = vmatpush1.bf16.msra.mxu0 0
      %1195 = vmatprep.subr.bf16.mxu0 0
      %1196 = vmatpush1.bf16.msra.mxu0 0
      %1197 = vmatprep.mubr.bf16.mxu0 0
      %1198 = vmatmul.mubr.bf16.gmra.mrb[0].mxu0 %v1085
      %v1199 = vpop.f32.mrb[0].mxu0
      %v1200 = vadd.f32 %v895, %v1199
      %v1201 = vpop.f32.mrb[0].mxu0
      %v1202 = vpop.f32.mrb[0].mxu0
      %v1203 = vadd.f32 %v898, %v1202
      %v1204 = vpop.f32.mrb[0].mxu0
      %1205 = vmatprep.mubr.bf16.mxu0 0
      %1206 = vmatmul.mubr.bf16.gmra.mrb[0].mxu0 %v1086
      %v1207 = vpop.f32.mrb[0].mxu0
      %v1208 = vadd.f32 %v903, %v1207
      %v1209 = vpop.f32.mrb[0].mxu0
      %v1210 = vpop.f32.mrb[0].mxu0
      %v1211 = vadd.f32 %v906, %v1210
      %v1212 = vpop.f32.mrb[0].mxu0
      %1213 = vmatprep.mubr.bf16.mxu0 0
      %1214 = vmatmul.mubr.bf16.gmra.mrb[0].mxu0 %v1087
      %v1215 = vpop.f32.mrb[0].mxu0
      %v1216 = vadd.f32 %v911, %v1215
      %v1217 = vpop.f32.mrb[0].mxu0
      %v1218 = vpop.f32.mrb[0].mxu0
      %v1219 = vadd.f32 %v914, %v1218
      %v1220 = vpop.f32.mrb[0].mxu0
      %1221 = vmatprep.mubr.bf16.mxu0 0
      %1222 = vmatmul.mubr.bf16.gmra.mrb[0].mxu0 %v1088
      %v1223 = vpop.f32.mrb[0].mxu0
      %v1224 = vadd.f32 %v919, %v1223
      %v1225 = vpop.f32.mrb[0].mxu0
      %v1226 = vpop.f32.mrb[0].mxu0
      %v1227 = vadd.f32 %v922, %v1226
      %v1228 = vpop.f32.mrb[0].mxu0
      %1229 = vmatprep.mubr.bf16.mxu0 0
      %1230 = vmatmul.mubr.bf16.gmra.mrb[0].mxu0 %v1089
      %v1231 = vpop.f32.mrb[0].mxu0
      %v1232 = vadd.f32 %v927, %v1231
      %v1233 = vpop.f32.mrb[0].mxu0
      %v1234 = vpop.f32.mrb[0].mxu0
      %v1235 = vadd.f32 %v930, %v1234
      %v1236 = vpop.f32.mrb[0].mxu0
      %1237 = vmatprep.mubr.bf16.mxu0 0
      %1238 = vmatmul.mubr.bf16.gmra.mrb[0].mxu0 %v1090
      %v1239 = vpop.f32.mrb[0].mxu0
      %v1240 = vadd.f32 %v935, %v1239
      %v1241 = vpop.f32.mrb[0].mxu0
      %v1242 = vpop.f32.mrb[0].mxu0
      %v1243 = vadd.f32 %v938, %v1242
      %v1244 = vpop.f32.mrb[0].mxu0
      %1245 = vmatprep.mubr.bf16.mxu0 0
      %1246 = vmatmul.mubr.bf16.gmra.mrb[0].mxu0 %v1091
      %v1247 = vpop.f32.mrb[0].mxu0
      %v1248 = vadd.f32 %v943, %v1247
      %v1249 = vpop.f32.mrb[0].mxu0
      %v1250 = vpop.f32.mrb[0].mxu0
      %v1251 = vadd.f32 %v946, %v1250
      %v1252 = vpop.f32.mrb[0].mxu0
      %1253 = vmatprep.mubr.bf16.mxu0 0
      %1254 = vmatmul.mubr.bf16.gmra.mrb[0].mxu0 %v1092
      %v1255 = vpop.f32.mrb[0].mxu0
      %v1256 = vadd.f32 %v951, %v1255
      %v1257 = vpop.f32.mrb[0].mxu0
      %v1258 = vpop.f32.mrb[0].mxu0
      %v1259 = vadd.f32 %v954, %v1258
      %v1260 = vpop.f32.mrb[0].mxu0
      %1261 = vmatprep.mubr.bf16.mxu0 0
      %1262 = vmatmul.mubr.bf16.gmra.mrb[0].mxu0 %v1093
      %v1263 = vpop.f32.mrb[0].mxu0
      %v1264 = vadd.f32 %v959, %v1263
      %v1265 = vpop.f32.mrb[0].mxu0
      %v1266 = vpop.f32.mrb[0].mxu0
      %v1267 = vadd.f32 %v962, %v1266
      %v1268 = vpop.f32.mrb[0].mxu0
      %1269 = vmatprep.mubr.bf16.mxu0 0
      %1270 = vmatmul.mubr.bf16.gmra.mrb[0].mxu0 %v1094
      %v1271 = vpop.f32.mrb[0].mxu0
      %v1272 = vadd.f32 %v967, %v1271
      %v1273 = vpop.f32.mrb[0].mxu0
      %v1274 = vpop.f32.mrb[0].mxu0
      %v1275 = vadd.f32 %v970, %v1274
      %v1276 = vpop.f32.mrb[0].mxu0
      %1277 = vmatprep.mubr.bf16.mxu0 0
      %1278 = vmatmul.mubr.bf16.gmra.mrb[0].mxu0 %v1095
      %v1279 = vpop.f32.mrb[0].mxu0
      %v1280 = vadd.f32 %v975, %v1279
      %v1281 = vpop.f32.mrb[0].mxu0
      %v1282 = vpop.f32.mrb[0].mxu0
      %v1283 = vadd.f32 %v978, %v1282
      %v1284 = vpop.f32.mrb[0].mxu0
      %1285 = vmatprep.mubr.bf16.mxu0 0
      %1286 = vmatmul.mubr.bf16.gmra.mrb[0].mxu0 %v1096
      %v1287 = vpop.f32.mrb[0].mxu0
      %v1288 = vadd.f32 %v983, %v1287
      %v1289 = vpop.f32.mrb[0].mxu0
      %v1290 = vpop.f32.mrb[0].mxu0
      %v1291 = vadd.f32 %v986, %v1290
      %v1292 = vpop.f32.mrb[0].mxu0
      %1293 = vmatprep.mubr.bf16.mxu0 0
      %1294 = vmatmul.mubr.bf16.gmra.mrb[0].mxu0 %v1097
      %v1295 = vpop.f32.mrb[0].mxu0
      %v1296 = vadd.f32 %v991, %v1295
      %v1297 = vpop.f32.mrb[0].mxu0
      %v1298 = vpop.f32.mrb[0].mxu0
      %v1299 = vadd.f32 %v994, %v1298
      %v1300 = vpop.f32.mrb[0].mxu0
      %1301 = vmatprep.mubr.bf16.mxu0 0
      %1302 = vmatmul.mubr.bf16.gmra.mrb[0].mxu0 %v1098
      %v1303 = vpop.f32.mrb[0].mxu0
      %v1304 = vadd.f32 %v999, %v1303
      %v1305 = vpop.f32.mrb[0].mxu0
      %v1306 = vpop.f32.mrb[0].mxu0
      %v1307 = vadd.f32 %v1002, %v1306
      %v1308 = vpop.f32.mrb[0].mxu0
      %1309 = vmatprep.mubr.bf16.mxu0 0
      %1310 = vmatmul.mubr.bf16.gmra.mrb[0].mxu0 %v1099
      %v1311 = vpop.f32.mrb[0].mxu0
      %v1312 = vadd.f32 %v1007, %v1311
      %v1313 = vpop.f32.mrb[0].mxu0
      %v1314 = vpop.f32.mrb[0].mxu0
      %v1315 = vadd.f32 %v1010, %v1314
      %v1316 = vpop.f32.mrb[0].mxu0
      %1317 = vmatprep.mubr.bf16.mxu0 0
      %1318 = vmatmul.mubr.bf16.gmra.mrb[0].mxu0 %v1100
      %v1319 = vpop.f32.mrb[0].mxu0
      %v1320 = vadd.f32 %v1015, %v1319
      %v1321 = vpop.f32.mrb[0].mxu0
      %v1322 = vpop.f32.mrb[0].mxu0
      %v1323 = vadd.f32 %v1018, %v1322
      %v1324 = vpop.f32.mrb[0].mxu0
      %1325 = vdwg.mxu0
      %v1326 = vld [vmem:[%s273] sm:$0xe]
      %v1327 = vld [vmem:[%s273 + $0xc] sm:$0xe]
      %v1328 = vld [vmem:[%s273 + $0x18] sm:$0xe]
      %v1329 = vld [vmem:[%s273 + $0x24] sm:$0xe]
      %v1330 = vld [vmem:[%s273 + $0x30] sm:$0xe]
      %v1331 = vld [vmem:[%s273 + $0x3c] sm:$0xe]
      %v1332 = vld [vmem:[%s273 + $0x48] sm:$0xe]
      %v1333 = vld [vmem:[%s273 + $0x54] sm:$0xe]
      %v1334 = vld [vmem:[%s273 + $0x60] sm:$0xe]
      %v1335 = vld [vmem:[%s273 + $0x6c] sm:$0xe]
      %v1336 = vld [vmem:[%s273 + $0x78] sm:$0xe]
      %v1337 = vld [vmem:[%s273 + $0x84] sm:$0xe]
      %v1338 = vld [vmem:[%s273 + $0x90] sm:$0xe]
      %v1339 = vld [vmem:[%s273 + $0x9c] sm:$0xe]
      %v1340 = vld [vmem:[%s273 + $0xa8] sm:$0xe]
      %v1341 = vld [vmem:[%s273 + $0xb4] sm:$0xe]
      %vm1374 = vcmask 1042432
      %vm1375 = vcmask 1046532
      %vm1376 = vmor %vm1374, %vm1375
      %v1377 = vrot.slane %v1326, 5
      %v1378 = vrot.slane %v1377, 4
      %v1379 = vrot.slane %v281, 5
      %v1380 = vsel %vm1376, %v1378, %v1379
      %v1381 = vrot.slane %v1379, 4
      %v1382 = vrot.slane %v328, 5
      %v1383 = vsel %vm1376, %v1381, %v1382
      %v1384 = vrot.slane %v1327, 5
      %v1385 = vrot.slane %v1384, 4
      %v1386 = vrot.slane %v283, 5
      %v1387 = vsel %vm1376, %v1385, %v1386
      %v1388 = vrot.slane %v1386, 4
      %v1389 = vrot.slane %v329, 5
      %v1390 = vsel %vm1376, %v1388, %v1389
      %v1391 = vrot.slane %v1328, 5
      %v1392 = vrot.slane %v1391, 4
      %v1393 = vrot.slane %v285, 5
      %v1394 = vsel %vm1376, %v1392, %v1393
      %v1395 = vrot.slane %v1393, 4
      %v1396 = vrot.slane %v330, 5
      %v1397 = vsel %vm1376, %v1395, %v1396
      %v1398 = vrot.slane %v1329, 5
      %v1399 = vrot.slane %v1398, 4
      %v1400 = vrot.slane %v287, 5
      %v1401 = vsel %vm1376, %v1399, %v1400
      %v1402 = vrot.slane %v1400, 4
      %v1403 = vrot.slane %v331, 5
      %v1404 = vsel %vm1376, %v1402, %v1403
      %v1405 = vrot.slane %v1330, 5
      %v1406 = vrot.slane %v1405, 4
      %v1407 = vrot.slane %v289, 5
      %v1408 = vsel %vm1376, %v1406, %v1407
      %v1409 = vrot.slane %v1407, 4
      %v1410 = vrot.slane %v332, 5
      %v1411 = vsel %vm1376, %v1409, %v1410
      %v1412 = vrot.slane %v1331, 5
      %v1413 = vrot.slane %v1412, 4
      %v1414 = vrot.slane %v291, 5
      %v1415 = vsel %vm1376, %v1413, %v1414
      %v1416 = vrot.slane %v1414, 4
      %v1417 = vrot.slane %v333, 5
      %v1418 = vsel %vm1376, %v1416, %v1417
      %v1419 = vrot.slane %v1332, 5
      %v1420 = vrot.slane %v1419, 4
      %v1421 = vrot.slane %v293, 5
      %v1422 = vsel %vm1376, %v1420, %v1421
      %v1423 = vrot.slane %v1421, 4
      %v1424 = vrot.slane %v334, 5
      %v1425 = vsel %vm1376, %v1423, %v1424
      %v1426 = vrot.slane %v1333, 5
      %v1427 = vrot.slane %v1426, 4
      %v1428 = vrot.slane %v295, 5
      %v1429 = vsel %vm1376, %v1427, %v1428
      %v1430 = vrot.slane %v1428, 4
      %v1431 = vrot.slane %v335, 5
      %v1432 = vsel %vm1376, %v1430, %v1431
      %v1433 = vrot.slane %v1334, 5
      %v1434 = vrot.slane %v1433, 4
      %v1435 = vrot.slane %v297, 5
      %v1436 = vsel %vm1376, %v1434, %v1435
      %v1437 = vrot.slane %v1435, 4
      %v1438 = vrot.slane %v336, 5
      %v1439 = vsel %vm1376, %v1437, %v1438
      %v1440 = vrot.slane %v1335, 5
      %v1441 = vrot.slane %v1440, 4
      %v1442 = vrot.slane %v299, 5
      %v1443 = vsel %vm1376, %v1441, %v1442
      %v1444 = vrot.slane %v1442, 4
      %v1445 = vrot.slane %v337, 5
      %v1446 = vsel %vm1376, %v1444, %v1445
      %v1447 = vrot.slane %v1336, 5
      %v1448 = vrot.slane %v1447, 4
      %v1449 = vrot.slane %v301, 5
      %v1450 = vsel %vm1376, %v1448, %v1449
      %v1451 = vrot.slane %v1449, 4
      %v1452 = vrot.slane %v338, 5
      %v1453 = vsel %vm1376, %v1451, %v1452
      %v1454 = vrot.slane %v1337, 5
      %v1455 = vrot.slane %v1454, 4
      %v1456 = vrot.slane %v303, 5
      %v1457 = vsel %vm1376, %v1455, %v1456
      %v1458 = vrot.slane %v1456, 4
      %v1459 = vrot.slane %v339, 5
      %v1460 = vsel %vm1376, %v1458, %v1459
      %v1461 = vrot.slane %v1338, 5
      %v1462 = vrot.slane %v1461, 4
      %v1463 = vrot.slane %v305, 5
      %v1464 = vsel %vm1376, %v1462, %v1463
      %v1465 = vrot.slane %v1463, 4
      %v1466 = vrot.slane %v340, 5
      %v1467 = vsel %vm1376, %v1465, %v1466
      %v1468 = vrot.slane %v1339, 5
      %v1469 = vrot.slane %v1468, 4
      %v1470 = vrot.slane %v307, 5
      %v1471 = vsel %vm1376, %v1469, %v1470
      %v1472 = vrot.slane %v1470, 4
      %v1473 = vrot.slane %v341, 5
      %v1474 = vsel %vm1376, %v1472, %v1473
      %v1475 = vrot.slane %v1340, 5
      %v1476 = vrot.slane %v1475, 4
      %v1477 = vrot.slane %v309, 5
      %v1478 = vsel %vm1376, %v1476, %v1477
      %v1479 = vrot.slane %v1477, 4
      %v1480 = vrot.slane %v342, 5
      %v1481 = vsel %vm1376, %v1479, %v1480
      %v1482 = vrot.slane %v1341, 5
      %v1483 = vrot.slane %v1482, 4
      %v1484 = vrot.slane %v311, 5
      %v1485 = vsel %vm1376, %v1483, %v1484
      %v1486 = vrot.slane %v1484, 4
      %v1487 = vrot.slane %v343, 5
      %v1488 = vsel %vm1376, %v1486, %v1487
      %s1489 = scalar_lea.vmem %s1, 128
      %v1490 = vld [vmem:[%s1489] sm:$0xf]
      %v1491 = vld [vmem:[%s1489 + $0x4] sm:$0xf]
      %v1492 = vld [vmem:[%s1489 + $0x8] sm:$0xf]
      %v1493 = vld [vmem:[%s1489 + $0xc] sm:$0xf]
      %v1494 = vld [vmem:[%s1489 + $0x10] sm:$0xf]
      %v1495 = vld [vmem:[%s1489 + $0x14] sm:$0xf]
      %v1496 = vld [vmem:[%s1489 + $0x18] sm:$0xf]
      %v1497 = vld [vmem:[%s1489 + $0x1c] sm:$0xf]
      %v1498 = vld [vmem:[%s1489 + $0x20] sm:$0xf]
      %v1499 = vld [vmem:[%s1489 + $0x24] sm:$0xf]
      %v1500 = vld [vmem:[%s1489 + $0x28] sm:$0xf]
      %v1501 = vld [vmem:[%s1489 + $0x2c] sm:$0xf]
      %v1502 = vld [vmem:[%s1489 + $0x30] sm:$0xf]
      %v1503 = vld [vmem:[%s1489 + $0x34] sm:$0xf]
      %v1504 = vld [vmem:[%s1489 + $0x38] sm:$0xf]
      %v1505 = vld [vmem:[%s1489 + $0x3c] sm:$0xf]
      %v1506 = vunpack.c.l.b16 %v1380
      %v1507 = vunpack.c.l.b16 %v1383
      %v1508 = vunpack.c.l.b16 %v1387
      %v1509 = vunpack.c.l.b16 %v1390
      %v1510 = vunpack.c.l.b16 %v1394
      %v1511 = vunpack.c.l.b16 %v1397
      %v1512 = vunpack.c.l.b16 %v1401
      %v1513 = vunpack.c.l.b16 %v1404
      %v1514 = vunpack.c.l.b16 %v1408
      %v1515 = vunpack.c.l.b16 %v1411
      %v1516 = vunpack.c.l.b16 %v1415
      %v1517 = vunpack.c.l.b16 %v1418
      %v1518 = vunpack.c.l.b16 %v1422
      %v1519 = vunpack.c.l.b16 %v1425
      %v1520 = vunpack.c.l.b16 %v1429
      %v1521 = vunpack.c.l.b16 %v1432
      %v1522 = vunpack.c.l.b16 %v1436
      %v1523 = vunpack.c.l.b16 %v1439
      %v1524 = vunpack.c.l.b16 %v1443
      %v1525 = vunpack.c.l.b16 %v1446
      %v1526 = vunpack.c.l.b16 %v1450
      %v1527 = vunpack.c.l.b16 %v1453
      %v1528 = vunpack.c.l.b16 %v1457
      %v1529 = vunpack.c.l.b16 %v1460
      %v1530 = vunpack.c.l.b16 %v1464
      %v1531 = vunpack.c.l.b16 %v1467
      %v1532 = vunpack.c.l.b16 %v1471
      %v1533 = vunpack.c.l.b16 %v1474
      %v1534 = vunpack.c.l.b16 %v1478
      %v1535 = vunpack.c.l.b16 %v1481
      %v1536 = vunpack.c.l.b16 %v1485
      %v1537 = vunpack.c.l.b16 %v1488
      %v1538 = vpack.c.b16 %v1507, %v1506
      %v1539 = vpack.c.b16 %v1509, %v1508
      %v1540 = vpack.c.b16 %v1511, %v1510
      %v1541 = vpack.c.b16 %v1513, %v1512
      %v1542 = vpack.c.b16 %v1515, %v1514
      %v1543 = vpack.c.b16 %v1517, %v1516
      %v1544 = vpack.c.b16 %v1519, %v1518
      %v1545 = vpack.c.b16 %v1521, %v1520
      %v1546 = vpack.c.b16 %v1523, %v1522
      %v1547 = vpack.c.b16 %v1525, %v1524
      %v1548 = vpack.c.b16 %v1527, %v1526
      %v1549 = vpack.c.b16 %v1529, %v1528
      %v1550 = vpack.c.b16 %v1531, %v1530
      %v1551 = vpack.c.b16 %v1533, %v1532
      %v1552 = vpack.c.b16 %v1535, %v1534
      %v1553 = vpack.c.b16 %v1537, %v1536
      %v1586 = vunpack.c.l.b16 %v1490
      %v1587 = vunpack.c.l.b16 %v1491
      %v1588 = vunpack.c.l.b16 %v1492
      %v1589 = vunpack.c.l.b16 %v1493
      %v1590 = vunpack.c.l.b16 %v1494
      %v1591 = vunpack.c.l.b16 %v1495
      %v1592 = vunpack.c.l.b16 %v1496
      %v1593 = vunpack.c.l.b16 %v1497
      %v1594 = vunpack.c.l.b16 %v1498
      %v1595 = vunpack.c.l.b16 %v1499
      %v1596 = vunpack.c.l.b16 %v1500
      %v1597 = vunpack.c.l.b16 %v1501
      %v1598 = vunpack.c.l.b16 %v1502
      %v1599 = vunpack.c.l.b16 %v1503
      %v1600 = vunpack.c.l.b16 %v1504
      %v1601 = vunpack.c.l.b16 %v1505
      %v1602 = vpack.c.b16 %v1587, %v1586
      %v1603 = vpack.c.b16 %v1589, %v1588
      %v1604 = vpack.c.b16 %v1591, %v1590
      %v1605 = vpack.c.b16 %v1593, %v1592
      %v1606 = vpack.c.b16 %v1595, %v1594
      %v1607 = vpack.c.b16 %v1597, %v1596
      %v1608 = vpack.c.b16 %v1599, %v1598
      %v1609 = vpack.c.b16 %v1601, %v1600
      %1618 = vmatprep.subr.bf16.mxu0 0
      %1619 = vmatpush1.bf16.msra.mxu0 %v1602
      %1620 = vmatprep.subr.bf16.mxu0 0
      %1621 = vmatpush1.bf16.msra.mxu0 %v1603
      %1622 = vmatprep.subr.bf16.mxu0 0
      %1623 = vmatpush1.bf16.msra.mxu0 %v1604
      %1624 = vmatprep.subr.bf16.mxu0 0
      %1625 = vmatpush1.bf16.msra.mxu0 %v1605
      %1626 = vmatprep.subr.bf16.mxu0 0
      %1627 = vmatpush1.bf16.msra.mxu0 %v1606
      %1628 = vmatprep.subr.bf16.mxu0 0
      %1629 = vmatpush1.bf16.msra.mxu0 %v1607
      %1630 = vmatprep.subr.bf16.mxu0 0
      %1631 = vmatpush1.bf16.msra.mxu0 %v1608
      %1632 = vmatprep.subr.bf16.mxu0 0
      %1633 = vmatpush1.bf16.msra.mxu0 %v1609
      %1634 = vmatprep.subr.bf16.mxu0 0
      %1635 = vmatpush1.bf16.msra.mxu0 0
      %1636 = vmatprep.subr.bf16.mxu0 0
      %1637 = vmatpush1.bf16.msra.mxu0 0
      %1638 = vmatprep.subr.bf16.mxu0 0
      %1639 = vmatpush1.bf16.msra.mxu0 0
      %1640 = vmatprep.subr.bf16.mxu0 0
      %1641 = vmatpush1.bf16.msra.mxu0 0
      %1642 = vmatprep.subr.bf16.mxu0 0
      %1643 = vmatpush1.bf16.msra.mxu0 0
      %1644 = vmatprep.subr.bf16.mxu0 0
      %1645 = vmatpush1.bf16.msra.mxu0 0
      %1646 = vmatprep.subr.bf16.mxu0 0
      %1647 = vmatpush1.bf16.msra.mxu0 0
      %1648 = vmatprep.subr.bf16.mxu0 0
      %1649 = vmatpush1.bf16.msra.mxu0 0
      %1650 = vmatprep.mubr.bf16.mxu0 0
      %1651 = vmatmul.mubr.bf16.gmra.mrb[0].mxu0 %v1538
      %v1652 = vpop.f32.mrb[0].mxu0
      %v1653 = vadd.f32 0.0, %v1652
      %v1654 = vpop.f32.mrb[0].mxu0
      %v1655 = vpop.f32.mrb[0].mxu0
      %v1656 = vadd.f32 0.0, %v1655
      %v1657 = vpop.f32.mrb[0].mxu0
      %1658 = vmatprep.mubr.bf16.mxu0 0
      %1659 = vmatmul.mubr.bf16.gmra.mrb[0].mxu0 %v1539
      %v1660 = vpop.f32.mrb[0].mxu0
      %v1661 = vadd.f32 0.0, %v1660
      %v1662 = vpop.f32.mrb[0].mxu0
      %v1663 = vpop.f32.mrb[0].mxu0
      %v1664 = vadd.f32 0.0, %v1663
      %v1665 = vpop.f32.mrb[0].mxu0
      %1666 = vmatprep.mubr.bf16.mxu0 0
      %1667 = vmatmul.mubr.bf16.gmra.mrb[0].mxu0 %v1540
      %v1668 = vpop.f32.mrb[0].mxu0
      %v1669 = vadd.f32 0.0, %v1668
      %v1670 = vpop.f32.mrb[0].mxu0
      %v1671 = vpop.f32.mrb[0].mxu0
      %v1672 = vadd.f32 0.0, %v1671
      %v1673 = vpop.f32.mrb[0].mxu0
      %1674 = vmatprep.mubr.bf16.mxu0 0
      %1675 = vmatmul.mubr.bf16.gmra.mrb[0].mxu0 %v1541
      %v1676 = vpop.f32.mrb[0].mxu0
      %v1677 = vadd.f32 0.0, %v1676
      %v1678 = vpop.f32.mrb[0].mxu0
      %v1679 = vpop.f32.mrb[0].mxu0
      %v1680 = vadd.f32 0.0, %v1679
      %v1681 = vpop.f32.mrb[0].mxu0
      %1682 = vmatprep.mubr.bf16.mxu0 0
      %1683 = vmatmul.mubr.bf16.gmra.mrb[0].mxu0 %v1542
      %v1684 = vpop.f32.mrb[0].mxu0
      %v1685 = vadd.f32 0.0, %v1684
      %v1686 = vpop.f32.mrb[0].mxu0
      %v1687 = vpop.f32.mrb[0].mxu0
      %v1688 = vadd.f32 0.0, %v1687
      %v1689 = vpop.f32.mrb[0].mxu0
      %1690 = vmatprep.mubr.bf16.mxu0 0
      %1691 = vmatmul.mubr.bf16.gmra.mrb[0].mxu0 %v1543
      %v1692 = vpop.f32.mrb[0].mxu0
      %v1693 = vadd.f32 0.0, %v1692
      %v1694 = vpop.f32.mrb[0].mxu0
      %v1695 = vpop.f32.mrb[0].mxu0
      %v1696 = vadd.f32 0.0, %v1695
      %v1697 = vpop.f32.mrb[0].mxu0
      %1698 = vmatprep.mubr.bf16.mxu0 0
      %1699 = vmatmul.mubr.bf16.gmra.mrb[0].mxu0 %v1544
      %v1700 = vpop.f32.mrb[0].mxu0
      %v1701 = vadd.f32 0.0, %v1700
      %v1702 = vpop.f32.mrb[0].mxu0
      %v1703 = vpop.f32.mrb[0].mxu0
      %v1704 = vadd.f32 0.0, %v1703
      %v1705 = vpop.f32.mrb[0].mxu0
      %1706 = vmatprep.mubr.bf16.mxu0 0
      %1707 = vmatmul.mubr.bf16.gmra.mrb[0].mxu0 %v1545
      %v1708 = vpop.f32.mrb[0].mxu0
      %v1709 = vadd.f32 0.0, %v1708
      %v1710 = vpop.f32.mrb[0].mxu0
      %v1711 = vpop.f32.mrb[0].mxu0
      %v1712 = vadd.f32 0.0, %v1711
      %v1713 = vpop.f32.mrb[0].mxu0
      %1714 = vmatprep.mubr.bf16.mxu0 0
      %1715 = vmatmul.mubr.bf16.gmra.mrb[0].mxu0 %v1546
      %v1716 = vpop.f32.mrb[0].mxu0
      %v1717 = vadd.f32 0.0, %v1716
      %v1718 = vpop.f32.mrb[0].mxu0
      %v1719 = vpop.f32.mrb[0].mxu0
      %v1720 = vadd.f32 0.0, %v1719
      %v1721 = vpop.f32.mrb[0].mxu0
      %1722 = vmatprep.mubr.bf16.mxu0 0
      %1723 = vmatmul.mubr.bf16.gmra.mrb[0].mxu0 %v1547
      %v1724 = vpop.f32.mrb[0].mxu0
      %v1725 = vadd.f32 0.0, %v1724
      %v1726 = vpop.f32.mrb[0].mxu0
      %v1727 = vpop.f32.mrb[0].mxu0
      %v1728 = vadd.f32 0.0, %v1727
      %v1729 = vpop.f32.mrb[0].mxu0
      %1730 = vmatprep.mubr.bf16.mxu0 0
      %1731 = vmatmul.mubr.bf16.gmra.mrb[0].mxu0 %v1548
      %v1732 = vpop.f32.mrb[0].mxu0
      %v1733 = vadd.f32 0.0, %v1732
      %v1734 = vpop.f32.mrb[0].mxu0
      %v1735 = vpop.f32.mrb[0].mxu0
      %v1736 = vadd.f32 0.0, %v1735
      %v1737 = vpop.f32.mrb[0].mxu0
      %1738 = vmatprep.mubr.bf16.mxu0 0
      %1739 = vmatmul.mubr.bf16.gmra.mrb[0].mxu0 %v1549
      %v1740 = vpop.f32.mrb[0].mxu0
      %v1741 = vadd.f32 0.0, %v1740
      %v1742 = vpop.f32.mrb[0].mxu0
      %v1743 = vpop.f32.mrb[0].mxu0
      %v1744 = vadd.f32 0.0, %v1743
      %v1745 = vpop.f32.mrb[0].mxu0
      %1746 = vmatprep.mubr.bf16.mxu0 0
      %1747 = vmatmul.mubr.bf16.gmra.mrb[0].mxu0 %v1550
      %v1748 = vpop.f32.mrb[0].mxu0
      %v1749 = vadd.f32 0.0, %v1748
      %v1750 = vpop.f32.mrb[0].mxu0
      %v1751 = vpop.f32.mrb[0].mxu0
      %v1752 = vadd.f32 0.0, %v1751
      %v1753 = vpop.f32.mrb[0].mxu0
      %1754 = vmatprep.mubr.bf16.mxu0 0
      %1755 = vmatmul.mubr.bf16.gmra.mrb[0].mxu0 %v1551
      %v1756 = vpop.f32.mrb[0].mxu0
      %v1757 = vadd.f32 0.0, %v1756
      %v1758 = vpop.f32.mrb[0].mxu0
      %v1759 = vpop.f32.mrb[0].mxu0
      %v1760 = vadd.f32 0.0, %v1759
      %v1761 = vpop.f32.mrb[0].mxu0
      %1762 = vmatprep.mubr.bf16.mxu0 0
      %1763 = vmatmul.mubr.bf16.gmra.mrb[0].mxu0 %v1552
      %v1764 = vpop.f32.mrb[0].mxu0
      %v1765 = vadd.f32 0.0, %v1764
      %v1766 = vpop.f32.mrb[0].mxu0
      %v1767 = vpop.f32.mrb[0].mxu0
      %v1768 = vadd.f32 0.0, %v1767
      %v1769 = vpop.f32.mrb[0].mxu0
      %1770 = vmatprep.mubr.bf16.mxu0 0
      %1771 = vmatmul.mubr.bf16.gmra.mrb[0].mxu0 %v1553
      %v1772 = vpop.f32.mrb[0].mxu0
      %v1773 = vadd.f32 0.0, %v1772
      %v1774 = vpop.f32.mrb[0].mxu0
      %v1775 = vpop.f32.mrb[0].mxu0
      %v1776 = vadd.f32 0.0, %v1775
      %v1777 = vpop.f32.mrb[0].mxu0
      %1778 = vdwg.mxu0
      %v1779 = vadd.f32 %v1200, %v1653
      %v1780 = vadd.f32 %v1203, %v1656
      %v1781 = vadd.f32 %v1208, %v1661
      %v1782 = vadd.f32 %v1211, %v1664
      %v1783 = vadd.f32 %v1216, %v1669
      %v1784 = vadd.f32 %v1219, %v1672
      %v1785 = vadd.f32 %v1224, %v1677
      %v1786 = vadd.f32 %v1227, %v1680
      %v1787 = vadd.f32 %v1232, %v1685
      %v1788 = vadd.f32 %v1235, %v1688
      %v1789 = vadd.f32 %v1240, %v1693
      %v1790 = vadd.f32 %v1243, %v1696
      %v1791 = vadd.f32 %v1248, %v1701
      %v1792 = vadd.f32 %v1251, %v1704
      %v1793 = vadd.f32 %v1256, %v1709
      %v1794 = vadd.f32 %v1259, %v1712
      %v1795 = vadd.f32 %v1264, %v1717
      %v1796 = vadd.f32 %v1267, %v1720
      %v1797 = vadd.f32 %v1272, %v1725
      %v1798 = vadd.f32 %v1275, %v1728
      %v1799 = vadd.f32 %v1280, %v1733
      %v1800 = vadd.f32 %v1283, %v1736
      %v1801 = vadd.f32 %v1288, %v1741
      %v1802 = vadd.f32 %v1291, %v1744
      %v1803 = vadd.f32 %v1296, %v1749
      %v1804 = vadd.f32 %v1299, %v1752
      %v1805 = vadd.f32 %v1304, %v1757
      %v1806 = vadd.f32 %v1307, %v1760
      %v1807 = vadd.f32 %v1312, %v1765
      %v1808 = vadd.f32 %v1315, %v1768
      %v1809 = vadd.f32 %v1320, %v1773
      %v1810 = vadd.f32 %v1323, %v1776
      %s1811 = scalar_lea.vmem %s273, 12
      %v1812 = vld [vmem:[%s1811] sm:$0xf]
      %v1813 = vld [vmem:[%s1811 + $0x4] sm:$0xf]
      %v1814 = vld [vmem:[%s1811 + $0xc] sm:$0xf]
      %v1815 = vld [vmem:[%s1811 + $0x10] sm:$0xf]
      %v1816 = vld [vmem:[%s1811 + $0x18] sm:$0xf]
      %v1817 = vld [vmem:[%s1811 + $0x1c] sm:$0xf]
      %v1818 = vld [vmem:[%s1811 + $0x24] sm:$0xf]
      %v1819 = vld [vmem:[%s1811 + $0x28] sm:$0xf]
      %v1820 = vld [vmem:[%s1811 + $0x30] sm:$0xf]
      %v1821 = vld [vmem:[%s1811 + $0x34] sm:$0xf]
      %v1822 = vld [vmem:[%s1811 + $0x3c] sm:$0xf]
      %v1823 = vld [vmem:[%s1811 + $0x40] sm:$0xf]
      %v1824 = vld [vmem:[%s1811 + $0x48] sm:$0xf]
      %v1825 = vld [vmem:[%s1811 + $0x4c] sm:$0xf]
      %v1826 = vld [vmem:[%s1811 + $0x54] sm:$0xf]
      %v1827 = vld [vmem:[%s1811 + $0x58] sm:$0xf]
      %v1828 = vld [vmem:[%s1811 + $0x60] sm:$0xf]
      %v1829 = vld [vmem:[%s1811 + $0x64] sm:$0xf]
      %v1830 = vld [vmem:[%s1811 + $0x6c] sm:$0xf]
      %v1831 = vld [vmem:[%s1811 + $0x70] sm:$0xf]
      %v1832 = vld [vmem:[%s1811 + $0x78] sm:$0xf]
      %v1833 = vld [vmem:[%s1811 + $0x7c] sm:$0xf]
      %v1834 = vld [vmem:[%s1811 + $0x84] sm:$0xf]
      %v1835 = vld [vmem:[%s1811 + $0x88] sm:$0xf]
      %v1836 = vld [vmem:[%s1811 + $0x90] sm:$0xf]
      %v1837 = vld [vmem:[%s1811 + $0x94] sm:$0xf]
      %v1838 = vld [vmem:[%s1811 + $0x9c] sm:$0xf]
      %v1839 = vld [vmem:[%s1811 + $0xa0] sm:$0xf]
      %v1840 = vld [vmem:[%s1811 + $0xa8] sm:$0xf]
      %v1841 = vld [vmem:[%s1811 + $0xac] sm:$0xf]
      %v1842 = vld [vmem:[%s1811 + $0xb4] sm:$0xf]
      %v1843 = vld [vmem:[%s1811 + $0xb8] sm:$0xf]
      %s1844 = scalar_lea.vmem %s1, 192
      %v1845 = vld [vmem:[%s1844] sm:$0xf]
      %v1846 = vld [vmem:[%s1844 + $0x4] sm:$0xf]
      %v1847 = vld [vmem:[%s1844 + $0x8] sm:$0xf]
      %v1848 = vld [vmem:[%s1844 + $0xc] sm:$0xf]
      %v1849 = vld [vmem:[%s1844 + $0x10] sm:$0xf]
      %v1850 = vld [vmem:[%s1844 + $0x14] sm:$0xf]
      %v1851 = vld [vmem:[%s1844 + $0x18] sm:$0xf]
      %v1852 = vld [vmem:[%s1844 + $0x1c] sm:$0xf]
      %v1853 = vld [vmem:[%s1844 + $0x20] sm:$0xf]
      %v1854 = vld [vmem:[%s1844 + $0x24] sm:$0xf]
      %v1855 = vld [vmem:[%s1844 + $0x28] sm:$0xf]
      %v1856 = vld [vmem:[%s1844 + $0x2c] sm:$0xf]
      %v1857 = vld [vmem:[%s1844 + $0x30] sm:$0xf]
      %v1858 = vld [vmem:[%s1844 + $0x34] sm:$0xf]
      %v1859 = vld [vmem:[%s1844 + $0x38] sm:$0xf]
      %v1860 = vld [vmem:[%s1844 + $0x3c] sm:$0xf]
      %v1893 = vunpack.c.l.b16 %v1812
      %v1894 = vunpack.c.l.b16 %v1813
      %v1895 = vunpack.c.l.b16 %v1814
      %v1896 = vunpack.c.l.b16 %v1815
      %v1897 = vunpack.c.l.b16 %v1816
      %v1898 = vunpack.c.l.b16 %v1817
      %v1899 = vunpack.c.l.b16 %v1818
      %v1900 = vunpack.c.l.b16 %v1819
      %v1901 = vunpack.c.l.b16 %v1820
      %v1902 = vunpack.c.l.b16 %v1821
      %v1903 = vunpack.c.l.b16 %v1822
      %v1904 = vunpack.c.l.b16 %v1823
      %v1905 = vunpack.c.l.b16 %v1824
      %v1906 = vunpack.c.l.b16 %v1825
      %v1907 = vunpack.c.l.b16 %v1826
      %v1908 = vunpack.c.l.b16 %v1827
      %v1909 = vunpack.c.l.b16 %v1828
      %v1910 = vunpack.c.l.b16 %v1829
      %v1911 = vunpack.c.l.b16 %v1830
      %v1912 = vunpack.c.l.b16 %v1831
      %v1913 = vunpack.c.l.b16 %v1832
      %v1914 = vunpack.c.l.b16 %v1833
      %v1915 = vunpack.c.l.b16 %v1834
      %v1916 = vunpack.c.l.b16 %v1835
      %v1917 = vunpack.c.l.b16 %v1836
      %v1918 = vunpack.c.l.b16 %v1837
      %v1919 = vunpack.c.l.b16 %v1838
      %v1920 = vunpack.c.l.b16 %v1839
      %v1921 = vunpack.c.l.b16 %v1840
      %v1922 = vunpack.c.l.b16 %v1841
      %v1923 = vunpack.c.l.b16 %v1842
      %v1924 = vunpack.c.l.b16 %v1843
      %v1925 = vpack.c.b16 %v1894, %v1893
      %v1926 = vpack.c.b16 %v1896, %v1895
      %v1927 = vpack.c.b16 %v1898, %v1897
      %v1928 = vpack.c.b16 %v1900, %v1899
      %v1929 = vpack.c.b16 %v1902, %v1901
      %v1930 = vpack.c.b16 %v1904, %v1903
      %v1931 = vpack.c.b16 %v1906, %v1905
      %v1932 = vpack.c.b16 %v1908, %v1907
      %v1933 = vpack.c.b16 %v1910, %v1909
      %v1934 = vpack.c.b16 %v1912, %v1911
      %v1935 = vpack.c.b16 %v1914, %v1913
      %v1936 = vpack.c.b16 %v1916, %v1915
      %v1937 = vpack.c.b16 %v1918, %v1917
      %v1938 = vpack.c.b16 %v1920, %v1919
      %v1939 = vpack.c.b16 %v1922, %v1921
      %v1940 = vpack.c.b16 %v1924, %v1923
      %v1973 = vunpack.c.l.b16 %v1845
      %v1974 = vunpack.c.l.b16 %v1846
      %v1975 = vunpack.c.l.b16 %v1847
      %v1976 = vunpack.c.l.b16 %v1848
      %v1977 = vunpack.c.l.b16 %v1849
      %v1978 = vunpack.c.l.b16 %v1850
      %v1979 = vunpack.c.l.b16 %v1851
      %v1980 = vunpack.c.l.b16 %v1852
      %v1981 = vunpack.c.l.b16 %v1853
      %v1982 = vunpack.c.l.b16 %v1854
      %v1983 = vunpack.c.l.b16 %v1855
      %v1984 = vunpack.c.l.b16 %v1856
      %v1985 = vunpack.c.l.b16 %v1857
      %v1986 = vunpack.c.l.b16 %v1858
      %v1987 = vunpack.c.l.b16 %v1859
      %v1988 = vunpack.c.l.b16 %v1860
      %v1989 = vpack.c.b16 %v1974, %v1973
      %v1990 = vpack.c.b16 %v1976, %v1975
      %v1991 = vpack.c.b16 %v1978, %v1977
      %v1992 = vpack.c.b16 %v1980, %v1979
      %v1993 = vpack.c.b16 %v1982, %v1981
      %v1994 = vpack.c.b16 %v1984, %v1983
      %v1995 = vpack.c.b16 %v1986, %v1985
      %v1996 = vpack.c.b16 %v1988, %v1987
      %2005 = vmatprep.subr.bf16.mxu0 0
      %2006 = vmatpush1.bf16.msra.mxu0 %v1989
      %2007 = vmatprep.subr.bf16.mxu0 0
      %2008 = vmatpush1.bf16.msra.mxu0 %v1990
      %2009 = vmatprep.subr.bf16.mxu0 0
      %2010 = vmatpush1.bf16.msra.mxu0 %v1991
      %2011 = vmatprep.subr.bf16.mxu0 0
      %2012 = vmatpush1.bf16.msra.mxu0 %v1992
      %2013 = vmatprep.subr.bf16.mxu0 0
      %2014 = vmatpush1.bf16.msra.mxu0 %v1993
      %2015 = vmatprep.subr.bf16.mxu0 0
      %2016 = vmatpush1.bf16.msra.mxu0 %v1994
      %2017 = vmatprep.subr.bf16.mxu0 0
      %2018 = vmatpush1.bf16.msra.mxu0 %v1995
      %2019 = vmatprep.subr.bf16.mxu0 0
      %2020 = vmatpush1.bf16.msra.mxu0 %v1996
      %2021 = vmatprep.subr.bf16.mxu0 0
      %2022 = vmatpush1.bf16.msra.mxu0 0
      %2023 = vmatprep.subr.bf16.mxu0 0
      %2024 = vmatpush1.bf16.msra.mxu0 0
      %2025 = vmatprep.subr.bf16.mxu0 0
      %2026 = vmatpush1.bf16.msra.mxu0 0
      %2027 = vmatprep.subr.bf16.mxu0 0
      %2028 = vmatpush1.bf16.msra.mxu0 0
      %2029 = vmatprep.subr.bf16.mxu0 0
      %2030 = vmatpush1.bf16.msra.mxu0 0
      %2031 = vmatprep.subr.bf16.mxu0 0
      %2032 = vmatpush1.bf16.msra.mxu0 0
      %2033 = vmatprep.subr.bf16.mxu0 0
      %2034 = vmatpush1.bf16.msra.mxu0 0
      %2035 = vmatprep.subr.bf16.mxu0 0
      %2036 = vmatpush1.bf16.msra.mxu0 0
      %2037 = vmatprep.mubr.bf16.mxu0 0
      %2038 = vmatmul.mubr.bf16.gmra.mrb[0].mxu0 %v1925
      %v2039 = vpop.f32.mrb[0].mxu0
      %v2040 = vadd.f32 0.0, %v2039
      %v2041 = vpop.f32.mrb[0].mxu0
      %v2042 = vpop.f32.mrb[0].mxu0
      %v2043 = vadd.f32 0.0, %v2042
      %v2044 = vpop.f32.mrb[0].mxu0
      %2045 = vmatprep.mubr.bf16.mxu0 0
      %2046 = vmatmul.mubr.bf16.gmra.mrb[0].mxu0 %v1926
      %v2047 = vpop.f32.mrb[0].mxu0
      %v2048 = vadd.f32 0.0, %v2047
      %v2049 = vpop.f32.mrb[0].mxu0
      %v2050 = vpop.f32.mrb[0].mxu0
      %v2051 = vadd.f32 0.0, %v2050
      %v2052 = vpop.f32.mrb[0].mxu0
      %2053 = vmatprep.mubr.bf16.mxu0 0
      %2054 = vmatmul.mubr.bf16.gmra.mrb[0].mxu0 %v1927
      %v2055 = vpop.f32.mrb[0].mxu0
      %v2056 = vadd.f32 0.0, %v2055
      %v2057 = vpop.f32.mrb[0].mxu0
      %v2058 = vpop.f32.mrb[0].mxu0
      %v2059 = vadd.f32 0.0, %v2058
      %v2060 = vpop.f32.mrb[0].mxu0
      %2061 = vmatprep.mubr.bf16.mxu0 0
      %2062 = vmatmul.mubr.bf16.gmra.mrb[0].mxu0 %v1928
      %v2063 = vpop.f32.mrb[0].mxu0
      %v2064 = vadd.f32 0.0, %v2063
      %v2065 = vpop.f32.mrb[0].mxu0
      %v2066 = vpop.f32.mrb[0].mxu0
      %v2067 = vadd.f32 0.0, %v2066
      %v2068 = vpop.f32.mrb[0].mxu0
      %2069 = vmatprep.mubr.bf16.mxu0 0
      %2070 = vmatmul.mubr.bf16.gmra.mrb[0].mxu0 %v1929
      %v2071 = vpop.f32.mrb[0].mxu0
      %v2072 = vadd.f32 0.0, %v2071
      %v2073 = vpop.f32.mrb[0].mxu0
      %v2074 = vpop.f32.mrb[0].mxu0
      %v2075 = vadd.f32 0.0, %v2074
      %v2076 = vpop.f32.mrb[0].mxu0
      %2077 = vmatprep.mubr.bf16.mxu0 0
      %2078 = vmatmul.mubr.bf16.gmra.mrb[0].mxu0 %v1930
      %v2079 = vpop.f32.mrb[0].mxu0
      %v2080 = vadd.f32 0.0, %v2079
      %v2081 = vpop.f32.mrb[0].mxu0
      %v2082 = vpop.f32.mrb[0].mxu0
      %v2083 = vadd.f32 0.0, %v2082
      %v2084 = vpop.f32.mrb[0].mxu0
      %2085 = vmatprep.mubr.bf16.mxu0 0
      %2086 = vmatmul.mubr.bf16.gmra.mrb[0].mxu0 %v1931
      %v2087 = vpop.f32.mrb[0].mxu0
      %v2088 = vadd.f32 0.0, %v2087
      %v2089 = vpop.f32.mrb[0].mxu0
      %v2090 = vpop.f32.mrb[0].mxu0
      %v2091 = vadd.f32 0.0, %v2090
      %v2092 = vpop.f32.mrb[0].mxu0
      %2093 = vmatprep.mubr.bf16.mxu0 0
      %2094 = vmatmul.mubr.bf16.gmra.mrb[0].mxu0 %v1932
      %v2095 = vpop.f32.mrb[0].mxu0
      %v2096 = vadd.f32 0.0, %v2095
      %v2097 = vpop.f32.mrb[0].mxu0
      %v2098 = vpop.f32.mrb[0].mxu0
      %v2099 = vadd.f32 0.0, %v2098
      %v2100 = vpop.f32.mrb[0].mxu0
      %2101 = vmatprep.mubr.bf16.mxu0 0
      %2102 = vmatmul.mubr.bf16.gmra.mrb[0].mxu0 %v1933
      %v2103 = vpop.f32.mrb[0].mxu0
      %v2104 = vadd.f32 0.0, %v2103
      %v2105 = vpop.f32.mrb[0].mxu0
      %v2106 = vpop.f32.mrb[0].mxu0
      %v2107 = vadd.f32 0.0, %v2106
      %v2108 = vpop.f32.mrb[0].mxu0
      %2109 = vmatprep.mubr.bf16.mxu0 0
      %2110 = vmatmul.mubr.bf16.gmra.mrb[0].mxu0 %v1934
      %v2111 = vpop.f32.mrb[0].mxu0
      %v2112 = vadd.f32 0.0, %v2111
      %v2113 = vpop.f32.mrb[0].mxu0
      %v2114 = vpop.f32.mrb[0].mxu0
      %v2115 = vadd.f32 0.0, %v2114
      %v2116 = vpop.f32.mrb[0].mxu0
      %2117 = vmatprep.mubr.bf16.mxu0 0
      %2118 = vmatmul.mubr.bf16.gmra.mrb[0].mxu0 %v1935
      %v2119 = vpop.f32.mrb[0].mxu0
      %v2120 = vadd.f32 0.0, %v2119
      %v2121 = vpop.f32.mrb[0].mxu0
      %v2122 = vpop.f32.mrb[0].mxu0
      %v2123 = vadd.f32 0.0, %v2122
      %v2124 = vpop.f32.mrb[0].mxu0
      %2125 = vmatprep.mubr.bf16.mxu0 0
      %2126 = vmatmul.mubr.bf16.gmra.mrb[0].mxu0 %v1936
      %v2127 = vpop.f32.mrb[0].mxu0
      %v2128 = vadd.f32 0.0, %v2127
      %v2129 = vpop.f32.mrb[0].mxu0
      %v2130 = vpop.f32.mrb[0].mxu0
      %v2131 = vadd.f32 0.0, %v2130
      %v2132 = vpop.f32.mrb[0].mxu0
      %2133 = vmatprep.mubr.bf16.mxu0 0
      %2134 = vmatmul.mubr.bf16.gmra.mrb[0].mxu0 %v1937
      %v2135 = vpop.f32.mrb[0].mxu0
      %v2136 = vadd.f32 0.0, %v2135
      %v2137 = vpop.f32.mrb[0].mxu0
      %v2138 = vpop.f32.mrb[0].mxu0
      %v2139 = vadd.f32 0.0, %v2138
      %v2140 = vpop.f32.mrb[0].mxu0
      %2141 = vmatprep.mubr.bf16.mxu0 0
      %2142 = vmatmul.mubr.bf16.gmra.mrb[0].mxu0 %v1938
      %v2143 = vpop.f32.mrb[0].mxu0
      %v2144 = vadd.f32 0.0, %v2143
      %v2145 = vpop.f32.mrb[0].mxu0
      %v2146 = vpop.f32.mrb[0].mxu0
      %v2147 = vadd.f32 0.0, %v2146
      %v2148 = vpop.f32.mrb[0].mxu0
      %2149 = vmatprep.mubr.bf16.mxu0 0
      %2150 = vmatmul.mubr.bf16.gmra.mrb[0].mxu0 %v1939
      %v2151 = vpop.f32.mrb[0].mxu0
      %v2152 = vadd.f32 0.0, %v2151
      %v2153 = vpop.f32.mrb[0].mxu0
      %v2154 = vpop.f32.mrb[0].mxu0
      %v2155 = vadd.f32 0.0, %v2154
      %v2156 = vpop.f32.mrb[0].mxu0
      %2157 = vmatprep.mubr.bf16.mxu0 0
      %2158 = vmatmul.mubr.bf16.gmra.mrb[0].mxu0 %v1940
      %v2159 = vpop.f32.mrb[0].mxu0
      %v2160 = vadd.f32 0.0, %v2159
      %v2161 = vpop.f32.mrb[0].mxu0
      %v2162 = vpop.f32.mrb[0].mxu0
      %v2163 = vadd.f32 0.0, %v2162
      %v2164 = vpop.f32.mrb[0].mxu0
      %2165 = vdwg.mxu0
      %v2166 = vadd.f32 %v1779, %v2040
      %v2167 = vadd.f32 %v1780, %v2043
      %v2168 = vadd.f32 %v1781, %v2048
      %v2169 = vadd.f32 %v1782, %v2051
      %v2170 = vadd.f32 %v1783, %v2056
      %v2171 = vadd.f32 %v1784, %v2059
      %v2172 = vadd.f32 %v1785, %v2064
      %v2173 = vadd.f32 %v1786, %v2067
      %v2174 = vadd.f32 %v1787, %v2072
      %v2175 = vadd.f32 %v1788, %v2075
      %v2176 = vadd.f32 %v1789, %v2080
      %v2177 = vadd.f32 %v1790, %v2083
      %v2178 = vadd.f32 %v1791, %v2088
      %v2179 = vadd.f32 %v1792, %v2091
      %v2180 = vadd.f32 %v1793, %v2096
      %v2181 = vadd.f32 %v1794, %v2099
      %v2182 = vadd.f32 %v1795, %v2104
      %v2183 = vadd.f32 %v1796, %v2107
      %v2184 = vadd.f32 %v1797, %v2112
      %v2185 = vadd.f32 %v1798, %v2115
      %v2186 = vadd.f32 %v1799, %v2120
      %v2187 = vadd.f32 %v1800, %v2123
      %v2188 = vadd.f32 %v1801, %v2128
      %v2189 = vadd.f32 %v1802, %v2131
      %v2190 = vadd.f32 %v1803, %v2136
      %v2191 = vadd.f32 %v1804, %v2139
      %v2192 = vadd.f32 %v1805, %v2144
      %v2193 = vadd.f32 %v1806, %v2147
      %v2194 = vadd.f32 %v1807, %v2152
      %v2195 = vadd.f32 %v1808, %v2155
      %v2196 = vadd.f32 %v1809, %v2160
      %v2197 = vadd.f32 %v1810, %v2163
      %v2198 = vld [vmem:[%s1811] sm:$0xf]
      %v2199 = vld [vmem:[%s1811 + $0x4] sm:$0xf]
      %v2200 = vld [vmem:[%s1811 + $0x8] sm:$0x1]
      %v2201 = vld [vmem:[%s1811 + $0xc] sm:$0xf]
      %v2202 = vld [vmem:[%s1811 + $0x10] sm:$0xf]
      %v2203 = vld [vmem:[%s1811 + $0x14] sm:$0x1]
      %v2204 = vld [vmem:[%s1811 + $0x18] sm:$0xf]
      %v2205 = vld [vmem:[%s1811 + $0x1c] sm:$0xf]
      %v2206 = vld [vmem:[%s1811 + $0x20] sm:$0x1]
      %v2207 = vld [vmem:[%s1811 + $0x24] sm:$0xf]
      %v2208 = vld [vmem:[%s1811 + $0x28] sm:$0xf]
      %v2209 = vld [vmem:[%s1811 + $0x2c] sm:$0x1]
      %v2210 = vld [vmem:[%s1811 + $0x30] sm:$0xf]
      %v2211 = vld [vmem:[%s1811 + $0x34] sm:$0xf]
      %v2212 = vld [vmem:[%s1811 + $0x38] sm:$0x1]
      %v2213 = vld [vmem:[%s1811 + $0x3c] sm:$0xf]
      %v2214 = vld [vmem:[%s1811 + $0x40] sm:$0xf]
      %v2215 = vld [vmem:[%s1811 + $0x44] sm:$0x1]
      %v2216 = vld [vmem:[%s1811 + $0x48] sm:$0xf]
      %v2217 = vld [vmem:[%s1811 + $0x4c] sm:$0xf]
      %v2218 = vld [vmem:[%s1811 + $0x50] sm:$0x1]
      %v2219 = vld [vmem:[%s1811 + $0x54] sm:$0xf]
      %v2220 = vld [vmem:[%s1811 + $0x58] sm:$0xf]
      %v2221 = vld [vmem:[%s1811 + $0x5c] sm:$0x1]
      %v2222 = vld [vmem:[%s1811 + $0x60] sm:$0xf]
      %v2223 = vld [vmem:[%s1811 + $0x64] sm:$0xf]
      %v2224 = vld [vmem:[%s1811 + $0x68] sm:$0x1]
      %v2225 = vld [vmem:[%s1811 + $0x6c] sm:$0xf]
      %v2226 = vld [vmem:[%s1811 + $0x70] sm:$0xf]
      %v2227 = vld [vmem:[%s1811 + $0x74] sm:$0x1]
      %v2228 = vld [vmem:[%s1811 + $0x78] sm:$0xf]
      %v2229 = vld [vmem:[%s1811 + $0x7c] sm:$0xf]
      %v2230 = vld [vmem:[%s1811 + $0x80] sm:$0x1]
      %v2231 = vld [vmem:[%s1811 + $0x84] sm:$0xf]
      %v2232 = vld [vmem:[%s1811 + $0x88] sm:$0xf]
      %v2233 = vld [vmem:[%s1811 + $0x8c] sm:$0x1]
      %v2234 = vld [vmem:[%s1811 + $0x90] sm:$0xf]
      %v2235 = vld [vmem:[%s1811 + $0x94] sm:$0xf]
      %v2236 = vld [vmem:[%s1811 + $0x98] sm:$0x1]
      %v2237 = vld [vmem:[%s1811 + $0x9c] sm:$0xf]
      %v2238 = vld [vmem:[%s1811 + $0xa0] sm:$0xf]
      %v2239 = vld [vmem:[%s1811 + $0xa4] sm:$0x1]
      %v2240 = vld [vmem:[%s1811 + $0xa8] sm:$0xf]
      %v2241 = vld [vmem:[%s1811 + $0xac] sm:$0xf]
      %v2242 = vld [vmem:[%s1811 + $0xb0] sm:$0x1]
      %v2243 = vld [vmem:[%s1811 + $0xb4] sm:$0xf]
      %v2244 = vld [vmem:[%s1811 + $0xb8] sm:$0xf]
      %v2245 = vld [vmem:[%s1811 + $0xbc] sm:$0x1]
      %v2247 = vshrl.u32 %v2198, 16
      %v2249 = vrot.slane %v2247, 4
      %v2250 = vshll.u32 %v2198, 16
      %v2252 = vrot.slane %v2250, 5
      %v2253 = vor.u32 %v2249, %v2252
      %v2254 = vrot.slane %v2253, 4
      %v2256 = vshll.u32 %v2199, 16
      %v2258 = vrot.slane %v2256, 5
      %v2259 = vsel %vm346, %v2254, %v2258
      %v2260 = vshrl.u32 %v2199, 16
      %v2262 = vrot.slane %v2260, 4
      %v2263 = vor.u32 %v2262, %v2258
      %v2264 = vrot.slane %v2263, 4
      %v2266 = vshll.u32 %v2200, 16
      %v2268 = vrot.slane %v2266, 5
      %v2269 = vsel %vm346, %v2264, %v2268
      %v2271 = vshrl.u32 %v2201, 16
      %v2273 = vrot.slane %v2271, 4
      %v2274 = vshll.u32 %v2201, 16
      %v2276 = vrot.slane %v2274, 5
      %v2277 = vor.u32 %v2273, %v2276
      %v2278 = vrot.slane %v2277, 4
      %v2280 = vshll.u32 %v2202, 16
      %v2282 = vrot.slane %v2280, 5
      %v2283 = vsel %vm346, %v2278, %v2282
      %v2284 = vshrl.u32 %v2202, 16
      %v2286 = vrot.slane %v2284, 4
      %v2287 = vor.u32 %v2286, %v2282
      %v2288 = vrot.slane %v2287, 4
      %v2290 = vshll.u32 %v2203, 16
      %v2292 = vrot.slane %v2290, 5
      %v2293 = vsel %vm346, %v2288, %v2292
      %v2295 = vshrl.u32 %v2204, 16
      %v2297 = vrot.slane %v2295, 4
      %v2298 = vshll.u32 %v2204, 16
      %v2300 = vrot.slane %v2298, 5
      %v2301 = vor.u32 %v2297, %v2300
      %v2302 = vrot.slane %v2301, 4
      %v2304 = vshll.u32 %v2205, 16
      %v2306 = vrot.slane %v2304, 5
      %v2307 = vsel %vm346, %v2302, %v2306
      %v2308 = vshrl.u32 %v2205, 16
      %v2310 = vrot.slane %v2308, 4
      %v2311 = vor.u32 %v2310, %v2306
      %v2312 = vrot.slane %v2311, 4
      %v2314 = vshll.u32 %v2206, 16
      %v2316 = vrot.slane %v2314, 5
      %v2317 = vsel %vm346, %v2312, %v2316
      %v2319 = vshrl.u32 %v2207, 16
      %v2321 = vrot.slane %v2319, 4
      %v2322 = vshll.u32 %v2207, 16
      %v2324 = vrot.slane %v2322, 5
      %v2325 = vor.u32 %v2321, %v2324
      %v2326 = vrot.slane %v2325, 4
      %v2328 = vshll.u32 %v2208, 16
      %v2330 = vrot.slane %v2328, 5
      %v2331 = vsel %vm346, %v2326, %v2330
      %v2332 = vshrl.u32 %v2208, 16
      %v2334 = vrot.slane %v2332, 4
      %v2335 = vor.u32 %v2334, %v2330
      %v2336 = vrot.slane %v2335, 4
      %v2338 = vshll.u32 %v2209, 16
      %v2340 = vrot.slane %v2338, 5
      %v2341 = vsel %vm346, %v2336, %v2340
      %v2343 = vshrl.u32 %v2210, 16
      %v2345 = vrot.slane %v2343, 4
      %v2346 = vshll.u32 %v2210, 16
      %v2348 = vrot.slane %v2346, 5
      %v2349 = vor.u32 %v2345, %v2348
      %v2350 = vrot.slane %v2349, 4
      %v2352 = vshll.u32 %v2211, 16
      %v2354 = vrot.slane %v2352, 5
      %v2355 = vsel %vm346, %v2350, %v2354
      %v2356 = vshrl.u32 %v2211, 16
      %v2358 = vrot.slane %v2356, 4
      %v2359 = vor.u32 %v2358, %v2354
      %v2360 = vrot.slane %v2359, 4
      %v2362 = vshll.u32 %v2212, 16
      %v2364 = vrot.slane %v2362, 5
      %v2365 = vsel %vm346, %v2360, %v2364
      %v2367 = vshrl.u32 %v2213, 16
      %v2369 = vrot.slane %v2367, 4
      %v2370 = vshll.u32 %v2213, 16
      %v2372 = vrot.slane %v2370, 5
      %v2373 = vor.u32 %v2369, %v2372
      %v2374 = vrot.slane %v2373, 4
      %v2376 = vshll.u32 %v2214, 16
      %v2378 = vrot.slane %v2376, 5
      %v2379 = vsel %vm346, %v2374, %v2378
      %v2380 = vshrl.u32 %v2214, 16
      %v2382 = vrot.slane %v2380, 4
      %v2383 = vor.u32 %v2382, %v2378
      %v2384 = vrot.slane %v2383, 4
      %v2386 = vshll.u32 %v2215, 16
      %v2388 = vrot.slane %v2386, 5
      %v2389 = vsel %vm346, %v2384, %v2388
      %v2391 = vshrl.u32 %v2216, 16
      %v2393 = vrot.slane %v2391, 4
      %v2394 = vshll.u32 %v2216, 16
      %v2396 = vrot.slane %v2394, 5
      %v2397 = vor.u32 %v2393, %v2396
      %v2398 = vrot.slane %v2397, 4
      %v2400 = vshll.u32 %v2217, 16
      %v2402 = vrot.slane %v2400, 5
      %v2403 = vsel %vm346, %v2398, %v2402
      %v2404 = vshrl.u32 %v2217, 16
      %v2406 = vrot.slane %v2404, 4
      %v2407 = vor.u32 %v2406, %v2402
      %v2408 = vrot.slane %v2407, 4
      %v2410 = vshll.u32 %v2218, 16
      %v2412 = vrot.slane %v2410, 5
      %v2413 = vsel %vm346, %v2408, %v2412
      %v2415 = vshrl.u32 %v2219, 16
      %v2417 = vrot.slane %v2415, 4
      %v2418 = vshll.u32 %v2219, 16
      %v2420 = vrot.slane %v2418, 5
      %v2421 = vor.u32 %v2417, %v2420
      %v2422 = vrot.slane %v2421, 4
      %v2424 = vshll.u32 %v2220, 16
      %v2426 = vrot.slane %v2424, 5
      %v2427 = vsel %vm346, %v2422, %v2426
      %v2428 = vshrl.u32 %v2220, 16
      %v2430 = vrot.slane %v2428, 4
      %v2431 = vor.u32 %v2430, %v2426
      %v2432 = vrot.slane %v2431, 4
      %v2434 = vshll.u32 %v2221, 16
      %v2436 = vrot.slane %v2434, 5
      %v2437 = vsel %vm346, %v2432, %v2436
      %v2439 = vshrl.u32 %v2222, 16
      %v2441 = vrot.slane %v2439, 4
      %v2442 = vshll.u32 %v2222, 16
      %v2444 = vrot.slane %v2442, 5
      %v2445 = vor.u32 %v2441, %v2444
      %v2446 = vrot.slane %v2445, 4
      %v2448 = vshll.u32 %v2223, 16
      %v2450 = vrot.slane %v2448, 5
      %v2451 = vsel %vm346, %v2446, %v2450
      %v2452 = vshrl.u32 %v2223, 16
      %v2454 = vrot.slane %v2452, 4
      %v2455 = vor.u32 %v2454, %v2450
      %v2456 = vrot.slane %v2455, 4
      %v2458 = vshll.u32 %v2224, 16
      %v2460 = vrot.slane %v2458, 5
      %v2461 = vsel %vm346, %v2456, %v2460
      %v2463 = vshrl.u32 %v2225, 16
      %v2465 = vrot.slane %v2463, 4
      %v2466 = vshll.u32 %v2225, 16
      %v2468 = vrot.slane %v2466, 5
      %v2469 = vor.u32 %v2465, %v2468
      %v2470 = vrot.slane %v2469, 4
      %v2472 = vshll.u32 %v2226, 16
      %v2474 = vrot.slane %v2472, 5
      %v2475 = vsel %vm346, %v2470, %v2474
      %v2476 = vshrl.u32 %v2226, 16
      %v2478 = vrot.slane %v2476, 4
      %v2479 = vor.u32 %v2478, %v2474
      %v2480 = vrot.slane %v2479, 4
      %v2482 = vshll.u32 %v2227, 16
      %v2484 = vrot.slane %v2482, 5
      %v2485 = vsel %vm346, %v2480, %v2484
      %v2487 = vshrl.u32 %v2228, 16
      %v2489 = vrot.slane %v2487, 4
      %v2490 = vshll.u32 %v2228, 16
      %v2492 = vrot.slane %v2490, 5
      %v2493 = vor.u32 %v2489, %v2492
      %v2494 = vrot.slane %v2493, 4
      %v2496 = vshll.u32 %v2229, 16
      %v2498 = vrot.slane %v2496, 5
      %v2499 = vsel %vm346, %v2494, %v2498
      %v2500 = vshrl.u32 %v2229, 16
      %v2502 = vrot.slane %v2500, 4
      %v2503 = vor.u32 %v2502, %v2498
      %v2504 = vrot.slane %v2503, 4
      %v2506 = vshll.u32 %v2230, 16
      %v2508 = vrot.slane %v2506, 5
      %v2509 = vsel %vm346, %v2504, %v2508
      %v2511 = vshrl.u32 %v2231, 16
      %v2513 = vrot.slane %v2511, 4
      %v2514 = vshll.u32 %v2231, 16
      %v2516 = vrot.slane %v2514, 5
      %v2517 = vor.u32 %v2513, %v2516
      %v2518 = vrot.slane %v2517, 4
      %v2520 = vshll.u32 %v2232, 16
      %v2522 = vrot.slane %v2520, 5
      %v2523 = vsel %vm346, %v2518, %v2522
      %v2524 = vshrl.u32 %v2232, 16
      %v2526 = vrot.slane %v2524, 4
      %v2527 = vor.u32 %v2526, %v2522
      %v2528 = vrot.slane %v2527, 4
      %v2530 = vshll.u32 %v2233, 16
      %v2532 = vrot.slane %v2530, 5
      %v2533 = vsel %vm346, %v2528, %v2532
      %v2535 = vshrl.u32 %v2234, 16
      %v2537 = vrot.slane %v2535, 4
      %v2538 = vshll.u32 %v2234, 16
      %v2540 = vrot.slane %v2538, 5
      %v2541 = vor.u32 %v2537, %v2540
      %v2542 = vrot.slane %v2541, 4
      %v2544 = vshll.u32 %v2235, 16
      %v2546 = vrot.slane %v2544, 5
      %v2547 = vsel %vm346, %v2542, %v2546
      %v2548 = vshrl.u32 %v2235, 16
      %v2550 = vrot.slane %v2548, 4
      %v2551 = vor.u32 %v2550, %v2546
      %v2552 = vrot.slane %v2551, 4
      %v2554 = vshll.u32 %v2236, 16
      %v2556 = vrot.slane %v2554, 5
      %v2557 = vsel %vm346, %v2552, %v2556
      %v2559 = vshrl.u32 %v2237, 16
      %v2561 = vrot.slane %v2559, 4
      %v2562 = vshll.u32 %v2237, 16
      %v2564 = vrot.slane %v2562, 5
      %v2565 = vor.u32 %v2561, %v2564
      %v2566 = vrot.slane %v2565, 4
      %v2568 = vshll.u32 %v2238, 16
      %v2570 = vrot.slane %v2568, 5
      %v2571 = vsel %vm346, %v2566, %v2570
      %v2572 = vshrl.u32 %v2238, 16
      %v2574 = vrot.slane %v2572, 4
      %v2575 = vor.u32 %v2574, %v2570
      %v2576 = vrot.slane %v2575, 4
      %v2578 = vshll.u32 %v2239, 16
      %v2580 = vrot.slane %v2578, 5
      %v2581 = vsel %vm346, %v2576, %v2580
      %v2583 = vshrl.u32 %v2240, 16
      %v2585 = vrot.slane %v2583, 4
      %v2586 = vshll.u32 %v2240, 16
      %v2588 = vrot.slane %v2586, 5
      %v2589 = vor.u32 %v2585, %v2588
      %v2590 = vrot.slane %v2589, 4
      %v2592 = vshll.u32 %v2241, 16
      %v2594 = vrot.slane %v2592, 5
      %v2595 = vsel %vm346, %v2590, %v2594
      %v2596 = vshrl.u32 %v2241, 16
      %v2598 = vrot.slane %v2596, 4
      %v2599 = vor.u32 %v2598, %v2594
      %v2600 = vrot.slane %v2599, 4
      %v2602 = vshll.u32 %v2242, 16
      %v2604 = vrot.slane %v2602, 5
      %v2605 = vsel %vm346, %v2600, %v2604
      %v2607 = vshrl.u32 %v2243, 16
      %v2609 = vrot.slane %v2607, 4
      %v2610 = vshll.u32 %v2243, 16
      %v2612 = vrot.slane %v2610, 5
      %v2613 = vor.u32 %v2609, %v2612
      %v2614 = vrot.slane %v2613, 4
      %v2616 = vshll.u32 %v2244, 16
      %v2618 = vrot.slane %v2616, 5
      %v2619 = vsel %vm346, %v2614, %v2618
      %v2620 = vshrl.u32 %v2244, 16
      %v2622 = vrot.slane %v2620, 4
      %v2623 = vor.u32 %v2622, %v2618
      %v2624 = vrot.slane %v2623, 4
      %v2626 = vshll.u32 %v2245, 16
      %v2628 = vrot.slane %v2626, 5
      %v2629 = vsel %vm346, %v2624, %v2628
      %s2630 = scalar_lea.vmem %s1, 256
      %v2631 = vld [vmem:[%s2630] sm:$0xf]
      %v2632 = vld [vmem:[%s2630 + $0x4] sm:$0xf]
      %v2633 = vld [vmem:[%s2630 + $0x8] sm:$0xf]
      %v2634 = vld [vmem:[%s2630 + $0xc] sm:$0xf]
      %v2635 = vld [vmem:[%s2630 + $0x10] sm:$0xf]
      %v2636 = vld [vmem:[%s2630 + $0x14] sm:$0xf]
      %v2637 = vld [vmem:[%s2630 + $0x18] sm:$0xf]
      %v2638 = vld [vmem:[%s2630 + $0x1c] sm:$0xf]
      %v2639 = vld [vmem:[%s2630 + $0x20] sm:$0xf]
      %v2640 = vld [vmem:[%s2630 + $0x24] sm:$0xf]
      %v2641 = vld [vmem:[%s2630 + $0x28] sm:$0xf]
      %v2642 = vld [vmem:[%s2630 + $0x2c] sm:$0xf]
      %v2643 = vld [vmem:[%s2630 + $0x30] sm:$0xf]
      %v2644 = vld [vmem:[%s2630 + $0x34] sm:$0xf]
      %v2645 = vld [vmem:[%s2630 + $0x38] sm:$0xf]
      %v2646 = vld [vmem:[%s2630 + $0x3c] sm:$0xf]
      %v2647 = vunpack.c.l.b16 %v2259
      %v2648 = vunpack.c.l.b16 %v2269
      %v2649 = vunpack.c.l.b16 %v2283
      %v2650 = vunpack.c.l.b16 %v2293
      %v2651 = vunpack.c.l.b16 %v2307
      %v2652 = vunpack.c.l.b16 %v2317
      %v2653 = vunpack.c.l.b16 %v2331
      %v2654 = vunpack.c.l.b16 %v2341
      %v2655 = vunpack.c.l.b16 %v2355
      %v2656 = vunpack.c.l.b16 %v2365
      %v2657 = vunpack.c.l.b16 %v2379
      %v2658 = vunpack.c.l.b16 %v2389
      %v2659 = vunpack.c.l.b16 %v2403
      %v2660 = vunpack.c.l.b16 %v2413
      %v2661 = vunpack.c.l.b16 %v2427
      %v2662 = vunpack.c.l.b16 %v2437
      %v2663 = vunpack.c.l.b16 %v2451
      %v2664 = vunpack.c.l.b16 %v2461
      %v2665 = vunpack.c.l.b16 %v2475
      %v2666 = vunpack.c.l.b16 %v2485
      %v2667 = vunpack.c.l.b16 %v2499
      %v2668 = vunpack.c.l.b16 %v2509
      %v2669 = vunpack.c.l.b16 %v2523
      %v2670 = vunpack.c.l.b16 %v2533
      %v2671 = vunpack.c.l.b16 %v2547
      %v2672 = vunpack.c.l.b16 %v2557
      %v2673 = vunpack.c.l.b16 %v2571
      %v2674 = vunpack.c.l.b16 %v2581
      %v2675 = vunpack.c.l.b16 %v2595
      %v2676 = vunpack.c.l.b16 %v2605
      %v2677 = vunpack.c.l.b16 %v2619
      %v2678 = vunpack.c.l.b16 %v2629
      %v2679 = vpack.c.b16 %v2648, %v2647
      %v2680 = vpack.c.b16 %v2650, %v2649
      %v2681 = vpack.c.b16 %v2652, %v2651
      %v2682 = vpack.c.b16 %v2654, %v2653
      %v2683 = vpack.c.b16 %v2656, %v2655
      %v2684 = vpack.c.b16 %v2658, %v2657
      %v2685 = vpack.c.b16 %v2660, %v2659
      %v2686 = vpack.c.b16 %v2662, %v2661
      %v2687 = vpack.c.b16 %v2664, %v2663
      %v2688 = vpack.c.b16 %v2666, %v2665
      %v2689 = vpack.c.b16 %v2668, %v2667
      %v2690 = vpack.c.b16 %v2670, %v2669
      %v2691 = vpack.c.b16 %v2672, %v2671
      %v2692 = vpack.c.b16 %v2674, %v2673
      %v2693 = vpack.c.b16 %v2676, %v2675
      %v2694 = vpack.c.b16 %v2678, %v2677
      %v2727 = vunpack.c.l.b16 %v2631
      %v2728 = vunpack.c.l.b16 %v2632
      %v2729 = vunpack.c.l.b16 %v2633
      %v2730 = vunpack.c.l.b16 %v2634
      %v2731 = vunpack.c.l.b16 %v2635
      %v2732 = vunpack.c.l.b16 %v2636
      %v2733 = vunpack.c.l.b16 %v2637
      %v2734 = vunpack.c.l.b16 %v2638
      %v2735 = vunpack.c.l.b16 %v2639
      %v2736 = vunpack.c.l.b16 %v2640
      %v2737 = vunpack.c.l.b16 %v2641
      %v2738 = vunpack.c.l.b16 %v2642
      %v2739 = vunpack.c.l.b16 %v2643
      %v2740 = vunpack.c.l.b16 %v2644
      %v2741 = vunpack.c.l.b16 %v2645
      %v2742 = vunpack.c.l.b16 %v2646
      %v2743 = vpack.c.b16 %v2728, %v2727
      %v2744 = vpack.c.b16 %v2730, %v2729
      %v2745 = vpack.c.b16 %v2732, %v2731
      %v2746 = vpack.c.b16 %v2734, %v2733
      %v2747 = vpack.c.b16 %v2736, %v2735
      %v2748 = vpack.c.b16 %v2738, %v2737
      %v2749 = vpack.c.b16 %v2740, %v2739
      %v2750 = vpack.c.b16 %v2742, %v2741
      %2759 = vmatprep.subr.bf16.mxu0 0
      %2760 = vmatpush1.bf16.msra.mxu0 %v2743
      %2761 = vmatprep.subr.bf16.mxu0 0
      %2762 = vmatpush1.bf16.msra.mxu0 %v2744
      %2763 = vmatprep.subr.bf16.mxu0 0
      %2764 = vmatpush1.bf16.msra.mxu0 %v2745
      %2765 = vmatprep.subr.bf16.mxu0 0
      %2766 = vmatpush1.bf16.msra.mxu0 %v2746
      %2767 = vmatprep.subr.bf16.mxu0 0
      %2768 = vmatpush1.bf16.msra.mxu0 %v2747
      %2769 = vmatprep.subr.bf16.mxu0 0
      %2770 = vmatpush1.bf16.msra.mxu0 %v2748
      %2771 = vmatprep.subr.bf16.mxu0 0
      %2772 = vmatpush1.bf16.msra.mxu0 %v2749
      %2773 = vmatprep.subr.bf16.mxu0 0
      %2774 = vmatpush1.bf16.msra.mxu0 %v2750
      %2775 = vmatprep.subr.bf16.mxu0 0
      %2776 = vmatpush1.bf16.msra.mxu0 0
      %2777 = vmatprep.subr.bf16.mxu0 0
      %2778 = vmatpush1.bf16.msra.mxu0 0
      %2779 = vmatprep.subr.bf16.mxu0 0
      %2780 = vmatpush1.bf16.msra.mxu0 0
      %2781 = vmatprep.subr.bf16.mxu0 0
      %2782 = vmatpush1.bf16.msra.mxu0 0
      %2783 = vmatprep.subr.bf16.mxu0 0
      %2784 = vmatpush1.bf16.msra.mxu0 0
      %2785 = vmatprep.subr.bf16.mxu0 0
      %2786 = vmatpush1.bf16.msra.mxu0 0
      %2787 = vmatprep.subr.bf16.mxu0 0
      %2788 = vmatpush1.bf16.msra.mxu0 0
      %2789 = vmatprep.subr.bf16.mxu0 0
      %2790 = vmatpush1.bf16.msra.mxu0 0
      %2791 = vmatprep.mubr.bf16.mxu0 0
      %2792 = vmatmul.mubr.bf16.gmra.mrb[0].mxu0 %v2679
      %v2793 = vpop.f32.mrb[0].mxu0
      %v2794 = vadd.f32 0.0, %v2793
      %v2795 = vpop.f32.mrb[0].mxu0
      %v2796 = vpop.f32.mrb[0].mxu0
      %v2797 = vadd.f32 0.0, %v2796
      %v2798 = vpop.f32.mrb[0].mxu0
      %2799 = vmatprep.mubr.bf16.mxu0 0
      %2800 = vmatmul.mubr.bf16.gmra.mrb[0].mxu0 %v2680
      %v2801 = vpop.f32.mrb[0].mxu0
      %v2802 = vadd.f32 0.0, %v2801
      %v2803 = vpop.f32.mrb[0].mxu0
      %v2804 = vpop.f32.mrb[0].mxu0
      %v2805 = vadd.f32 0.0, %v2804
      %v2806 = vpop.f32.mrb[0].mxu0
      %2807 = vmatprep.mubr.bf16.mxu0 0
      %2808 = vmatmul.mubr.bf16.gmra.mrb[0].mxu0 %v2681
      %v2809 = vpop.f32.mrb[0].mxu0
      %v2810 = vadd.f32 0.0, %v2809
      %v2811 = vpop.f32.mrb[0].mxu0
      %v2812 = vpop.f32.mrb[0].mxu0
      %v2813 = vadd.f32 0.0, %v2812
      %v2814 = vpop.f32.mrb[0].mxu0
      %2815 = vmatprep.mubr.bf16.mxu0 0
      %2816 = vmatmul.mubr.bf16.gmra.mrb[0].mxu0 %v2682
      %v2817 = vpop.f32.mrb[0].mxu0
      %v2818 = vadd.f32 0.0, %v2817
      %v2819 = vpop.f32.mrb[0].mxu0
      %v2820 = vpop.f32.mrb[0].mxu0
      %v2821 = vadd.f32 0.0, %v2820
      %v2822 = vpop.f32.mrb[0].mxu0
      %2823 = vmatprep.mubr.bf16.mxu0 0
      %2824 = vmatmul.mubr.bf16.gmra.mrb[0].mxu0 %v2683
      %v2825 = vpop.f32.mrb[0].mxu0
      %v2826 = vadd.f32 0.0, %v2825
      %v2827 = vpop.f32.mrb[0].mxu0
      %v2828 = vpop.f32.mrb[0].mxu0
      %v2829 = vadd.f32 0.0, %v2828
      %v2830 = vpop.f32.mrb[0].mxu0
      %2831 = vmatprep.mubr.bf16.mxu0 0
      %2832 = vmatmul.mubr.bf16.gmra.mrb[0].mxu0 %v2684
      %v2833 = vpop.f32.mrb[0].mxu0
      %v2834 = vadd.f32 0.0, %v2833
      %v2835 = vpop.f32.mrb[0].mxu0
      %v2836 = vpop.f32.mrb[0].mxu0
      %v2837 = vadd.f32 0.0, %v2836
      %v2838 = vpop.f32.mrb[0].mxu0
      %2839 = vmatprep.mubr.bf16.mxu0 0
      %2840 = vmatmul.mubr.bf16.gmra.mrb[0].mxu0 %v2685
      %v2841 = vpop.f32.mrb[0].mxu0
      %v2842 = vadd.f32 0.0, %v2841
      %v2843 = vpop.f32.mrb[0].mxu0
      %v2844 = vpop.f32.mrb[0].mxu0
      %v2845 = vadd.f32 0.0, %v2844
      %v2846 = vpop.f32.mrb[0].mxu0
      %2847 = vmatprep.mubr.bf16.mxu0 0
      %2848 = vmatmul.mubr.bf16.gmra.mrb[0].mxu0 %v2686
      %v2849 = vpop.f32.mrb[0].mxu0
      %v2850 = vadd.f32 0.0, %v2849
      %v2851 = vpop.f32.mrb[0].mxu0
      %v2852 = vpop.f32.mrb[0].mxu0
      %v2853 = vadd.f32 0.0, %v2852
      %v2854 = vpop.f32.mrb[0].mxu0
      %2855 = vmatprep.mubr.bf16.mxu0 0
      %2856 = vmatmul.mubr.bf16.gmra.mrb[0].mxu0 %v2687
      %v2857 = vpop.f32.mrb[0].mxu0
      %v2858 = vadd.f32 0.0, %v2857
      %v2859 = vpop.f32.mrb[0].mxu0
      %v2860 = vpop.f32.mrb[0].mxu0
      %v2861 = vadd.f32 0.0, %v2860
      %v2862 = vpop.f32.mrb[0].mxu0
      %2863 = vmatprep.mubr.bf16.mxu0 0
      %2864 = vmatmul.mubr.bf16.gmra.mrb[0].mxu0 %v2688
      %v2865 = vpop.f32.mrb[0].mxu0
      %v2866 = vadd.f32 0.0, %v2865
      %v2867 = vpop.f32.mrb[0].mxu0
      %v2868 = vpop.f32.mrb[0].mxu0
      %v2869 = vadd.f32 0.0, %v2868
      %v2870 = vpop.f32.mrb[0].mxu0
      %2871 = vmatprep.mubr.bf16.mxu0 0
      %2872 = vmatmul.mubr.bf16.gmra.mrb[0].mxu0 %v2689
      %v2873 = vpop.f32.mrb[0].mxu0
      %v2874 = vadd.f32 0.0, %v2873
      %v2875 = vpop.f32.mrb[0].mxu0
      %v2876 = vpop.f32.mrb[0].mxu0
      %v2877 = vadd.f32 0.0, %v2876
      %v2878 = vpop.f32.mrb[0].mxu0
      %2879 = vmatprep.mubr.bf16.mxu0 0
      %2880 = vmatmul.mubr.bf16.gmra.mrb[0].mxu0 %v2690
      %v2881 = vpop.f32.mrb[0].mxu0
      %v2882 = vadd.f32 0.0, %v2881
      %v2883 = vpop.f32.mrb[0].mxu0
      %v2884 = vpop.f32.mrb[0].mxu0
      %v2885 = vadd.f32 0.0, %v2884
      %v2886 = vpop.f32.mrb[0].mxu0
      %2887 = vmatprep.mubr.bf16.mxu0 0
      %2888 = vmatmul.mubr.bf16.gmra.mrb[0].mxu0 %v2691
      %v2889 = vpop.f32.mrb[0].mxu0
      %v2890 = vadd.f32 0.0, %v2889
      %v2891 = vpop.f32.mrb[0].mxu0
      %v2892 = vpop.f32.mrb[0].mxu0
      %v2893 = vadd.f32 0.0, %v2892
      %v2894 = vpop.f32.mrb[0].mxu0
      %2895 = vmatprep.mubr.bf16.mxu0 0
      %2896 = vmatmul.mubr.bf16.gmra.mrb[0].mxu0 %v2692
      %v2897 = vpop.f32.mrb[0].mxu0
      %v2898 = vadd.f32 0.0, %v2897
      %v2899 = vpop.f32.mrb[0].mxu0
      %v2900 = vpop.f32.mrb[0].mxu0
      %v2901 = vadd.f32 0.0, %v2900
      %v2902 = vpop.f32.mrb[0].mxu0
      %2903 = vmatprep.mubr.bf16.mxu0 0
      %2904 = vmatmul.mubr.bf16.gmra.mrb[0].mxu0 %v2693
      %v2905 = vpop.f32.mrb[0].mxu0
      %v2906 = vadd.f32 0.0, %v2905
      %v2907 = vpop.f32.mrb[0].mxu0
      %v2908 = vpop.f32.mrb[0].mxu0
      %v2909 = vadd.f32 0.0, %v2908
      %v2910 = vpop.f32.mrb[0].mxu0
      %2911 = vmatprep.mubr.bf16.mxu0 0
      %2912 = vmatmul.mubr.bf16.gmra.mrb[0].mxu0 %v2694
      %v2913 = vpop.f32.mrb[0].mxu0
      %v2914 = vadd.f32 0.0, %v2913
      %v2915 = vpop.f32.mrb[0].mxu0
      %v2916 = vpop.f32.mrb[0].mxu0
      %v2917 = vadd.f32 0.0, %v2916
      %v2918 = vpop.f32.mrb[0].mxu0
      %2919 = vdwg.mxu0
      %v2920 = vadd.f32 %v2166, %v2794
      %v2921 = vadd.f32 %v2167, %v2797
      %v2922 = vadd.f32 %v2168, %v2802
      %v2923 = vadd.f32 %v2169, %v2805
      %v2924 = vadd.f32 %v2170, %v2810
      %v2925 = vadd.f32 %v2171, %v2813
      %v2926 = vadd.f32 %v2172, %v2818
      %v2927 = vadd.f32 %v2173, %v2821
      %v2928 = vadd.f32 %v2174, %v2826
      %v2929 = vadd.f32 %v2175, %v2829
      %v2930 = vadd.f32 %v2176, %v2834
      %v2931 = vadd.f32 %v2177, %v2837
      %v2932 = vadd.f32 %v2178, %v2842
      %v2933 = vadd.f32 %v2179, %v2845
      %v2934 = vadd.f32 %v2180, %v2850
      %v2935 = vadd.f32 %v2181, %v2853
      %v2936 = vadd.f32 %v2182, %v2858
      %v2937 = vadd.f32 %v2183, %v2861
      %v2938 = vadd.f32 %v2184, %v2866
      %v2939 = vadd.f32 %v2185, %v2869
      %v2940 = vadd.f32 %v2186, %v2874
      %v2941 = vadd.f32 %v2187, %v2877
      %v2942 = vadd.f32 %v2188, %v2882
      %v2943 = vadd.f32 %v2189, %v2885
      %v2944 = vadd.f32 %v2190, %v2890
      %v2945 = vadd.f32 %v2191, %v2893
      %v2946 = vadd.f32 %v2192, %v2898
      %v2947 = vadd.f32 %v2193, %v2901
      %v2948 = vadd.f32 %v2194, %v2906
      %v2949 = vadd.f32 %v2195, %v2909
      %v2950 = vadd.f32 %v2196, %v2914
      %v2951 = vadd.f32 %v2197, %v2917
      %v2952 = vld [vmem:[%s1811] sm:$0xe]
      %v2953 = vld [vmem:[%s1811 + $0xc] sm:$0xe]
      %v2954 = vld [vmem:[%s1811 + $0x18] sm:$0xe]
      %v2955 = vld [vmem:[%s1811 + $0x24] sm:$0xe]
      %v2956 = vld [vmem:[%s1811 + $0x30] sm:$0xe]
      %v2957 = vld [vmem:[%s1811 + $0x3c] sm:$0xe]
      %v2958 = vld [vmem:[%s1811 + $0x48] sm:$0xe]
      %v2959 = vld [vmem:[%s1811 + $0x54] sm:$0xe]
      %v2960 = vld [vmem:[%s1811 + $0x60] sm:$0xe]
      %v2961 = vld [vmem:[%s1811 + $0x6c] sm:$0xe]
      %v2962 = vld [vmem:[%s1811 + $0x78] sm:$0xe]
      %v2963 = vld [vmem:[%s1811 + $0x84] sm:$0xe]
      %v2964 = vld [vmem:[%s1811 + $0x90] sm:$0xe]
      %v2965 = vld [vmem:[%s1811 + $0x9c] sm:$0xe]
      %v2966 = vld [vmem:[%s1811 + $0xa8] sm:$0xe]
      %v2967 = vld [vmem:[%s1811 + $0xb4] sm:$0xe]
      %v3016 = vrot.slane %v2952, 5
      %v3017 = vrot.slane %v3016, 4
      %v3018 = vrot.slane %v2199, 5
      %v3019 = vsel %vm1376, %v3017, %v3018
      %v3020 = vrot.slane %v3018, 4
      %v3021 = vrot.slane %v2200, 5
      %v3022 = vsel %vm1376, %v3020, %v3021
      %v3023 = vrot.slane %v2953, 5
      %v3024 = vrot.slane %v3023, 4
      %v3025 = vrot.slane %v2202, 5
      %v3026 = vsel %vm1376, %v3024, %v3025
      %v3027 = vrot.slane %v3025, 4
      %v3028 = vrot.slane %v2203, 5
      %v3029 = vsel %vm1376, %v3027, %v3028
      %v3030 = vrot.slane %v2954, 5
      %v3031 = vrot.slane %v3030, 4
      %v3032 = vrot.slane %v2205, 5
      %v3033 = vsel %vm1376, %v3031, %v3032
      %v3034 = vrot.slane %v3032, 4
      %v3035 = vrot.slane %v2206, 5
      %v3036 = vsel %vm1376, %v3034, %v3035
      %v3037 = vrot.slane %v2955, 5
      %v3038 = vrot.slane %v3037, 4
      %v3039 = vrot.slane %v2208, 5
      %v3040 = vsel %vm1376, %v3038, %v3039
      %v3041 = vrot.slane %v3039, 4
      %v3042 = vrot.slane %v2209, 5
      %v3043 = vsel %vm1376, %v3041, %v3042
      %v3044 = vrot.slane %v2956, 5
      %v3045 = vrot.slane %v3044, 4
      %v3046 = vrot.slane %v2211, 5
      %v3047 = vsel %vm1376, %v3045, %v3046
      %v3048 = vrot.slane %v3046, 4
      %v3049 = vrot.slane %v2212, 5
      %v3050 = vsel %vm1376, %v3048, %v3049
      %v3051 = vrot.slane %v2957, 5
      %v3052 = vrot.slane %v3051, 4
      %v3053 = vrot.slane %v2214, 5
      %v3054 = vsel %vm1376, %v3052, %v3053
      %v3055 = vrot.slane %v3053, 4
      %v3056 = vrot.slane %v2215, 5
      %v3057 = vsel %vm1376, %v3055, %v3056
      %v3058 = vrot.slane %v2958, 5
      %v3059 = vrot.slane %v3058, 4
      %v3060 = vrot.slane %v2217, 5
      %v3061 = vsel %vm1376, %v3059, %v3060
      %v3062 = vrot.slane %v3060, 4
      %v3063 = vrot.slane %v2218, 5
      %v3064 = vsel %vm1376, %v3062, %v3063
      %v3065 = vrot.slane %v2959, 5
      %v3066 = vrot.slane %v3065, 4
      %v3067 = vrot.slane %v2220, 5
      %v3068 = vsel %vm1376, %v3066, %v3067
      %v3069 = vrot.slane %v3067, 4
      %v3070 = vrot.slane %v2221, 5
      %v3071 = vsel %vm1376, %v3069, %v3070
      %v3072 = vrot.slane %v2960, 5
      %v3073 = vrot.slane %v3072, 4
      %v3074 = vrot.slane %v2223, 5
      %v3075 = vsel %vm1376, %v3073, %v3074
      %v3076 = vrot.slane %v3074, 4
      %v3077 = vrot.slane %v2224, 5
      %v3078 = vsel %vm1376, %v3076, %v3077
      %v3079 = vrot.slane %v2961, 5
      %v3080 = vrot.slane %v3079, 4
      %v3081 = vrot.slane %v2226, 5
      %v3082 = vsel %vm1376, %v3080, %v3081
      %v3083 = vrot.slane %v3081, 4
      %v3084 = vrot.slane %v2227, 5
      %v3085 = vsel %vm1376, %v3083, %v3084
      %v3086 = vrot.slane %v2962, 5
      %v3087 = vrot.slane %v3086, 4
      %v3088 = vrot.slane %v2229, 5
      %v3089 = vsel %vm1376, %v3087, %v3088
      %v3090 = vrot.slane %v3088, 4
      %v3091 = vrot.slane %v2230, 5
      %v3092 = vsel %vm1376, %v3090, %v3091
      %v3093 = vrot.slane %v2963, 5
      %v3094 = vrot.slane %v3093, 4
      %v3095 = vrot.slane %v2232, 5
      %v3096 = vsel %vm1376, %v3094, %v3095
      %v3097 = vrot.slane %v3095, 4
      %v3098 = vrot.slane %v2233, 5
      %v3099 = vsel %vm1376, %v3097, %v3098
      %v3100 = vrot.slane %v2964, 5
      %v3101 = vrot.slane %v3100, 4
      %v3102 = vrot.slane %v2235, 5
      %v3103 = vsel %vm1376, %v3101, %v3102
      %v3104 = vrot.slane %v3102, 4
      %v3105 = vrot.slane %v2236, 5
      %v3106 = vsel %vm1376, %v3104, %v3105
      %v3107 = vrot.slane %v2965, 5
      %v3108 = vrot.slane %v3107, 4
      %v3109 = vrot.slane %v2238, 5
      %v3110 = vsel %vm1376, %v3108, %v3109
      %v3111 = vrot.slane %v3109, 4
      %v3112 = vrot.slane %v2239, 5
      %v3113 = vsel %vm1376, %v3111, %v3112
      %v3114 = vrot.slane %v2966, 5
      %v3115 = vrot.slane %v3114, 4
      %v3116 = vrot.slane %v2241, 5
      %v3117 = vsel %vm1376, %v3115, %v3116
      %v3118 = vrot.slane %v3116, 4
      %v3119 = vrot.slane %v2242, 5
      %v3120 = vsel %vm1376, %v3118, %v3119
      %v3121 = vrot.slane %v2967, 5
      %v3122 = vrot.slane %v3121, 4
      %v3123 = vrot.slane %v2244, 5
      %v3124 = vsel %vm1376, %v3122, %v3123
      %v3125 = vrot.slane %v3123, 4
      %v3126 = vrot.slane %v2245, 5
      %v3127 = vsel %vm1376, %v3125, %v3126
      %s3128 = scalar_lea.vmem %s1, 320
      %v3129 = vld [vmem:[%s3128] sm:$0xf]
      %v3130 = vld [vmem:[%s3128 + $0x4] sm:$0xf]
      %v3131 = vld [vmem:[%s3128 + $0x8] sm:$0xf]
      %v3132 = vld [vmem:[%s3128 + $0xc] sm:$0xf]
      %v3133 = vld [vmem:[%s3128 + $0x10] sm:$0xf]
      %v3134 = vld [vmem:[%s3128 + $0x14] sm:$0xf]
      %v3135 = vld [vmem:[%s3128 + $0x18] sm:$0xf]
      %v3136 = vld [vmem:[%s3128 + $0x1c] sm:$0xf]
      %v3137 = vld [vmem:[%s3128 + $0x20] sm:$0xf]
      %v3138 = vld [vmem:[%s3128 + $0x24] sm:$0xf]
      %v3139 = vld [vmem:[%s3128 + $0x28] sm:$0xf]
      %v3140 = vld [vmem:[%s3128 + $0x2c] sm:$0xf]
      %v3141 = vld [vmem:[%s3128 + $0x30] sm:$0xf]
      %v3142 = vld [vmem:[%s3128 + $0x34] sm:$0xf]
      %v3143 = vld [vmem:[%s3128 + $0x38] sm:$0xf]
      %v3144 = vld [vmem:[%s3128 + $0x3c] sm:$0xf]
      %v3145 = vunpack.c.l.b16 %v3019
      %v3146 = vunpack.c.l.b16 %v3022
      %v3147 = vunpack.c.l.b16 %v3026
      %v3148 = vunpack.c.l.b16 %v3029
      %v3149 = vunpack.c.l.b16 %v3033
      %v3150 = vunpack.c.l.b16 %v3036
      %v3151 = vunpack.c.l.b16 %v3040
      %v3152 = vunpack.c.l.b16 %v3043
      %v3153 = vunpack.c.l.b16 %v3047
      %v3154 = vunpack.c.l.b16 %v3050
      %v3155 = vunpack.c.l.b16 %v3054
      %v3156 = vunpack.c.l.b16 %v3057
      %v3157 = vunpack.c.l.b16 %v3061
      %v3158 = vunpack.c.l.b16 %v3064
      %v3159 = vunpack.c.l.b16 %v3068
      %v3160 = vunpack.c.l.b16 %v3071
      %v3161 = vunpack.c.l.b16 %v3075
      %v3162 = vunpack.c.l.b16 %v3078
      %v3163 = vunpack.c.l.b16 %v3082
      %v3164 = vunpack.c.l.b16 %v3085
      %v3165 = vunpack.c.l.b16 %v3089
      %v3166 = vunpack.c.l.b16 %v3092
      %v3167 = vunpack.c.l.b16 %v3096
      %v3168 = vunpack.c.l.b16 %v3099
      %v3169 = vunpack.c.l.b16 %v3103
      %v3170 = vunpack.c.l.b16 %v3106
      %v3171 = vunpack.c.l.b16 %v3110
      %v3172 = vunpack.c.l.b16 %v3113
      %v3173 = vunpack.c.l.b16 %v3117
      %v3174 = vunpack.c.l.b16 %v3120
      %v3175 = vunpack.c.l.b16 %v3124
      %v3176 = vunpack.c.l.b16 %v3127
      %v3177 = vpack.c.b16 %v3146, %v3145
      %v3178 = vpack.c.b16 %v3148, %v3147
      %v3179 = vpack.c.b16 %v3150, %v3149
      %v3180 = vpack.c.b16 %v3152, %v3151
      %v3181 = vpack.c.b16 %v3154, %v3153
      %v3182 = vpack.c.b16 %v3156, %v3155
      %v3183 = vpack.c.b16 %v3158, %v3157
      %v3184 = vpack.c.b16 %v3160, %v3159
      %v3185 = vpack.c.b16 %v3162, %v3161
      %v3186 = vpack.c.b16 %v3164, %v3163
      %v3187 = vpack.c.b16 %v3166, %v3165
      %v3188 = vpack.c.b16 %v3168, %v3167
      %v3189 = vpack.c.b16 %v3170, %v3169
      %v3190 = vpack.c.b16 %v3172, %v3171
      %v3191 = vpack.c.b16 %v3174, %v3173
      %v3192 = vpack.c.b16 %v3176, %v3175
      %v3225 = vunpack.c.l.b16 %v3129
      %v3226 = vunpack.c.l.b16 %v3130
      %v3227 = vunpack.c.l.b16 %v3131
      %v3228 = vunpack.c.l.b16 %v3132
      %v3229 = vunpack.c.l.b16 %v3133
      %v3230 = vunpack.c.l.b16 %v3134
      %v3231 = vunpack.c.l.b16 %v3135
      %v3232 = vunpack.c.l.b16 %v3136
      %v3233 = vunpack.c.l.b16 %v3137
      %v3234 = vunpack.c.l.b16 %v3138
      %v3235 = vunpack.c.l.b16 %v3139
      %v3236 = vunpack.c.l.b16 %v3140
      %v3237 = vunpack.c.l.b16 %v3141
      %v3238 = vunpack.c.l.b16 %v3142
      %v3239 = vunpack.c.l.b16 %v3143
      %v3240 = vunpack.c.l.b16 %v3144
      %v3241 = vpack.c.b16 %v3226, %v3225
      %v3242 = vpack.c.b16 %v3228, %v3227
      %v3243 = vpack.c.b16 %v3230, %v3229
      %v3244 = vpack.c.b16 %v3232, %v3231
      %v3245 = vpack.c.b16 %v3234, %v3233
      %v3246 = vpack.c.b16 %v3236, %v3235
      %v3247 = vpack.c.b16 %v3238, %v3237
      %v3248 = vpack.c.b16 %v3240, %v3239
      %3257 = vmatprep.subr.bf16.mxu0 0
      %3258 = vmatpush1.bf16.msra.mxu0 %v3241
      %3259 = vmatprep.subr.bf16.mxu0 0
      %3260 = vmatpush1.bf16.msra.mxu0 %v3242
      %3261 = vmatprep.subr.bf16.mxu0 0
      %3262 = vmatpush1.bf16.msra.mxu0 %v3243
      %3263 = vmatprep.subr.bf16.mxu0 0
      %3264 = vmatpush1.bf16.msra.mxu0 %v3244
      %3265 = vmatprep.subr.bf16.mxu0 0
      %3266 = vmatpush1.bf16.msra.mxu0 %v3245
      %3267 = vmatprep.subr.bf16.mxu0 0
      %3268 = vmatpush1.bf16.msra.mxu0 %v3246
      %3269 = vmatprep.subr.bf16.mxu0 0
      %3270 = vmatpush1.bf16.msra.mxu0 %v3247
      %3271 = vmatprep.subr.bf16.mxu0 0
      %3272 = vmatpush1.bf16.msra.mxu0 %v3248
      %3273 = vmatprep.subr.bf16.mxu0 0
      %3274 = vmatpush1.bf16.msra.mxu0 0
      %3275 = vmatprep.subr.bf16.mxu0 0
      %3276 = vmatpush1.bf16.msra.mxu0 0
      %3277 = vmatprep.subr.bf16.mxu0 0
      %3278 = vmatpush1.bf16.msra.mxu0 0
      %3279 = vmatprep.subr.bf16.mxu0 0
      %3280 = vmatpush1.bf16.msra.mxu0 0
      %3281 = vmatprep.subr.bf16.mxu0 0
      %3282 = vmatpush1.bf16.msra.mxu0 0
      %3283 = vmatprep.subr.bf16.mxu0 0
      %3284 = vmatpush1.bf16.msra.mxu0 0
      %3285 = vmatprep.subr.bf16.mxu0 0
      %3286 = vmatpush1.bf16.msra.mxu0 0
      %3287 = vmatprep.subr.bf16.mxu0 0
      %3288 = vmatpush1.bf16.msra.mxu0 0
      %3289 = vmatprep.mubr.bf16.mxu0 0
      %3290 = vmatmul.mubr.bf16.gmra.mrb[0].mxu0 %v3177
      %v3291 = vpop.f32.mrb[0].mxu0
      %v3292 = vadd.f32 0.0, %v3291
      %v3293 = vpop.f32.mrb[0].mxu0
      %v3294 = vpop.f32.mrb[0].mxu0
      %v3295 = vadd.f32 0.0, %v3294
      %v3296 = vpop.f32.mrb[0].mxu0
      %3297 = vmatprep.mubr.bf16.mxu0 0
      %3298 = vmatmul.mubr.bf16.gmra.mrb[0].mxu0 %v3178
      %v3299 = vpop.f32.mrb[0].mxu0
      %v3300 = vadd.f32 0.0, %v3299
      %v3301 = vpop.f32.mrb[0].mxu0
      %v3302 = vpop.f32.mrb[0].mxu0
      %v3303 = vadd.f32 0.0, %v3302
      %v3304 = vpop.f32.mrb[0].mxu0
      %3305 = vmatprep.mubr.bf16.mxu0 0
      %3306 = vmatmul.mubr.bf16.gmra.mrb[0].mxu0 %v3179
      %v3307 = vpop.f32.mrb[0].mxu0
      %v3308 = vadd.f32 0.0, %v3307
      %v3309 = vpop.f32.mrb[0].mxu0
      %v3310 = vpop.f32.mrb[0].mxu0
      %v3311 = vadd.f32 0.0, %v3310
      %v3312 = vpop.f32.mrb[0].mxu0
      %3313 = vmatprep.mubr.bf16.mxu0 0
      %3314 = vmatmul.mubr.bf16.gmra.mrb[0].mxu0 %v3180
      %v3315 = vpop.f32.mrb[0].mxu0
      %v3316 = vadd.f32 0.0, %v3315
      %v3317 = vpop.f32.mrb[0].mxu0
      %v3318 = vpop.f32.mrb[0].mxu0
      %v3319 = vadd.f32 0.0, %v3318
      %v3320 = vpop.f32.mrb[0].mxu0
      %3321 = vmatprep.mubr.bf16.mxu0 0
      %3322 = vmatmul.mubr.bf16.gmra.mrb[0].mxu0 %v3181
      %v3323 = vpop.f32.mrb[0].mxu0
      %v3324 = vadd.f32 0.0, %v3323
      %v3325 = vpop.f32.mrb[0].mxu0
      %v3326 = vpop.f32.mrb[0].mxu0
      %v3327 = vadd.f32 0.0, %v3326
      %v3328 = vpop.f32.mrb[0].mxu0
      %3329 = vmatprep.mubr.bf16.mxu0 0
      %3330 = vmatmul.mubr.bf16.gmra.mrb[0].mxu0 %v3182
      %v3331 = vpop.f32.mrb[0].mxu0
      %v3332 = vadd.f32 0.0, %v3331
      %v3333 = vpop.f32.mrb[0].mxu0
      %v3334 = vpop.f32.mrb[0].mxu0
      %v3335 = vadd.f32 0.0, %v3334
      %v3336 = vpop.f32.mrb[0].mxu0
      %3337 = vmatprep.mubr.bf16.mxu0 0
      %3338 = vmatmul.mubr.bf16.gmra.mrb[0].mxu0 %v3183
      %v3339 = vpop.f32.mrb[0].mxu0
      %v3340 = vadd.f32 0.0, %v3339
      %v3341 = vpop.f32.mrb[0].mxu0
      %v3342 = vpop.f32.mrb[0].mxu0
      %v3343 = vadd.f32 0.0, %v3342
      %v3344 = vpop.f32.mrb[0].mxu0
      %3345 = vmatprep.mubr.bf16.mxu0 0
      %3346 = vmatmul.mubr.bf16.gmra.mrb[0].mxu0 %v3184
      %v3347 = vpop.f32.mrb[0].mxu0
      %v3348 = vadd.f32 0.0, %v3347
      %v3349 = vpop.f32.mrb[0].mxu0
      %v3350 = vpop.f32.mrb[0].mxu0
      %v3351 = vadd.f32 0.0, %v3350
      %v3352 = vpop.f32.mrb[0].mxu0
      %3353 = vmatprep.mubr.bf16.mxu0 0
      %3354 = vmatmul.mubr.bf16.gmra.mrb[0].mxu0 %v3185
      %v3355 = vpop.f32.mrb[0].mxu0
      %v3356 = vadd.f32 0.0, %v3355
      %v3357 = vpop.f32.mrb[0].mxu0
      %v3358 = vpop.f32.mrb[0].mxu0
      %v3359 = vadd.f32 0.0, %v3358
      %v3360 = vpop.f32.mrb[0].mxu0
      %3361 = vmatprep.mubr.bf16.mxu0 0
      %3362 = vmatmul.mubr.bf16.gmra.mrb[0].mxu0 %v3186
      %v3363 = vpop.f32.mrb[0].mxu0
      %v3364 = vadd.f32 0.0, %v3363
      %v3365 = vpop.f32.mrb[0].mxu0
      %v3366 = vpop.f32.mrb[0].mxu0
      %v3367 = vadd.f32 0.0, %v3366
      %v3368 = vpop.f32.mrb[0].mxu0
      %3369 = vmatprep.mubr.bf16.mxu0 0
      %3370 = vmatmul.mubr.bf16.gmra.mrb[0].mxu0 %v3187
      %v3371 = vpop.f32.mrb[0].mxu0
      %v3372 = vadd.f32 0.0, %v3371
      %v3373 = vpop.f32.mrb[0].mxu0
      %v3374 = vpop.f32.mrb[0].mxu0
      %v3375 = vadd.f32 0.0, %v3374
      %v3376 = vpop.f32.mrb[0].mxu0
      %3377 = vmatprep.mubr.bf16.mxu0 0
      %3378 = vmatmul.mubr.bf16.gmra.mrb[0].mxu0 %v3188
      %v3379 = vpop.f32.mrb[0].mxu0
      %v3380 = vadd.f32 0.0, %v3379
      %v3381 = vpop.f32.mrb[0].mxu0
      %v3382 = vpop.f32.mrb[0].mxu0
      %v3383 = vadd.f32 0.0, %v3382
      %v3384 = vpop.f32.mrb[0].mxu0
      %3385 = vmatprep.mubr.bf16.mxu0 0
      %3386 = vmatmul.mubr.bf16.gmra.mrb[0].mxu0 %v3189
      %v3387 = vpop.f32.mrb[0].mxu0
      %v3388 = vadd.f32 0.0, %v3387
      %v3389 = vpop.f32.mrb[0].mxu0
      %v3390 = vpop.f32.mrb[0].mxu0
      %v3391 = vadd.f32 0.0, %v3390
      %v3392 = vpop.f32.mrb[0].mxu0
      %3393 = vmatprep.mubr.bf16.mxu0 0
      %3394 = vmatmul.mubr.bf16.gmra.mrb[0].mxu0 %v3190
      %v3395 = vpop.f32.mrb[0].mxu0
      %v3396 = vadd.f32 0.0, %v3395
      %v3397 = vpop.f32.mrb[0].mxu0
      %v3398 = vpop.f32.mrb[0].mxu0
      %v3399 = vadd.f32 0.0, %v3398
      %v3400 = vpop.f32.mrb[0].mxu0
      %3401 = vmatprep.mubr.bf16.mxu0 0
      %3402 = vmatmul.mubr.bf16.gmra.mrb[0].mxu0 %v3191
      %v3403 = vpop.f32.mrb[0].mxu0
      %v3404 = vadd.f32 0.0, %v3403
      %v3405 = vpop.f32.mrb[0].mxu0
      %v3406 = vpop.f32.mrb[0].mxu0
      %v3407 = vadd.f32 0.0, %v3406
      %v3408 = vpop.f32.mrb[0].mxu0
      %3409 = vmatprep.mubr.bf16.mxu0 0
      %3410 = vmatmul.mubr.bf16.gmra.mrb[0].mxu0 %v3192
      %v3411 = vpop.f32.mrb[0].mxu0
      %v3412 = vadd.f32 0.0, %v3411
      %v3413 = vpop.f32.mrb[0].mxu0
      %v3414 = vpop.f32.mrb[0].mxu0
      %v3415 = vadd.f32 0.0, %v3414
      %v3416 = vpop.f32.mrb[0].mxu0
      %3417 = vdwg.mxu0
      %v3418 = vadd.f32 %v2920, %v3292
      %v3419 = vadd.f32 %v2921, %v3295
      %v3420 = vadd.f32 %v2922, %v3300
      %v3421 = vadd.f32 %v2923, %v3303
      %v3422 = vadd.f32 %v2924, %v3308
      %v3423 = vadd.f32 %v2925, %v3311
      %v3424 = vadd.f32 %v2926, %v3316
      %v3425 = vadd.f32 %v2927, %v3319
      %v3426 = vadd.f32 %v2928, %v3324
      %v3427 = vadd.f32 %v2929, %v3327
      %v3428 = vadd.f32 %v2930, %v3332
      %v3429 = vadd.f32 %v2931, %v3335
      %v3430 = vadd.f32 %v2932, %v3340
      %v3431 = vadd.f32 %v2933, %v3343
      %v3432 = vadd.f32 %v2934, %v3348
      %v3433 = vadd.f32 %v2935, %v3351
      %v3434 = vadd.f32 %v2936, %v3356
      %v3435 = vadd.f32 %v2937, %v3359
      %v3436 = vadd.f32 %v2938, %v3364
      %v3437 = vadd.f32 %v2939, %v3367
      %v3438 = vadd.f32 %v2940, %v3372
      %v3439 = vadd.f32 %v2941, %v3375
      %v3440 = vadd.f32 %v2942, %v3380
      %v3441 = vadd.f32 %v2943, %v3383
      %v3442 = vadd.f32 %v2944, %v3388
      %v3443 = vadd.f32 %v2945, %v3391
      %v3444 = vadd.f32 %v2946, %v3396
      %v3445 = vadd.f32 %v2947, %v3399
      %v3446 = vadd.f32 %v2948, %v3404
      %v3447 = vadd.f32 %v2949, %v3407
      %v3448 = vadd.f32 %v2950, %v3412
      %v3449 = vadd.f32 %v2951, %v3415
      %s3450 = scalar_lea.vmem %s273, 24
      %v3451 = vld [vmem:[%s3450] sm:$0xf]
      %v3452 = vld [vmem:[%s3450 + $0x4] sm:$0xf]
      %v3453 = vld [vmem:[%s3450 + $0xc] sm:$0xf]
      %v3454 = vld [vmem:[%s3450 + $0x10] sm:$0xf]
      %v3455 = vld [vmem:[%s3450 + $0x18] sm:$0xf]
      %v3456 = vld [vmem:[%s3450 + $0x1c] sm:$0xf]
      %v3457 = vld [vmem:[%s3450 + $0x24] sm:$0xf]
      %v3458 = vld [vmem:[%s3450 + $0x28] sm:$0xf]
      %v3459 = vld [vmem:[%s3450 + $0x30] sm:$0xf]
      %v3460 = vld [vmem:[%s3450 + $0x34] sm:$0xf]
      %v3461 = vld [vmem:[%s3450 + $0x3c] sm:$0xf]
      %v3462 = vld [vmem:[%s3450 + $0x40] sm:$0xf]
      %v3463 = vld [vmem:[%s3450 + $0x48] sm:$0xf]
      %v3464 = vld [vmem:[%s3450 + $0x4c] sm:$0xf]
      %v3465 = vld [vmem:[%s3450 + $0x54] sm:$0xf]
      %v3466 = vld [vmem:[%s3450 + $0x58] sm:$0xf]
      %v3467 = vld [vmem:[%s3450 + $0x60] sm:$0xf]
      %v3468 = vld [vmem:[%s3450 + $0x64] sm:$0xf]
      %v3469 = vld [vmem:[%s3450 + $0x6c] sm:$0xf]
      %v3470 = vld [vmem:[%s3450 + $0x70] sm:$0xf]
      %v3471 = vld [vmem:[%s3450 + $0x78] sm:$0xf]
      %v3472 = vld [vmem:[%s3450 + $0x7c] sm:$0xf]
      %v3473 = vld [vmem:[%s3450 + $0x84] sm:$0xf]
      %v3474 = vld [vmem:[%s3450 + $0x88] sm:$0xf]
      %v3475 = vld [vmem:[%s3450 + $0x90] sm:$0xf]
      %v3476 = vld [vmem:[%s3450 + $0x94] sm:$0xf]
      %v3477 = vld [vmem:[%s3450 + $0x9c] sm:$0xf]
      %v3478 = vld [vmem:[%s3450 + $0xa0] sm:$0xf]
      %v3479 = vld [vmem:[%s3450 + $0xa8] sm:$0xf]
      %v3480 = vld [vmem:[%s3450 + $0xac] sm:$0xf]
      %v3481 = vld [vmem:[%s3450 + $0xb4] sm:$0xf]
      %v3482 = vld [vmem:[%s3450 + $0xb8] sm:$0xf]
      %s3483 = scalar_lea.vmem %s1, 384
      %v3484 = vld [vmem:[%s3483] sm:$0xf]
      %v3485 = vld [vmem:[%s3483 + $0x4] sm:$0xf]
      %v3486 = vld [vmem:[%s3483 + $0x8] sm:$0xf]
      %v3487 = vld [vmem:[%s3483 + $0xc] sm:$0xf]
      %v3488 = vld [vmem:[%s3483 + $0x10] sm:$0xf]
      %v3489 = vld [vmem:[%s3483 + $0x14] sm:$0xf]
      %v3490 = vld [vmem:[%s3483 + $0x18] sm:$0xf]
      %v3491 = vld [vmem:[%s3483 + $0x1c] sm:$0xf]
      %v3492 = vld [vmem:[%s3483 + $0x20] sm:$0xf]
      %v3493 = vld [vmem:[%s3483 + $0x24] sm:$0xf]
      %v3494 = vld [vmem:[%s3483 + $0x28] sm:$0xf]
      %v3495 = vld [vmem:[%s3483 + $0x2c] sm:$0xf]
      %v3496 = vld [vmem:[%s3483 + $0x30] sm:$0xf]
      %v3497 = vld [vmem:[%s3483 + $0x34] sm:$0xf]
      %v3498 = vld [vmem:[%s3483 + $0x38] sm:$0xf]
      %v3499 = vld [vmem:[%s3483 + $0x3c] sm:$0xf]
      %v3532 = vunpack.c.l.b16 %v3451
      %v3533 = vunpack.c.l.b16 %v3452
      %v3534 = vunpack.c.l.b16 %v3453
      %v3535 = vunpack.c.l.b16 %v3454
      %v3536 = vunpack.c.l.b16 %v3455
      %v3537 = vunpack.c.l.b16 %v3456
      %v3538 = vunpack.c.l.b16 %v3457
      %v3539 = vunpack.c.l.b16 %v3458
      %v3540 = vunpack.c.l.b16 %v3459
      %v3541 = vunpack.c.l.b16 %v3460
      %v3542 = vunpack.c.l.b16 %v3461
      %v3543 = vunpack.c.l.b16 %v3462
      %v3544 = vunpack.c.l.b16 %v3463
      %v3545 = vunpack.c.l.b16 %v3464
      %v3546 = vunpack.c.l.b16 %v3465
      %v3547 = vunpack.c.l.b16 %v3466
      %v3548 = vunpack.c.l.b16 %v3467
      %v3549 = vunpack.c.l.b16 %v3468
      %v3550 = vunpack.c.l.b16 %v3469
      %v3551 = vunpack.c.l.b16 %v3470
      %v3552 = vunpack.c.l.b16 %v3471
      %v3553 = vunpack.c.l.b16 %v3472
      %v3554 = vunpack.c.l.b16 %v3473
      %v3555 = vunpack.c.l.b16 %v3474
      %v3556 = vunpack.c.l.b16 %v3475
      %v3557 = vunpack.c.l.b16 %v3476
      %v3558 = vunpack.c.l.b16 %v3477
      %v3559 = vunpack.c.l.b16 %v3478
      %v3560 = vunpack.c.l.b16 %v3479
      %v3561 = vunpack.c.l.b16 %v3480
      %v3562 = vunpack.c.l.b16 %v3481
      %v3563 = vunpack.c.l.b16 %v3482
      %v3564 = vpack.c.b16 %v3533, %v3532
      %v3565 = vpack.c.b16 %v3535, %v3534
      %v3566 = vpack.c.b16 %v3537, %v3536
      %v3567 = vpack.c.b16 %v3539, %v3538
      %v3568 = vpack.c.b16 %v3541, %v3540
      %v3569 = vpack.c.b16 %v3543, %v3542
      %v3570 = vpack.c.b16 %v3545, %v3544
      %v3571 = vpack.c.b16 %v3547, %v3546
      %v3572 = vpack.c.b16 %v3549, %v3548
      %v3573 = vpack.c.b16 %v3551, %v3550
      %v3574 = vpack.c.b16 %v3553, %v3552
      %v3575 = vpack.c.b16 %v3555, %v3554
      %v3576 = vpack.c.b16 %v3557, %v3556
      %v3577 = vpack.c.b16 %v3559, %v3558
      %v3578 = vpack.c.b16 %v3561, %v3560
      %v3579 = vpack.c.b16 %v3563, %v3562
      %v3612 = vunpack.c.l.b16 %v3484
      %v3613 = vunpack.c.l.b16 %v3485
      %v3614 = vunpack.c.l.b16 %v3486
      %v3615 = vunpack.c.l.b16 %v3487
      %v3616 = vunpack.c.l.b16 %v3488
      %v3617 = vunpack.c.l.b16 %v3489
      %v3618 = vunpack.c.l.b16 %v3490
      %v3619 = vunpack.c.l.b16 %v3491
      %v3620 = vunpack.c.l.b16 %v3492
      %v3621 = vunpack.c.l.b16 %v3493
      %v3622 = vunpack.c.l.b16 %v3494
      %v3623 = vunpack.c.l.b16 %v3495
      %v3624 = vunpack.c.l.b16 %v3496
      %v3625 = vunpack.c.l.b16 %v3497
      %v3626 = vunpack.c.l.b16 %v3498
      %v3627 = vunpack.c.l.b16 %v3499
      %v3628 = vpack.c.b16 %v3613, %v3612
      %v3629 = vpack.c.b16 %v3615, %v3614
      %v3630 = vpack.c.b16 %v3617, %v3616
      %v3631 = vpack.c.b16 %v3619, %v3618
      %v3632 = vpack.c.b16 %v3621, %v3620
      %v3633 = vpack.c.b16 %v3623, %v3622
      %v3634 = vpack.c.b16 %v3625, %v3624
      %v3635 = vpack.c.b16 %v3627, %v3626
      %3644 = vmatprep.subr.bf16.mxu0 0
      %3645 = vmatpush1.bf16.msra.mxu0 %v3628
      %3646 = vmatprep.subr.bf16.mxu0 0
      %3647 = vmatpush1.bf16.msra.mxu0 %v3629
      %3648 = vmatprep.subr.bf16.mxu0 0
      %3649 = vmatpush1.bf16.msra.mxu0 %v3630
      %3650 = vmatprep.subr.bf16.mxu0 0
      %3651 = vmatpush1.bf16.msra.mxu0 %v3631
      %3652 = vmatprep.subr.bf16.mxu0 0
      %3653 = vmatpush1.bf16.msra.mxu0 %v3632
      %3654 = vmatprep.subr.bf16.mxu0 0
      %3655 = vmatpush1.bf16.msra.mxu0 %v3633
      %3656 = vmatprep.subr.bf16.mxu0 0
      %3657 = vmatpush1.bf16.msra.mxu0 %v3634
      %3658 = vmatprep.subr.bf16.mxu0 0
      %3659 = vmatpush1.bf16.msra.mxu0 %v3635
      %3660 = vmatprep.subr.bf16.mxu0 0
      %3661 = vmatpush1.bf16.msra.mxu0 0
      %3662 = vmatprep.subr.bf16.mxu0 0
      %3663 = vmatpush1.bf16.msra.mxu0 0
      %3664 = vmatprep.subr.bf16.mxu0 0
      %3665 = vmatpush1.bf16.msra.mxu0 0
      %3666 = vmatprep.subr.bf16.mxu0 0
      %3667 = vmatpush1.bf16.msra.mxu0 0
      %3668 = vmatprep.subr.bf16.mxu0 0
      %3669 = vmatpush1.bf16.msra.mxu0 0
      %3670 = vmatprep.subr.bf16.mxu0 0
      %3671 = vmatpush1.bf16.msra.mxu0 0
      %3672 = vmatprep.subr.bf16.mxu0 0
      %3673 = vmatpush1.bf16.msra.mxu0 0
      %3674 = vmatprep.subr.bf16.mxu0 0
      %3675 = vmatpush1.bf16.msra.mxu0 0
      %3676 = vmatprep.mubr.bf16.mxu0 0
      %3677 = vmatmul.mubr.bf16.gmra.mrb[0].mxu0 %v3564
      %v3678 = vpop.f32.mrb[0].mxu0
      %v3679 = vadd.f32 0.0, %v3678
      %v3680 = vpop.f32.mrb[0].mxu0
      %v3681 = vpop.f32.mrb[0].mxu0
      %v3682 = vadd.f32 0.0, %v3681
      %v3683 = vpop.f32.mrb[0].mxu0
      %3684 = vmatprep.mubr.bf16.mxu0 0
      %3685 = vmatmul.mubr.bf16.gmra.mrb[0].mxu0 %v3565
      %v3686 = vpop.f32.mrb[0].mxu0
      %v3687 = vadd.f32 0.0, %v3686
      %v3688 = vpop.f32.mrb[0].mxu0
      %v3689 = vpop.f32.mrb[0].mxu0
      %v3690 = vadd.f32 0.0, %v3689
      %v3691 = vpop.f32.mrb[0].mxu0
      %3692 = vmatprep.mubr.bf16.mxu0 0
      %3693 = vmatmul.mubr.bf16.gmra.mrb[0].mxu0 %v3566
      %v3694 = vpop.f32.mrb[0].mxu0
      %v3695 = vadd.f32 0.0, %v3694
      %v3696 = vpop.f32.mrb[0].mxu0
      %v3697 = vpop.f32.mrb[0].mxu0
      %v3698 = vadd.f32 0.0, %v3697
      %v3699 = vpop.f32.mrb[0].mxu0
      %3700 = vmatprep.mubr.bf16.mxu0 0
      %3701 = vmatmul.mubr.bf16.gmra.mrb[0].mxu0 %v3567
      %v3702 = vpop.f32.mrb[0].mxu0
      %v3703 = vadd.f32 0.0, %v3702
      %v3704 = vpop.f32.mrb[0].mxu0
      %v3705 = vpop.f32.mrb[0].mxu0
      %v3706 = vadd.f32 0.0, %v3705
      %v3707 = vpop.f32.mrb[0].mxu0
      %3708 = vmatprep.mubr.bf16.mxu0 0
      %3709 = vmatmul.mubr.bf16.gmra.mrb[0].mxu0 %v3568
      %v3710 = vpop.f32.mrb[0].mxu0
      %v3711 = vadd.f32 0.0, %v3710
      %v3712 = vpop.f32.mrb[0].mxu0
      %v3713 = vpop.f32.mrb[0].mxu0
      %v3714 = vadd.f32 0.0, %v3713
      %v3715 = vpop.f32.mrb[0].mxu0
      %3716 = vmatprep.mubr.bf16.mxu0 0
      %3717 = vmatmul.mubr.bf16.gmra.mrb[0].mxu0 %v3569
      %v3718 = vpop.f32.mrb[0].mxu0
      %v3719 = vadd.f32 0.0, %v3718
      %v3720 = vpop.f32.mrb[0].mxu0
      %v3721 = vpop.f32.mrb[0].mxu0
      %v3722 = vadd.f32 0.0, %v3721
      %v3723 = vpop.f32.mrb[0].mxu0
      %3724 = vmatprep.mubr.bf16.mxu0 0
      %3725 = vmatmul.mubr.bf16.gmra.mrb[0].mxu0 %v3570
      %v3726 = vpop.f32.mrb[0].mxu0
      %v3727 = vadd.f32 0.0, %v3726
      %v3728 = vpop.f32.mrb[0].mxu0
      %v3729 = vpop.f32.mrb[0].mxu0
      %v3730 = vadd.f32 0.0, %v3729
      %v3731 = vpop.f32.mrb[0].mxu0
      %3732 = vmatprep.mubr.bf16.mxu0 0
      %3733 = vmatmul.mubr.bf16.gmra.mrb[0].mxu0 %v3571
      %v3734 = vpop.f32.mrb[0].mxu0
      %v3735 = vadd.f32 0.0, %v3734
      %v3736 = vpop.f32.mrb[0].mxu0
      %v3737 = vpop.f32.mrb[0].mxu0
      %v3738 = vadd.f32 0.0, %v3737
      %v3739 = vpop.f32.mrb[0].mxu0
      %3740 = vmatprep.mubr.bf16.mxu0 0
      %3741 = vmatmul.mubr.bf16.gmra.mrb[0].mxu0 %v3572
      %v3742 = vpop.f32.mrb[0].mxu0
      %v3743 = vadd.f32 0.0, %v3742
      %v3744 = vpop.f32.mrb[0].mxu0
      %v3745 = vpop.f32.mrb[0].mxu0
      %v3746 = vadd.f32 0.0, %v3745
      %v3747 = vpop.f32.mrb[0].mxu0
      %3748 = vmatprep.mubr.bf16.mxu0 0
      %3749 = vmatmul.mubr.bf16.gmra.mrb[0].mxu0 %v3573
      %v3750 = vpop.f32.mrb[0].mxu0
      %v3751 = vadd.f32 0.0, %v3750
      %v3752 = vpop.f32.mrb[0].mxu0
      %v3753 = vpop.f32.mrb[0].mxu0
      %v3754 = vadd.f32 0.0, %v3753
      %v3755 = vpop.f32.mrb[0].mxu0
      %3756 = vmatprep.mubr.bf16.mxu0 0
      %3757 = vmatmul.mubr.bf16.gmra.mrb[0].mxu0 %v3574
      %v3758 = vpop.f32.mrb[0].mxu0
      %v3759 = vadd.f32 0.0, %v3758
      %v3760 = vpop.f32.mrb[0].mxu0
      %v3761 = vpop.f32.mrb[0].mxu0
      %v3762 = vadd.f32 0.0, %v3761
      %v3763 = vpop.f32.mrb[0].mxu0
      %3764 = vmatprep.mubr.bf16.mxu0 0
      %3765 = vmatmul.mubr.bf16.gmra.mrb[0].mxu0 %v3575
      %v3766 = vpop.f32.mrb[0].mxu0
      %v3767 = vadd.f32 0.0, %v3766
      %v3768 = vpop.f32.mrb[0].mxu0
      %v3769 = vpop.f32.mrb[0].mxu0
      %v3770 = vadd.f32 0.0, %v3769
      %v3771 = vpop.f32.mrb[0].mxu0
      %3772 = vmatprep.mubr.bf16.mxu0 0
      %3773 = vmatmul.mubr.bf16.gmra.mrb[0].mxu0 %v3576
      %v3774 = vpop.f32.mrb[0].mxu0
      %v3775 = vadd.f32 0.0, %v3774
      %v3776 = vpop.f32.mrb[0].mxu0
      %v3777 = vpop.f32.mrb[0].mxu0
      %v3778 = vadd.f32 0.0, %v3777
      %v3779 = vpop.f32.mrb[0].mxu0
      %3780 = vmatprep.mubr.bf16.mxu0 0
      %3781 = vmatmul.mubr.bf16.gmra.mrb[0].mxu0 %v3577
      %v3782 = vpop.f32.mrb[0].mxu0
      %v3783 = vadd.f32 0.0, %v3782
      %v3784 = vpop.f32.mrb[0].mxu0
      %v3785 = vpop.f32.mrb[0].mxu0
      %v3786 = vadd.f32 0.0, %v3785
      %v3787 = vpop.f32.mrb[0].mxu0
      %3788 = vmatprep.mubr.bf16.mxu0 0
      %3789 = vmatmul.mubr.bf16.gmra.mrb[0].mxu0 %v3578
      %v3790 = vpop.f32.mrb[0].mxu0
      %v3791 = vadd.f32 0.0, %v3790
      %v3792 = vpop.f32.mrb[0].mxu0
      %v3793 = vpop.f32.mrb[0].mxu0
      %v3794 = vadd.f32 0.0, %v3793
      %v3795 = vpop.f32.mrb[0].mxu0
      %3796 = vmatprep.mubr.bf16.mxu0 0
      %3797 = vmatmul.mubr.bf16.gmra.mrb[0].mxu0 %v3579
      %v3798 = vpop.f32.mrb[0].mxu0
      %v3799 = vadd.f32 0.0, %v3798
      %v3800 = vpop.f32.mrb[0].mxu0
      %v3801 = vpop.f32.mrb[0].mxu0
      %v3802 = vadd.f32 0.0, %v3801
      %v3803 = vpop.f32.mrb[0].mxu0
      %3804 = vdwg.mxu0
      %v3805 = vadd.f32 %v3418, %v3679
      %v3806 = vadd.f32 %v3419, %v3682
      %v3807 = vadd.f32 %v3420, %v3687
      %v3808 = vadd.f32 %v3421, %v3690
      %v3809 = vadd.f32 %v3422, %v3695
      %v3810 = vadd.f32 %v3423, %v3698
      %v3811 = vadd.f32 %v3424, %v3703
      %v3812 = vadd.f32 %v3425, %v3706
      %v3813 = vadd.f32 %v3426, %v3711
      %v3814 = vadd.f32 %v3427, %v3714
      %v3815 = vadd.f32 %v3428, %v3719
      %v3816 = vadd.f32 %v3429, %v3722
      %v3817 = vadd.f32 %v3430, %v3727
      %v3818 = vadd.f32 %v3431, %v3730
      %v3819 = vadd.f32 %v3432, %v3735
      %v3820 = vadd.f32 %v3433, %v3738
      %v3821 = vadd.f32 %v3434, %v3743
      %v3822 = vadd.f32 %v3435, %v3746
      %v3823 = vadd.f32 %v3436, %v3751
      %v3824 = vadd.f32 %v3437, %v3754
      %v3825 = vadd.f32 %v3438, %v3759
      %v3826 = vadd.f32 %v3439, %v3762
      %v3827 = vadd.f32 %v3440, %v3767
      %v3828 = vadd.f32 %v3441, %v3770
      %v3829 = vadd.f32 %v3442, %v3775
      %v3830 = vadd.f32 %v3443, %v3778
      %v3831 = vadd.f32 %v3444, %v3783
      %v3832 = vadd.f32 %v3445, %v3786
      %v3833 = vadd.f32 %v3446, %v3791
      %v3834 = vadd.f32 %v3447, %v3794
      %v3835 = vadd.f32 %v3448, %v3799
      %v3836 = vadd.f32 %v3449, %v3802
      %v3837 = vld [vmem:[%s3450] sm:$0xf]
      %v3838 = vld [vmem:[%s3450 + $0x4] sm:$0xf]
      %v3839 = vld [vmem:[%s3450 + $0x8] sm:$0x1]
      %v3840 = vld [vmem:[%s3450 + $0xc] sm:$0xf]
      %v3841 = vld [vmem:[%s3450 + $0x10] sm:$0xf]
      %v3842 = vld [vmem:[%s3450 + $0x14] sm:$0x1]
      %v3843 = vld [vmem:[%s3450 + $0x18] sm:$0xf]
      %v3844 = vld [vmem:[%s3450 + $0x1c] sm:$0xf]
      %v3845 = vld [vmem:[%s3450 + $0x20] sm:$0x1]
      %v3846 = vld [vmem:[%s3450 + $0x24] sm:$0xf]
      %v3847 = vld [vmem:[%s3450 + $0x28] sm:$0xf]
      %v3848 = vld [vmem:[%s3450 + $0x2c] sm:$0x1]
      %v3849 = vld [vmem:[%s3450 + $0x30] sm:$0xf]
      %v3850 = vld [vmem:[%s3450 + $0x34] sm:$0xf]
      %v3851 = vld [vmem:[%s3450 + $0x38] sm:$0x1]
      %v3852 = vld [vmem:[%s3450 + $0x3c] sm:$0xf]
      %v3853 = vld [vmem:[%s3450 + $0x40] sm:$0xf]
      %v3854 = vld [vmem:[%s3450 + $0x44] sm:$0x1]
      %v3855 = vld [vmem:[%s3450 + $0x48] sm:$0xf]
      %v3856 = vld [vmem:[%s3450 + $0x4c] sm:$0xf]
      %v3857 = vld [vmem:[%s3450 + $0x50] sm:$0x1]
      %v3858 = vld [vmem:[%s3450 + $0x54] sm:$0xf]
      %v3859 = vld [vmem:[%s3450 + $0x58] sm:$0xf]
      %v3860 = vld [vmem:[%s3450 + $0x5c] sm:$0x1]
      %v3861 = vld [vmem:[%s3450 + $0x60] sm:$0xf]
      %v3862 = vld [vmem:[%s3450 + $0x64] sm:$0xf]
      %v3863 = vld [vmem:[%s3450 + $0x68] sm:$0x1]
      %v3864 = vld [vmem:[%s3450 + $0x6c] sm:$0xf]
      %v3865 = vld [vmem:[%s3450 + $0x70] sm:$0xf]
      %v3866 = vld [vmem:[%s3450 + $0x74] sm:$0x1]
      %v3867 = vld [vmem:[%s3450 + $0x78] sm:$0xf]
      %v3868 = vld [vmem:[%s3450 + $0x7c] sm:$0xf]
      %v3869 = vld [vmem:[%s3450 + $0x80] sm:$0x1]
      %v3870 = vld [vmem:[%s3450 + $0x84] sm:$0xf]
      %v3871 = vld [vmem:[%s3450 + $0x88] sm:$0xf]
      %v3872 = vld [vmem:[%s3450 + $0x8c] sm:$0x1]
      %v3873 = vld [vmem:[%s3450 + $0x90] sm:$0xf]
      %v3874 = vld [vmem:[%s3450 + $0x94] sm:$0xf]
      %v3875 = vld [vmem:[%s3450 + $0x98] sm:$0x1]
      %v3876 = vld [vmem:[%s3450 + $0x9c] sm:$0xf]
      %v3877 = vld [vmem:[%s3450 + $0xa0] sm:$0xf]
      %v3878 = vld [vmem:[%s3450 + $0xa4] sm:$0x1]
      %v3879 = vld [vmem:[%s3450 + $0xa8] sm:$0xf]
      %v3880 = vld [vmem:[%s3450 + $0xac] sm:$0xf]
      %v3881 = vld [vmem:[%s3450 + $0xb0] sm:$0x1]
      %v3882 = vld [vmem:[%s3450 + $0xb4] sm:$0xf]
      %v3883 = vld [vmem:[%s3450 + $0xb8] sm:$0xf]
      %v3884 = vld [vmem:[%s3450 + $0xbc] sm:$0x1]
      %v3886 = vshrl.u32 %v3837, 16
      %v3888 = vrot.slane %v3886, 4
      %v3889 = vshll.u32 %v3837, 16
      %v3891 = vrot.slane %v3889, 5
      %v3892 = vor.u32 %v3888, %v3891
      %v3893 = vrot.slane %v3892, 4
      %v3895 = vshll.u32 %v3838, 16
      %v3897 = vrot.slane %v3895, 5
      %v3898 = vsel %vm346, %v3893, %v3897
      %v3899 = vshrl.u32 %v3838, 16
      %v3901 = vrot.slane %v3899, 4
      %v3902 = vor.u32 %v3901, %v3897
      %v3903 = vrot.slane %v3902, 4
      %v3905 = vshll.u32 %v3839, 16
      %v3907 = vrot.slane %v3905, 5
      %v3908 = vsel %vm346, %v3903, %v3907
      %v3910 = vshrl.u32 %v3840, 16
      %v3912 = vrot.slane %v3910, 4
      %v3913 = vshll.u32 %v3840, 16
      %v3915 = vrot.slane %v3913, 5
      %v3916 = vor.u32 %v3912, %v3915
      %v3917 = vrot.slane %v3916, 4
      %v3919 = vshll.u32 %v3841, 16
      %v3921 = vrot.slane %v3919, 5
      %v3922 = vsel %vm346, %v3917, %v3921
      %v3923 = vshrl.u32 %v3841, 16
      %v3925 = vrot.slane %v3923, 4
      %v3926 = vor.u32 %v3925, %v3921
      %v3927 = vrot.slane %v3926, 4
      %v3929 = vshll.u32 %v3842, 16
      %v3931 = vrot.slane %v3929, 5
      %v3932 = vsel %vm346, %v3927, %v3931
      %v3934 = vshrl.u32 %v3843, 16
      %v3936 = vrot.slane %v3934, 4
      %v3937 = vshll.u32 %v3843, 16
      %v3939 = vrot.slane %v3937, 5
      %v3940 = vor.u32 %v3936, %v3939
      %v3941 = vrot.slane %v3940, 4
      %v3943 = vshll.u32 %v3844, 16
      %v3945 = vrot.slane %v3943, 5
      %v3946 = vsel %vm346, %v3941, %v3945
      %v3947 = vshrl.u32 %v3844, 16
      %v3949 = vrot.slane %v3947, 4
      %v3950 = vor.u32 %v3949, %v3945
      %v3951 = vrot.slane %v3950, 4
      %v3953 = vshll.u32 %v3845, 16
      %v3955 = vrot.slane %v3953, 5
      %v3956 = vsel %vm346, %v3951, %v3955
      %v3958 = vshrl.u32 %v3846, 16
      %v3960 = vrot.slane %v3958, 4
      %v3961 = vshll.u32 %v3846, 16
      %v3963 = vrot.slane %v3961, 5
      %v3964 = vor.u32 %v3960, %v3963
      %v3965 = vrot.slane %v3964, 4
      %v3967 = vshll.u32 %v3847, 16
      %v3969 = vrot.slane %v3967, 5
      %v3970 = vsel %vm346, %v3965, %v3969
      %v3971 = vshrl.u32 %v3847, 16
      %v3973 = vrot.slane %v3971, 4
      %v3974 = vor.u32 %v3973, %v3969
      %v3975 = vrot.slane %v3974, 4
      %v3977 = vshll.u32 %v3848, 16
      %v3979 = vrot.slane %v3977, 5
      %v3980 = vsel %vm346, %v3975, %v3979
      %v3982 = vshrl.u32 %v3849, 16
      %v3984 = vrot.slane %v3982, 4
      %v3985 = vshll.u32 %v3849, 16
      %v3987 = vrot.slane %v3985, 5
      %v3988 = vor.u32 %v3984, %v3987
      %v3989 = vrot.slane %v3988, 4
      %v3991 = vshll.u32 %v3850, 16
      %v3993 = vrot.slane %v3991, 5
      %v3994 = vsel %vm346, %v3989, %v3993
      %v3995 = vshrl.u32 %v3850, 16
      %v3997 = vrot.slane %v3995, 4
      %v3998 = vor.u32 %v3997, %v3993
      %v3999 = vrot.slane %v3998, 4
      %v4001 = vshll.u32 %v3851, 16
      %v4003 = vrot.slane %v4001, 5
      %v4004 = vsel %vm346, %v3999, %v4003
      %v4006 = vshrl.u32 %v3852, 16
      %v4008 = vrot.slane %v4006, 4
      %v4009 = vshll.u32 %v3852, 16
      %v4011 = vrot.slane %v4009, 5
      %v4012 = vor.u32 %v4008, %v4011
      %v4013 = vrot.slane %v4012, 4
      %v4015 = vshll.u32 %v3853, 16
      %v4017 = vrot.slane %v4015, 5
      %v4018 = vsel %vm346, %v4013, %v4017
      %v4019 = vshrl.u32 %v3853, 16
      %v4021 = vrot.slane %v4019, 4
      %v4022 = vor.u32 %v4021, %v4017
      %v4023 = vrot.slane %v4022, 4
      %v4025 = vshll.u32 %v3854, 16
      %v4027 = vrot.slane %v4025, 5
      %v4028 = vsel %vm346, %v4023, %v4027
      %v4030 = vshrl.u32 %v3855, 16
      %v4032 = vrot.slane %v4030, 4
      %v4033 = vshll.u32 %v3855, 16
      %v4035 = vrot.slane %v4033, 5
      %v4036 = vor.u32 %v4032, %v4035
      %v4037 = vrot.slane %v4036, 4
      %v4039 = vshll.u32 %v3856, 16
      %v4041 = vrot.slane %v4039, 5
      %v4042 = vsel %vm346, %v4037, %v4041
      %v4043 = vshrl.u32 %v3856, 16
      %v4045 = vrot.slane %v4043, 4
      %v4046 = vor.u32 %v4045, %v4041
      %v4047 = vrot.slane %v4046, 4
      %v4049 = vshll.u32 %v3857, 16
      %v4051 = vrot.slane %v4049, 5
      %v4052 = vsel %vm346, %v4047, %v4051
      %v4054 = vshrl.u32 %v3858, 16
      %v4056 = vrot.slane %v4054, 4
      %v4057 = vshll.u32 %v3858, 16
      %v4059 = vrot.slane %v4057, 5
      %v4060 = vor.u32 %v4056, %v4059
      %v4061 = vrot.slane %v4060, 4
      %v4063 = vshll.u32 %v3859, 16
      %v4065 = vrot.slane %v4063, 5
      %v4066 = vsel %vm346, %v4061, %v4065
      %v4067 = vshrl.u32 %v3859, 16
      %v4069 = vrot.slane %v4067, 4
      %v4070 = vor.u32 %v4069, %v4065
      %v4071 = vrot.slane %v4070, 4
      %v4073 = vshll.u32 %v3860, 16
      %v4075 = vrot.slane %v4073, 5
      %v4076 = vsel %vm346, %v4071, %v4075
      %v4078 = vshrl.u32 %v3861, 16
      %v4080 = vrot.slane %v4078, 4
      %v4081 = vshll.u32 %v3861, 16
      %v4083 = vrot.slane %v4081, 5
      %v4084 = vor.u32 %v4080, %v4083
      %v4085 = vrot.slane %v4084, 4
      %v4087 = vshll.u32 %v3862, 16
      %v4089 = vrot.slane %v4087, 5
      %v4090 = vsel %vm346, %v4085, %v4089
      %v4091 = vshrl.u32 %v3862, 16
      %v4093 = vrot.slane %v4091, 4
      %v4094 = vor.u32 %v4093, %v4089
      %v4095 = vrot.slane %v4094, 4
      %v4097 = vshll.u32 %v3863, 16
      %v4099 = vrot.slane %v4097, 5
      %v4100 = vsel %vm346, %v4095, %v4099
      %v4102 = vshrl.u32 %v3864, 16
      %v4104 = vrot.slane %v4102, 4
      %v4105 = vshll.u32 %v3864, 16
      %v4107 = vrot.slane %v4105, 5
      %v4108 = vor.u32 %v4104, %v4107
      %v4109 = vrot.slane %v4108, 4
      %v4111 = vshll.u32 %v3865, 16
      %v4113 = vrot.slane %v4111, 5
      %v4114 = vsel %vm346, %v4109, %v4113
      %v4115 = vshrl.u32 %v3865, 16
      %v4117 = vrot.slane %v4115, 4
      %v4118 = vor.u32 %v4117, %v4113
      %v4119 = vrot.slane %v4118, 4
      %v4121 = vshll.u32 %v3866, 16
      %v4123 = vrot.slane %v4121, 5
      %v4124 = vsel %vm346, %v4119, %v4123
      %v4126 = vshrl.u32 %v3867, 16
      %v4128 = vrot.slane %v4126, 4
      %v4129 = vshll.u32 %v3867, 16
      %v4131 = vrot.slane %v4129, 5
      %v4132 = vor.u32 %v4128, %v4131
      %v4133 = vrot.slane %v4132, 4
      %v4135 = vshll.u32 %v3868, 16
      %v4137 = vrot.slane %v4135, 5
      %v4138 = vsel %vm346, %v4133, %v4137
      %v4139 = vshrl.u32 %v3868, 16
      %v4141 = vrot.slane %v4139, 4
      %v4142 = vor.u32 %v4141, %v4137
      %v4143 = vrot.slane %v4142, 4
      %v4145 = vshll.u32 %v3869, 16
      %v4147 = vrot.slane %v4145, 5
      %v4148 = vsel %vm346, %v4143, %v4147
      %v4150 = vshrl.u32 %v3870, 16
      %v4152 = vrot.slane %v4150, 4
      %v4153 = vshll.u32 %v3870, 16
      %v4155 = vrot.slane %v4153, 5
      %v4156 = vor.u32 %v4152, %v4155
      %v4157 = vrot.slane %v4156, 4
      %v4159 = vshll.u32 %v3871, 16
      %v4161 = vrot.slane %v4159, 5
      %v4162 = vsel %vm346, %v4157, %v4161
      %v4163 = vshrl.u32 %v3871, 16
      %v4165 = vrot.slane %v4163, 4
      %v4166 = vor.u32 %v4165, %v4161
      %v4167 = vrot.slane %v4166, 4
      %v4169 = vshll.u32 %v3872, 16
      %v4171 = vrot.slane %v4169, 5
      %v4172 = vsel %vm346, %v4167, %v4171
      %v4174 = vshrl.u32 %v3873, 16
      %v4176 = vrot.slane %v4174, 4
      %v4177 = vshll.u32 %v3873, 16
      %v4179 = vrot.slane %v4177, 5
      %v4180 = vor.u32 %v4176, %v4179
      %v4181 = vrot.slane %v4180, 4
      %v4183 = vshll.u32 %v3874, 16
      %v4185 = vrot.slane %v4183, 5
      %v4186 = vsel %vm346, %v4181, %v4185
      %v4187 = vshrl.u32 %v3874, 16
      %v4189 = vrot.slane %v4187, 4
      %v4190 = vor.u32 %v4189, %v4185
      %v4191 = vrot.slane %v4190, 4
      %v4193 = vshll.u32 %v3875, 16
      %v4195 = vrot.slane %v4193, 5
      %v4196 = vsel %vm346, %v4191, %v4195
      %v4198 = vshrl.u32 %v3876, 16
      %v4200 = vrot.slane %v4198, 4
      %v4201 = vshll.u32 %v3876, 16
      %v4203 = vrot.slane %v4201, 5
      %v4204 = vor.u32 %v4200, %v4203
      %v4205 = vrot.slane %v4204, 4
      %v4207 = vshll.u32 %v3877, 16
      %v4209 = vrot.slane %v4207, 5
      %v4210 = vsel %vm346, %v4205, %v4209
      %v4211 = vshrl.u32 %v3877, 16
      %v4213 = vrot.slane %v4211, 4
      %v4214 = vor.u32 %v4213, %v4209
      %v4215 = vrot.slane %v4214, 4
      %v4217 = vshll.u32 %v3878, 16
      %v4219 = vrot.slane %v4217, 5
      %v4220 = vsel %vm346, %v4215, %v4219
      %v4222 = vshrl.u32 %v3879, 16
      %v4224 = vrot.slane %v4222, 4
      %v4225 = vshll.u32 %v3879, 16
      %v4227 = vrot.slane %v4225, 5
      %v4228 = vor.u32 %v4224, %v4227
      %v4229 = vrot.slane %v4228, 4
      %v4231 = vshll.u32 %v3880, 16
      %v4233 = vrot.slane %v4231, 5
      %v4234 = vsel %vm346, %v4229, %v4233
      %v4235 = vshrl.u32 %v3880, 16
      %v4237 = vrot.slane %v4235, 4
      %v4238 = vor.u32 %v4237, %v4233
      %v4239 = vrot.slane %v4238, 4
      %v4241 = vshll.u32 %v3881, 16
      %v4243 = vrot.slane %v4241, 5
      %v4244 = vsel %vm346, %v4239, %v4243
      %v4246 = vshrl.u32 %v3882, 16
      %v4248 = vrot.slane %v4246, 4
      %v4249 = vshll.u32 %v3882, 16
      %v4251 = vrot.slane %v4249, 5
      %v4252 = vor.u32 %v4248, %v4251
      %v4253 = vrot.slane %v4252, 4
      %v4255 = vshll.u32 %v3883, 16
      %v4257 = vrot.slane %v4255, 5
      %v4258 = vsel %vm346, %v4253, %v4257
      %v4259 = vshrl.u32 %v3883, 16
      %v4261 = vrot.slane %v4259, 4
      %v4262 = vor.u32 %v4261, %v4257
      %v4263 = vrot.slane %v4262, 4
      %v4265 = vshll.u32 %v3884, 16
      %v4267 = vrot.slane %v4265, 5
      %v4268 = vsel %vm346, %v4263, %v4267
      %s4269 = scalar_lea.vmem %s1, 448
      %v4270 = vld [vmem:[%s4269] sm:$0xf]
      %v4271 = vld [vmem:[%s4269 + $0x4] sm:$0xf]
      %v4272 = vld [vmem:[%s4269 + $0x8] sm:$0xf]
      %v4273 = vld [vmem:[%s4269 + $0xc] sm:$0xf]
      %v4274 = vld [vmem:[%s4269 + $0x10] sm:$0xf]
      %v4275 = vld [vmem:[%s4269 + $0x14] sm:$0xf]
      %v4276 = vld [vmem:[%s4269 + $0x18] sm:$0xf]
      %v4277 = vld [vmem:[%s4269 + $0x1c] sm:$0xf]
      %v4278 = vld [vmem:[%s4269 + $0x20] sm:$0xf]
      %v4279 = vld [vmem:[%s4269 + $0x24] sm:$0xf]
      %v4280 = vld [vmem:[%s4269 + $0x28] sm:$0xf]
      %v4281 = vld [vmem:[%s4269 + $0x2c] sm:$0xf]
      %v4282 = vld [vmem:[%s4269 + $0x30] sm:$0xf]
      %v4283 = vld [vmem:[%s4269 + $0x34] sm:$0xf]
      %v4284 = vld [vmem:[%s4269 + $0x38] sm:$0xf]
      %v4285 = vld [vmem:[%s4269 + $0x3c] sm:$0xf]
      %v4286 = vunpack.c.l.b16 %v3898
      %v4287 = vunpack.c.l.b16 %v3908
      %v4288 = vunpack.c.l.b16 %v3922
      %v4289 = vunpack.c.l.b16 %v3932
      %v4290 = vunpack.c.l.b16 %v3946
      %v4291 = vunpack.c.l.b16 %v3956
      %v4292 = vunpack.c.l.b16 %v3970
      %v4293 = vunpack.c.l.b16 %v3980
      %v4294 = vunpack.c.l.b16 %v3994
      %v4295 = vunpack.c.l.b16 %v4004
      %v4296 = vunpack.c.l.b16 %v4018
      %v4297 = vunpack.c.l.b16 %v4028
      %v4298 = vunpack.c.l.b16 %v4042
      %v4299 = vunpack.c.l.b16 %v4052
      %v4300 = vunpack.c.l.b16 %v4066
      %v4301 = vunpack.c.l.b16 %v4076
      %v4302 = vunpack.c.l.b16 %v4090
      %v4303 = vunpack.c.l.b16 %v4100
      %v4304 = vunpack.c.l.b16 %v4114
      %v4305 = vunpack.c.l.b16 %v4124
      %v4306 = vunpack.c.l.b16 %v4138
      %v4307 = vunpack.c.l.b16 %v4148
      %v4308 = vunpack.c.l.b16 %v4162
      %v4309 = vunpack.c.l.b16 %v4172
      %v4310 = vunpack.c.l.b16 %v4186
      %v4311 = vunpack.c.l.b16 %v4196
      %v4312 = vunpack.c.l.b16 %v4210
      %v4313 = vunpack.c.l.b16 %v4220
      %v4314 = vunpack.c.l.b16 %v4234
      %v4315 = vunpack.c.l.b16 %v4244
      %v4316 = vunpack.c.l.b16 %v4258
      %v4317 = vunpack.c.l.b16 %v4268
      %v4318 = vpack.c.b16 %v4287, %v4286
      %v4319 = vpack.c.b16 %v4289, %v4288
      %v4320 = vpack.c.b16 %v4291, %v4290
      %v4321 = vpack.c.b16 %v4293, %v4292
      %v4322 = vpack.c.b16 %v4295, %v4294
      %v4323 = vpack.c.b16 %v4297, %v4296
      %v4324 = vpack.c.b16 %v4299, %v4298
      %v4325 = vpack.c.b16 %v4301, %v4300
      %v4326 = vpack.c.b16 %v4303, %v4302
      %v4327 = vpack.c.b16 %v4305, %v4304
      %v4328 = vpack.c.b16 %v4307, %v4306
      %v4329 = vpack.c.b16 %v4309, %v4308
      %v4330 = vpack.c.b16 %v4311, %v4310
      %v4331 = vpack.c.b16 %v4313, %v4312
      %v4332 = vpack.c.b16 %v4315, %v4314
      %v4333 = vpack.c.b16 %v4317, %v4316
      %v4366 = vunpack.c.l.b16 %v4270
      %v4367 = vunpack.c.l.b16 %v4271
      %v4368 = vunpack.c.l.b16 %v4272
      %v4369 = vunpack.c.l.b16 %v4273
      %v4370 = vunpack.c.l.b16 %v4274
      %v4371 = vunpack.c.l.b16 %v4275
      %v4372 = vunpack.c.l.b16 %v4276
      %v4373 = vunpack.c.l.b16 %v4277
      %v4374 = vunpack.c.l.b16 %v4278
      %v4375 = vunpack.c.l.b16 %v4279
      %v4376 = vunpack.c.l.b16 %v4280
      %v4377 = vunpack.c.l.b16 %v4281
      %v4378 = vunpack.c.l.b16 %v4282
      %v4379 = vunpack.c.l.b16 %v4283
      %v4380 = vunpack.c.l.b16 %v4284
      %v4381 = vunpack.c.l.b16 %v4285
      %v4382 = vpack.c.b16 %v4367, %v4366
      %v4383 = vpack.c.b16 %v4369, %v4368
      %v4384 = vpack.c.b16 %v4371, %v4370
      %v4385 = vpack.c.b16 %v4373, %v4372
      %v4386 = vpack.c.b16 %v4375, %v4374
      %v4387 = vpack.c.b16 %v4377, %v4376
      %v4388 = vpack.c.b16 %v4379, %v4378
      %v4389 = vpack.c.b16 %v4381, %v4380
      %4398 = vmatprep.subr.bf16.mxu0 0
      %4399 = vmatpush1.bf16.msra.mxu0 %v4382
      %4400 = vmatprep.subr.bf16.mxu0 0
      %4401 = vmatpush1.bf16.msra.mxu0 %v4383
      %4402 = vmatprep.subr.bf16.mxu0 0
      %4403 = vmatpush1.bf16.msra.mxu0 %v4384
      %4404 = vmatprep.subr.bf16.mxu0 0
      %4405 = vmatpush1.bf16.msra.mxu0 %v4385
      %4406 = vmatprep.subr.bf16.mxu0 0
      %4407 = vmatpush1.bf16.msra.mxu0 %v4386
      %4408 = vmatprep.subr.bf16.mxu0 0
      %4409 = vmatpush1.bf16.msra.mxu0 %v4387
      %4410 = vmatprep.subr.bf16.mxu0 0
      %4411 = vmatpush1.bf16.msra.mxu0 %v4388
      %4412 = vmatprep.subr.bf16.mxu0 0
      %4413 = vmatpush1.bf16.msra.mxu0 %v4389
      %4414 = vmatprep.subr.bf16.mxu0 0
      %4415 = vmatpush1.bf16.msra.mxu0 0
      %4416 = vmatprep.subr.bf16.mxu0 0
      %4417 = vmatpush1.bf16.msra.mxu0 0
      %4418 = vmatprep.subr.bf16.mxu0 0
      %4419 = vmatpush1.bf16.msra.mxu0 0
      %4420 = vmatprep.subr.bf16.mxu0 0
      %4421 = vmatpush1.bf16.msra.mxu0 0
      %4422 = vmatprep.subr.bf16.mxu0 0
      %4423 = vmatpush1.bf16.msra.mxu0 0
      %4424 = vmatprep.subr.bf16.mxu0 0
      %4425 = vmatpush1.bf16.msra.mxu0 0
      %4426 = vmatprep.subr.bf16.mxu0 0
      %4427 = vmatpush1.bf16.msra.mxu0 0
      %4428 = vmatprep.subr.bf16.mxu0 0
      %4429 = vmatpush1.bf16.msra.mxu0 0
      %4430 = vmatprep.mubr.bf16.mxu0 0
      %4431 = vmatmul.mubr.bf16.gmra.mrb[0].mxu0 %v4318
      %v4432 = vpop.f32.mrb[0].mxu0
      %v4433 = vadd.f32 0.0, %v4432
      %v4434 = vpop.f32.mrb[0].mxu0
      %v4435 = vpop.f32.mrb[0].mxu0
      %v4436 = vadd.f32 0.0, %v4435
      %v4437 = vpop.f32.mrb[0].mxu0
      %4438 = vmatprep.mubr.bf16.mxu0 0
      %4439 = vmatmul.mubr.bf16.gmra.mrb[0].mxu0 %v4319
      %v4440 = vpop.f32.mrb[0].mxu0
      %v4441 = vadd.f32 0.0, %v4440
      %v4442 = vpop.f32.mrb[0].mxu0
      %v4443 = vpop.f32.mrb[0].mxu0
      %v4444 = vadd.f32 0.0, %v4443
      %v4445 = vpop.f32.mrb[0].mxu0
      %4446 = vmatprep.mubr.bf16.mxu0 0
      %4447 = vmatmul.mubr.bf16.gmra.mrb[0].mxu0 %v4320
      %v4448 = vpop.f32.mrb[0].mxu0
      %v4449 = vadd.f32 0.0, %v4448
      %v4450 = vpop.f32.mrb[0].mxu0
      %v4451 = vpop.f32.mrb[0].mxu0
      %v4452 = vadd.f32 0.0, %v4451
      %v4453 = vpop.f32.mrb[0].mxu0
      %4454 = vmatprep.mubr.bf16.mxu0 0
      %4455 = vmatmul.mubr.bf16.gmra.mrb[0].mxu0 %v4321
      %v4456 = vpop.f32.mrb[0].mxu0
      %v4457 = vadd.f32 0.0, %v4456
      %v4458 = vpop.f32.mrb[0].mxu0
      %v4459 = vpop.f32.mrb[0].mxu0
      %v4460 = vadd.f32 0.0, %v4459
      %v4461 = vpop.f32.mrb[0].mxu0
      %4462 = vmatprep.mubr.bf16.mxu0 0
      %4463 = vmatmul.mubr.bf16.gmra.mrb[0].mxu0 %v4322
      %v4464 = vpop.f32.mrb[0].mxu0
      %v4465 = vadd.f32 0.0, %v4464
      %v4466 = vpop.f32.mrb[0].mxu0
      %v4467 = vpop.f32.mrb[0].mxu0
      %v4468 = vadd.f32 0.0, %v4467
      %v4469 = vpop.f32.mrb[0].mxu0
      %4470 = vmatprep.mubr.bf16.mxu0 0
      %4471 = vmatmul.mubr.bf16.gmra.mrb[0].mxu0 %v4323
      %v4472 = vpop.f32.mrb[0].mxu0
      %v4473 = vadd.f32 0.0, %v4472
      %v4474 = vpop.f32.mrb[0].mxu0
      %v4475 = vpop.f32.mrb[0].mxu0
      %v4476 = vadd.f32 0.0, %v4475
      %v4477 = vpop.f32.mrb[0].mxu0
      %4478 = vmatprep.mubr.bf16.mxu0 0
      %4479 = vmatmul.mubr.bf16.gmra.mrb[0].mxu0 %v4324
      %v4480 = vpop.f32.mrb[0].mxu0
      %v4481 = vadd.f32 0.0, %v4480
      %v4482 = vpop.f32.mrb[0].mxu0
      %v4483 = vpop.f32.mrb[0].mxu0
      %v4484 = vadd.f32 0.0, %v4483
      %v4485 = vpop.f32.mrb[0].mxu0
      %4486 = vmatprep.mubr.bf16.mxu0 0
      %4487 = vmatmul.mubr.bf16.gmra.mrb[0].mxu0 %v4325
      %v4488 = vpop.f32.mrb[0].mxu0
      %v4489 = vadd.f32 0.0, %v4488
      %v4490 = vpop.f32.mrb[0].mxu0
      %v4491 = vpop.f32.mrb[0].mxu0
      %v4492 = vadd.f32 0.0, %v4491
      %v4493 = vpop.f32.mrb[0].mxu0
      %4494 = vmatprep.mubr.bf16.mxu0 0
      %4495 = vmatmul.mubr.bf16.gmra.mrb[0].mxu0 %v4326
      %v4496 = vpop.f32.mrb[0].mxu0
      %v4497 = vadd.f32 0.0, %v4496
      %v4498 = vpop.f32.mrb[0].mxu0
      %v4499 = vpop.f32.mrb[0].mxu0
      %v4500 = vadd.f32 0.0, %v4499
      %v4501 = vpop.f32.mrb[0].mxu0
      %4502 = vmatprep.mubr.bf16.mxu0 0
      %4503 = vmatmul.mubr.bf16.gmra.mrb[0].mxu0 %v4327
      %v4504 = vpop.f32.mrb[0].mxu0
      %v4505 = vadd.f32 0.0, %v4504
      %v4506 = vpop.f32.mrb[0].mxu0
      %v4507 = vpop.f32.mrb[0].mxu0
      %v4508 = vadd.f32 0.0, %v4507
      %v4509 = vpop.f32.mrb[0].mxu0
      %4510 = vmatprep.mubr.bf16.mxu0 0
      %4511 = vmatmul.mubr.bf16.gmra.mrb[0].mxu0 %v4328
      %v4512 = vpop.f32.mrb[0].mxu0
      %v4513 = vadd.f32 0.0, %v4512
      %v4514 = vpop.f32.mrb[0].mxu0
      %v4515 = vpop.f32.mrb[0].mxu0
      %v4516 = vadd.f32 0.0, %v4515
      %v4517 = vpop.f32.mrb[0].mxu0
      %4518 = vmatprep.mubr.bf16.mxu0 0
      %4519 = vmatmul.mubr.bf16.gmra.mrb[0].mxu0 %v4329
      %v4520 = vpop.f32.mrb[0].mxu0
      %v4521 = vadd.f32 0.0, %v4520
      %v4522 = vpop.f32.mrb[0].mxu0
      %v4523 = vpop.f32.mrb[0].mxu0
      %v4524 = vadd.f32 0.0, %v4523
      %v4525 = vpop.f32.mrb[0].mxu0
      %4526 = vmatprep.mubr.bf16.mxu0 0
      %4527 = vmatmul.mubr.bf16.gmra.mrb[0].mxu0 %v4330
      %v4528 = vpop.f32.mrb[0].mxu0
      %v4529 = vadd.f32 0.0, %v4528
      %v4530 = vpop.f32.mrb[0].mxu0
      %v4531 = vpop.f32.mrb[0].mxu0
      %v4532 = vadd.f32 0.0, %v4531
      %v4533 = vpop.f32.mrb[0].mxu0
      %4534 = vmatprep.mubr.bf16.mxu0 0
      %4535 = vmatmul.mubr.bf16.gmra.mrb[0].mxu0 %v4331
      %v4536 = vpop.f32.mrb[0].mxu0
      %v4537 = vadd.f32 0.0, %v4536
      %v4538 = vpop.f32.mrb[0].mxu0
      %v4539 = vpop.f32.mrb[0].mxu0
      %v4540 = vadd.f32 0.0, %v4539
      %v4541 = vpop.f32.mrb[0].mxu0
      %4542 = vmatprep.mubr.bf16.mxu0 0
      %4543 = vmatmul.mubr.bf16.gmra.mrb[0].mxu0 %v4332
      %v4544 = vpop.f32.mrb[0].mxu0
      %v4545 = vadd.f32 0.0, %v4544
      %v4546 = vpop.f32.mrb[0].mxu0
      %v4547 = vpop.f32.mrb[0].mxu0
      %v4548 = vadd.f32 0.0, %v4547
      %v4549 = vpop.f32.mrb[0].mxu0
      %4550 = vmatprep.mubr.bf16.mxu0 0
      %4551 = vmatmul.mubr.bf16.gmra.mrb[0].mxu0 %v4333
      %v4552 = vpop.f32.mrb[0].mxu0
      %v4553 = vadd.f32 0.0, %v4552
      %v4554 = vpop.f32.mrb[0].mxu0
      %v4555 = vpop.f32.mrb[0].mxu0
      %v4556 = vadd.f32 0.0, %v4555
      %v4557 = vpop.f32.mrb[0].mxu0
      %4558 = vdwg.mxu0
      %v4559 = vadd.f32 %v3805, %v4433
      %v4560 = vadd.f32 %v3806, %v4436
      %v4561 = vadd.f32 %v3807, %v4441
      %v4562 = vadd.f32 %v3808, %v4444
      %v4563 = vadd.f32 %v3809, %v4449
      %v4564 = vadd.f32 %v3810, %v4452
      %v4565 = vadd.f32 %v3811, %v4457
      %v4566 = vadd.f32 %v3812, %v4460
      %v4567 = vadd.f32 %v3813, %v4465
      %v4568 = vadd.f32 %v3814, %v4468
      %v4569 = vadd.f32 %v3815, %v4473
      %v4570 = vadd.f32 %v3816, %v4476
      %v4571 = vadd.f32 %v3817, %v4481
      %v4572 = vadd.f32 %v3818, %v4484
      %v4573 = vadd.f32 %v3819, %v4489
      %v4574 = vadd.f32 %v3820, %v4492
      %v4575 = vadd.f32 %v3821, %v4497
      %v4576 = vadd.f32 %v3822, %v4500
      %v4577 = vadd.f32 %v3823, %v4505
      %v4578 = vadd.f32 %v3824, %v4508
      %v4579 = vadd.f32 %v3825, %v4513
      %v4580 = vadd.f32 %v3826, %v4516
      %v4581 = vadd.f32 %v3827, %v4521
      %v4582 = vadd.f32 %v3828, %v4524
      %v4583 = vadd.f32 %v3829, %v4529
      %v4584 = vadd.f32 %v3830, %v4532
      %v4585 = vadd.f32 %v3831, %v4537
      %v4586 = vadd.f32 %v3832, %v4540
      %v4587 = vadd.f32 %v3833, %v4545
      %v4588 = vadd.f32 %v3834, %v4548
      %v4589 = vadd.f32 %v3835, %v4553
      %v4590 = vadd.f32 %v3836, %v4556
      %v4591 = vld [vmem:[%s3450] sm:$0xe]
      %v4592 = vld [vmem:[%s3450 + $0xc] sm:$0xe]
      %v4593 = vld [vmem:[%s3450 + $0x18] sm:$0xe]
      %v4594 = vld [vmem:[%s3450 + $0x24] sm:$0xe]
      %v4595 = vld [vmem:[%s3450 + $0x30] sm:$0xe]
      %v4596 = vld [vmem:[%s3450 + $0x3c] sm:$0xe]
      %v4597 = vld [vmem:[%s3450 + $0x48] sm:$0xe]
      %v4598 = vld [vmem:[%s3450 + $0x54] sm:$0xe]
      %v4599 = vld [vmem:[%s3450 + $0x60] sm:$0xe]
      %v4600 = vld [vmem:[%s3450 + $0x6c] sm:$0xe]
      %v4601 = vld [vmem:[%s3450 + $0x78] sm:$0xe]
      %v4602 = vld [vmem:[%s3450 + $0x84] sm:$0xe]
      %v4603 = vld [vmem:[%s3450 + $0x90] sm:$0xe]
      %v4604 = vld [vmem:[%s3450 + $0x9c] sm:$0xe]
      %v4605 = vld [vmem:[%s3450 + $0xa8] sm:$0xe]
      %v4606 = vld [vmem:[%s3450 + $0xb4] sm:$0xe]
      %v4655 = vrot.slane %v4591, 5
      %v4656 = vrot.slane %v4655, 4
      %v4657 = vrot.slane %v3838, 5
      %v4658 = vsel %vm1376, %v4656, %v4657
      %v4659 = vrot.slane %v4657, 4
      %v4660 = vrot.slane %v3839, 5
      %v4661 = vsel %vm1376, %v4659, %v4660
      %v4662 = vrot.slane %v4592, 5
      %v4663 = vrot.slane %v4662, 4
      %v4664 = vrot.slane %v3841, 5
      %v4665 = vsel %vm1376, %v4663, %v4664
      %v4666 = vrot.slane %v4664, 4
      %v4667 = vrot.slane %v3842, 5
      %v4668 = vsel %vm1376, %v4666, %v4667
      %v4669 = vrot.slane %v4593, 5
      %v4670 = vrot.slane %v4669, 4
      %v4671 = vrot.slane %v3844, 5
      %v4672 = vsel %vm1376, %v4670, %v4671
      %v4673 = vrot.slane %v4671, 4
      %v4674 = vrot.slane %v3845, 5
      %v4675 = vsel %vm1376, %v4673, %v4674
      %v4676 = vrot.slane %v4594, 5
      %v4677 = vrot.slane %v4676, 4
      %v4678 = vrot.slane %v3847, 5
      %v4679 = vsel %vm1376, %v4677, %v4678
      %v4680 = vrot.slane %v4678, 4
      %v4681 = vrot.slane %v3848, 5
      %v4682 = vsel %vm1376, %v4680, %v4681
      %v4683 = vrot.slane %v4595, 5
      %v4684 = vrot.slane %v4683, 4
      %v4685 = vrot.slane %v3850, 5
      %v4686 = vsel %vm1376, %v4684, %v4685
      %v4687 = vrot.slane %v4685, 4
      %v4688 = vrot.slane %v3851, 5
      %v4689 = vsel %vm1376, %v4687, %v4688
      %v4690 = vrot.slane %v4596, 5
      %v4691 = vrot.slane %v4690, 4
      %v4692 = vrot.slane %v3853, 5
      %v4693 = vsel %vm1376, %v4691, %v4692
      %v4694 = vrot.slane %v4692, 4
      %v4695 = vrot.slane %v3854, 5
      %v4696 = vsel %vm1376, %v4694, %v4695
      %v4697 = vrot.slane %v4597, 5
      %v4698 = vrot.slane %v4697, 4
      %v4699 = vrot.slane %v3856, 5
      %v4700 = vsel %vm1376, %v4698, %v4699
      %v4701 = vrot.slane %v4699, 4
      %v4702 = vrot.slane %v3857, 5
      %v4703 = vsel %vm1376, %v4701, %v4702
      %v4704 = vrot.slane %v4598, 5
      %v4705 = vrot.slane %v4704, 4
      %v4706 = vrot.slane %v3859, 5
      %v4707 = vsel %vm1376, %v4705, %v4706
      %v4708 = vrot.slane %v4706, 4
      %v4709 = vrot.slane %v3860, 5
      %v4710 = vsel %vm1376, %v4708, %v4709
      %v4711 = vrot.slane %v4599, 5
      %v4712 = vrot.slane %v4711, 4
      %v4713 = vrot.slane %v3862, 5
      %v4714 = vsel %vm1376, %v4712, %v4713
      %v4715 = vrot.slane %v4713, 4
      %v4716 = vrot.slane %v3863, 5
      %v4717 = vsel %vm1376, %v4715, %v4716
      %v4718 = vrot.slane %v4600, 5
      %v4719 = vrot.slane %v4718, 4
      %v4720 = vrot.slane %v3865, 5
      %v4721 = vsel %vm1376, %v4719, %v4720
      %v4722 = vrot.slane %v4720, 4
      %v4723 = vrot.slane %v3866, 5
      %v4724 = vsel %vm1376, %v4722, %v4723
      %v4725 = vrot.slane %v4601, 5
      %v4726 = vrot.slane %v4725, 4
      %v4727 = vrot.slane %v3868, 5
      %v4728 = vsel %vm1376, %v4726, %v4727
      %v4729 = vrot.slane %v4727, 4
      %v4730 = vrot.slane %v3869, 5
      %v4731 = vsel %vm1376, %v4729, %v4730
      %v4732 = vrot.slane %v4602, 5
      %v4733 = vrot.slane %v4732, 4
      %v4734 = vrot.slane %v3871, 5
      %v4735 = vsel %vm1376, %v4733, %v4734
      %v4736 = vrot.slane %v4734, 4
      %v4737 = vrot.slane %v3872, 5
      %v4738 = vsel %vm1376, %v4736, %v4737
      %v4739 = vrot.slane %v4603, 5
      %v4740 = vrot.slane %v4739, 4
      %v4741 = vrot.slane %v3874, 5
      %v4742 = vsel %vm1376, %v4740, %v4741
      %v4743 = vrot.slane %v4741, 4
      %v4744 = vrot.slane %v3875, 5
      %v4745 = vsel %vm1376, %v4743, %v4744
      %v4746 = vrot.slane %v4604, 5
      %v4747 = vrot.slane %v4746, 4
      %v4748 = vrot.slane %v3877, 5
      %v4749 = vsel %vm1376, %v4747, %v4748
      %v4750 = vrot.slane %v4748, 4
      %v4751 = vrot.slane %v3878, 5
      %v4752 = vsel %vm1376, %v4750, %v4751
      %v4753 = vrot.slane %v4605, 5
      %v4754 = vrot.slane %v4753, 4
      %v4755 = vrot.slane %v3880, 5
      %v4756 = vsel %vm1376, %v4754, %v4755
      %v4757 = vrot.slane %v4755, 4
      %v4758 = vrot.slane %v3881, 5
      %v4759 = vsel %vm1376, %v4757, %v4758
      %v4760 = vrot.slane %v4606, 5
      %v4761 = vrot.slane %v4760, 4
      %v4762 = vrot.slane %v3883, 5
      %v4763 = vsel %vm1376, %v4761, %v4762
      %v4764 = vrot.slane %v4762, 4
      %v4765 = vrot.slane %v3884, 5
      %v4766 = vsel %vm1376, %v4764, %v4765
      %s4767 = scalar_lea.vmem %s1, 512
      %v4768 = vld [vmem:[%s4767] sm:$0xf]
      %v4769 = vld [vmem:[%s4767 + $0x4] sm:$0xf]
      %v4770 = vld [vmem:[%s4767 + $0x8] sm:$0xf]
      %v4771 = vld [vmem:[%s4767 + $0xc] sm:$0xf]
      %v4772 = vld [vmem:[%s4767 + $0x10] sm:$0xf]
      %v4773 = vld [vmem:[%s4767 + $0x14] sm:$0xf]
      %v4774 = vld [vmem:[%s4767 + $0x18] sm:$0xf]
      %v4775 = vld [vmem:[%s4767 + $0x1c] sm:$0xf]
      %v4776 = vld [vmem:[%s4767 + $0x20] sm:$0xf]
      %v4777 = vld [vmem:[%s4767 + $0x24] sm:$0xf]
      %v4778 = vld [vmem:[%s4767 + $0x28] sm:$0xf]
      %v4779 = vld [vmem:[%s4767 + $0x2c] sm:$0xf]
      %v4780 = vld [vmem:[%s4767 + $0x30] sm:$0xf]
      %v4781 = vld [vmem:[%s4767 + $0x34] sm:$0xf]
      %v4782 = vld [vmem:[%s4767 + $0x38] sm:$0xf]
      %v4783 = vld [vmem:[%s4767 + $0x3c] sm:$0xf]
      %v4784 = vunpack.c.l.b16 %v4658
      %v4785 = vunpack.c.l.b16 %v4661
      %v4786 = vunpack.c.l.b16 %v4665
      %v4787 = vunpack.c.l.b16 %v4668
      %v4788 = vunpack.c.l.b16 %v4672
      %v4789 = vunpack.c.l.b16 %v4675
      %v4790 = vunpack.c.l.b16 %v4679
      %v4791 = vunpack.c.l.b16 %v4682
      %v4792 = vunpack.c.l.b16 %v4686
      %v4793 = vunpack.c.l.b16 %v4689
      %v4794 = vunpack.c.l.b16 %v4693
      %v4795 = vunpack.c.l.b16 %v4696
      %v4796 = vunpack.c.l.b16 %v4700
      %v4797 = vunpack.c.l.b16 %v4703
      %v4798 = vunpack.c.l.b16 %v4707
      %v4799 = vunpack.c.l.b16 %v4710
      %v4800 = vunpack.c.l.b16 %v4714
      %v4801 = vunpack.c.l.b16 %v4717
      %v4802 = vunpack.c.l.b16 %v4721
      %v4803 = vunpack.c.l.b16 %v4724
      %v4804 = vunpack.c.l.b16 %v4728
      %v4805 = vunpack.c.l.b16 %v4731
      %v4806 = vunpack.c.l.b16 %v4735
      %v4807 = vunpack.c.l.b16 %v4738
      %v4808 = vunpack.c.l.b16 %v4742
      %v4809 = vunpack.c.l.b16 %v4745
      %v4810 = vunpack.c.l.b16 %v4749
      %v4811 = vunpack.c.l.b16 %v4752
      %v4812 = vunpack.c.l.b16 %v4756
      %v4813 = vunpack.c.l.b16 %v4759
      %v4814 = vunpack.c.l.b16 %v4763
      %v4815 = vunpack.c.l.b16 %v4766
      %v4816 = vpack.c.b16 %v4785, %v4784
      %v4817 = vpack.c.b16 %v4787, %v4786
      %v4818 = vpack.c.b16 %v4789, %v4788
      %v4819 = vpack.c.b16 %v4791, %v4790
      %v4820 = vpack.c.b16 %v4793, %v4792
      %v4821 = vpack.c.b16 %v4795, %v4794
      %v4822 = vpack.c.b16 %v4797, %v4796
      %v4823 = vpack.c.b16 %v4799, %v4798
      %v4824 = vpack.c.b16 %v4801, %v4800
      %v4825 = vpack.c.b16 %v4803, %v4802
      %v4826 = vpack.c.b16 %v4805, %v4804
      %v4827 = vpack.c.b16 %v4807, %v4806
      %v4828 = vpack.c.b16 %v4809, %v4808
      %v4829 = vpack.c.b16 %v4811, %v4810
      %v4830 = vpack.c.b16 %v4813, %v4812
      %v4831 = vpack.c.b16 %v4815, %v4814
      %v4864 = vunpack.c.l.b16 %v4768
      %v4865 = vunpack.c.l.b16 %v4769
      %v4866 = vunpack.c.l.b16 %v4770
      %v4867 = vunpack.c.l.b16 %v4771
      %v4868 = vunpack.c.l.b16 %v4772
      %v4869 = vunpack.c.l.b16 %v4773
      %v4870 = vunpack.c.l.b16 %v4774
      %v4871 = vunpack.c.l.b16 %v4775
      %v4872 = vunpack.c.l.b16 %v4776
      %v4873 = vunpack.c.l.b16 %v4777
      %v4874 = vunpack.c.l.b16 %v4778
      %v4875 = vunpack.c.l.b16 %v4779
      %v4876 = vunpack.c.l.b16 %v4780
      %v4877 = vunpack.c.l.b16 %v4781
      %v4878 = vunpack.c.l.b16 %v4782
      %v4879 = vunpack.c.l.b16 %v4783
      %v4880 = vpack.c.b16 %v4865, %v4864
      %v4881 = vpack.c.b16 %v4867, %v4866
      %v4882 = vpack.c.b16 %v4869, %v4868
      %v4883 = vpack.c.b16 %v4871, %v4870
      %v4884 = vpack.c.b16 %v4873, %v4872
      %v4885 = vpack.c.b16 %v4875, %v4874
      %v4886 = vpack.c.b16 %v4877, %v4876
      %v4887 = vpack.c.b16 %v4879, %v4878
      %4896 = vmatprep.subr.bf16.mxu0 0
      %4897 = vmatpush1.bf16.msra.mxu0 %v4880
      %4898 = vmatprep.subr.bf16.mxu0 0
      %4899 = vmatpush1.bf16.msra.mxu0 %v4881
      %4900 = vmatprep.subr.bf16.mxu0 0
      %4901 = vmatpush1.bf16.msra.mxu0 %v4882
      %4902 = vmatprep.subr.bf16.mxu0 0
      %4903 = vmatpush1.bf16.msra.mxu0 %v4883
      %4904 = vmatprep.subr.bf16.mxu0 0
      %4905 = vmatpush1.bf16.msra.mxu0 %v4884
      %4906 = vmatprep.subr.bf16.mxu0 0
      %4907 = vmatpush1.bf16.msra.mxu0 %v4885
      %4908 = vmatprep.subr.bf16.mxu0 0
      %4909 = vmatpush1.bf16.msra.mxu0 %v4886
      %4910 = vmatprep.subr.bf16.mxu0 0
      %4911 = vmatpush1.bf16.msra.mxu0 %v4887
      %4912 = vmatprep.subr.bf16.mxu0 0
      %4913 = vmatpush1.bf16.msra.mxu0 0
      %4914 = vmatprep.subr.bf16.mxu0 0
      %4915 = vmatpush1.bf16.msra.mxu0 0
      %4916 = vmatprep.subr.bf16.mxu0 0
      %4917 = vmatpush1.bf16.msra.mxu0 0
      %4918 = vmatprep.subr.bf16.mxu0 0
      %4919 = vmatpush1.bf16.msra.mxu0 0
      %4920 = vmatprep.subr.bf16.mxu0 0
      %4921 = vmatpush1.bf16.msra.mxu0 0
      %4922 = vmatprep.subr.bf16.mxu0 0
      %4923 = vmatpush1.bf16.msra.mxu0 0
      %4924 = vmatprep.subr.bf16.mxu0 0
      %4925 = vmatpush1.bf16.msra.mxu0 0
      %4926 = vmatprep.subr.bf16.mxu0 0
      %4927 = vmatpush1.bf16.msra.mxu0 0
      %4928 = vmatprep.mubr.bf16.mxu0 0
      %4929 = vmatmul.mubr.bf16.gmra.mrb[0].mxu0 %v4816
      %v4930 = vpop.f32.mrb[0].mxu0
      %v4931 = vadd.f32 0.0, %v4930
      %v4932 = vpop.f32.mrb[0].mxu0
      %v4933 = vpop.f32.mrb[0].mxu0
      %v4934 = vadd.f32 0.0, %v4933
      %v4935 = vpop.f32.mrb[0].mxu0
      %4936 = vmatprep.mubr.bf16.mxu0 0
      %4937 = vmatmul.mubr.bf16.gmra.mrb[0].mxu0 %v4817
      %v4938 = vpop.f32.mrb[0].mxu0
      %v4939 = vadd.f32 0.0, %v4938
      %v4940 = vpop.f32.mrb[0].mxu0
      %v4941 = vpop.f32.mrb[0].mxu0
      %v4942 = vadd.f32 0.0, %v4941
      %v4943 = vpop.f32.mrb[0].mxu0
      %4944 = vmatprep.mubr.bf16.mxu0 0
      %4945 = vmatmul.mubr.bf16.gmra.mrb[0].mxu0 %v4818
      %v4946 = vpop.f32.mrb[0].mxu0
      %v4947 = vadd.f32 0.0, %v4946
      %v4948 = vpop.f32.mrb[0].mxu0
      %v4949 = vpop.f32.mrb[0].mxu0
      %v4950 = vadd.f32 0.0, %v4949
      %v4951 = vpop.f32.mrb[0].mxu0
      %4952 = vmatprep.mubr.bf16.mxu0 0
      %4953 = vmatmul.mubr.bf16.gmra.mrb[0].mxu0 %v4819
      %v4954 = vpop.f32.mrb[0].mxu0
      %v4955 = vadd.f32 0.0, %v4954
      %v4956 = vpop.f32.mrb[0].mxu0
      %v4957 = vpop.f32.mrb[0].mxu0
      %v4958 = vadd.f32 0.0, %v4957
      %v4959 = vpop.f32.mrb[0].mxu0
      %4960 = vmatprep.mubr.bf16.mxu0 0
      %4961 = vmatmul.mubr.bf16.gmra.mrb[0].mxu0 %v4820
      %v4962 = vpop.f32.mrb[0].mxu0
      %v4963 = vadd.f32 0.0, %v4962
      %v4964 = vpop.f32.mrb[0].mxu0
      %v4965 = vpop.f32.mrb[0].mxu0
      %v4966 = vadd.f32 0.0, %v4965
      %v4967 = vpop.f32.mrb[0].mxu0
      %4968 = vmatprep.mubr.bf16.mxu0 0
      %4969 = vmatmul.mubr.bf16.gmra.mrb[0].mxu0 %v4821
      %v4970 = vpop.f32.mrb[0].mxu0
      %v4971 = vadd.f32 0.0, %v4970
      %v4972 = vpop.f32.mrb[0].mxu0
      %v4973 = vpop.f32.mrb[0].mxu0
      %v4974 = vadd.f32 0.0, %v4973
      %v4975 = vpop.f32.mrb[0].mxu0
      %4976 = vmatprep.mubr.bf16.mxu0 0
      %4977 = vmatmul.mubr.bf16.gmra.mrb[0].mxu0 %v4822
      %v4978 = vpop.f32.mrb[0].mxu0
      %v4979 = vadd.f32 0.0, %v4978
      %v4980 = vpop.f32.mrb[0].mxu0
      %v4981 = vpop.f32.mrb[0].mxu0
      %v4982 = vadd.f32 0.0, %v4981
      %v4983 = vpop.f32.mrb[0].mxu0
      %4984 = vmatprep.mubr.bf16.mxu0 0
      %4985 = vmatmul.mubr.bf16.gmra.mrb[0].mxu0 %v4823
      %v4986 = vpop.f32.mrb[0].mxu0
      %v4987 = vadd.f32 0.0, %v4986
      %v4988 = vpop.f32.mrb[0].mxu0
      %v4989 = vpop.f32.mrb[0].mxu0
      %v4990 = vadd.f32 0.0, %v4989
      %v4991 = vpop.f32.mrb[0].mxu0
      %4992 = vmatprep.mubr.bf16.mxu0 0
      %4993 = vmatmul.mubr.bf16.gmra.mrb[0].mxu0 %v4824
      %v4994 = vpop.f32.mrb[0].mxu0
      %v4995 = vadd.f32 0.0, %v4994
      %v4996 = vpop.f32.mrb[0].mxu0
      %v4997 = vpop.f32.mrb[0].mxu0
      %v4998 = vadd.f32 0.0, %v4997
      %v4999 = vpop.f32.mrb[0].mxu0
      %5000 = vmatprep.mubr.bf16.mxu0 0
      %5001 = vmatmul.mubr.bf16.gmra.mrb[0].mxu0 %v4825
      %v5002 = vpop.f32.mrb[0].mxu0
      %v5003 = vadd.f32 0.0, %v5002
      %v5004 = vpop.f32.mrb[0].mxu0
      %v5005 = vpop.f32.mrb[0].mxu0
      %v5006 = vadd.f32 0.0, %v5005
      %v5007 = vpop.f32.mrb[0].mxu0
      %5008 = vmatprep.mubr.bf16.mxu0 0
      %5009 = vmatmul.mubr.bf16.gmra.mrb[0].mxu0 %v4826
      %v5010 = vpop.f32.mrb[0].mxu0
      %v5011 = vadd.f32 0.0, %v5010
      %v5012 = vpop.f32.mrb[0].mxu0
      %v5013 = vpop.f32.mrb[0].mxu0
      %v5014 = vadd.f32 0.0, %v5013
      %v5015 = vpop.f32.mrb[0].mxu0
      %5016 = vmatprep.mubr.bf16.mxu0 0
      %5017 = vmatmul.mubr.bf16.gmra.mrb[0].mxu0 %v4827
      %v5018 = vpop.f32.mrb[0].mxu0
      %v5019 = vadd.f32 0.0, %v5018
      %v5020 = vpop.f32.mrb[0].mxu0
      %v5021 = vpop.f32.mrb[0].mxu0
      %v5022 = vadd.f32 0.0, %v5021
      %v5023 = vpop.f32.mrb[0].mxu0
      %5024 = vmatprep.mubr.bf16.mxu0 0
      %5025 = vmatmul.mubr.bf16.gmra.mrb[0].mxu0 %v4828
      %v5026 = vpop.f32.mrb[0].mxu0
      %v5027 = vadd.f32 0.0, %v5026
      %v5028 = vpop.f32.mrb[0].mxu0
      %v5029 = vpop.f32.mrb[0].mxu0
      %v5030 = vadd.f32 0.0, %v5029
      %v5031 = vpop.f32.mrb[0].mxu0
      %5032 = vmatprep.mubr.bf16.mxu0 0
      %5033 = vmatmul.mubr.bf16.gmra.mrb[0].mxu0 %v4829
      %v5034 = vpop.f32.mrb[0].mxu0
      %v5035 = vadd.f32 0.0, %v5034
      %v5036 = vpop.f32.mrb[0].mxu0
      %v5037 = vpop.f32.mrb[0].mxu0
      %v5038 = vadd.f32 0.0, %v5037
      %v5039 = vpop.f32.mrb[0].mxu0
      %5040 = vmatprep.mubr.bf16.mxu0 0
      %5041 = vmatmul.mubr.bf16.gmra.mrb[0].mxu0 %v4830
      %v5042 = vpop.f32.mrb[0].mxu0
      %v5043 = vadd.f32 0.0, %v5042
      %v5044 = vpop.f32.mrb[0].mxu0
      %v5045 = vpop.f32.mrb[0].mxu0
      %v5046 = vadd.f32 0.0, %v5045
      %v5047 = vpop.f32.mrb[0].mxu0
      %5048 = vmatprep.mubr.bf16.mxu0 0
      %5049 = vmatmul.mubr.bf16.gmra.mrb[0].mxu0 %v4831
      %v5050 = vpop.f32.mrb[0].mxu0
      %v5051 = vadd.f32 0.0, %v5050
      %v5052 = vpop.f32.mrb[0].mxu0
      %v5053 = vpop.f32.mrb[0].mxu0
      %v5054 = vadd.f32 0.0, %v5053
      %v5055 = vpop.f32.mrb[0].mxu0
      %5056 = vdwg.mxu0
      %v5057 = vadd.f32 %v4559, %v4931
      %v5058 = vadd.f32 %v4560, %v4934
      %v5059 = vadd.f32 %v4561, %v4939
      %v5060 = vadd.f32 %v4562, %v4942
      %v5061 = vadd.f32 %v4563, %v4947
      %v5062 = vadd.f32 %v4564, %v4950
      %v5063 = vadd.f32 %v4565, %v4955
      %v5064 = vadd.f32 %v4566, %v4958
      %v5065 = vadd.f32 %v4567, %v4963
      %v5066 = vadd.f32 %v4568, %v4966
      %v5067 = vadd.f32 %v4569, %v4971
      %v5068 = vadd.f32 %v4570, %v4974
      %v5069 = vadd.f32 %v4571, %v4979
      %v5070 = vadd.f32 %v4572, %v4982
      %v5071 = vadd.f32 %v4573, %v4987
      %v5072 = vadd.f32 %v4574, %v4990
      %v5073 = vadd.f32 %v4575, %v4995
      %v5074 = vadd.f32 %v4576, %v4998
      %v5075 = vadd.f32 %v4577, %v5003
      %v5076 = vadd.f32 %v4578, %v5006
      %v5077 = vadd.f32 %v4579, %v5011
      %v5078 = vadd.f32 %v4580, %v5014
      %v5079 = vadd.f32 %v4581, %v5019
      %v5080 = vadd.f32 %v4582, %v5022
      %v5081 = vadd.f32 %v4583, %v5027
      %v5082 = vadd.f32 %v4584, %v5030
      %v5083 = vadd.f32 %v4585, %v5035
      %v5084 = vadd.f32 %v4586, %v5038
      %v5085 = vadd.f32 %v4587, %v5043
      %v5086 = vadd.f32 %v4588, %v5046
      %v5087 = vadd.f32 %v4589, %v5051
      %v5088 = vadd.f32 %v4590, %v5054
      %v5089 = vld [vmem:[%s2] sm:$0x1]
      %v5091 = vlaneseq
      %v5092 = vshrl.u32 %v5091, 7
      %v5093 = vsub.s32 0, %v5092
      %v5094 = vrot.slane %v5089, %v5093
      %v5096 = vadd.f32 %v5057, %v5094
      %v5097 = vadd.f32 %v5058, %v5094
      %v5098 = vadd.f32 %v5059, %v5094
      %v5099 = vadd.f32 %v5060, %v5094
      %v5100 = vadd.f32 %v5061, %v5094
      %v5101 = vadd.f32 %v5062, %v5094
      %v5102 = vadd.f32 %v5063, %v5094
      %v5103 = vadd.f32 %v5064, %v5094
      %v5104 = vadd.f32 %v5065, %v5094
      %v5105 = vadd.f32 %v5066, %v5094
      %v5106 = vadd.f32 %v5067, %v5094
      %v5107 = vadd.f32 %v5068, %v5094
      %v5108 = vadd.f32 %v5069, %v5094
      %v5109 = vadd.f32 %v5070, %v5094
      %v5110 = vadd.f32 %v5071, %v5094
      %v5111 = vadd.f32 %v5072, %v5094
      %v5112 = vadd.f32 %v5073, %v5094
      %v5113 = vadd.f32 %v5074, %v5094
      %v5114 = vadd.f32 %v5075, %v5094
      %v5115 = vadd.f32 %v5076, %v5094
      %v5116 = vadd.f32 %v5077, %v5094
      %v5117 = vadd.f32 %v5078, %v5094
      %v5118 = vadd.f32 %v5079, %v5094
      %v5119 = vadd.f32 %v5080, %v5094
      %v5120 = vadd.f32 %v5081, %v5094
      %v5121 = vadd.f32 %v5082, %v5094
      %v5122 = vadd.f32 %v5083, %v5094
      %v5123 = vadd.f32 %v5084, %v5094
      %v5124 = vadd.f32 %v5085, %v5094
      %v5125 = vadd.f32 %v5086, %v5094
      %v5126 = vadd.f32 %v5087, %v5094
      %v5127 = vadd.f32 %v5088, %v5094
      %v5128 = vmax.f32 %v5096, 0.0
      %v5129 = vmax.f32 %v5097, 0.0
      %v5130 = vmax.f32 %v5098, 0.0
      %v5131 = vmax.f32 %v5099, 0.0
      %v5132 = vmax.f32 %v5100, 0.0
      %v5133 = vmax.f32 %v5101, 0.0
      %v5134 = vmax.f32 %v5102, 0.0
      %v5135 = vmax.f32 %v5103, 0.0
      %v5136 = vmax.f32 %v5104, 0.0
      %v5137 = vmax.f32 %v5105, 0.0
      %v5138 = vmax.f32 %v5106, 0.0
      %v5139 = vmax.f32 %v5107, 0.0
      %v5140 = vmax.f32 %v5108, 0.0
      %v5141 = vmax.f32 %v5109, 0.0
      %v5142 = vmax.f32 %v5110, 0.0
      %v5143 = vmax.f32 %v5111, 0.0
      %v5144 = vmax.f32 %v5112, 0.0
      %v5145 = vmax.f32 %v5113, 0.0
      %v5146 = vmax.f32 %v5114, 0.0
      %v5147 = vmax.f32 %v5115, 0.0
      %v5148 = vmax.f32 %v5116, 0.0
      %v5149 = vmax.f32 %v5117, 0.0
      %v5150 = vmax.f32 %v5118, 0.0
      %v5151 = vmax.f32 %v5119, 0.0
      %v5152 = vmax.f32 %v5120, 0.0
      %v5153 = vmax.f32 %v5121, 0.0
      %v5154 = vmax.f32 %v5122, 0.0
      %v5155 = vmax.f32 %v5123, 0.0
      %v5156 = vmax.f32 %v5124, 0.0
      %v5157 = vmax.f32 %v5125, 0.0
      %v5158 = vmax.f32 %v5126, 0.0
      %v5159 = vmax.f32 %v5127, 0.0
      %5160 = vst [vmem:[#allocation2] sm:$0xf] 0
      %5161 = vst [vmem:[#allocation2 + $0x4] sm:$0xf] 0
      %5162 = vst [vmem:[#allocation2 + $0x8] sm:$0x1] 0
      %5163 = vst [vmem:[#allocation2 + $0xc] sm:$0xf] 0
      %5164 = vst [vmem:[#allocation2 + $0x10] sm:$0xf] 0
      %5165 = vst [vmem:[#allocation2 + $0x14] sm:$0x1] 0
      %5166 = vst [vmem:[#allocation2 + $0x18] sm:$0xf] 0
      %5167 = vst [vmem:[#allocation2 + $0x1c] sm:$0xf] 0
      %5168 = vst [vmem:[#allocation2 + $0x20] sm:$0x1] 0
      %5169 = vst [vmem:[#allocation2 + $0x24] sm:$0xf] 0
      %5170 = vst [vmem:[#allocation2 + $0x28] sm:$0xf] 0
      %5171 = vst [vmem:[#allocation2 + $0x2c] sm:$0x1] 0
      %5172 = vst [vmem:[#allocation2 + $0x30] sm:$0xf] 0
      %5173 = vst [vmem:[#allocation2 + $0x34] sm:$0xf] 0
      %5174 = vst [vmem:[#allocation2 + $0x38] sm:$0x1] 0
      %5175 = vst [vmem:[#allocation2 + $0x3c] sm:$0xf] 0
      %5176 = vst [vmem:[#allocation2 + $0x40] sm:$0xf] 0
      %5177 = vst [vmem:[#allocation2 + $0x44] sm:$0x1] 0
      %5178 = vst [vmem:[#allocation2 + $0x48] sm:$0xf] 0
      %5179 = vst [vmem:[#allocation2 + $0x4c] sm:$0xf] 0
      %5180 = vst [vmem:[#allocation2 + $0x50] sm:$0x1] 0
      %5181 = vst [vmem:[#allocation2 + $0x54] sm:$0xf] 0
      %5182 = vst [vmem:[#allocation2 + $0x58] sm:$0xf] 0
      %5183 = vst [vmem:[#allocation2 + $0x5c] sm:$0x1] 0
      %5184 = vst [vmem:[#allocation2 + $0x60] sm:$0xf] 0
      %5185 = vst [vmem:[#allocation2 + $0x64] sm:$0xf] 0
      %5186 = vst [vmem:[#allocation2 + $0x68] sm:$0x1] 0
      %5187 = vst [vmem:[#allocation2 + $0x6c] sm:$0xf] 0
      %5188 = vst [vmem:[#allocation2 + $0x70] sm:$0xf] 0
      %5189 = vst [vmem:[#allocation2 + $0x74] sm:$0x1] 0
      %5190 = vst [vmem:[#allocation2 + $0x78] sm:$0xf] 0
      %5191 = vst [vmem:[#allocation2 + $0x7c] sm:$0xf] 0
      %5192 = vst [vmem:[#allocation2 + $0x80] sm:$0x1] 0
      %5193 = vst [vmem:[#allocation2 + $0x84] sm:$0xf] 0
      %5194 = vst [vmem:[#allocation2 + $0x88] sm:$0xf] 0
      %5195 = vst [vmem:[#allocation2 + $0x8c] sm:$0x1] 0
      %5196 = vst [vmem:[#allocation2 + $0x90] sm:$0xf] 0
      %5197 = vst [vmem:[#allocation2 + $0x94] sm:$0xf] 0
      %5198 = vst [vmem:[#allocation2 + $0x98] sm:$0x1] 0
      %5199 = vst [vmem:[#allocation2 + $0x9c] sm:$0xf] 0
      %5200 = vst [vmem:[#allocation2 + $0xa0] sm:$0xf] 0
      %5201 = vst [vmem:[#allocation2 + $0xa4] sm:$0x1] 0
      %5202 = vst [vmem:[#allocation2 + $0xa8] sm:$0xf] 0
      %5203 = vst [vmem:[#allocation2 + $0xac] sm:$0xf] 0
      %5204 = vst [vmem:[#allocation2 + $0xb0] sm:$0x1] 0
      %5205 = vst [vmem:[#allocation2 + $0xb4] sm:$0xf] 0
      %5206 = vst [vmem:[#allocation2 + $0xb8] sm:$0xf] 0
      %5207 = vst [vmem:[#allocation2 + $0xbc] sm:$0x1] 0
      %5208 = vst [vmem:[#allocation2 + $0xc0] sm:$0xf] 0
      %5209 = vst [vmem:[#allocation2 + $0xc4] sm:$0xf] 0
      %5210 = vst [vmem:[#allocation2 + $0xc8] sm:$0x1] 0
      %5211 = vst [vmem:[#allocation2 + $0xcc] sm:$0xf] 0
      %5212 = vst [vmem:[#allocation2 + $0xd0] sm:$0xf] 0
      %5213 = vst [vmem:[#allocation2 + $0xd4] sm:$0x1] 0
      %v5214 = vpack.c.bf16 %v5129, %v5128
      %v5215 = vpack.c.bf16 %v5131, %v5130
      %v5216 = vpack.c.bf16 %v5133, %v5132
      %v5217 = vpack.c.bf16 %v5135, %v5134
      %v5218 = vpack.c.bf16 %v5137, %v5136
      %v5219 = vpack.c.bf16 %v5139, %v5138
      %v5220 = vpack.c.bf16 %v5141, %v5140
      %v5221 = vpack.c.bf16 %v5143, %v5142
      %v5222 = vpack.c.bf16 %v5145, %v5144
      %v5223 = vpack.c.bf16 %v5147, %v5146
      %v5224 = vpack.c.bf16 %v5149, %v5148
      %v5225 = vpack.c.bf16 %v5151, %v5150
      %v5226 = vpack.c.bf16 %v5153, %v5152
      %v5227 = vpack.c.bf16 %v5155, %v5154
      %v5228 = vpack.c.bf16 %v5157, %v5156
      %v5229 = vpack.c.bf16 %v5159, %v5158
      %v5246 = vunpack.c.l.b16 %v5214
      %v5247 = vunpack.c.h.b16 %v5214
      %v5248 = vunpack.c.l.b16 %v5215
      %v5249 = vunpack.c.h.b16 %v5215
      %v5250 = vunpack.c.l.b16 %v5216
      %v5251 = vunpack.c.h.b16 %v5216
      %v5252 = vunpack.c.l.b16 %v5217
      %v5253 = vunpack.c.h.b16 %v5217
      %v5254 = vunpack.c.l.b16 %v5218
      %v5255 = vunpack.c.h.b16 %v5218
      %v5256 = vunpack.c.l.b16 %v5219
      %v5257 = vunpack.c.h.b16 %v5219
      %v5258 = vunpack.c.l.b16 %v5220
      %v5259 = vunpack.c.h.b16 %v5220
      %v5260 = vunpack.c.l.b16 %v5221
      %v5261 = vunpack.c.h.b16 %v5221
      %v5262 = vunpack.c.l.b16 %v5222
      %v5263 = vunpack.c.h.b16 %v5222
      %v5264 = vunpack.c.l.b16 %v5223
      %v5265 = vunpack.c.h.b16 %v5223
      %v5266 = vunpack.c.l.b16 %v5224
      %v5267 = vunpack.c.h.b16 %v5224
      %v5268 = vunpack.c.l.b16 %v5225
      %v5269 = vunpack.c.h.b16 %v5225
      %v5270 = vunpack.c.l.b16 %v5226
      %v5271 = vunpack.c.h.b16 %v5226
      %v5272 = vunpack.c.l.b16 %v5227
      %v5273 = vunpack.c.h.b16 %v5227
      %v5274 = vunpack.c.l.b16 %v5228
      %v5275 = vunpack.c.h.b16 %v5228
      %v5276 = vunpack.c.l.b16 %v5229
      %v5277 = vunpack.c.h.b16 %v5229
      %v5278 = vpack.c.b16 %v5246, %v5246
      %v5279 = vpack.c.b16 %v5247, %v5247
      %v5280 = vpack.c.b16 %v5248, %v5248
      %v5281 = vpack.c.b16 %v5249, %v5249
      %v5282 = vpack.c.b16 %v5250, %v5250
      %v5283 = vpack.c.b16 %v5251, %v5251
      %v5284 = vpack.c.b16 %v5252, %v5252
      %v5285 = vpack.c.b16 %v5253, %v5253
      %v5286 = vpack.c.b16 %v5254, %v5254
      %v5287 = vpack.c.b16 %v5255, %v5255
      %v5288 = vpack.c.b16 %v5256, %v5256
      %v5289 = vpack.c.b16 %v5257, %v5257
      %v5290 = vpack.c.b16 %v5258, %v5258
      %v5291 = vpack.c.b16 %v5259, %v5259
      %v5292 = vpack.c.b16 %v5260, %v5260
      %v5293 = vpack.c.b16 %v5261, %v5261
      %v5294 = vpack.c.b16 %v5262, %v5262
      %v5295 = vpack.c.b16 %v5263, %v5263
      %v5296 = vpack.c.b16 %v5264, %v5264
      %v5297 = vpack.c.b16 %v5265, %v5265
      %v5298 = vpack.c.b16 %v5266, %v5266
      %v5299 = vpack.c.b16 %v5267, %v5267
      %v5300 = vpack.c.b16 %v5268, %v5268
      %v5301 = vpack.c.b16 %v5269, %v5269
      %v5302 = vpack.c.b16 %v5270, %v5270
      %v5303 = vpack.c.b16 %v5271, %v5271
      %v5304 = vpack.c.b16 %v5272, %v5272
      %v5305 = vpack.c.b16 %v5273, %v5273
      %v5306 = vpack.c.b16 %v5274, %v5274
      %v5307 = vpack.c.b16 %v5275, %v5275
      %v5308 = vpack.c.b16 %v5276, %v5276
      %v5309 = vpack.c.b16 %v5277, %v5277
      %vm5310 = vsmask.f32 256
      %vm5311 = vsmask.f32 4368
      %vm5312 = vmor %vm5310, %vm5311
      %v5314 = vshrl.u32 %v5278, 16
      %v5316 = vrot.slane %v5314, 7
      %v5317 = vshll.u32 %v5278, 16
      %v5319 = vor.u32 %v5316, %v5317
      %v5320 = vrot.slane %v5316, 4
      %v5322 = vshrl.u32 %v5279, 16
      %v5324 = vrot.slane %v5322, 7
      %v5325 = vshll.u32 %v5279, 16
      %v5327 = vor.u32 %v5324, %v5325
      %v5328 = vsel %vm5312, %v5320, %v5327
      %v5329 = vrot.slane %v5324, 4
      %v5331 = vshrl.u32 %v5280, 16
      %v5333 = vrot.slane %v5331, 7
      %v5334 = vshll.u32 %v5280, 16
      %v5336 = vor.u32 %v5333, %v5334
      %v5337 = vrot.slane %v5333, 4
      %v5339 = vshrl.u32 %v5281, 16
      %v5341 = vrot.slane %v5339, 7
      %v5342 = vshll.u32 %v5281, 16
      %v5344 = vor.u32 %v5341, %v5342
      %v5345 = vsel %vm5312, %v5337, %v5344
      %v5346 = vrot.slane %v5341, 4
      %v5348 = vshrl.u32 %v5282, 16
      %v5350 = vrot.slane %v5348, 7
      %v5351 = vshll.u32 %v5282, 16
      %v5353 = vor.u32 %v5350, %v5351
      %v5354 = vrot.slane %v5350, 4
      %v5356 = vshrl.u32 %v5283, 16
      %v5358 = vrot.slane %v5356, 7
      %v5359 = vshll.u32 %v5283, 16
      %v5361 = vor.u32 %v5358, %v5359
      %v5362 = vsel %vm5312, %v5354, %v5361
      %v5363 = vrot.slane %v5358, 4
      %v5365 = vshrl.u32 %v5284, 16
      %v5367 = vrot.slane %v5365, 7
      %v5368 = vshll.u32 %v5284, 16
      %v5370 = vor.u32 %v5367, %v5368
      %v5371 = vrot.slane %v5367, 4
      %v5373 = vshrl.u32 %v5285, 16
      %v5375 = vrot.slane %v5373, 7
      %v5376 = vshll.u32 %v5285, 16
      %v5378 = vor.u32 %v5375, %v5376
      %v5379 = vsel %vm5312, %v5371, %v5378
      %v5380 = vrot.slane %v5375, 4
      %v5382 = vshrl.u32 %v5286, 16
      %v5384 = vrot.slane %v5382, 7
      %v5385 = vshll.u32 %v5286, 16
      %v5387 = vor.u32 %v5384, %v5385
      %v5388 = vrot.slane %v5384, 4
      %v5390 = vshrl.u32 %v5287, 16
      %v5392 = vrot.slane %v5390, 7
      %v5393 = vshll.u32 %v5287, 16
      %v5395 = vor.u32 %v5392, %v5393
      %v5396 = vsel %vm5312, %v5388, %v5395
      %v5397 = vrot.slane %v5392, 4
      %v5399 = vshrl.u32 %v5288, 16
      %v5401 = vrot.slane %v5399, 7
      %v5402 = vshll.u32 %v5288, 16
      %v5404 = vor.u32 %v5401, %v5402
      %v5405 = vrot.slane %v5401, 4
      %v5407 = vshrl.u32 %v5289, 16
      %v5409 = vrot.slane %v5407, 7
      %v5410 = vshll.u32 %v5289, 16
      %v5412 = vor.u32 %v5409, %v5410
      %v5413 = vsel %vm5312, %v5405, %v5412
      %v5414 = vrot.slane %v5409, 4
      %v5416 = vshrl.u32 %v5290, 16
      %v5418 = vrot.slane %v5416, 7
      %v5419 = vshll.u32 %v5290, 16
      %v5421 = vor.u32 %v5418, %v5419
      %v5422 = vrot.slane %v5418, 4
      %v5424 = vshrl.u32 %v5291, 16
      %v5426 = vrot.slane %v5424, 7
      %v5427 = vshll.u32 %v5291, 16
      %v5429 = vor.u32 %v5426, %v5427
      %v5430 = vsel %vm5312, %v5422, %v5429
      %v5431 = vrot.slane %v5426, 4
      %v5433 = vshrl.u32 %v5292, 16
      %v5435 = vrot.slane %v5433, 7
      %v5436 = vshll.u32 %v5292, 16
      %v5438 = vor.u32 %v5435, %v5436
      %v5439 = vrot.slane %v5435, 4
      %v5441 = vshrl.u32 %v5293, 16
      %v5443 = vrot.slane %v5441, 7
      %v5444 = vshll.u32 %v5293, 16
      %v5446 = vor.u32 %v5443, %v5444
      %v5447 = vsel %vm5312, %v5439, %v5446
      %v5448 = vrot.slane %v5443, 4
      %v5450 = vshrl.u32 %v5294, 16
      %v5452 = vrot.slane %v5450, 7
      %v5453 = vshll.u32 %v5294, 16
      %v5455 = vor.u32 %v5452, %v5453
      %v5456 = vrot.slane %v5452, 4
      %v5458 = vshrl.u32 %v5295, 16
      %v5460 = vrot.slane %v5458, 7
      %v5461 = vshll.u32 %v5295, 16
      %v5463 = vor.u32 %v5460, %v5461
      %v5464 = vsel %vm5312, %v5456, %v5463
      %v5465 = vrot.slane %v5460, 4
      %v5467 = vshrl.u32 %v5296, 16
      %v5469 = vrot.slane %v5467, 7
      %v5470 = vshll.u32 %v5296, 16
      %v5472 = vor.u32 %v5469, %v5470
      %v5473 = vrot.slane %v5469, 4
      %v5475 = vshrl.u32 %v5297, 16
      %v5477 = vrot.slane %v5475, 7
      %v5478 = vshll.u32 %v5297, 16
      %v5480 = vor.u32 %v5477, %v5478
      %v5481 = vsel %vm5312, %v5473, %v5480
      %v5482 = vrot.slane %v5477, 4
      %v5484 = vshrl.u32 %v5298, 16
      %v5486 = vrot.slane %v5484, 7
      %v5487 = vshll.u32 %v5298, 16
      %v5489 = vor.u32 %v5486, %v5487
      %v5490 = vrot.slane %v5486, 4
      %v5492 = vshrl.u32 %v5299, 16
      %v5494 = vrot.slane %v5492, 7
      %v5495 = vshll.u32 %v5299, 16
      %v5497 = vor.u32 %v5494, %v5495
      %v5498 = vsel %vm5312, %v5490, %v5497
      %v5499 = vrot.slane %v5494, 4
      %v5501 = vshrl.u32 %v5300, 16
      %v5503 = vrot.slane %v5501, 7
      %v5504 = vshll.u32 %v5300, 16
      %v5506 = vor.u32 %v5503, %v5504
      %v5507 = vrot.slane %v5503, 4
      %v5509 = vshrl.u32 %v5301, 16
      %v5511 = vrot.slane %v5509, 7
      %v5512 = vshll.u32 %v5301, 16
      %v5514 = vor.u32 %v5511, %v5512
      %v5515 = vsel %vm5312, %v5507, %v5514
      %v5516 = vrot.slane %v5511, 4
      %v5518 = vshrl.u32 %v5302, 16
      %v5520 = vrot.slane %v5518, 7
      %v5521 = vshll.u32 %v5302, 16
      %v5523 = vor.u32 %v5520, %v5521
      %v5524 = vrot.slane %v5520, 4
      %v5526 = vshrl.u32 %v5303, 16
      %v5528 = vrot.slane %v5526, 7
      %v5529 = vshll.u32 %v5303, 16
      %v5531 = vor.u32 %v5528, %v5529
      %v5532 = vsel %vm5312, %v5524, %v5531
      %v5533 = vrot.slane %v5528, 4
      %v5535 = vshrl.u32 %v5304, 16
      %v5537 = vrot.slane %v5535, 7
      %v5538 = vshll.u32 %v5304, 16
      %v5540 = vor.u32 %v5537, %v5538
      %v5541 = vrot.slane %v5537, 4
      %v5543 = vshrl.u32 %v5305, 16
      %v5545 = vrot.slane %v5543, 7
      %v5546 = vshll.u32 %v5305, 16
      %v5548 = vor.u32 %v5545, %v5546
      %v5549 = vsel %vm5312, %v5541, %v5548
      %v5550 = vrot.slane %v5545, 4
      %v5552 = vshrl.u32 %v5306, 16
      %v5554 = vrot.slane %v5552, 7
      %v5555 = vshll.u32 %v5306, 16
      %v5557 = vor.u32 %v5554, %v5555
      %v5558 = vrot.slane %v5554, 4
      %v5560 = vshrl.u32 %v5307, 16
      %v5562 = vrot.slane %v5560, 7
      %v5563 = vshll.u32 %v5307, 16
      %v5565 = vor.u32 %v5562, %v5563
      %v5566 = vsel %vm5312, %v5558, %v5565
      %v5567 = vrot.slane %v5562, 4
      %v5569 = vshrl.u32 %v5308, 16
      %v5571 = vrot.slane %v5569, 7
      %v5572 = vshll.u32 %v5308, 16
      %v5574 = vor.u32 %v5571, %v5572
      %v5575 = vrot.slane %v5571, 4
      %v5577 = vshrl.u32 %v5309, 16
      %v5579 = vrot.slane %v5577, 7
      %v5580 = vshll.u32 %v5309, 16
      %v5582 = vor.u32 %v5579, %v5580
      %v5583 = vsel %vm5312, %v5575, %v5582
      %v5584 = vrot.slane %v5579, 4
      %s5633 = scalar_lea.vmem [#allocation2], 12
      %vm5634 = vcmask 1043456
      %vm5635 = vsmask.f32 7938
      %vm5636 = vmand %vm5634, %vm5635
      %v5637 = vld [vmem:[%s5633] sm:$0xf]
      %v5638 = vsel %vm5636, %v5319, %v5637
      %5639 = vst [vmem:[%s5633] sm:$0xf] %v5638
      %5640 = vst [vmem:[%s5633 + $0x4] sm:$0xf] %v5328
      %vm5641 = vcmask 1040384
      %vm5642 = vmand %vm5641, %vm5310
      %v5643 = vld [vmem:[%s5633 + $0x8] sm:$0x1]
      %v5644 = vsel %vm5642, %v5329, %v5643
      %5645 = vst [vmem:[%s5633 + $0x8] sm:$0x1] %v5644
      %v5646 = vld [vmem:[%s5633 + $0xc] sm:$0xf]
      %v5647 = vsel %vm5636, %v5336, %v5646
      %5648 = vst [vmem:[%s5633 + $0xc] sm:$0xf] %v5647
      %5649 = vst [vmem:[%s5633 + $0x10] sm:$0xf] %v5345
      %v5650 = vld [vmem:[%s5633 + $0x14] sm:$0x1]
      %v5651 = vsel %vm5642, %v5346, %v5650
      %5652 = vst [vmem:[%s5633 + $0x14] sm:$0x1] %v5651
      %v5653 = vld [vmem:[%s5633 + $0x18] sm:$0xf]
      %v5654 = vsel %vm5636, %v5353, %v5653
      %5655 = vst [vmem:[%s5633 + $0x18] sm:$0xf] %v5654
      %5656 = vst [vmem:[%s5633 + $0x1c] sm:$0xf] %v5362
      %v5657 = vld [vmem:[%s5633 + $0x20] sm:$0x1]
      %v5658 = vsel %vm5642, %v5363, %v5657
      %5659 = vst [vmem:[%s5633 + $0x20] sm:$0x1] %v5658
      %v5660 = vld [vmem:[%s5633 + $0x24] sm:$0xf]
      %v5661 = vsel %vm5636, %v5370, %v5660
      %5662 = vst [vmem:[%s5633 + $0x24] sm:$0xf] %v5661
      %5663 = vst [vmem:[%s5633 + $0x28] sm:$0xf] %v5379
      %v5664 = vld [vmem:[%s5633 + $0x2c] sm:$0x1]
      %v5665 = vsel %vm5642, %v5380, %v5664
      %5666 = vst [vmem:[%s5633 + $0x2c] sm:$0x1] %v5665
      %v5667 = vld [vmem:[%s5633 + $0x30] sm:$0xf]
      %v5668 = vsel %vm5636, %v5387, %v5667
      %5669 = vst [vmem:[%s5633 + $0x30] sm:$0xf] %v5668
      %5670 = vst [vmem:[%s5633 + $0x34] sm:$0xf] %v5396
      %v5671 = vld [vmem:[%s5633 + $0x38] sm:$0x1]
      %v5672 = vsel %vm5642, %v5397, %v5671
      %5673 = vst [vmem:[%s5633 + $0x38] sm:$0x1] %v5672
      %v5674 = vld [vmem:[%s5633 + $0x3c] sm:$0xf]
      %v5675 = vsel %vm5636, %v5404, %v5674
      %5676 = vst [vmem:[%s5633 + $0x3c] sm:$0xf] %v5675
      %5677 = vst [vmem:[%s5633 + $0x40] sm:$0xf] %v5413
      %v5678 = vld [vmem:[%s5633 + $0x44] sm:$0x1]
      %v5679 = vsel %vm5642, %v5414, %v5678
      %5680 = vst [vmem:[%s5633 + $0x44] sm:$0x1] %v5679
      %v5681 = vld [vmem:[%s5633 + $0x48] sm:$0xf]
      %v5682 = vsel %vm5636, %v5421, %v5681
      %5683 = vst [vmem:[%s5633 + $0x48] sm:$0xf] %v5682
      %5684 = vst [vmem:[%s5633 + $0x4c] sm:$0xf] %v5430
      %v5685 = vld [vmem:[%s5633 + $0x50] sm:$0x1]
      %v5686 = vsel %vm5642, %v5431, %v5685
      %5687 = vst [vmem:[%s5633 + $0x50] sm:$0x1] %v5686
      %v5688 = vld [vmem:[%s5633 + $0x54] sm:$0xf]
      %v5689 = vsel %vm5636, %v5438, %v5688
      %5690 = vst [vmem:[%s5633 + $0x54] sm:$0xf] %v5689
      %5691 = vst [vmem:[%s5633 + $0x58] sm:$0xf] %v5447
      %v5692 = vld [vmem:[%s5633 + $0x5c] sm:$0x1]
      %v5693 = vsel %vm5642, %v5448, %v5692
      %5694 = vst [vmem:[%s5633 + $0x5c] sm:$0x1] %v5693
      %v5695 = vld [vmem:[%s5633 + $0x60] sm:$0xf]
      %v5696 = vsel %vm5636, %v5455, %v5695
      %5697 = vst [vmem:[%s5633 + $0x60] sm:$0xf] %v5696
      %5698 = vst [vmem:[%s5633 + $0x64] sm:$0xf] %v5464
      %v5699 = vld [vmem:[%s5633 + $0x68] sm:$0x1]
      %v5700 = vsel %vm5642, %v5465, %v5699
      %5701 = vst [vmem:[%s5633 + $0x68] sm:$0x1] %v5700
      %v5702 = vld [vmem:[%s5633 + $0x6c] sm:$0xf]
      %v5703 = vsel %vm5636, %v5472, %v5702
      %5704 = vst [vmem:[%s5633 + $0x6c] sm:$0xf] %v5703
      %5705 = vst [vmem:[%s5633 + $0x70] sm:$0xf] %v5481
      %v5706 = vld [vmem:[%s5633 + $0x74] sm:$0x1]
      %v5707 = vsel %vm5642, %v5482, %v5706
      %5708 = vst [vmem:[%s5633 + $0x74] sm:$0x1] %v5707
      %v5709 = vld [vmem:[%s5633 + $0x78] sm:$0xf]
      %v5710 = vsel %vm5636, %v5489, %v5709
      %5711 = vst [vmem:[%s5633 + $0x78] sm:$0xf] %v5710
      %5712 = vst [vmem:[%s5633 + $0x7c] sm:$0xf] %v5498
      %v5713 = vld [vmem:[%s5633 + $0x80] sm:$0x1]
      %v5714 = vsel %vm5642, %v5499, %v5713
      %5715 = vst [vmem:[%s5633 + $0x80] sm:$0x1] %v5714
      %v5716 = vld [vmem:[%s5633 + $0x84] sm:$0xf]
      %v5717 = vsel %vm5636, %v5506, %v5716
      %5718 = vst [vmem:[%s5633 + $0x84] sm:$0xf] %v5717
      %5719 = vst [vmem:[%s5633 + $0x88] sm:$0xf] %v5515
      %v5720 = vld [vmem:[%s5633 + $0x8c] sm:$0x1]
      %v5721 = vsel %vm5642, %v5516, %v5720
      %5722 = vst [vmem:[%s5633 + $0x8c] sm:$0x1] %v5721
      %v5723 = vld [vmem:[%s5633 + $0x90] sm:$0xf]
      %v5724 = vsel %vm5636, %v5523, %v5723
      %5725 = vst [vmem:[%s5633 + $0x90] sm:$0xf] %v5724
      %5726 = vst [vmem:[%s5633 + $0x94] sm:$0xf] %v5532
      %v5727 = vld [vmem:[%s5633 + $0x98] sm:$0x1]
      %v5728 = vsel %vm5642, %v5533, %v5727
      %5729 = vst [vmem:[%s5633 + $0x98] sm:$0x1] %v5728
      %v5730 = vld [vmem:[%s5633 + $0x9c] sm:$0xf]
      %v5731 = vsel %vm5636, %v5540, %v5730
      %5732 = vst [vmem:[%s5633 + $0x9c] sm:$0xf] %v5731
      %5733 = vst [vmem:[%s5633 + $0xa0] sm:$0xf] %v5549
      %v5734 = vld [vmem:[%s5633 + $0xa4] sm:$0x1]
      %v5735 = vsel %vm5642, %v5550, %v5734
      %5736 = vst [vmem:[%s5633 + $0xa4] sm:$0x1] %v5735
      %v5737 = vld [vmem:[%s5633 + $0xa8] sm:$0xf]
      %v5738 = vsel %vm5636, %v5557, %v5737
      %5739 = vst [vmem:[%s5633 + $0xa8] sm:$0xf] %v5738
      %5740 = vst [vmem:[%s5633 + $0xac] sm:$0xf] %v5566
      %v5741 = vld [vmem:[%s5633 + $0xb0] sm:$0x1]
      %v5742 = vsel %vm5642, %v5567, %v5741
      %5743 = vst [vmem:[%s5633 + $0xb0] sm:$0x1] %v5742
      %v5744 = vld [vmem:[%s5633 + $0xb4] sm:$0xf]
      %v5745 = vsel %vm5636, %v5574, %v5744
      %5746 = vst [vmem:[%s5633 + $0xb4] sm:$0xf] %v5745
      %5747 = vst [vmem:[%s5633 + $0xb8] sm:$0xf] %v5583
      %v5748 = vld [vmem:[%s5633 + $0xbc] sm:$0x1]
      %v5749 = vsel %vm5642, %v5584, %v5748
      %5750 = vst [vmem:[%s5633 + $0xbc] sm:$0x1] %v5749
      %v5751 = vld [vmem:[#allocation2] sm:$0xf]
      %v5752 = vld [vmem:[#allocation2 + $0x4] sm:$0xf]
      %v5753 = vld [vmem:[#allocation2 + $0xc] sm:$0xf]
      %v5754 = vld [vmem:[#allocation2 + $0x10] sm:$0xf]
      %v5755 = vld [vmem:[#allocation2 + $0x18] sm:$0xf]
      %v5756 = vld [vmem:[#allocation2 + $0x1c] sm:$0xf]
      %v5757 = vld [vmem:[#allocation2 + $0x24] sm:$0xf]
      %v5758 = vld [vmem:[#allocation2 + $0x28] sm:$0xf]
      %v5759 = vld [vmem:[#allocation2 + $0x30] sm:$0xf]
      %v5760 = vld [vmem:[#allocation2 + $0x34] sm:$0xf]
      %v5761 = vld [vmem:[#allocation2 + $0x3c] sm:$0xf]
      %v5762 = vld [vmem:[#allocation2 + $0x40] sm:$0xf]
      %v5763 = vld [vmem:[#allocation2 + $0x48] sm:$0xf]
      %v5764 = vld [vmem:[#allocation2 + $0x4c] sm:$0xf]
      %v5765 = vld [vmem:[#allocation2 + $0x54] sm:$0xf]
      %v5766 = vld [vmem:[#allocation2 + $0x58] sm:$0xf]
      %v5767 = vld [vmem:[#allocation2 + $0x60] sm:$0xf]
      %v5768 = vld [vmem:[#allocation2 + $0x64] sm:$0xf]
      %v5769 = vld [vmem:[#allocation2 + $0x6c] sm:$0xf]
      %v5770 = vld [vmem:[#allocation2 + $0x70] sm:$0xf]
      %v5771 = vld [vmem:[#allocation2 + $0x78] sm:$0xf]
      %v5772 = vld [vmem:[#allocation2 + $0x7c] sm:$0xf]
      %v5773 = vld [vmem:[#allocation2 + $0x84] sm:$0xf]
      %v5774 = vld [vmem:[#allocation2 + $0x88] sm:$0xf]
      %v5775 = vld [vmem:[#allocation2 + $0x90] sm:$0xf]
      %v5776 = vld [vmem:[#allocation2 + $0x94] sm:$0xf]
      %v5777 = vld [vmem:[#allocation2 + $0x9c] sm:$0xf]
      %v5778 = vld [vmem:[#allocation2 + $0xa0] sm:$0xf]
      %v5779 = vld [vmem:[#allocation2 + $0xa8] sm:$0xf]
      %v5780 = vld [vmem:[#allocation2 + $0xac] sm:$0xf]
      %v5781 = vld [vmem:[#allocation2 + $0xb4] sm:$0xf]
      %v5782 = vld [vmem:[#allocation2 + $0xb8] sm:$0xf]
      %v5783 = vld [vmem:[%s3] sm:$0xf]
      %v5784 = vld [vmem:[%s3 + $0x4] sm:$0xf]
      %v5785 = vld [vmem:[%s3 + $0x8] sm:$0xf]
      %v5786 = vld [vmem:[%s3 + $0xc] sm:$0xf]
      %v5787 = vld [vmem:[%s3 + $0x10] sm:$0xf]
      %v5788 = vld [vmem:[%s3 + $0x14] sm:$0xf]
      %v5789 = vld [vmem:[%s3 + $0x18] sm:$0xf]
      %v5790 = vld [vmem:[%s3 + $0x1c] sm:$0xf]
      %v5791 = vld [vmem:[%s3 + $0x20] sm:$0xf]
      %v5792 = vld [vmem:[%s3 + $0x24] sm:$0xf]
      %v5793 = vld [vmem:[%s3 + $0x28] sm:$0xf]
      %v5794 = vld [vmem:[%s3 + $0x2c] sm:$0xf]
      %v5795 = vld [vmem:[%s3 + $0x30] sm:$0xf]
      %v5796 = vld [vmem:[%s3 + $0x34] sm:$0xf]
      %v5797 = vld [vmem:[%s3 + $0x38] sm:$0xf]
      %v5798 = vld [vmem:[%s3 + $0x3c] sm:$0xf]
      %v5799 = vld [vmem:[#allocation2 + $0x8] sm:$0x1]
      %v5800 = vld [vmem:[#allocation2 + $0x14] sm:$0x1]
      %v5801 = vld [vmem:[#allocation2 + $0x20] sm:$0x1]
      %v5802 = vld [vmem:[#allocation2 + $0x2c] sm:$0x1]
      %v5803 = vld [vmem:[#allocation2 + $0x38] sm:$0x1]
      %v5804 = vld [vmem:[#allocation2 + $0x44] sm:$0x1]
      %v5805 = vld [vmem:[#allocation2 + $0x50] sm:$0x1]
      %v5806 = vld [vmem:[#allocation2 + $0x5c] sm:$0x1]
      %v5807 = vld [vmem:[#allocation2 + $0x68] sm:$0x1]
      %v5808 = vld [vmem:[#allocation2 + $0x74] sm:$0x1]
      %v5809 = vld [vmem:[#allocation2 + $0x80] sm:$0x1]
      %v5810 = vld [vmem:[#allocation2 + $0x8c] sm:$0x1]
      %v5811 = vld [vmem:[#allocation2 + $0x98] sm:$0x1]
      %v5812 = vld [vmem:[#allocation2 + $0xa4] sm:$0x1]
      %v5813 = vld [vmem:[#allocation2 + $0xb0] sm:$0x1]
      %v5814 = vld [vmem:[#allocation2 + $0xbc] sm:$0x1]
      %v5816 = vshrl.u32 %v5751, 16
      %v5818 = vrot.slane %v5816, 4
      %v5819 = vshll.u32 %v5751, 16
      %v5821 = vrot.slane %v5819, 5
      %v5822 = vor.u32 %v5818, %v5821
      %v5823 = vrot.slane %v5822, 4
      %v5825 = vshll.u32 %v5752, 16
      %v5827 = vrot.slane %v5825, 5
      %v5828 = vsel %vm346, %v5823, %v5827
      %v5829 = vshrl.u32 %v5752, 16
      %v5831 = vrot.slane %v5829, 4
      %v5832 = vor.u32 %v5831, %v5827
      %v5833 = vrot.slane %v5832, 4
      %v5835 = vshll.u32 %v5799, 16
      %v5837 = vrot.slane %v5835, 5
      %v5838 = vsel %vm346, %v5833, %v5837
      %v5840 = vshrl.u32 %v5753, 16
      %v5842 = vrot.slane %v5840, 4
      %v5843 = vshll.u32 %v5753, 16
      %v5845 = vrot.slane %v5843, 5
      %v5846 = vor.u32 %v5842, %v5845
      %v5847 = vrot.slane %v5846, 4
      %v5849 = vshll.u32 %v5754, 16
      %v5851 = vrot.slane %v5849, 5
      %v5852 = vsel %vm346, %v5847, %v5851
      %v5853 = vshrl.u32 %v5754, 16
      %v5855 = vrot.slane %v5853, 4
      %v5856 = vor.u32 %v5855, %v5851
      %v5857 = vrot.slane %v5856, 4
      %v5859 = vshll.u32 %v5800, 16
      %v5861 = vrot.slane %v5859, 5
      %v5862 = vsel %vm346, %v5857, %v5861
      %v5864 = vshrl.u32 %v5755, 16
      %v5866 = vrot.slane %v5864, 4
      %v5867 = vshll.u32 %v5755, 16
      %v5869 = vrot.slane %v5867, 5
      %v5870 = vor.u32 %v5866, %v5869
      %v5871 = vrot.slane %v5870, 4
      %v5873 = vshll.u32 %v5756, 16
      %v5875 = vrot.slane %v5873, 5
      %v5876 = vsel %vm346, %v5871, %v5875
      %v5877 = vshrl.u32 %v5756, 16
      %v5879 = vrot.slane %v5877, 4
      %v5880 = vor.u32 %v5879, %v5875
      %v5881 = vrot.slane %v5880, 4
      %v5883 = vshll.u32 %v5801, 16
      %v5885 = vrot.slane %v5883, 5
      %v5886 = vsel %vm346, %v5881, %v5885
      %v5888 = vshrl.u32 %v5757, 16
      %v5890 = vrot.slane %v5888, 4
      %v5891 = vshll.u32 %v5757, 16
      %v5893 = vrot.slane %v5891, 5
      %v5894 = vor.u32 %v5890, %v5893
      %v5895 = vrot.slane %v5894, 4
      %v5897 = vshll.u32 %v5758, 16
      %v5899 = vrot.slane %v5897, 5
      %v5900 = vsel %vm346, %v5895, %v5899
      %v5901 = vshrl.u32 %v5758, 16
      %v5903 = vrot.slane %v5901, 4
      %v5904 = vor.u32 %v5903, %v5899
      %v5905 = vrot.slane %v5904, 4
      %v5907 = vshll.u32 %v5802, 16
      %v5909 = vrot.slane %v5907, 5
      %v5910 = vsel %vm346, %v5905, %v5909
      %v5912 = vshrl.u32 %v5759, 16
      %v5914 = vrot.slane %v5912, 4
      %v5915 = vshll.u32 %v5759, 16
      %v5917 = vrot.slane %v5915, 5
      %v5918 = vor.u32 %v5914, %v5917
      %v5919 = vrot.slane %v5918, 4
      %v5921 = vshll.u32 %v5760, 16
      %v5923 = vrot.slane %v5921, 5
      %v5924 = vsel %vm346, %v5919, %v5923
      %v5925 = vshrl.u32 %v5760, 16
      %v5927 = vrot.slane %v5925, 4
      %v5928 = vor.u32 %v5927, %v5923
      %v5929 = vrot.slane %v5928, 4
      %v5931 = vshll.u32 %v5803, 16
      %v5933 = vrot.slane %v5931, 5
      %v5934 = vsel %vm346, %v5929, %v5933
      %v5936 = vshrl.u32 %v5761, 16
      %v5938 = vrot.slane %v5936, 4
      %v5939 = vshll.u32 %v5761, 16
      %v5941 = vrot.slane %v5939, 5
      %v5942 = vor.u32 %v5938, %v5941
      %v5943 = vrot.slane %v5942, 4
      %v5945 = vshll.u32 %v5762, 16
      %v5947 = vrot.slane %v5945, 5
      %v5948 = vsel %vm346, %v5943, %v5947
      %v5949 = vshrl.u32 %v5762, 16
      %v5951 = vrot.slane %v5949, 4
      %v5952 = vor.u32 %v5951, %v5947
      %v5953 = vrot.slane %v5952, 4
      %v5955 = vshll.u32 %v5804, 16
      %v5957 = vrot.slane %v5955, 5
      %v5958 = vsel %vm346, %v5953, %v5957
      %v5960 = vshrl.u32 %v5763, 16
      %v5962 = vrot.slane %v5960, 4
      %v5963 = vshll.u32 %v5763, 16
      %v5965 = vrot.slane %v5963, 5
      %v5966 = vor.u32 %v5962, %v5965
      %v5967 = vrot.slane %v5966, 4
      %v5969 = vshll.u32 %v5764, 16
      %v5971 = vrot.slane %v5969, 5
      %v5972 = vsel %vm346, %v5967, %v5971
      %v5973 = vshrl.u32 %v5764, 16
      %v5975 = vrot.slane %v5973, 4
      %v5976 = vor.u32 %v5975, %v5971
      %v5977 = vrot.slane %v5976, 4
      %v5979 = vshll.u32 %v5805, 16
      %v5981 = vrot.slane %v5979, 5
      %v5982 = vsel %vm346, %v5977, %v5981
      %v5984 = vshrl.u32 %v5765, 16
      %v5986 = vrot.slane %v5984, 4
      %v5987 = vshll.u32 %v5765, 16
      %v5989 = vrot.slane %v5987, 5
      %v5990 = vor.u32 %v5986, %v5989
      %v5991 = vrot.slane %v5990, 4
      %v5993 = vshll.u32 %v5766, 16
      %v5995 = vrot.slane %v5993, 5
      %v5996 = vsel %vm346, %v5991, %v5995
      %v5997 = vshrl.u32 %v5766, 16
      %v5999 = vrot.slane %v5997, 4
      %v6000 = vor.u32 %v5999, %v5995
      %v6001 = vrot.slane %v6000, 4
      %v6003 = vshll.u32 %v5806, 16
      %v6005 = vrot.slane %v6003, 5
      %v6006 = vsel %vm346, %v6001, %v6005
      %v6008 = vshrl.u32 %v5767, 16
      %v6010 = vrot.slane %v6008, 4
      %v6011 = vshll.u32 %v5767, 16
      %v6013 = vrot.slane %v6011, 5
      %v6014 = vor.u32 %v6010, %v6013
      %v6015 = vrot.slane %v6014, 4
      %v6017 = vshll.u32 %v5768, 16
      %v6019 = vrot.slane %v6017, 5
      %v6020 = vsel %vm346, %v6015, %v6019
      %v6021 = vshrl.u32 %v5768, 16
      %v6023 = vrot.slane %v6021, 4
      %v6024 = vor.u32 %v6023, %v6019
      %v6025 = vrot.slane %v6024, 4
      %v6027 = vshll.u32 %v5807, 16
      %v6029 = vrot.slane %v6027, 5
      %v6030 = vsel %vm346, %v6025, %v6029
      %v6032 = vshrl.u32 %v5769, 16
      %v6034 = vrot.slane %v6032, 4
      %v6035 = vshll.u32 %v5769, 16
      %v6037 = vrot.slane %v6035, 5
      %v6038 = vor.u32 %v6034, %v6037
      %v6039 = vrot.slane %v6038, 4
      %v6041 = vshll.u32 %v5770, 16
      %v6043 = vrot.slane %v6041, 5
      %v6044 = vsel %vm346, %v6039, %v6043
      %v6045 = vshrl.u32 %v5770, 16
      %v6047 = vrot.slane %v6045, 4
      %v6048 = vor.u32 %v6047, %v6043
      %v6049 = vrot.slane %v6048, 4
      %v6051 = vshll.u32 %v5808, 16
      %v6053 = vrot.slane %v6051, 5
      %v6054 = vsel %vm346, %v6049, %v6053
      %v6056 = vshrl.u32 %v5771, 16
      %v6058 = vrot.slane %v6056, 4
      %v6059 = vshll.u32 %v5771, 16
      %v6061 = vrot.slane %v6059, 5
      %v6062 = vor.u32 %v6058, %v6061
      %v6063 = vrot.slane %v6062, 4
      %v6065 = vshll.u32 %v5772, 16
      %v6067 = vrot.slane %v6065, 5
      %v6068 = vsel %vm346, %v6063, %v6067
      %v6069 = vshrl.u32 %v5772, 16
      %v6071 = vrot.slane %v6069, 4
      %v6072 = vor.u32 %v6071, %v6067
      %v6073 = vrot.slane %v6072, 4
      %v6075 = vshll.u32 %v5809, 16
      %v6077 = vrot.slane %v6075, 5
      %v6078 = vsel %vm346, %v6073, %v6077
      %v6080 = vshrl.u32 %v5773, 16
      %v6082 = vrot.slane %v6080, 4
      %v6083 = vshll.u32 %v5773, 16
      %v6085 = vrot.slane %v6083, 5
      %v6086 = vor.u32 %v6082, %v6085
      %v6087 = vrot.slane %v6086, 4
      %v6089 = vshll.u32 %v5774, 16
      %v6091 = vrot.slane %v6089, 5
      %v6092 = vsel %vm346, %v6087, %v6091
      %v6093 = vshrl.u32 %v5774, 16
      %v6095 = vrot.slane %v6093, 4
      %v6096 = vor.u32 %v6095, %v6091
      %v6097 = vrot.slane %v6096, 4
      %v6099 = vshll.u32 %v5810, 16
      %v6101 = vrot.slane %v6099, 5
      %v6102 = vsel %vm346, %v6097, %v6101
      %v6104 = vshrl.u32 %v5775, 16
      %v6106 = vrot.slane %v6104, 4
      %v6107 = vshll.u32 %v5775, 16
      %v6109 = vrot.slane %v6107, 5
      %v6110 = vor.u32 %v6106, %v6109
      %v6111 = vrot.slane %v6110, 4
      %v6113 = vshll.u32 %v5776, 16
      %v6115 = vrot.slane %v6113, 5
      %v6116 = vsel %vm346, %v6111, %v6115
      %v6117 = vshrl.u32 %v5776, 16
      %v6119 = vrot.slane %v6117, 4
      %v6120 = vor.u32 %v6119, %v6115
      %v6121 = vrot.slane %v6120, 4
      %v6123 = vshll.u32 %v5811, 16
      %v6125 = vrot.slane %v6123, 5
      %v6126 = vsel %vm346, %v6121, %v6125
      %v6128 = vshrl.u32 %v5777, 16
      %v6130 = vrot.slane %v6128, 4
      %v6131 = vshll.u32 %v5777, 16
      %v6133 = vrot.slane %v6131, 5
      %v6134 = vor.u32 %v6130, %v6133
      %v6135 = vrot.slane %v6134, 4
      %v6137 = vshll.u32 %v5778, 16
      %v6139 = vrot.slane %v6137, 5
      %v6140 = vsel %vm346, %v6135, %v6139
      %v6141 = vshrl.u32 %v5778, 16
      %v6143 = vrot.slane %v6141, 4
      %v6144 = vor.u32 %v6143, %v6139
      %v6145 = vrot.slane %v6144, 4
      %v6147 = vshll.u32 %v5812, 16
      %v6149 = vrot.slane %v6147, 5
      %v6150 = vsel %vm346, %v6145, %v6149
      %v6152 = vshrl.u32 %v5779, 16
      %v6154 = vrot.slane %v6152, 4
      %v6155 = vshll.u32 %v5779, 16
      %v6157 = vrot.slane %v6155, 5
      %v6158 = vor.u32 %v6154, %v6157
      %v6159 = vrot.slane %v6158, 4
      %v6161 = vshll.u32 %v5780, 16
      %v6163 = vrot.slane %v6161, 5
      %v6164 = vsel %vm346, %v6159, %v6163
      %v6165 = vshrl.u32 %v5780, 16
      %v6167 = vrot.slane %v6165, 4
      %v6168 = vor.u32 %v6167, %v6163
      %v6169 = vrot.slane %v6168, 4
      %v6171 = vshll.u32 %v5813, 16
      %v6173 = vrot.slane %v6171, 5
      %v6174 = vsel %vm346, %v6169, %v6173
      %v6176 = vshrl.u32 %v5781, 16
      %v6178 = vrot.slane %v6176, 4
      %v6179 = vshll.u32 %v5781, 16
      %v6181 = vrot.slane %v6179, 5
      %v6182 = vor.u32 %v6178, %v6181
      %v6183 = vrot.slane %v6182, 4
      %v6185 = vshll.u32 %v5782, 16
      %v6187 = vrot.slane %v6185, 5
      %v6188 = vsel %vm346, %v6183, %v6187
      %v6189 = vshrl.u32 %v5782, 16
      %v6191 = vrot.slane %v6189, 4
      %v6192 = vor.u32 %v6191, %v6187
      %v6193 = vrot.slane %v6192, 4
      %v6195 = vshll.u32 %v5814, 16
      %v6197 = vrot.slane %v6195, 5
      %v6198 = vsel %vm346, %v6193, %v6197
      %s6199 = scalar_lea.vmem %s3, 64
      %v6200 = vld [vmem:[%s6199] sm:$0xf]
      %v6201 = vld [vmem:[%s6199 + $0x4] sm:$0xf]
      %v6202 = vld [vmem:[%s6199 + $0x8] sm:$0xf]
      %v6203 = vld [vmem:[%s6199 + $0xc] sm:$0xf]
      %v6204 = vld [vmem:[%s6199 + $0x10] sm:$0xf]
      %v6205 = vld [vmem:[%s6199 + $0x14] sm:$0xf]
      %v6206 = vld [vmem:[%s6199 + $0x18] sm:$0xf]
      %v6207 = vld [vmem:[%s6199 + $0x1c] sm:$0xf]
      %v6208 = vld [vmem:[%s6199 + $0x20] sm:$0xf]
      %v6209 = vld [vmem:[%s6199 + $0x24] sm:$0xf]
      %v6210 = vld [vmem:[%s6199 + $0x28] sm:$0xf]
      %v6211 = vld [vmem:[%s6199 + $0x2c] sm:$0xf]
      %v6212 = vld [vmem:[%s6199 + $0x30] sm:$0xf]
      %v6213 = vld [vmem:[%s6199 + $0x34] sm:$0xf]
      %v6214 = vld [vmem:[%s6199 + $0x38] sm:$0xf]
      %v6215 = vld [vmem:[%s6199 + $0x3c] sm:$0xf]
      %v6216 = vunpack.c.l.b16 %v5828
      %v6217 = vunpack.c.l.b16 %v5838
      %v6218 = vunpack.c.l.b16 %v5852
      %v6219 = vunpack.c.l.b16 %v5862
      %v6220 = vunpack.c.l.b16 %v5876
      %v6221 = vunpack.c.l.b16 %v5886
      %v6222 = vunpack.c.l.b16 %v5900
      %v6223 = vunpack.c.l.b16 %v5910
      %v6224 = vunpack.c.l.b16 %v5924
      %v6225 = vunpack.c.l.b16 %v5934
      %v6226 = vunpack.c.l.b16 %v5948
      %v6227 = vunpack.c.l.b16 %v5958
      %v6228 = vunpack.c.l.b16 %v5972
      %v6229 = vunpack.c.l.b16 %v5982
      %v6230 = vunpack.c.l.b16 %v5996
      %v6231 = vunpack.c.l.b16 %v6006
      %v6232 = vunpack.c.l.b16 %v6020
      %v6233 = vunpack.c.l.b16 %v6030
      %v6234 = vunpack.c.l.b16 %v6044
      %v6235 = vunpack.c.l.b16 %v6054
      %v6236 = vunpack.c.l.b16 %v6068
      %v6237 = vunpack.c.l.b16 %v6078
      %v6238 = vunpack.c.l.b16 %v6092
      %v6239 = vunpack.c.l.b16 %v6102
      %v6240 = vunpack.c.l.b16 %v6116
      %v6241 = vunpack.c.l.b16 %v6126
      %v6242 = vunpack.c.l.b16 %v6140
      %v6243 = vunpack.c.l.b16 %v6150
      %v6244 = vunpack.c.l.b16 %v6164
      %v6245 = vunpack.c.l.b16 %v6174
      %v6246 = vunpack.c.l.b16 %v6188
      %v6247 = vunpack.c.l.b16 %v6198
      %v6248 = vpack.c.b16 %v6217, %v6216
      %v6249 = vpack.c.b16 %v6219, %v6218
      %v6250 = vpack.c.b16 %v6221, %v6220
      %v6251 = vpack.c.b16 %v6223, %v6222
      %v6252 = vpack.c.b16 %v6225, %v6224
      %v6253 = vpack.c.b16 %v6227, %v6226
      %v6254 = vpack.c.b16 %v6229, %v6228
      %v6255 = vpack.c.b16 %v6231, %v6230
      %v6256 = vpack.c.b16 %v6233, %v6232
      %v6257 = vpack.c.b16 %v6235, %v6234
      %v6258 = vpack.c.b16 %v6237, %v6236
      %v6259 = vpack.c.b16 %v6239, %v6238
      %v6260 = vpack.c.b16 %v6241, %v6240
      %v6261 = vpack.c.b16 %v6243, %v6242
      %v6262 = vpack.c.b16 %v6245, %v6244
      %v6263 = vpack.c.b16 %v6247, %v6246
      %v6296 = vunpack.c.l.b16 %v6200
      %v6297 = vunpack.c.l.b16 %v6201
      %v6298 = vunpack.c.l.b16 %v6202
      %v6299 = vunpack.c.l.b16 %v6203
      %v6300 = vunpack.c.l.b16 %v6204
      %v6301 = vunpack.c.l.b16 %v6205
      %v6302 = vunpack.c.l.b16 %v6206
      %v6303 = vunpack.c.l.b16 %v6207
      %v6304 = vunpack.c.l.b16 %v6208
      %v6305 = vunpack.c.l.b16 %v6209
      %v6306 = vunpack.c.l.b16 %v6210
      %v6307 = vunpack.c.l.b16 %v6211
      %v6308 = vunpack.c.l.b16 %v6212
      %v6309 = vunpack.c.l.b16 %v6213
      %v6310 = vunpack.c.l.b16 %v6214
      %v6311 = vunpack.c.l.b16 %v6215
      %v6312 = vpack.c.b16 %v6297, %v6296
      %v6313 = vpack.c.b16 %v6299, %v6298
      %v6314 = vpack.c.b16 %v6301, %v6300
      %v6315 = vpack.c.b16 %v6303, %v6302
      %v6316 = vpack.c.b16 %v6305, %v6304
      %v6317 = vpack.c.b16 %v6307, %v6306
      %v6318 = vpack.c.b16 %v6309, %v6308
      %v6319 = vpack.c.b16 %v6311, %v6310
      %6328 = vmatprep.subr.bf16.mxu0 0
      %6329 = vmatpush1.bf16.msra.mxu0 %v6312
      %6330 = vmatprep.subr.bf16.mxu0 0
      %6331 = vmatpush1.bf16.msra.mxu0 %v6313
      %6332 = vmatprep.subr.bf16.mxu0 0
      %6333 = vmatpush1.bf16.msra.mxu0 %v6314
      %6334 = vmatprep.subr.bf16.mxu0 0
      %6335 = vmatpush1.bf16.msra.mxu0 %v6315
      %6336 = vmatprep.subr.bf16.mxu0 0
      %6337 = vmatpush1.bf16.msra.mxu0 %v6316
      %6338 = vmatprep.subr.bf16.mxu0 0
      %6339 = vmatpush1.bf16.msra.mxu0 %v6317
      %6340 = vmatprep.subr.bf16.mxu0 0
      %6341 = vmatpush1.bf16.msra.mxu0 %v6318
      %6342 = vmatprep.subr.bf16.mxu0 0
      %6343 = vmatpush1.bf16.msra.mxu0 %v6319
      %6344 = vmatprep.subr.bf16.mxu0 0
      %6345 = vmatpush1.bf16.msra.mxu0 0
      %6346 = vmatprep.subr.bf16.mxu0 0
      %6347 = vmatpush1.bf16.msra.mxu0 0
      %6348 = vmatprep.subr.bf16.mxu0 0
      %6349 = vmatpush1.bf16.msra.mxu0 0
      %6350 = vmatprep.subr.bf16.mxu0 0
      %6351 = vmatpush1.bf16.msra.mxu0 0
      %6352 = vmatprep.subr.bf16.mxu0 0
      %6353 = vmatpush1.bf16.msra.mxu0 0
      %6354 = vmatprep.subr.bf16.mxu0 0
      %6355 = vmatpush1.bf16.msra.mxu0 0
      %6356 = vmatprep.subr.bf16.mxu0 0
      %6357 = vmatpush1.bf16.msra.mxu0 0
      %6358 = vmatprep.subr.bf16.mxu0 0
      %6359 = vmatpush1.bf16.msra.mxu0 0
      %6360 = vmatprep.mubr.bf16.mxu0 0
      %6361 = vmatmul.mubr.bf16.gmra.mrb[0].mxu0 %v6248
      %v6362 = vpop.f32.mrb[0].mxu0
      %v6363 = vadd.f32 0.0, %v6362
      %v6364 = vpop.f32.mrb[0].mxu0
      %v6365 = vpop.f32.mrb[0].mxu0
      %v6366 = vadd.f32 0.0, %v6365
      %v6367 = vpop.f32.mrb[0].mxu0
      %6368 = vmatprep.mubr.bf16.mxu0 0
      %6369 = vmatmul.mubr.bf16.gmra.mrb[0].mxu0 %v6249
      %v6370 = vpop.f32.mrb[0].mxu0
      %v6371 = vadd.f32 0.0, %v6370
      %v6372 = vpop.f32.mrb[0].mxu0
      %v6373 = vpop.f32.mrb[0].mxu0
      %v6374 = vadd.f32 0.0, %v6373
      %v6375 = vpop.f32.mrb[0].mxu0
      %6376 = vmatprep.mubr.bf16.mxu0 0
      %6377 = vmatmul.mubr.bf16.gmra.mrb[0].mxu0 %v6250
      %v6378 = vpop.f32.mrb[0].mxu0
      %v6379 = vadd.f32 0.0, %v6378
      %v6380 = vpop.f32.mrb[0].mxu0
      %v6381 = vpop.f32.mrb[0].mxu0
      %v6382 = vadd.f32 0.0, %v6381
      %v6383 = vpop.f32.mrb[0].mxu0
      %6384 = vmatprep.mubr.bf16.mxu0 0
      %6385 = vmatmul.mubr.bf16.gmra.mrb[0].mxu0 %v6251
      %v6386 = vpop.f32.mrb[0].mxu0
      %v6387 = vadd.f32 0.0, %v6386
      %v6388 = vpop.f32.mrb[0].mxu0
      %v6389 = vpop.f32.mrb[0].mxu0
      %v6390 = vadd.f32 0.0, %v6389
      %v6391 = vpop.f32.mrb[0].mxu0
      %6392 = vmatprep.mubr.bf16.mxu0 0
      %6393 = vmatmul.mubr.bf16.gmra.mrb[0].mxu0 %v6252
      %v6394 = vpop.f32.mrb[0].mxu0
      %v6395 = vadd.f32 0.0, %v6394
      %v6396 = vpop.f32.mrb[0].mxu0
      %v6397 = vpop.f32.mrb[0].mxu0
      %v6398 = vadd.f32 0.0, %v6397
      %v6399 = vpop.f32.mrb[0].mxu0
      %6400 = vmatprep.mubr.bf16.mxu0 0
      %6401 = vmatmul.mubr.bf16.gmra.mrb[0].mxu0 %v6253
      %v6402 = vpop.f32.mrb[0].mxu0
      %v6403 = vadd.f32 0.0, %v6402
      %v6404 = vpop.f32.mrb[0].mxu0
      %v6405 = vpop.f32.mrb[0].mxu0
      %v6406 = vadd.f32 0.0, %v6405
      %v6407 = vpop.f32.mrb[0].mxu0
      %6408 = vmatprep.mubr.bf16.mxu0 0
      %6409 = vmatmul.mubr.bf16.gmra.mrb[0].mxu0 %v6254
      %v6410 = vpop.f32.mrb[0].mxu0
      %v6411 = vadd.f32 0.0, %v6410
      %v6412 = vpop.f32.mrb[0].mxu0
      %v6413 = vpop.f32.mrb[0].mxu0
      %v6414 = vadd.f32 0.0, %v6413
      %v6415 = vpop.f32.mrb[0].mxu0
      %6416 = vmatprep.mubr.bf16.mxu0 0
      %6417 = vmatmul.mubr.bf16.gmra.mrb[0].mxu0 %v6255
      %v6418 = vpop.f32.mrb[0].mxu0
      %v6419 = vadd.f32 0.0, %v6418
      %v6420 = vpop.f32.mrb[0].mxu0
      %v6421 = vpop.f32.mrb[0].mxu0
      %v6422 = vadd.f32 0.0, %v6421
      %v6423 = vpop.f32.mrb[0].mxu0
      %6424 = vmatprep.mubr.bf16.mxu0 0
      %6425 = vmatmul.mubr.bf16.gmra.mrb[0].mxu0 %v6256
      %v6426 = vpop.f32.mrb[0].mxu0
      %v6427 = vadd.f32 0.0, %v6426
      %v6428 = vpop.f32.mrb[0].mxu0
      %v6429 = vpop.f32.mrb[0].mxu0
      %v6430 = vadd.f32 0.0, %v6429
      %v6431 = vpop.f32.mrb[0].mxu0
      %6432 = vmatprep.mubr.bf16.mxu0 0
      %6433 = vmatmul.mubr.bf16.gmra.mrb[0].mxu0 %v6257
      %v6434 = vpop.f32.mrb[0].mxu0
      %v6435 = vadd.f32 0.0, %v6434
      %v6436 = vpop.f32.mrb[0].mxu0
      %v6437 = vpop.f32.mrb[0].mxu0
      %v6438 = vadd.f32 0.0, %v6437
      %v6439 = vpop.f32.mrb[0].mxu0
      %6440 = vmatprep.mubr.bf16.mxu0 0
      %6441 = vmatmul.mubr.bf16.gmra.mrb[0].mxu0 %v6258
      %v6442 = vpop.f32.mrb[0].mxu0
      %v6443 = vadd.f32 0.0, %v6442
      %v6444 = vpop.f32.mrb[0].mxu0
      %v6445 = vpop.f32.mrb[0].mxu0
      %v6446 = vadd.f32 0.0, %v6445
      %v6447 = vpop.f32.mrb[0].mxu0
      %6448 = vmatprep.mubr.bf16.mxu0 0
      %6449 = vmatmul.mubr.bf16.gmra.mrb[0].mxu0 %v6259
      %v6450 = vpop.f32.mrb[0].mxu0
      %v6451 = vadd.f32 0.0, %v6450
      %v6452 = vpop.f32.mrb[0].mxu0
      %v6453 = vpop.f32.mrb[0].mxu0
      %v6454 = vadd.f32 0.0, %v6453
      %v6455 = vpop.f32.mrb[0].mxu0
      %6456 = vmatprep.mubr.bf16.mxu0 0
      %6457 = vmatmul.mubr.bf16.gmra.mrb[0].mxu0 %v6260
      %v6458 = vpop.f32.mrb[0].mxu0
      %v6459 = vadd.f32 0.0, %v6458
      %v6460 = vpop.f32.mrb[0].mxu0
      %v6461 = vpop.f32.mrb[0].mxu0
      %v6462 = vadd.f32 0.0, %v6461
      %v6463 = vpop.f32.mrb[0].mxu0
      %6464 = vmatprep.mubr.bf16.mxu0 0
      %6465 = vmatmul.mubr.bf16.gmra.mrb[0].mxu0 %v6261
      %v6466 = vpop.f32.mrb[0].mxu0
      %v6467 = vadd.f32 0.0, %v6466
      %v6468 = vpop.f32.mrb[0].mxu0
      %v6469 = vpop.f32.mrb[0].mxu0
      %v6470 = vadd.f32 0.0, %v6469
      %v6471 = vpop.f32.mrb[0].mxu0
      %6472 = vmatprep.mubr.bf16.mxu0 0
      %6473 = vmatmul.mubr.bf16.gmra.mrb[0].mxu0 %v6262
      %v6474 = vpop.f32.mrb[0].mxu0
      %v6475 = vadd.f32 0.0, %v6474
      %v6476 = vpop.f32.mrb[0].mxu0
      %v6477 = vpop.f32.mrb[0].mxu0
      %v6478 = vadd.f32 0.0, %v6477
      %v6479 = vpop.f32.mrb[0].mxu0
      %6480 = vmatprep.mubr.bf16.mxu0 0
      %6481 = vmatmul.mubr.bf16.gmra.mrb[0].mxu0 %v6263
      %v6482 = vpop.f32.mrb[0].mxu0
      %v6483 = vadd.f32 0.0, %v6482
      %v6484 = vpop.f32.mrb[0].mxu0
      %v6485 = vpop.f32.mrb[0].mxu0
      %v6486 = vadd.f32 0.0, %v6485
      %v6487 = vpop.f32.mrb[0].mxu0
      %6488 = vdwg.mxu0
      %v6521 = vunpack.c.l.b16 %v5751
      %v6522 = vunpack.c.l.b16 %v5752
      %v6523 = vunpack.c.l.b16 %v5753
      %v6524 = vunpack.c.l.b16 %v5754
      %v6525 = vunpack.c.l.b16 %v5755
      %v6526 = vunpack.c.l.b16 %v5756
      %v6527 = vunpack.c.l.b16 %v5757
      %v6528 = vunpack.c.l.b16 %v5758
      %v6529 = vunpack.c.l.b16 %v5759
      %v6530 = vunpack.c.l.b16 %v5760
      %v6531 = vunpack.c.l.b16 %v5761
      %v6532 = vunpack.c.l.b16 %v5762
      %v6533 = vunpack.c.l.b16 %v5763
      %v6534 = vunpack.c.l.b16 %v5764
      %v6535 = vunpack.c.l.b16 %v5765
      %v6536 = vunpack.c.l.b16 %v5766
      %v6537 = vunpack.c.l.b16 %v5767
      %v6538 = vunpack.c.l.b16 %v5768
      %v6539 = vunpack.c.l.b16 %v5769
      %v6540 = vunpack.c.l.b16 %v5770
      %v6541 = vunpack.c.l.b16 %v5771
      %v6542 = vunpack.c.l.b16 %v5772
      %v6543 = vunpack.c.l.b16 %v5773
      %v6544 = vunpack.c.l.b16 %v5774
      %v6545 = vunpack.c.l.b16 %v5775
      %v6546 = vunpack.c.l.b16 %v5776
      %v6547 = vunpack.c.l.b16 %v5777
      %v6548 = vunpack.c.l.b16 %v5778
      %v6549 = vunpack.c.l.b16 %v5779
      %v6550 = vunpack.c.l.b16 %v5780
      %v6551 = vunpack.c.l.b16 %v5781
      %v6552 = vunpack.c.l.b16 %v5782
      %v6553 = vpack.c.b16 %v6522, %v6521
      %v6554 = vpack.c.b16 %v6524, %v6523
      %v6555 = vpack.c.b16 %v6526, %v6525
      %v6556 = vpack.c.b16 %v6528, %v6527
      %v6557 = vpack.c.b16 %v6530, %v6529
      %v6558 = vpack.c.b16 %v6532, %v6531
      %v6559 = vpack.c.b16 %v6534, %v6533
      %v6560 = vpack.c.b16 %v6536, %v6535
      %v6561 = vpack.c.b16 %v6538, %v6537
      %v6562 = vpack.c.b16 %v6540, %v6539
      %v6563 = vpack.c.b16 %v6542, %v6541
      %v6564 = vpack.c.b16 %v6544, %v6543
      %v6565 = vpack.c.b16 %v6546, %v6545
      %v6566 = vpack.c.b16 %v6548, %v6547
      %v6567 = vpack.c.b16 %v6550, %v6549
      %v6568 = vpack.c.b16 %v6552, %v6551
      %v6601 = vunpack.c.l.b16 %v5783
      %v6602 = vunpack.c.l.b16 %v5784
      %v6603 = vunpack.c.l.b16 %v5785
      %v6604 = vunpack.c.l.b16 %v5786
      %v6605 = vunpack.c.l.b16 %v5787
      %v6606 = vunpack.c.l.b16 %v5788
      %v6607 = vunpack.c.l.b16 %v5789
      %v6608 = vunpack.c.l.b16 %v5790
      %v6609 = vunpack.c.l.b16 %v5791
      %v6610 = vunpack.c.l.b16 %v5792
      %v6611 = vunpack.c.l.b16 %v5793
      %v6612 = vunpack.c.l.b16 %v5794
      %v6613 = vunpack.c.l.b16 %v5795
      %v6614 = vunpack.c.l.b16 %v5796
      %v6615 = vunpack.c.l.b16 %v5797
      %v6616 = vunpack.c.l.b16 %v5798
      %v6617 = vpack.c.b16 %v6602, %v6601
      %v6618 = vpack.c.b16 %v6604, %v6603
      %v6619 = vpack.c.b16 %v6606, %v6605
      %v6620 = vpack.c.b16 %v6608, %v6607
      %v6621 = vpack.c.b16 %v6610, %v6609
      %v6622 = vpack.c.b16 %v6612, %v6611
      %v6623 = vpack.c.b16 %v6614, %v6613
      %v6624 = vpack.c.b16 %v6616, %v6615
      %6633 = vmatprep.subr.bf16.mxu0 0
      %6634 = vmatpush1.bf16.msra.mxu0 %v6617
      %6635 = vmatprep.subr.bf16.mxu0 0
      %6636 = vmatpush1.bf16.msra.mxu0 %v6618
      %6637 = vmatprep.subr.bf16.mxu0 0
      %6638 = vmatpush1.bf16.msra.mxu0 %v6619
      %6639 = vmatprep.subr.bf16.mxu0 0
      %6640 = vmatpush1.bf16.msra.mxu0 %v6620
      %6641 = vmatprep.subr.bf16.mxu0 0
      %6642 = vmatpush1.bf16.msra.mxu0 %v6621
      %6643 = vmatprep.subr.bf16.mxu0 0
      %6644 = vmatpush1.bf16.msra.mxu0 %v6622
      %6645 = vmatprep.subr.bf16.mxu0 0
      %6646 = vmatpush1.bf16.msra.mxu0 %v6623
      %6647 = vmatprep.subr.bf16.mxu0 0
      %6648 = vmatpush1.bf16.msra.mxu0 %v6624
      %6649 = vmatprep.subr.bf16.mxu0 0
      %6650 = vmatpush1.bf16.msra.mxu0 0
      %6651 = vmatprep.subr.bf16.mxu0 0
      %6652 = vmatpush1.bf16.msra.mxu0 0
      %6653 = vmatprep.subr.bf16.mxu0 0
      %6654 = vmatpush1.bf16.msra.mxu0 0
      %6655 = vmatprep.subr.bf16.mxu0 0
      %6656 = vmatpush1.bf16.msra.mxu0 0
      %6657 = vmatprep.subr.bf16.mxu0 0
      %6658 = vmatpush1.bf16.msra.mxu0 0
      %6659 = vmatprep.subr.bf16.mxu0 0
      %6660 = vmatpush1.bf16.msra.mxu0 0
      %6661 = vmatprep.subr.bf16.mxu0 0
      %6662 = vmatpush1.bf16.msra.mxu0 0
      %6663 = vmatprep.subr.bf16.mxu0 0
      %6664 = vmatpush1.bf16.msra.mxu0 0
      %6665 = vmatprep.mubr.bf16.mxu0 0
      %6666 = vmatmul.mubr.bf16.gmra.mrb[0].mxu0 %v6553
      %v6667 = vpop.f32.mrb[0].mxu0
      %v6668 = vadd.f32 %v6363, %v6667
      %v6669 = vpop.f32.mrb[0].mxu0
      %v6670 = vpop.f32.mrb[0].mxu0
      %v6671 = vadd.f32 %v6366, %v6670
      %v6672 = vpop.f32.mrb[0].mxu0
      %6673 = vmatprep.mubr.bf16.mxu0 0
      %6674 = vmatmul.mubr.bf16.gmra.mrb[0].mxu0 %v6554
      %v6675 = vpop.f32.mrb[0].mxu0
      %v6676 = vadd.f32 %v6371, %v6675
      %v6677 = vpop.f32.mrb[0].mxu0
      %v6678 = vpop.f32.mrb[0].mxu0
      %v6679 = vadd.f32 %v6374, %v6678
      %v6680 = vpop.f32.mrb[0].mxu0
      %6681 = vmatprep.mubr.bf16.mxu0 0
      %6682 = vmatmul.mubr.bf16.gmra.mrb[0].mxu0 %v6555
      %v6683 = vpop.f32.mrb[0].mxu0
      %v6684 = vadd.f32 %v6379, %v6683
      %v6685 = vpop.f32.mrb[0].mxu0
      %v6686 = vpop.f32.mrb[0].mxu0
      %v6687 = vadd.f32 %v6382, %v6686
      %v6688 = vpop.f32.mrb[0].mxu0
      %6689 = vmatprep.mubr.bf16.mxu0 0
      %6690 = vmatmul.mubr.bf16.gmra.mrb[0].mxu0 %v6556
      %v6691 = vpop.f32.mrb[0].mxu0
      %v6692 = vadd.f32 %v6387, %v6691
      %v6693 = vpop.f32.mrb[0].mxu0
      %v6694 = vpop.f32.mrb[0].mxu0
      %v6695 = vadd.f32 %v6390, %v6694
      %v6696 = vpop.f32.mrb[0].mxu0
      %6697 = vmatprep.mubr.bf16.mxu0 0
      %6698 = vmatmul.mubr.bf16.gmra.mrb[0].mxu0 %v6557
      %v6699 = vpop.f32.mrb[0].mxu0
      %v6700 = vadd.f32 %v6395, %v6699
      %v6701 = vpop.f32.mrb[0].mxu0
      %v6702 = vpop.f32.mrb[0].mxu0
      %v6703 = vadd.f32 %v6398, %v6702
      %v6704 = vpop.f32.mrb[0].mxu0
      %6705 = vmatprep.mubr.bf16.mxu0 0
      %6706 = vmatmul.mubr.bf16.gmra.mrb[0].mxu0 %v6558
      %v6707 = vpop.f32.mrb[0].mxu0
      %v6708 = vadd.f32 %v6403, %v6707
      %v6709 = vpop.f32.mrb[0].mxu0
      %v6710 = vpop.f32.mrb[0].mxu0
      %v6711 = vadd.f32 %v6406, %v6710
      %v6712 = vpop.f32.mrb[0].mxu0
      %6713 = vmatprep.mubr.bf16.mxu0 0
      %6714 = vmatmul.mubr.bf16.gmra.mrb[0].mxu0 %v6559
      %v6715 = vpop.f32.mrb[0].mxu0
      %v6716 = vadd.f32 %v6411, %v6715
      %v6717 = vpop.f32.mrb[0].mxu0
      %v6718 = vpop.f32.mrb[0].mxu0
      %v6719 = vadd.f32 %v6414, %v6718
      %v6720 = vpop.f32.mrb[0].mxu0
      %6721 = vmatprep.mubr.bf16.mxu0 0
      %6722 = vmatmul.mubr.bf16.gmra.mrb[0].mxu0 %v6560
      %v6723 = vpop.f32.mrb[0].mxu0
      %v6724 = vadd.f32 %v6419, %v6723
      %v6725 = vpop.f32.mrb[0].mxu0
      %v6726 = vpop.f32.mrb[0].mxu0
      %v6727 = vadd.f32 %v6422, %v6726
      %v6728 = vpop.f32.mrb[0].mxu0
      %6729 = vmatprep.mubr.bf16.mxu0 0
      %6730 = vmatmul.mubr.bf16.gmra.mrb[0].mxu0 %v6561
      %v6731 = vpop.f32.mrb[0].mxu0
      %v6732 = vadd.f32 %v6427, %v6731
      %v6733 = vpop.f32.mrb[0].mxu0
      %v6734 = vpop.f32.mrb[0].mxu0
      %v6735 = vadd.f32 %v6430, %v6734
      %v6736 = vpop.f32.mrb[0].mxu0
      %6737 = vmatprep.mubr.bf16.mxu0 0
      %6738 = vmatmul.mubr.bf16.gmra.mrb[0].mxu0 %v6562
      %v6739 = vpop.f32.mrb[0].mxu0
      %v6740 = vadd.f32 %v6435, %v6739
      %v6741 = vpop.f32.mrb[0].mxu0
      %v6742 = vpop.f32.mrb[0].mxu0
      %v6743 = vadd.f32 %v6438, %v6742
      %v6744 = vpop.f32.mrb[0].mxu0
      %6745 = vmatprep.mubr.bf16.mxu0 0
      %6746 = vmatmul.mubr.bf16.gmra.mrb[0].mxu0 %v6563
      %v6747 = vpop.f32.mrb[0].mxu0
      %v6748 = vadd.f32 %v6443, %v6747
      %v6749 = vpop.f32.mrb[0].mxu0
      %v6750 = vpop.f32.mrb[0].mxu0
      %v6751 = vadd.f32 %v6446, %v6750
      %v6752 = vpop.f32.mrb[0].mxu0
      %6753 = vmatprep.mubr.bf16.mxu0 0
      %6754 = vmatmul.mubr.bf16.gmra.mrb[0].mxu0 %v6564
      %v6755 = vpop.f32.mrb[0].mxu0
      %v6756 = vadd.f32 %v6451, %v6755
      %v6757 = vpop.f32.mrb[0].mxu0
      %v6758 = vpop.f32.mrb[0].mxu0
      %v6759 = vadd.f32 %v6454, %v6758
      %v6760 = vpop.f32.mrb[0].mxu0
      %6761 = vmatprep.mubr.bf16.mxu0 0
      %6762 = vmatmul.mubr.bf16.gmra.mrb[0].mxu0 %v6565
      %v6763 = vpop.f32.mrb[0].mxu0
      %v6764 = vadd.f32 %v6459, %v6763
      %v6765 = vpop.f32.mrb[0].mxu0
      %v6766 = vpop.f32.mrb[0].mxu0
      %v6767 = vadd.f32 %v6462, %v6766
      %v6768 = vpop.f32.mrb[0].mxu0
      %6769 = vmatprep.mubr.bf16.mxu0 0
      %6770 = vmatmul.mubr.bf16.gmra.mrb[0].mxu0 %v6566
      %v6771 = vpop.f32.mrb[0].mxu0
      %v6772 = vadd.f32 %v6467, %v6771
      %v6773 = vpop.f32.mrb[0].mxu0
      %v6774 = vpop.f32.mrb[0].mxu0
      %v6775 = vadd.f32 %v6470, %v6774
      %v6776 = vpop.f32.mrb[0].mxu0
      %6777 = vmatprep.mubr.bf16.mxu0 0
      %6778 = vmatmul.mubr.bf16.gmra.mrb[0].mxu0 %v6567
      %v6779 = vpop.f32.mrb[0].mxu0
      %v6780 = vadd.f32 %v6475, %v6779
      %v6781 = vpop.f32.mrb[0].mxu0
      %v6782 = vpop.f32.mrb[0].mxu0
      %v6783 = vadd.f32 %v6478, %v6782
      %v6784 = vpop.f32.mrb[0].mxu0
      %6785 = vmatprep.mubr.bf16.mxu0 0
      %6786 = vmatmul.mubr.bf16.gmra.mrb[0].mxu0 %v6568
      %v6787 = vpop.f32.mrb[0].mxu0
      %v6788 = vadd.f32 %v6483, %v6787
      %v6789 = vpop.f32.mrb[0].mxu0
      %v6790 = vpop.f32.mrb[0].mxu0
      %v6791 = vadd.f32 %v6486, %v6790
      %v6792 = vpop.f32.mrb[0].mxu0
      %6793 = vdwg.mxu0
      %v6794 = vld [vmem:[#allocation2] sm:$0xe]
      %v6795 = vld [vmem:[#allocation2 + $0xc] sm:$0xe]
      %v6796 = vld [vmem:[#allocation2 + $0x18] sm:$0xe]
      %v6797 = vld [vmem:[#allocation2 + $0x24] sm:$0xe]
      %v6798 = vld [vmem:[#allocation2 + $0x30] sm:$0xe]
      %v6799 = vld [vmem:[#allocation2 + $0x3c] sm:$0xe]
      %v6800 = vld [vmem:[#allocation2 + $0x48] sm:$0xe]
      %v6801 = vld [vmem:[#allocation2 + $0x54] sm:$0xe]
      %v6802 = vld [vmem:[#allocation2 + $0x60] sm:$0xe]
      %v6803 = vld [vmem:[#allocation2 + $0x6c] sm:$0xe]
      %v6804 = vld [vmem:[#allocation2 + $0x78] sm:$0xe]
      %v6805 = vld [vmem:[#allocation2 + $0x84] sm:$0xe]
      %v6806 = vld [vmem:[#allocation2 + $0x90] sm:$0xe]
      %v6807 = vld [vmem:[#allocation2 + $0x9c] sm:$0xe]
      %v6808 = vld [vmem:[#allocation2 + $0xa8] sm:$0xe]
      %v6809 = vld [vmem:[#allocation2 + $0xb4] sm:$0xe]
      %v6842 = vrot.slane %v6794, 5
      %v6843 = vrot.slane %v6842, 4
      %v6844 = vrot.slane %v5752, 5
      %v6845 = vsel %vm1376, %v6843, %v6844
      %v6846 = vrot.slane %v6844, 4
      %v6847 = vrot.slane %v5799, 5
      %v6848 = vsel %vm1376, %v6846, %v6847
      %v6849 = vrot.slane %v6795, 5
      %v6850 = vrot.slane %v6849, 4
      %v6851 = vrot.slane %v5754, 5
      %v6852 = vsel %vm1376, %v6850, %v6851
      %v6853 = vrot.slane %v6851, 4
      %v6854 = vrot.slane %v5800, 5
      %v6855 = vsel %vm1376, %v6853, %v6854
      %v6856 = vrot.slane %v6796, 5
      %v6857 = vrot.slane %v6856, 4
      %v6858 = vrot.slane %v5756, 5
      %v6859 = vsel %vm1376, %v6857, %v6858
      %v6860 = vrot.slane %v6858, 4
      %v6861 = vrot.slane %v5801, 5
      %v6862 = vsel %vm1376, %v6860, %v6861
      %v6863 = vrot.slane %v6797, 5
      %v6864 = vrot.slane %v6863, 4
      %v6865 = vrot.slane %v5758, 5
      %v6866 = vsel %vm1376, %v6864, %v6865
      %v6867 = vrot.slane %v6865, 4
      %v6868 = vrot.slane %v5802, 5
      %v6869 = vsel %vm1376, %v6867, %v6868
      %v6870 = vrot.slane %v6798, 5
      %v6871 = vrot.slane %v6870, 4
      %v6872 = vrot.slane %v5760, 5
      %v6873 = vsel %vm1376, %v6871, %v6872
      %v6874 = vrot.slane %v6872, 4
      %v6875 = vrot.slane %v5803, 5
      %v6876 = vsel %vm1376, %v6874, %v6875
      %v6877 = vrot.slane %v6799, 5
      %v6878 = vrot.slane %v6877, 4
      %v6879 = vrot.slane %v5762, 5
      %v6880 = vsel %vm1376, %v6878, %v6879
      %v6881 = vrot.slane %v6879, 4
      %v6882 = vrot.slane %v5804, 5
      %v6883 = vsel %vm1376, %v6881, %v6882
      %v6884 = vrot.slane %v6800, 5
      %v6885 = vrot.slane %v6884, 4
      %v6886 = vrot.slane %v5764, 5
      %v6887 = vsel %vm1376, %v6885, %v6886
      %v6888 = vrot.slane %v6886, 4
      %v6889 = vrot.slane %v5805, 5
      %v6890 = vsel %vm1376, %v6888, %v6889
      %v6891 = vrot.slane %v6801, 5
      %v6892 = vrot.slane %v6891, 4
      %v6893 = vrot.slane %v5766, 5
      %v6894 = vsel %vm1376, %v6892, %v6893
      %v6895 = vrot.slane %v6893, 4
      %v6896 = vrot.slane %v5806, 5
      %v6897 = vsel %vm1376, %v6895, %v6896
      %v6898 = vrot.slane %v6802, 5
      %v6899 = vrot.slane %v6898, 4
      %v6900 = vrot.slane %v5768, 5
      %v6901 = vsel %vm1376, %v6899, %v6900
      %v6902 = vrot.slane %v6900, 4
      %v6903 = vrot.slane %v5807, 5
      %v6904 = vsel %vm1376, %v6902, %v6903
      %v6905 = vrot.slane %v6803, 5
      %v6906 = vrot.slane %v6905, 4
      %v6907 = vrot.slane %v5770, 5
      %v6908 = vsel %vm1376, %v6906, %v6907
      %v6909 = vrot.slane %v6907, 4
      %v6910 = vrot.slane %v5808, 5
      %v6911 = vsel %vm1376, %v6909, %v6910
      %v6912 = vrot.slane %v6804, 5
      %v6913 = vrot.slane %v6912, 4
      %v6914 = vrot.slane %v5772, 5
      %v6915 = vsel %vm1376, %v6913, %v6914
      %v6916 = vrot.slane %v6914, 4
      %v6917 = vrot.slane %v5809, 5
      %v6918 = vsel %vm1376, %v6916, %v6917
      %v6919 = vrot.slane %v6805, 5
      %v6920 = vrot.slane %v6919, 4
      %v6921 = vrot.slane %v5774, 5
      %v6922 = vsel %vm1376, %v6920, %v6921
      %v6923 = vrot.slane %v6921, 4
      %v6924 = vrot.slane %v5810, 5
      %v6925 = vsel %vm1376, %v6923, %v6924
      %v6926 = vrot.slane %v6806, 5
      %v6927 = vrot.slane %v6926, 4
      %v6928 = vrot.slane %v5776, 5
      %v6929 = vsel %vm1376, %v6927, %v6928
      %v6930 = vrot.slane %v6928, 4
      %v6931 = vrot.slane %v5811, 5
      %v6932 = vsel %vm1376, %v6930, %v6931
      %v6933 = vrot.slane %v6807, 5
      %v6934 = vrot.slane %v6933, 4
      %v6935 = vrot.slane %v5778, 5
      %v6936 = vsel %vm1376, %v6934, %v6935
      %v6937 = vrot.slane %v6935, 4
      %v6938 = vrot.slane %v5812, 5
      %v6939 = vsel %vm1376, %v6937, %v6938
      %v6940 = vrot.slane %v6808, 5
      %v6941 = vrot.slane %v6940, 4
      %v6942 = vrot.slane %v5780, 5
      %v6943 = vsel %vm1376, %v6941, %v6942
      %v6944 = vrot.slane %v6942, 4
      %v6945 = vrot.slane %v5813, 5
      %v6946 = vsel %vm1376, %v6944, %v6945
      %v6947 = vrot.slane %v6809, 5
      %v6948 = vrot.slane %v6947, 4
      %v6949 = vrot.slane %v5782, 5
      %v6950 = vsel %vm1376, %v6948, %v6949
      %v6951 = vrot.slane %v6949, 4
      %v6952 = vrot.slane %v5814, 5
      %v6953 = vsel %vm1376, %v6951, %v6952
      %s6954 = scalar_lea.vmem %s3, 128
      %v6955 = vld [vmem:[%s6954] sm:$0xf]
      %v6956 = vld [vmem:[%s6954 + $0x4] sm:$0xf]
      %v6957 = vld [vmem:[%s6954 + $0x8] sm:$0xf]
      %v6958 = vld [vmem:[%s6954 + $0xc] sm:$0xf]
      %v6959 = vld [vmem:[%s6954 + $0x10] sm:$0xf]
      %v6960 = vld [vmem:[%s6954 + $0x14] sm:$0xf]
      %v6961 = vld [vmem:[%s6954 + $0x18] sm:$0xf]
      %v6962 = vld [vmem:[%s6954 + $0x1c] sm:$0xf]
      %v6963 = vld [vmem:[%s6954 + $0x20] sm:$0xf]
      %v6964 = vld [vmem:[%s6954 + $0x24] sm:$0xf]
      %v6965 = vld [vmem:[%s6954 + $0x28] sm:$0xf]
      %v6966 = vld [vmem:[%s6954 + $0x2c] sm:$0xf]
      %v6967 = vld [vmem:[%s6954 + $0x30] sm:$0xf]
      %v6968 = vld [vmem:[%s6954 + $0x34] sm:$0xf]
      %v6969 = vld [vmem:[%s6954 + $0x38] sm:$0xf]
      %v6970 = vld [vmem:[%s6954 + $0x3c] sm:$0xf]
      %v6971 = vunpack.c.l.b16 %v6845
      %v6972 = vunpack.c.l.b16 %v6848
      %v6973 = vunpack.c.l.b16 %v6852
      %v6974 = vunpack.c.l.b16 %v6855
      %v6975 = vunpack.c.l.b16 %v6859
      %v6976 = vunpack.c.l.b16 %v6862
      %v6977 = vunpack.c.l.b16 %v6866
      %v6978 = vunpack.c.l.b16 %v6869
      %v6979 = vunpack.c.l.b16 %v6873
      %v6980 = vunpack.c.l.b16 %v6876
      %v6981 = vunpack.c.l.b16 %v6880
      %v6982 = vunpack.c.l.b16 %v6883
      %v6983 = vunpack.c.l.b16 %v6887
      %v6984 = vunpack.c.l.b16 %v6890
      %v6985 = vunpack.c.l.b16 %v6894
      %v6986 = vunpack.c.l.b16 %v6897
      %v6987 = vunpack.c.l.b16 %v6901
      %v6988 = vunpack.c.l.b16 %v6904
      %v6989 = vunpack.c.l.b16 %v6908
      %v6990 = vunpack.c.l.b16 %v6911
      %v6991 = vunpack.c.l.b16 %v6915
      %v6992 = vunpack.c.l.b16 %v6918
      %v6993 = vunpack.c.l.b16 %v6922
      %v6994 = vunpack.c.l.b16 %v6925
      %v6995 = vunpack.c.l.b16 %v6929
      %v6996 = vunpack.c.l.b16 %v6932
      %v6997 = vunpack.c.l.b16 %v6936
      %v6998 = vunpack.c.l.b16 %v6939
      %v6999 = vunpack.c.l.b16 %v6943
      %v7000 = vunpack.c.l.b16 %v6946
      %v7001 = vunpack.c.l.b16 %v6950
      %v7002 = vunpack.c.l.b16 %v6953
      %v7003 = vpack.c.b16 %v6972, %v6971
      %v7004 = vpack.c.b16 %v6974, %v6973
      %v7005 = vpack.c.b16 %v6976, %v6975
      %v7006 = vpack.c.b16 %v6978, %v6977
      %v7007 = vpack.c.b16 %v6980, %v6979
      %v7008 = vpack.c.b16 %v6982, %v6981
      %v7009 = vpack.c.b16 %v6984, %v6983
      %v7010 = vpack.c.b16 %v6986, %v6985
      %v7011 = vpack.c.b16 %v6988, %v6987
      %v7012 = vpack.c.b16 %v6990, %v6989
      %v7013 = vpack.c.b16 %v6992, %v6991
      %v7014 = vpack.c.b16 %v6994, %v6993
      %v7015 = vpack.c.b16 %v6996, %v6995
      %v7016 = vpack.c.b16 %v6998, %v6997
      %v7017 = vpack.c.b16 %v7000, %v6999
      %v7018 = vpack.c.b16 %v7002, %v7001
      %v7051 = vunpack.c.l.b16 %v6955
      %v7052 = vunpack.c.l.b16 %v6956
      %v7053 = vunpack.c.l.b16 %v6957
      %v7054 = vunpack.c.l.b16 %v6958
      %v7055 = vunpack.c.l.b16 %v6959
      %v7056 = vunpack.c.l.b16 %v6960
      %v7057 = vunpack.c.l.b16 %v6961
      %v7058 = vunpack.c.l.b16 %v6962
      %v7059 = vunpack.c.l.b16 %v6963
      %v7060 = vunpack.c.l.b16 %v6964
      %v7061 = vunpack.c.l.b16 %v6965
      %v7062 = vunpack.c.l.b16 %v6966
      %v7063 = vunpack.c.l.b16 %v6967
      %v7064 = vunpack.c.l.b16 %v6968
      %v7065 = vunpack.c.l.b16 %v6969
      %v7066 = vunpack.c.l.b16 %v6970
      %v7067 = vpack.c.b16 %v7052, %v7051
      %v7068 = vpack.c.b16 %v7054, %v7053
      %v7069 = vpack.c.b16 %v7056, %v7055
      %v7070 = vpack.c.b16 %v7058, %v7057
      %v7071 = vpack.c.b16 %v7060, %v7059
      %v7072 = vpack.c.b16 %v7062, %v7061
      %v7073 = vpack.c.b16 %v7064, %v7063
      %v7074 = vpack.c.b16 %v7066, %v7065
      %7083 = vmatprep.subr.bf16.mxu0 0
      %7084 = vmatpush1.bf16.msra.mxu0 %v7067
      %7085 = vmatprep.subr.bf16.mxu0 0
      %7086 = vmatpush1.bf16.msra.mxu0 %v7068
      %7087 = vmatprep.subr.bf16.mxu0 0
      %7088 = vmatpush1.bf16.msra.mxu0 %v7069
      %7089 = vmatprep.subr.bf16.mxu0 0
      %7090 = vmatpush1.bf16.msra.mxu0 %v7070
      %7091 = vmatprep.subr.bf16.mxu0 0
      %7092 = vmatpush1.bf16.msra.mxu0 %v7071
      %7093 = vmatprep.subr.bf16.mxu0 0
      %7094 = vmatpush1.bf16.msra.mxu0 %v7072
      %7095 = vmatprep.subr.bf16.mxu0 0
      %7096 = vmatpush1.bf16.msra.mxu0 %v7073
      %7097 = vmatprep.subr.bf16.mxu0 0
      %7098 = vmatpush1.bf16.msra.mxu0 %v7074
      %7099 = vmatprep.subr.bf16.mxu0 0
      %7100 = vmatpush1.bf16.msra.mxu0 0
      %7101 = vmatprep.subr.bf16.mxu0 0
      %7102 = vmatpush1.bf16.msra.mxu0 0
      %7103 = vmatprep.subr.bf16.mxu0 0
      %7104 = vmatpush1.bf16.msra.mxu0 0
      %7105 = vmatprep.subr.bf16.mxu0 0
      %7106 = vmatpush1.bf16.msra.mxu0 0
      %7107 = vmatprep.subr.bf16.mxu0 0
      %7108 = vmatpush1.bf16.msra.mxu0 0
      %7109 = vmatprep.subr.bf16.mxu0 0
      %7110 = vmatpush1.bf16.msra.mxu0 0
      %7111 = vmatprep.subr.bf16.mxu0 0
      %7112 = vmatpush1.bf16.msra.mxu0 0
      %7113 = vmatprep.subr.bf16.mxu0 0
      %7114 = vmatpush1.bf16.msra.mxu0 0
      %7115 = vmatprep.mubr.bf16.mxu0 0
      %7116 = vmatmul.mubr.bf16.gmra.mrb[0].mxu0 %v7003
      %v7117 = vpop.f32.mrb[0].mxu0
      %v7118 = vadd.f32 0.0, %v7117
      %v7119 = vpop.f32.mrb[0].mxu0
      %v7120 = vpop.f32.mrb[0].mxu0
      %v7121 = vadd.f32 0.0, %v7120
      %v7122 = vpop.f32.mrb[0].mxu0
      %7123 = vmatprep.mubr.bf16.mxu0 0
      %7124 = vmatmul.mubr.bf16.gmra.mrb[0].mxu0 %v7004
      %v7125 = vpop.f32.mrb[0].mxu0
      %v7126 = vadd.f32 0.0, %v7125
      %v7127 = vpop.f32.mrb[0].mxu0
      %v7128 = vpop.f32.mrb[0].mxu0
      %v7129 = vadd.f32 0.0, %v7128
      %v7130 = vpop.f32.mrb[0].mxu0
      %7131 = vmatprep.mubr.bf16.mxu0 0
      %7132 = vmatmul.mubr.bf16.gmra.mrb[0].mxu0 %v7005
      %v7133 = vpop.f32.mrb[0].mxu0
      %v7134 = vadd.f32 0.0, %v7133
      %v7135 = vpop.f32.mrb[0].mxu0
      %v7136 = vpop.f32.mrb[0].mxu0
      %v7137 = vadd.f32 0.0, %v7136
      %v7138 = vpop.f32.mrb[0].mxu0
      %7139 = vmatprep.mubr.bf16.mxu0 0
      %7140 = vmatmul.mubr.bf16.gmra.mrb[0].mxu0 %v7006
      %v7141 = vpop.f32.mrb[0].mxu0
      %v7142 = vadd.f32 0.0, %v7141
      %v7143 = vpop.f32.mrb[0].mxu0
      %v7144 = vpop.f32.mrb[0].mxu0
      %v7145 = vadd.f32 0.0, %v7144
      %v7146 = vpop.f32.mrb[0].mxu0
      %7147 = vmatprep.mubr.bf16.mxu0 0
      %7148 = vmatmul.mubr.bf16.gmra.mrb[0].mxu0 %v7007
      %v7149 = vpop.f32.mrb[0].mxu0
      %v7150 = vadd.f32 0.0, %v7149
      %v7151 = vpop.f32.mrb[0].mxu0
      %v7152 = vpop.f32.mrb[0].mxu0
      %v7153 = vadd.f32 0.0, %v7152
      %v7154 = vpop.f32.mrb[0].mxu0
      %7155 = vmatprep.mubr.bf16.mxu0 0
      %7156 = vmatmul.mubr.bf16.gmra.mrb[0].mxu0 %v7008
      %v7157 = vpop.f32.mrb[0].mxu0
      %v7158 = vadd.f32 0.0, %v7157
      %v7159 = vpop.f32.mrb[0].mxu0
      %v7160 = vpop.f32.mrb[0].mxu0
      %v7161 = vadd.f32 0.0, %v7160
      %v7162 = vpop.f32.mrb[0].mxu0
      %7163 = vmatprep.mubr.bf16.mxu0 0
      %7164 = vmatmul.mubr.bf16.gmra.mrb[0].mxu0 %v7009
      %v7165 = vpop.f32.mrb[0].mxu0
      %v7166 = vadd.f32 0.0, %v7165
      %v7167 = vpop.f32.mrb[0].mxu0
      %v7168 = vpop.f32.mrb[0].mxu0
      %v7169 = vadd.f32 0.0, %v7168
      %v7170 = vpop.f32.mrb[0].mxu0
      %7171 = vmatprep.mubr.bf16.mxu0 0
      %7172 = vmatmul.mubr.bf16.gmra.mrb[0].mxu0 %v7010
      %v7173 = vpop.f32.mrb[0].mxu0
      %v7174 = vadd.f32 0.0, %v7173
      %v7175 = vpop.f32.mrb[0].mxu0
      %v7176 = vpop.f32.mrb[0].mxu0
      %v7177 = vadd.f32 0.0, %v7176
      %v7178 = vpop.f32.mrb[0].mxu0
      %7179 = vmatprep.mubr.bf16.mxu0 0
      %7180 = vmatmul.mubr.bf16.gmra.mrb[0].mxu0 %v7011
      %v7181 = vpop.f32.mrb[0].mxu0
      %v7182 = vadd.f32 0.0, %v7181
      %v7183 = vpop.f32.mrb[0].mxu0
      %v7184 = vpop.f32.mrb[0].mxu0
      %v7185 = vadd.f32 0.0, %v7184
      %v7186 = vpop.f32.mrb[0].mxu0
      %7187 = vmatprep.mubr.bf16.mxu0 0
      %7188 = vmatmul.mubr.bf16.gmra.mrb[0].mxu0 %v7012
      %v7189 = vpop.f32.mrb[0].mxu0
      %v7190 = vadd.f32 0.0, %v7189
      %v7191 = vpop.f32.mrb[0].mxu0
      %v7192 = vpop.f32.mrb[0].mxu0
      %v7193 = vadd.f32 0.0, %v7192
      %v7194 = vpop.f32.mrb[0].mxu0
      %7195 = vmatprep.mubr.bf16.mxu0 0
      %7196 = vmatmul.mubr.bf16.gmra.mrb[0].mxu0 %v7013
      %v7197 = vpop.f32.mrb[0].mxu0
      %v7198 = vadd.f32 0.0, %v7197
      %v7199 = vpop.f32.mrb[0].mxu0
      %v7200 = vpop.f32.mrb[0].mxu0
      %v7201 = vadd.f32 0.0, %v7200
      %v7202 = vpop.f32.mrb[0].mxu0
      %7203 = vmatprep.mubr.bf16.mxu0 0
      %7204 = vmatmul.mubr.bf16.gmra.mrb[0].mxu0 %v7014
      %v7205 = vpop.f32.mrb[0].mxu0
      %v7206 = vadd.f32 0.0, %v7205
      %v7207 = vpop.f32.mrb[0].mxu0
      %v7208 = vpop.f32.mrb[0].mxu0
      %v7209 = vadd.f32 0.0, %v7208
      %v7210 = vpop.f32.mrb[0].mxu0
      %7211 = vmatprep.mubr.bf16.mxu0 0
      %7212 = vmatmul.mubr.bf16.gmra.mrb[0].mxu0 %v7015
      %v7213 = vpop.f32.mrb[0].mxu0
      %v7214 = vadd.f32 0.0, %v7213
      %v7215 = vpop.f32.mrb[0].mxu0
      %v7216 = vpop.f32.mrb[0].mxu0
      %v7217 = vadd.f32 0.0, %v7216
      %v7218 = vpop.f32.mrb[0].mxu0
      %7219 = vmatprep.mubr.bf16.mxu0 0
      %7220 = vmatmul.mubr.bf16.gmra.mrb[0].mxu0 %v7016
      %v7221 = vpop.f32.mrb[0].mxu0
      %v7222 = vadd.f32 0.0, %v7221
      %v7223 = vpop.f32.mrb[0].mxu0
      %v7224 = vpop.f32.mrb[0].mxu0
      %v7225 = vadd.f32 0.0, %v7224
      %v7226 = vpop.f32.mrb[0].mxu0
      %7227 = vmatprep.mubr.bf16.mxu0 0
      %7228 = vmatmul.mubr.bf16.gmra.mrb[0].mxu0 %v7017
      %v7229 = vpop.f32.mrb[0].mxu0
      %v7230 = vadd.f32 0.0, %v7229
      %v7231 = vpop.f32.mrb[0].mxu0
      %v7232 = vpop.f32.mrb[0].mxu0
      %v7233 = vadd.f32 0.0, %v7232
      %v7234 = vpop.f32.mrb[0].mxu0
      %7235 = vmatprep.mubr.bf16.mxu0 0
      %7236 = vmatmul.mubr.bf16.gmra.mrb[0].mxu0 %v7018
      %v7237 = vpop.f32.mrb[0].mxu0
      %v7238 = vadd.f32 0.0, %v7237
      %v7239 = vpop.f32.mrb[0].mxu0
      %v7240 = vpop.f32.mrb[0].mxu0
      %v7241 = vadd.f32 0.0, %v7240
      %v7242 = vpop.f32.mrb[0].mxu0
      %7243 = vdwg.mxu0
      %v7244 = vadd.f32 %v6668, %v7118
      %v7245 = vadd.f32 %v6671, %v7121
      %v7246 = vadd.f32 %v6676, %v7126
      %v7247 = vadd.f32 %v6679, %v7129
      %v7248 = vadd.f32 %v6684, %v7134
      %v7249 = vadd.f32 %v6687, %v7137
      %v7250 = vadd.f32 %v6692, %v7142
      %v7251 = vadd.f32 %v6695, %v7145
      %v7252 = vadd.f32 %v6700, %v7150
      %v7253 = vadd.f32 %v6703, %v7153
      %v7254 = vadd.f32 %v6708, %v7158
      %v7255 = vadd.f32 %v6711, %v7161
      %v7256 = vadd.f32 %v6716, %v7166
      %v7257 = vadd.f32 %v6719, %v7169
      %v7258 = vadd.f32 %v6724, %v7174
      %v7259 = vadd.f32 %v6727, %v7177
      %v7260 = vadd.f32 %v6732, %v7182
      %v7261 = vadd.f32 %v6735, %v7185
      %v7262 = vadd.f32 %v6740, %v7190
      %v7263 = vadd.f32 %v6743, %v7193
      %v7264 = vadd.f32 %v6748, %v7198
      %v7265 = vadd.f32 %v6751, %v7201
      %v7266 = vadd.f32 %v6756, %v7206
      %v7267 = vadd.f32 %v6759, %v7209
      %v7268 = vadd.f32 %v6764, %v7214
      %v7269 = vadd.f32 %v6767, %v7217
      %v7270 = vadd.f32 %v6772, %v7222
      %v7271 = vadd.f32 %v6775, %v7225
      %v7272 = vadd.f32 %v6780, %v7230
      %v7273 = vadd.f32 %v6783, %v7233
      %v7274 = vadd.f32 %v6788, %v7238
      %v7275 = vadd.f32 %v6791, %v7241
      %v7276 = vld [vmem:[%s5633] sm:$0xf]
      %v7277 = vld [vmem:[%s5633 + $0x4] sm:$0xf]
      %v7278 = vld [vmem:[%s5633 + $0xc] sm:$0xf]
      %v7279 = vld [vmem:[%s5633 + $0x10] sm:$0xf]
      %v7280 = vld [vmem:[%s5633 + $0x18] sm:$0xf]
      %v7281 = vld [vmem:[%s5633 + $0x1c] sm:$0xf]
      %v7282 = vld [vmem:[%s5633 + $0x24] sm:$0xf]
      %v7283 = vld [vmem:[%s5633 + $0x28] sm:$0xf]
      %v7284 = vld [vmem:[%s5633 + $0x30] sm:$0xf]
      %v7285 = vld [vmem:[%s5633 + $0x34] sm:$0xf]
      %v7286 = vld [vmem:[%s5633 + $0x3c] sm:$0xf]
      %v7287 = vld [vmem:[%s5633 + $0x40] sm:$0xf]
      %v7288 = vld [vmem:[%s5633 + $0x48] sm:$0xf]
      %v7289 = vld [vmem:[%s5633 + $0x4c] sm:$0xf]
      %v7290 = vld [vmem:[%s5633 + $0x54] sm:$0xf]
      %v7291 = vld [vmem:[%s5633 + $0x58] sm:$0xf]
      %v7292 = vld [vmem:[%s5633 + $0x60] sm:$0xf]
      %v7293 = vld [vmem:[%s5633 + $0x64] sm:$0xf]
      %v7294 = vld [vmem:[%s5633 + $0x6c] sm:$0xf]
      %v7295 = vld [vmem:[%s5633 + $0x70] sm:$0xf]
      %v7296 = vld [vmem:[%s5633 + $0x78] sm:$0xf]
      %v7297 = vld [vmem:[%s5633 + $0x7c] sm:$0xf]
      %v7298 = vld [vmem:[%s5633 + $0x84] sm:$0xf]
      %v7299 = vld [vmem:[%s5633 + $0x88] sm:$0xf]
      %v7300 = vld [vmem:[%s5633 + $0x90] sm:$0xf]
      %v7301 = vld [vmem:[%s5633 + $0x94] sm:$0xf]
      %v7302 = vld [vmem:[%s5633 + $0x9c] sm:$0xf]
      %v7303 = vld [vmem:[%s5633 + $0xa0] sm:$0xf]
      %v7304 = vld [vmem:[%s5633 + $0xa8] sm:$0xf]
      %v7305 = vld [vmem:[%s5633 + $0xac] sm:$0xf]
      %v7306 = vld [vmem:[%s5633 + $0xb4] sm:$0xf]
      %v7307 = vld [vmem:[%s5633 + $0xb8] sm:$0xf]
      %s7308 = scalar_lea.vmem %s3, 192
      %v7309 = vld [vmem:[%s7308] sm:$0xf]
      %v7310 = vld [vmem:[%s7308 + $0x4] sm:$0xf]
      %v7311 = vld [vmem:[%s7308 + $0x8] sm:$0xf]
      %v7312 = vld [vmem:[%s7308 + $0xc] sm:$0xf]
      %v7313 = vld [vmem:[%s7308 + $0x10] sm:$0xf]
      %v7314 = vld [vmem:[%s7308 + $0x14] sm:$0xf]
      %v7315 = vld [vmem:[%s7308 + $0x18] sm:$0xf]
      %v7316 = vld [vmem:[%s7308 + $0x1c] sm:$0xf]
      %v7317 = vld [vmem:[%s7308 + $0x20] sm:$0xf]
      %v7318 = vld [vmem:[%s7308 + $0x24] sm:$0xf]
      %v7319 = vld [vmem:[%s7308 + $0x28] sm:$0xf]
      %v7320 = vld [vmem:[%s7308 + $0x2c] sm:$0xf]
      %v7321 = vld [vmem:[%s7308 + $0x30] sm:$0xf]
      %v7322 = vld [vmem:[%s7308 + $0x34] sm:$0xf]
      %v7323 = vld [vmem:[%s7308 + $0x38] sm:$0xf]
      %v7324 = vld [vmem:[%s7308 + $0x3c] sm:$0xf]
      %v7357 = vunpack.c.l.b16 %v7276
      %v7358 = vunpack.c.l.b16 %v7277
      %v7359 = vunpack.c.l.b16 %v7278
      %v7360 = vunpack.c.l.b16 %v7279
      %v7361 = vunpack.c.l.b16 %v7280
      %v7362 = vunpack.c.l.b16 %v7281
      %v7363 = vunpack.c.l.b16 %v7282
      %v7364 = vunpack.c.l.b16 %v7283
      %v7365 = vunpack.c.l.b16 %v7284
      %v7366 = vunpack.c.l.b16 %v7285
      %v7367 = vunpack.c.l.b16 %v7286
      %v7368 = vunpack.c.l.b16 %v7287
      %v7369 = vunpack.c.l.b16 %v7288
      %v7370 = vunpack.c.l.b16 %v7289
      %v7371 = vunpack.c.l.b16 %v7290
      %v7372 = vunpack.c.l.b16 %v7291
      %v7373 = vunpack.c.l.b16 %v7292
      %v7374 = vunpack.c.l.b16 %v7293
      %v7375 = vunpack.c.l.b16 %v7294
      %v7376 = vunpack.c.l.b16 %v7295
      %v7377 = vunpack.c.l.b16 %v7296
      %v7378 = vunpack.c.l.b16 %v7297
      %v7379 = vunpack.c.l.b16 %v7298
      %v7380 = vunpack.c.l.b16 %v7299
      %v7381 = vunpack.c.l.b16 %v7300
      %v7382 = vunpack.c.l.b16 %v7301
      %v7383 = vunpack.c.l.b16 %v7302
      %v7384 = vunpack.c.l.b16 %v7303
      %v7385 = vunpack.c.l.b16 %v7304
      %v7386 = vunpack.c.l.b16 %v7305
      %v7387 = vunpack.c.l.b16 %v7306
      %v7388 = vunpack.c.l.b16 %v7307
      %v7389 = vpack.c.b16 %v7358, %v7357
      %v7390 = vpack.c.b16 %v7360, %v7359
      %v7391 = vpack.c.b16 %v7362, %v7361
      %v7392 = vpack.c.b16 %v7364, %v7363
      %v7393 = vpack.c.b16 %v7366, %v7365
      %v7394 = vpack.c.b16 %v7368, %v7367
      %v7395 = vpack.c.b16 %v7370, %v7369
      %v7396 = vpack.c.b16 %v7372, %v7371
      %v7397 = vpack.c.b16 %v7374, %v7373
      %v7398 = vpack.c.b16 %v7376, %v7375
      %v7399 = vpack.c.b16 %v7378, %v7377
      %v7400 = vpack.c.b16 %v7380, %v7379
      %v7401 = vpack.c.b16 %v7382, %v7381
      %v7402 = vpack.c.b16 %v7384, %v7383
      %v7403 = vpack.c.b16 %v7386, %v7385
      %v7404 = vpack.c.b16 %v7388, %v7387
      %v7437 = vunpack.c.l.b16 %v7309
      %v7438 = vunpack.c.l.b16 %v7310
      %v7439 = vunpack.c.l.b16 %v7311
      %v7440 = vunpack.c.l.b16 %v7312
      %v7441 = vunpack.c.l.b16 %v7313
      %v7442 = vunpack.c.l.b16 %v7314
      %v7443 = vunpack.c.l.b16 %v7315
      %v7444 = vunpack.c.l.b16 %v7316
      %v7445 = vunpack.c.l.b16 %v7317
      %v7446 = vunpack.c.l.b16 %v7318
      %v7447 = vunpack.c.l.b16 %v7319
      %v7448 = vunpack.c.l.b16 %v7320
      %v7449 = vunpack.c.l.b16 %v7321
      %v7450 = vunpack.c.l.b16 %v7322
      %v7451 = vunpack.c.l.b16 %v7323
      %v7452 = vunpack.c.l.b16 %v7324
      %v7453 = vpack.c.b16 %v7438, %v7437
      %v7454 = vpack.c.b16 %v7440, %v7439
      %v7455 = vpack.c.b16 %v7442, %v7441
      %v7456 = vpack.c.b16 %v7444, %v7443
      %v7457 = vpack.c.b16 %v7446, %v7445
      %v7458 = vpack.c.b16 %v7448, %v7447
      %v7459 = vpack.c.b16 %v7450, %v7449
      %v7460 = vpack.c.b16 %v7452, %v7451
      %7469 = vmatprep.subr.bf16.mxu0 0
      %7470 = vmatpush1.bf16.msra.mxu0 %v7453
      %7471 = vmatprep.subr.bf16.mxu0 0
      %7472 = vmatpush1.bf16.msra.mxu0 %v7454
      %7473 = vmatprep.subr.bf16.mxu0 0
      %7474 = vmatpush1.bf16.msra.mxu0 %v7455
      %7475 = vmatprep.subr.bf16.mxu0 0
      %7476 = vmatpush1.bf16.msra.mxu0 %v7456
      %7477 = vmatprep.subr.bf16.mxu0 0
      %7478 = vmatpush1.bf16.msra.mxu0 %v7457
      %7479 = vmatprep.subr.bf16.mxu0 0
      %7480 = vmatpush1.bf16.msra.mxu0 %v7458
      %7481 = vmatprep.subr.bf16.mxu0 0
      %7482 = vmatpush1.bf16.msra.mxu0 %v7459
      %7483 = vmatprep.subr.bf16.mxu0 0
      %7484 = vmatpush1.bf16.msra.mxu0 %v7460
      %7485 = vmatprep.subr.bf16.mxu0 0
      %7486 = vmatpush1.bf16.msra.mxu0 0
      %7487 = vmatprep.subr.bf16.mxu0 0
      %7488 = vmatpush1.bf16.msra.mxu0 0
      %7489 = vmatprep.subr.bf16.mxu0 0
      %7490 = vmatpush1.bf16.msra.mxu0 0
      %7491 = vmatprep.subr.bf16.mxu0 0
      %7492 = vmatpush1.bf16.msra.mxu0 0
      %7493 = vmatprep.subr.bf16.mxu0 0
      %7494 = vmatpush1.bf16.msra.mxu0 0
      %7495 = vmatprep.subr.bf16.mxu0 0
      %7496 = vmatpush1.bf16.msra.mxu0 0
      %7497 = vmatprep.subr.bf16.mxu0 0
      %7498 = vmatpush1.bf16.msra.mxu0 0
      %7499 = vmatprep.subr.bf16.mxu0 0
      %7500 = vmatpush1.bf16.msra.mxu0 0
      %7501 = vmatprep.mubr.bf16.mxu0 0
      %7502 = vmatmul.mubr.bf16.gmra.mrb[0].mxu0 %v7389
      %v7503 = vpop.f32.mrb[0].mxu0
      %v7504 = vadd.f32 0.0, %v7503
      %v7505 = vpop.f32.mrb[0].mxu0
      %v7506 = vpop.f32.mrb[0].mxu0
      %v7507 = vadd.f32 0.0, %v7506
      %v7508 = vpop.f32.mrb[0].mxu0
      %7509 = vmatprep.mubr.bf16.mxu0 0
      %7510 = vmatmul.mubr.bf16.gmra.mrb[0].mxu0 %v7390
      %v7511 = vpop.f32.mrb[0].mxu0
      %v7512 = vadd.f32 0.0, %v7511
      %v7513 = vpop.f32.mrb[0].mxu0
      %v7514 = vpop.f32.mrb[0].mxu0
      %v7515 = vadd.f32 0.0, %v7514
      %v7516 = vpop.f32.mrb[0].mxu0
      %7517 = vmatprep.mubr.bf16.mxu0 0
      %7518 = vmatmul.mubr.bf16.gmra.mrb[0].mxu0 %v7391
      %v7519 = vpop.f32.mrb[0].mxu0
      %v7520 = vadd.f32 0.0, %v7519
      %v7521 = vpop.f32.mrb[0].mxu0
      %v7522 = vpop.f32.mrb[0].mxu0
      %v7523 = vadd.f32 0.0, %v7522
      %v7524 = vpop.f32.mrb[0].mxu0
      %7525 = vmatprep.mubr.bf16.mxu0 0
      %7526 = vmatmul.mubr.bf16.gmra.mrb[0].mxu0 %v7392
      %v7527 = vpop.f32.mrb[0].mxu0
      %v7528 = vadd.f32 0.0, %v7527
      %v7529 = vpop.f32.mrb[0].mxu0
      %v7530 = vpop.f32.mrb[0].mxu0
      %v7531 = vadd.f32 0.0, %v7530
      %v7532 = vpop.f32.mrb[0].mxu0
      %7533 = vmatprep.mubr.bf16.mxu0 0
      %7534 = vmatmul.mubr.bf16.gmra.mrb[0].mxu0 %v7393
      %v7535 = vpop.f32.mrb[0].mxu0
      %v7536 = vadd.f32 0.0, %v7535
      %v7537 = vpop.f32.mrb[0].mxu0
      %v7538 = vpop.f32.mrb[0].mxu0
      %v7539 = vadd.f32 0.0, %v7538
      %v7540 = vpop.f32.mrb[0].mxu0
      %7541 = vmatprep.mubr.bf16.mxu0 0
      %7542 = vmatmul.mubr.bf16.gmra.mrb[0].mxu0 %v7394
      %v7543 = vpop.f32.mrb[0].mxu0
      %v7544 = vadd.f32 0.0, %v7543
      %v7545 = vpop.f32.mrb[0].mxu0
      %v7546 = vpop.f32.mrb[0].mxu0
      %v7547 = vadd.f32 0.0, %v7546
      %v7548 = vpop.f32.mrb[0].mxu0
      %7549 = vmatprep.mubr.bf16.mxu0 0
      %7550 = vmatmul.mubr.bf16.gmra.mrb[0].mxu0 %v7395
      %v7551 = vpop.f32.mrb[0].mxu0
      %v7552 = vadd.f32 0.0, %v7551
      %v7553 = vpop.f32.mrb[0].mxu0
      %v7554 = vpop.f32.mrb[0].mxu0
      %v7555 = vadd.f32 0.0, %v7554
      %v7556 = vpop.f32.mrb[0].mxu0
      %7557 = vmatprep.mubr.bf16.mxu0 0
      %7558 = vmatmul.mubr.bf16.gmra.mrb[0].mxu0 %v7396
      %v7559 = vpop.f32.mrb[0].mxu0
      %v7560 = vadd.f32 0.0, %v7559
      %v7561 = vpop.f32.mrb[0].mxu0
      %v7562 = vpop.f32.mrb[0].mxu0
      %v7563 = vadd.f32 0.0, %v7562
      %v7564 = vpop.f32.mrb[0].mxu0
      %7565 = vmatprep.mubr.bf16.mxu0 0
      %7566 = vmatmul.mubr.bf16.gmra.mrb[0].mxu0 %v7397
      %v7567 = vpop.f32.mrb[0].mxu0
      %v7568 = vadd.f32 0.0, %v7567
      %v7569 = vpop.f32.mrb[0].mxu0
      %v7570 = vpop.f32.mrb[0].mxu0
      %v7571 = vadd.f32 0.0, %v7570
      %v7572 = vpop.f32.mrb[0].mxu0
      %7573 = vmatprep.mubr.bf16.mxu0 0
      %7574 = vmatmul.mubr.bf16.gmra.mrb[0].mxu0 %v7398
      %v7575 = vpop.f32.mrb[0].mxu0
      %v7576 = vadd.f32 0.0, %v7575
      %v7577 = vpop.f32.mrb[0].mxu0
      %v7578 = vpop.f32.mrb[0].mxu0
      %v7579 = vadd.f32 0.0, %v7578
      %v7580 = vpop.f32.mrb[0].mxu0
      %7581 = vmatprep.mubr.bf16.mxu0 0
      %7582 = vmatmul.mubr.bf16.gmra.mrb[0].mxu0 %v7399
      %v7583 = vpop.f32.mrb[0].mxu0
      %v7584 = vadd.f32 0.0, %v7583
      %v7585 = vpop.f32.mrb[0].mxu0
      %v7586 = vpop.f32.mrb[0].mxu0
      %v7587 = vadd.f32 0.0, %v7586
      %v7588 = vpop.f32.mrb[0].mxu0
      %7589 = vmatprep.mubr.bf16.mxu0 0
      %7590 = vmatmul.mubr.bf16.gmra.mrb[0].mxu0 %v7400
      %v7591 = vpop.f32.mrb[0].mxu0
      %v7592 = vadd.f32 0.0, %v7591
      %v7593 = vpop.f32.mrb[0].mxu0
      %v7594 = vpop.f32.mrb[0].mxu0
      %v7595 = vadd.f32 0.0, %v7594
      %v7596 = vpop.f32.mrb[0].mxu0
      %7597 = vmatprep.mubr.bf16.mxu0 0
      %7598 = vmatmul.mubr.bf16.gmra.mrb[0].mxu0 %v7401
      %v7599 = vpop.f32.mrb[0].mxu0
      %v7600 = vadd.f32 0.0, %v7599
      %v7601 = vpop.f32.mrb[0].mxu0
      %v7602 = vpop.f32.mrb[0].mxu0
      %v7603 = vadd.f32 0.0, %v7602
      %v7604 = vpop.f32.mrb[0].mxu0
      %7605 = vmatprep.mubr.bf16.mxu0 0
      %7606 = vmatmul.mubr.bf16.gmra.mrb[0].mxu0 %v7402
      %v7607 = vpop.f32.mrb[0].mxu0
      %v7608 = vadd.f32 0.0, %v7607
      %v7609 = vpop.f32.mrb[0].mxu0
      %v7610 = vpop.f32.mrb[0].mxu0
      %v7611 = vadd.f32 0.0, %v7610
      %v7612 = vpop.f32.mrb[0].mxu0
      %7613 = vmatprep.mubr.bf16.mxu0 0
      %7614 = vmatmul.mubr.bf16.gmra.mrb[0].mxu0 %v7403
      %v7615 = vpop.f32.mrb[0].mxu0
      %v7616 = vadd.f32 0.0, %v7615
      %v7617 = vpop.f32.mrb[0].mxu0
      %v7618 = vpop.f32.mrb[0].mxu0
      %v7619 = vadd.f32 0.0, %v7618
      %v7620 = vpop.f32.mrb[0].mxu0
      %7621 = vmatprep.mubr.bf16.mxu0 0
      %7622 = vmatmul.mubr.bf16.gmra.mrb[0].mxu0 %v7404
      %v7623 = vpop.f32.mrb[0].mxu0
      %v7624 = vadd.f32 0.0, %v7623
      %v7625 = vpop.f32.mrb[0].mxu0
      %v7626 = vpop.f32.mrb[0].mxu0
      %v7627 = vadd.f32 0.0, %v7626
      %v7628 = vpop.f32.mrb[0].mxu0
      %7629 = vdwg.mxu0
      %v7630 = vadd.f32 %v7244, %v7504
      %v7631 = vadd.f32 %v7245, %v7507
      %v7632 = vadd.f32 %v7246, %v7512
      %v7633 = vadd.f32 %v7247, %v7515
      %v7634 = vadd.f32 %v7248, %v7520
      %v7635 = vadd.f32 %v7249, %v7523
      %v7636 = vadd.f32 %v7250, %v7528
      %v7637 = vadd.f32 %v7251, %v7531
      %v7638 = vadd.f32 %v7252, %v7536
      %v7639 = vadd.f32 %v7253, %v7539
      %v7640 = vadd.f32 %v7254, %v7544
      %v7641 = vadd.f32 %v7255, %v7547
      %v7642 = vadd.f32 %v7256, %v7552
      %v7643 = vadd.f32 %v7257, %v7555
      %v7644 = vadd.f32 %v7258, %v7560
      %v7645 = vadd.f32 %v7259, %v7563
      %v7646 = vadd.f32 %v7260, %v7568
      %v7647 = vadd.f32 %v7261, %v7571
      %v7648 = vadd.f32 %v7262, %v7576
      %v7649 = vadd.f32 %v7263, %v7579
      %v7650 = vadd.f32 %v7264, %v7584
      %v7651 = vadd.f32 %v7265, %v7587
      %v7652 = vadd.f32 %v7266, %v7592
      %v7653 = vadd.f32 %v7267, %v7595
      %v7654 = vadd.f32 %v7268, %v7600
      %v7655 = vadd.f32 %v7269, %v7603
      %v7656 = vadd.f32 %v7270, %v7608
      %v7657 = vadd.f32 %v7271, %v7611
      %v7658 = vadd.f32 %v7272, %v7616
      %v7659 = vadd.f32 %v7273, %v7619
      %v7660 = vadd.f32 %v7274, %v7624
      %v7661 = vadd.f32 %v7275, %v7627
      %v7662 = vld [vmem:[%s5633] sm:$0xf]
      %v7663 = vld [vmem:[%s5633 + $0x4] sm:$0xf]
      %v7664 = vld [vmem:[%s5633 + $0x8] sm:$0x1]
      %v7665 = vld [vmem:[%s5633 + $0xc] sm:$0xf]
      %v7666 = vld [vmem:[%s5633 + $0x10] sm:$0xf]
      %v7667 = vld [vmem:[%s5633 + $0x14] sm:$0x1]
      %v7668 = vld [vmem:[%s5633 + $0x18] sm:$0xf]
      %v7669 = vld [vmem:[%s5633 + $0x1c] sm:$0xf]
      %v7670 = vld [vmem:[%s5633 + $0x20] sm:$0x1]
      %v7671 = vld [vmem:[%s5633 + $0x24] sm:$0xf]
      %v7672 = vld [vmem:[%s5633 + $0x28] sm:$0xf]
      %v7673 = vld [vmem:[%s5633 + $0x2c] sm:$0x1]
      %v7674 = vld [vmem:[%s5633 + $0x30] sm:$0xf]
      %v7675 = vld [vmem:[%s5633 + $0x34] sm:$0xf]
      %v7676 = vld [vmem:[%s5633 + $0x38] sm:$0x1]
      %v7677 = vld [vmem:[%s5633 + $0x3c] sm:$0xf]
      %v7678 = vld [vmem:[%s5633 + $0x40] sm:$0xf]
      %v7679 = vld [vmem:[%s5633 + $0x44] sm:$0x1]
      %v7680 = vld [vmem:[%s5633 + $0x48] sm:$0xf]
      %v7681 = vld [vmem:[%s5633 + $0x4c] sm:$0xf]
      %v7682 = vld [vmem:[%s5633 + $0x50] sm:$0x1]
      %v7683 = vld [vmem:[%s5633 + $0x54] sm:$0xf]
      %v7684 = vld [vmem:[%s5633 + $0x58] sm:$0xf]
      %v7685 = vld [vmem:[%s5633 + $0x5c] sm:$0x1]
      %v7686 = vld [vmem:[%s5633 + $0x60] sm:$0xf]
      %v7687 = vld [vmem:[%s5633 + $0x64] sm:$0xf]
      %v7688 = vld [vmem:[%s5633 + $0x68] sm:$0x1]
      %v7689 = vld [vmem:[%s5633 + $0x6c] sm:$0xf]
      %v7690 = vld [vmem:[%s5633 + $0x70] sm:$0xf]
      %v7691 = vld [vmem:[%s5633 + $0x74] sm:$0x1]
      %v7692 = vld [vmem:[%s5633 + $0x78] sm:$0xf]
      %v7693 = vld [vmem:[%s5633 + $0x7c] sm:$0xf]
      %v7694 = vld [vmem:[%s5633 + $0x80] sm:$0x1]
      %v7695 = vld [vmem:[%s5633 + $0x84] sm:$0xf]
      %v7696 = vld [vmem:[%s5633 + $0x88] sm:$0xf]
      %v7697 = vld [vmem:[%s5633 + $0x8c] sm:$0x1]
      %v7698 = vld [vmem:[%s5633 + $0x90] sm:$0xf]
      %v7699 = vld [vmem:[%s5633 + $0x94] sm:$0xf]
      %v7700 = vld [vmem:[%s5633 + $0x98] sm:$0x1]
      %v7701 = vld [vmem:[%s5633 + $0x9c] sm:$0xf]
      %v7702 = vld [vmem:[%s5633 + $0xa0] sm:$0xf]
      %v7703 = vld [vmem:[%s5633 + $0xa4] sm:$0x1]
      %v7704 = vld [vmem:[%s5633 + $0xa8] sm:$0xf]
      %v7705 = vld [vmem:[%s5633 + $0xac] sm:$0xf]
      %v7706 = vld [vmem:[%s5633 + $0xb0] sm:$0x1]
      %v7707 = vld [vmem:[%s5633 + $0xb4] sm:$0xf]
      %v7708 = vld [vmem:[%s5633 + $0xb8] sm:$0xf]
      %v7709 = vld [vmem:[%s5633 + $0xbc] sm:$0x1]
      %v7711 = vshrl.u32 %v7662, 16
      %v7713 = vrot.slane %v7711, 4
      %v7714 = vshll.u32 %v7662, 16
      %v7716 = vrot.slane %v7714, 5
      %v7717 = vor.u32 %v7713, %v7716
      %v7718 = vrot.slane %v7717, 4
      %v7720 = vshll.u32 %v7663, 16
      %v7722 = vrot.slane %v7720, 5
      %v7723 = vsel %vm346, %v7718, %v7722
      %v7724 = vshrl.u32 %v7663, 16
      %v7726 = vrot.slane %v7724, 4
      %v7727 = vor.u32 %v7726, %v7722
      %v7728 = vrot.slane %v7727, 4
      %v7730 = vshll.u32 %v7664, 16
      %v7732 = vrot.slane %v7730, 5
      %v7733 = vsel %vm346, %v7728, %v7732
      %v7735 = vshrl.u32 %v7665, 16
      %v7737 = vrot.slane %v7735, 4
      %v7738 = vshll.u32 %v7665, 16
      %v7740 = vrot.slane %v7738, 5
      %v7741 = vor.u32 %v7737, %v7740
      %v7742 = vrot.slane %v7741, 4
      %v7744 = vshll.u32 %v7666, 16
      %v7746 = vrot.slane %v7744, 5
      %v7747 = vsel %vm346, %v7742, %v7746
      %v7748 = vshrl.u32 %v7666, 16
      %v7750 = vrot.slane %v7748, 4
      %v7751 = vor.u32 %v7750, %v7746
      %v7752 = vrot.slane %v7751, 4
      %v7754 = vshll.u32 %v7667, 16
      %v7756 = vrot.slane %v7754, 5
      %v7757 = vsel %vm346, %v7752, %v7756
      %v7759 = vshrl.u32 %v7668, 16
      %v7761 = vrot.slane %v7759, 4
      %v7762 = vshll.u32 %v7668, 16
      %v7764 = vrot.slane %v7762, 5
      %v7765 = vor.u32 %v7761, %v7764
      %v7766 = vrot.slane %v7765, 4
      %v7768 = vshll.u32 %v7669, 16
      %v7770 = vrot.slane %v7768, 5
      %v7771 = vsel %vm346, %v7766, %v7770
      %v7772 = vshrl.u32 %v7669, 16
      %v7774 = vrot.slane %v7772, 4
      %v7775 = vor.u32 %v7774, %v7770
      %v7776 = vrot.slane %v7775, 4
      %v7778 = vshll.u32 %v7670, 16
      %v7780 = vrot.slane %v7778, 5
      %v7781 = vsel %vm346, %v7776, %v7780
      %v7783 = vshrl.u32 %v7671, 16
      %v7785 = vrot.slane %v7783, 4
      %v7786 = vshll.u32 %v7671, 16
      %v7788 = vrot.slane %v7786, 5
      %v7789 = vor.u32 %v7785, %v7788
      %v7790 = vrot.slane %v7789, 4
      %v7792 = vshll.u32 %v7672, 16
      %v7794 = vrot.slane %v7792, 5
      %v7795 = vsel %vm346, %v7790, %v7794
      %v7796 = vshrl.u32 %v7672, 16
      %v7798 = vrot.slane %v7796, 4
      %v7799 = vor.u32 %v7798, %v7794
      %v7800 = vrot.slane %v7799, 4
      %v7802 = vshll.u32 %v7673, 16
      %v7804 = vrot.slane %v7802, 5
      %v7805 = vsel %vm346, %v7800, %v7804
      %v7807 = vshrl.u32 %v7674, 16
      %v7809 = vrot.slane %v7807, 4
      %v7810 = vshll.u32 %v7674, 16
      %v7812 = vrot.slane %v7810, 5
      %v7813 = vor.u32 %v7809, %v7812
      %v7814 = vrot.slane %v7813, 4
      %v7816 = vshll.u32 %v7675, 16
      %v7818 = vrot.slane %v7816, 5
      %v7819 = vsel %vm346, %v7814, %v7818
      %v7820 = vshrl.u32 %v7675, 16
      %v7822 = vrot.slane %v7820, 4
      %v7823 = vor.u32 %v7822, %v7818
      %v7824 = vrot.slane %v7823, 4
      %v7826 = vshll.u32 %v7676, 16
      %v7828 = vrot.slane %v7826, 5
      %v7829 = vsel %vm346, %v7824, %v7828
      %v7831 = vshrl.u32 %v7677, 16
      %v7833 = vrot.slane %v7831, 4
      %v7834 = vshll.u32 %v7677, 16
      %v7836 = vrot.slane %v7834, 5
      %v7837 = vor.u32 %v7833, %v7836
      %v7838 = vrot.slane %v7837, 4
      %v7840 = vshll.u32 %v7678, 16
      %v7842 = vrot.slane %v7840, 5
      %v7843 = vsel %vm346, %v7838, %v7842
      %v7844 = vshrl.u32 %v7678, 16
      %v7846 = vrot.slane %v7844, 4
      %v7847 = vor.u32 %v7846, %v7842
      %v7848 = vrot.slane %v7847, 4
      %v7850 = vshll.u32 %v7679, 16
      %v7852 = vrot.slane %v7850, 5
      %v7853 = vsel %vm346, %v7848, %v7852
      %v7855 = vshrl.u32 %v7680, 16
      %v7857 = vrot.slane %v7855, 4
      %v7858 = vshll.u32 %v7680, 16
      %v7860 = vrot.slane %v7858, 5
      %v7861 = vor.u32 %v7857, %v7860
      %v7862 = vrot.slane %v7861, 4
      %v7864 = vshll.u32 %v7681, 16
      %v7866 = vrot.slane %v7864, 5
      %v7867 = vsel %vm346, %v7862, %v7866
      %v7868 = vshrl.u32 %v7681, 16
      %v7870 = vrot.slane %v7868, 4
      %v7871 = vor.u32 %v7870, %v7866
      %v7872 = vrot.slane %v7871, 4
      %v7874 = vshll.u32 %v7682, 16
      %v7876 = vrot.slane %v7874, 5
      %v7877 = vsel %vm346, %v7872, %v7876
      %v7879 = vshrl.u32 %v7683, 16
      %v7881 = vrot.slane %v7879, 4
      %v7882 = vshll.u32 %v7683, 16
      %v7884 = vrot.slane %v7882, 5
      %v7885 = vor.u32 %v7881, %v7884
      %v7886 = vrot.slane %v7885, 4
      %v7888 = vshll.u32 %v7684, 16
      %v7890 = vrot.slane %v7888, 5
      %v7891 = vsel %vm346, %v7886, %v7890
      %v7892 = vshrl.u32 %v7684, 16
      %v7894 = vrot.slane %v7892, 4
      %v7895 = vor.u32 %v7894, %v7890
      %v7896 = vrot.slane %v7895, 4
      %v7898 = vshll.u32 %v7685, 16
      %v7900 = vrot.slane %v7898, 5
      %v7901 = vsel %vm346, %v7896, %v7900
      %v7903 = vshrl.u32 %v7686, 16
      %v7905 = vrot.slane %v7903, 4
      %v7906 = vshll.u32 %v7686, 16
      %v7908 = vrot.slane %v7906, 5
      %v7909 = vor.u32 %v7905, %v7908
      %v7910 = vrot.slane %v7909, 4
      %v7912 = vshll.u32 %v7687, 16
      %v7914 = vrot.slane %v7912, 5
      %v7915 = vsel %vm346, %v7910, %v7914
      %v7916 = vshrl.u32 %v7687, 16
      %v7918 = vrot.slane %v7916, 4
      %v7919 = vor.u32 %v7918, %v7914
      %v7920 = vrot.slane %v7919, 4
      %v7922 = vshll.u32 %v7688, 16
      %v7924 = vrot.slane %v7922, 5
      %v7925 = vsel %vm346, %v7920, %v7924
      %v7927 = vshrl.u32 %v7689, 16
      %v7929 = vrot.slane %v7927, 4
      %v7930 = vshll.u32 %v7689, 16
      %v7932 = vrot.slane %v7930, 5
      %v7933 = vor.u32 %v7929, %v7932
      %v7934 = vrot.slane %v7933, 4
      %v7936 = vshll.u32 %v7690, 16
      %v7938 = vrot.slane %v7936, 5
      %v7939 = vsel %vm346, %v7934, %v7938
      %v7940 = vshrl.u32 %v7690, 16
      %v7942 = vrot.slane %v7940, 4
      %v7943 = vor.u32 %v7942, %v7938
      %v7944 = vrot.slane %v7943, 4
      %v7946 = vshll.u32 %v7691, 16
      %v7948 = vrot.slane %v7946, 5
      %v7949 = vsel %vm346, %v7944, %v7948
      %v7951 = vshrl.u32 %v7692, 16
      %v7953 = vrot.slane %v7951, 4
      %v7954 = vshll.u32 %v7692, 16
      %v7956 = vrot.slane %v7954, 5
      %v7957 = vor.u32 %v7953, %v7956
      %v7958 = vrot.slane %v7957, 4
      %v7960 = vshll.u32 %v7693, 16
      %v7962 = vrot.slane %v7960, 5
      %v7963 = vsel %vm346, %v7958, %v7962
      %v7964 = vshrl.u32 %v7693, 16
      %v7966 = vrot.slane %v7964, 4
      %v7967 = vor.u32 %v7966, %v7962
      %v7968 = vrot.slane %v7967, 4
      %v7970 = vshll.u32 %v7694, 16
      %v7972 = vrot.slane %v7970, 5
      %v7973 = vsel %vm346, %v7968, %v7972
      %v7975 = vshrl.u32 %v7695, 16
      %v7977 = vrot.slane %v7975, 4
      %v7978 = vshll.u32 %v7695, 16
      %v7980 = vrot.slane %v7978, 5
      %v7981 = vor.u32 %v7977, %v7980
      %v7982 = vrot.slane %v7981, 4
      %v7984 = vshll.u32 %v7696, 16
      %v7986 = vrot.slane %v7984, 5
      %v7987 = vsel %vm346, %v7982, %v7986
      %v7988 = vshrl.u32 %v7696, 16
      %v7990 = vrot.slane %v7988, 4
      %v7991 = vor.u32 %v7990, %v7986
      %v7992 = vrot.slane %v7991, 4
      %v7994 = vshll.u32 %v7697, 16
      %v7996 = vrot.slane %v7994, 5
      %v7997 = vsel %vm346, %v7992, %v7996
      %v7999 = vshrl.u32 %v7698, 16
      %v8001 = vrot.slane %v7999, 4
      %v8002 = vshll.u32 %v7698, 16
      %v8004 = vrot.slane %v8002, 5
      %v8005 = vor.u32 %v8001, %v8004
      %v8006 = vrot.slane %v8005, 4
      %v8008 = vshll.u32 %v7699, 16
      %v8010 = vrot.slane %v8008, 5
      %v8011 = vsel %vm346, %v8006, %v8010
      %v8012 = vshrl.u32 %v7699, 16
      %v8014 = vrot.slane %v8012, 4
      %v8015 = vor.u32 %v8014, %v8010
      %v8016 = vrot.slane %v8015, 4
      %v8018 = vshll.u32 %v7700, 16
      %v8020 = vrot.slane %v8018, 5
      %v8021 = vsel %vm346, %v8016, %v8020
      %v8023 = vshrl.u32 %v7701, 16
      %v8025 = vrot.slane %v8023, 4
      %v8026 = vshll.u32 %v7701, 16
      %v8028 = vrot.slane %v8026, 5
      %v8029 = vor.u32 %v8025, %v8028
      %v8030 = vrot.slane %v8029, 4
      %v8032 = vshll.u32 %v7702, 16
      %v8034 = vrot.slane %v8032, 5
      %v8035 = vsel %vm346, %v8030, %v8034
      %v8036 = vshrl.u32 %v7702, 16
      %v8038 = vrot.slane %v8036, 4
      %v8039 = vor.u32 %v8038, %v8034
      %v8040 = vrot.slane %v8039, 4
      %v8042 = vshll.u32 %v7703, 16
      %v8044 = vrot.slane %v8042, 5
      %v8045 = vsel %vm346, %v8040, %v8044
      %v8047 = vshrl.u32 %v7704, 16
      %v8049 = vrot.slane %v8047, 4
      %v8050 = vshll.u32 %v7704, 16
      %v8052 = vrot.slane %v8050, 5
      %v8053 = vor.u32 %v8049, %v8052
      %v8054 = vrot.slane %v8053, 4
      %v8056 = vshll.u32 %v7705, 16
      %v8058 = vrot.slane %v8056, 5
      %v8059 = vsel %vm346, %v8054, %v8058
      %v8060 = vshrl.u32 %v7705, 16
      %v8062 = vrot.slane %v8060, 4
      %v8063 = vor.u32 %v8062, %v8058
      %v8064 = vrot.slane %v8063, 4
      %v8066 = vshll.u32 %v7706, 16
      %v8068 = vrot.slane %v8066, 5
      %v8069 = vsel %vm346, %v8064, %v8068
      %v8071 = vshrl.u32 %v7707, 16
      %v8073 = vrot.slane %v8071, 4
      %v8074 = vshll.u32 %v7707, 16
      %v8076 = vrot.slane %v8074, 5
      %v8077 = vor.u32 %v8073, %v8076
      %v8078 = vrot.slane %v8077, 4
      %v8080 = vshll.u32 %v7708, 16
      %v8082 = vrot.slane %v8080, 5
      %v8083 = vsel %vm346, %v8078, %v8082
      %v8084 = vshrl.u32 %v7708, 16
      %v8086 = vrot.slane %v8084, 4
      %v8087 = vor.u32 %v8086, %v8082
      %v8088 = vrot.slane %v8087, 4
      %v8090 = vshll.u32 %v7709, 16
      %v8092 = vrot.slane %v8090, 5
      %v8093 = vsel %vm346, %v8088, %v8092
      %s8094 = scalar_lea.vmem %s3, 256
      %v8095 = vld [vmem:[%s8094] sm:$0xf]
      %v8096 = vld [vmem:[%s8094 + $0x4] sm:$0xf]
      %v8097 = vld [vmem:[%s8094 + $0x8] sm:$0xf]
      %v8098 = vld [vmem:[%s8094 + $0xc] sm:$0xf]
      %v8099 = vld [vmem:[%s8094 + $0x10] sm:$0xf]
      %v8100 = vld [vmem:[%s8094 + $0x14] sm:$0xf]
      %v8101 = vld [vmem:[%s8094 + $0x18] sm:$0xf]
      %v8102 = vld [vmem:[%s8094 + $0x1c] sm:$0xf]
      %v8103 = vld [vmem:[%s8094 + $0x20] sm:$0xf]
      %v8104 = vld [vmem:[%s8094 + $0x24] sm:$0xf]
      %v8105 = vld [vmem:[%s8094 + $0x28] sm:$0xf]
      %v8106 = vld [vmem:[%s8094 + $0x2c] sm:$0xf]
      %v8107 = vld [vmem:[%s8094 + $0x30] sm:$0xf]
      %v8108 = vld [vmem:[%s8094 + $0x34] sm:$0xf]
      %v8109 = vld [vmem:[%s8094 + $0x38] sm:$0xf]
      %v8110 = vld [vmem:[%s8094 + $0x3c] sm:$0xf]
      %v8111 = vunpack.c.l.b16 %v7723
      %v8112 = vunpack.c.l.b16 %v7733
      %v8113 = vunpack.c.l.b16 %v7747
      %v8114 = vunpack.c.l.b16 %v7757
      %v8115 = vunpack.c.l.b16 %v7771
      %v8116 = vunpack.c.l.b16 %v7781
      %v8117 = vunpack.c.l.b16 %v7795
      %v8118 = vunpack.c.l.b16 %v7805
      %v8119 = vunpack.c.l.b16 %v7819
      %v8120 = vunpack.c.l.b16 %v7829
      %v8121 = vunpack.c.l.b16 %v7843
      %v8122 = vunpack.c.l.b16 %v7853
      %v8123 = vunpack.c.l.b16 %v7867
      %v8124 = vunpack.c.l.b16 %v7877
      %v8125 = vunpack.c.l.b16 %v7891
      %v8126 = vunpack.c.l.b16 %v7901
      %v8127 = vunpack.c.l.b16 %v7915
      %v8128 = vunpack.c.l.b16 %v7925
      %v8129 = vunpack.c.l.b16 %v7939
      %v8130 = vunpack.c.l.b16 %v7949
      %v8131 = vunpack.c.l.b16 %v7963
      %v8132 = vunpack.c.l.b16 %v7973
      %v8133 = vunpack.c.l.b16 %v7987
      %v8134 = vunpack.c.l.b16 %v7997
      %v8135 = vunpack.c.l.b16 %v8011
      %v8136 = vunpack.c.l.b16 %v8021
      %v8137 = vunpack.c.l.b16 %v8035
      %v8138 = vunpack.c.l.b16 %v8045
      %v8139 = vunpack.c.l.b16 %v8059
      %v8140 = vunpack.c.l.b16 %v8069
      %v8141 = vunpack.c.l.b16 %v8083
      %v8142 = vunpack.c.l.b16 %v8093
      %v8143 = vpack.c.b16 %v8112, %v8111
      %v8144 = vpack.c.b16 %v8114, %v8113
      %v8145 = vpack.c.b16 %v8116, %v8115
      %v8146 = vpack.c.b16 %v8118, %v8117
      %v8147 = vpack.c.b16 %v8120, %v8119
      %v8148 = vpack.c.b16 %v8122, %v8121
      %v8149 = vpack.c.b16 %v8124, %v8123
      %v8150 = vpack.c.b16 %v8126, %v8125
      %v8151 = vpack.c.b16 %v8128, %v8127
      %v8152 = vpack.c.b16 %v8130, %v8129
      %v8153 = vpack.c.b16 %v8132, %v8131
      %v8154 = vpack.c.b16 %v8134, %v8133
      %v8155 = vpack.c.b16 %v8136, %v8135
      %v8156 = vpack.c.b16 %v8138, %v8137
      %v8157 = vpack.c.b16 %v8140, %v8139
      %v8158 = vpack.c.b16 %v8142, %v8141
      %v8191 = vunpack.c.l.b16 %v8095
      %v8192 = vunpack.c.l.b16 %v8096
      %v8193 = vunpack.c.l.b16 %v8097
      %v8194 = vunpack.c.l.b16 %v8098
      %v8195 = vunpack.c.l.b16 %v8099
      %v8196 = vunpack.c.l.b16 %v8100
      %v8197 = vunpack.c.l.b16 %v8101
      %v8198 = vunpack.c.l.b16 %v8102
      %v8199 = vunpack.c.l.b16 %v8103
      %v8200 = vunpack.c.l.b16 %v8104
      %v8201 = vunpack.c.l.b16 %v8105
      %v8202 = vunpack.c.l.b16 %v8106
      %v8203 = vunpack.c.l.b16 %v8107
      %v8204 = vunpack.c.l.b16 %v8108
      %v8205 = vunpack.c.l.b16 %v8109
      %v8206 = vunpack.c.l.b16 %v8110
      %v8207 = vpack.c.b16 %v8192, %v8191
      %v8208 = vpack.c.b16 %v8194, %v8193
      %v8209 = vpack.c.b16 %v8196, %v8195
      %v8210 = vpack.c.b16 %v8198, %v8197
      %v8211 = vpack.c.b16 %v8200, %v8199
      %v8212 = vpack.c.b16 %v8202, %v8201
      %v8213 = vpack.c.b16 %v8204, %v8203
      %v8214 = vpack.c.b16 %v8206, %v8205
      %8223 = vmatprep.subr.bf16.mxu0 0
      %8224 = vmatpush1.bf16.msra.mxu0 %v8207
      %8225 = vmatprep.subr.bf16.mxu0 0
      %8226 = vmatpush1.bf16.msra.mxu0 %v8208
      %8227 = vmatprep.subr.bf16.mxu0 0
      %8228 = vmatpush1.bf16.msra.mxu0 %v8209
      %8229 = vmatprep.subr.bf16.mxu0 0
      %8230 = vmatpush1.bf16.msra.mxu0 %v8210
      %8231 = vmatprep.subr.bf16.mxu0 0
      %8232 = vmatpush1.bf16.msra.mxu0 %v8211
      %8233 = vmatprep.subr.bf16.mxu0 0
      %8234 = vmatpush1.bf16.msra.mxu0 %v8212
      %8235 = vmatprep.subr.bf16.mxu0 0
      %8236 = vmatpush1.bf16.msra.mxu0 %v8213
      %8237 = vmatprep.subr.bf16.mxu0 0
      %8238 = vmatpush1.bf16.msra.mxu0 %v8214
      %8239 = vmatprep.subr.bf16.mxu0 0
      %8240 = vmatpush1.bf16.msra.mxu0 0
      %8241 = vmatprep.subr.bf16.mxu0 0
      %8242 = vmatpush1.bf16.msra.mxu0 0
      %8243 = vmatprep.subr.bf16.mxu0 0
      %8244 = vmatpush1.bf16.msra.mxu0 0
      %8245 = vmatprep.subr.bf16.mxu0 0
      %8246 = vmatpush1.bf16.msra.mxu0 0
      %8247 = vmatprep.subr.bf16.mxu0 0
      %8248 = vmatpush1.bf16.msra.mxu0 0
      %8249 = vmatprep.subr.bf16.mxu0 0
      %8250 = vmatpush1.bf16.msra.mxu0 0
      %8251 = vmatprep.subr.bf16.mxu0 0
      %8252 = vmatpush1.bf16.msra.mxu0 0
      %8253 = vmatprep.subr.bf16.mxu0 0
      %8254 = vmatpush1.bf16.msra.mxu0 0
      %8255 = vmatprep.mubr.bf16.mxu0 0
      %8256 = vmatmul.mubr.bf16.gmra.mrb[0].mxu0 %v8143
      %v8257 = vpop.f32.mrb[0].mxu0
      %v8258 = vadd.f32 0.0, %v8257
      %v8259 = vpop.f32.mrb[0].mxu0
      %v8260 = vpop.f32.mrb[0].mxu0
      %v8261 = vadd.f32 0.0, %v8260
      %v8262 = vpop.f32.mrb[0].mxu0
      %8263 = vmatprep.mubr.bf16.mxu0 0
      %8264 = vmatmul.mubr.bf16.gmra.mrb[0].mxu0 %v8144
      %v8265 = vpop.f32.mrb[0].mxu0
      %v8266 = vadd.f32 0.0, %v8265
      %v8267 = vpop.f32.mrb[0].mxu0
      %v8268 = vpop.f32.mrb[0].mxu0
      %v8269 = vadd.f32 0.0, %v8268
      %v8270 = vpop.f32.mrb[0].mxu0
      %8271 = vmatprep.mubr.bf16.mxu0 0
      %8272 = vmatmul.mubr.bf16.gmra.mrb[0].mxu0 %v8145
      %v8273 = vpop.f32.mrb[0].mxu0
      %v8274 = vadd.f32 0.0, %v8273
      %v8275 = vpop.f32.mrb[0].mxu0
      %v8276 = vpop.f32.mrb[0].mxu0
      %v8277 = vadd.f32 0.0, %v8276
      %v8278 = vpop.f32.mrb[0].mxu0
      %8279 = vmatprep.mubr.bf16.mxu0 0
      %8280 = vmatmul.mubr.bf16.gmra.mrb[0].mxu0 %v8146
      %v8281 = vpop.f32.mrb[0].mxu0
      %v8282 = vadd.f32 0.0, %v8281
      %v8283 = vpop.f32.mrb[0].mxu0
      %v8284 = vpop.f32.mrb[0].mxu0
      %v8285 = vadd.f32 0.0, %v8284
      %v8286 = vpop.f32.mrb[0].mxu0
      %8287 = vmatprep.mubr.bf16.mxu0 0
      %8288 = vmatmul.mubr.bf16.gmra.mrb[0].mxu0 %v8147
      %v8289 = vpop.f32.mrb[0].mxu0
      %v8290 = vadd.f32 0.0, %v8289
      %v8291 = vpop.f32.mrb[0].mxu0
      %v8292 = vpop.f32.mrb[0].mxu0
      %v8293 = vadd.f32 0.0, %v8292
      %v8294 = vpop.f32.mrb[0].mxu0
      %8295 = vmatprep.mubr.bf16.mxu0 0
      %8296 = vmatmul.mubr.bf16.gmra.mrb[0].mxu0 %v8148
      %v8297 = vpop.f32.mrb[0].mxu0
      %v8298 = vadd.f32 0.0, %v8297
      %v8299 = vpop.f32.mrb[0].mxu0
      %v8300 = vpop.f32.mrb[0].mxu0
      %v8301 = vadd.f32 0.0, %v8300
      %v8302 = vpop.f32.mrb[0].mxu0
      %8303 = vmatprep.mubr.bf16.mxu0 0
      %8304 = vmatmul.mubr.bf16.gmra.mrb[0].mxu0 %v8149
      %v8305 = vpop.f32.mrb[0].mxu0
      %v8306 = vadd.f32 0.0, %v8305
      %v8307 = vpop.f32.mrb[0].mxu0
      %v8308 = vpop.f32.mrb[0].mxu0
      %v8309 = vadd.f32 0.0, %v8308
      %v8310 = vpop.f32.mrb[0].mxu0
      %8311 = vmatprep.mubr.bf16.mxu0 0
      %8312 = vmatmul.mubr.bf16.gmra.mrb[0].mxu0 %v8150
      %v8313 = vpop.f32.mrb[0].mxu0
      %v8314 = vadd.f32 0.0, %v8313
      %v8315 = vpop.f32.mrb[0].mxu0
      %v8316 = vpop.f32.mrb[0].mxu0
      %v8317 = vadd.f32 0.0, %v8316
      %v8318 = vpop.f32.mrb[0].mxu0
      %8319 = vmatprep.mubr.bf16.mxu0 0
      %8320 = vmatmul.mubr.bf16.gmra.mrb[0].mxu0 %v8151
      %v8321 = vpop.f32.mrb[0].mxu0
      %v8322 = vadd.f32 0.0, %v8321
      %v8323 = vpop.f32.mrb[0].mxu0
      %v8324 = vpop.f32.mrb[0].mxu0
      %v8325 = vadd.f32 0.0, %v8324
      %v8326 = vpop.f32.mrb[0].mxu0
      %8327 = vmatprep.mubr.bf16.mxu0 0
      %8328 = vmatmul.mubr.bf16.gmra.mrb[0].mxu0 %v8152
      %v8329 = vpop.f32.mrb[0].mxu0
      %v8330 = vadd.f32 0.0, %v8329
      %v8331 = vpop.f32.mrb[0].mxu0
      %v8332 = vpop.f32.mrb[0].mxu0
      %v8333 = vadd.f32 0.0, %v8332
      %v8334 = vpop.f32.mrb[0].mxu0
      %8335 = vmatprep.mubr.bf16.mxu0 0
      %8336 = vmatmul.mubr.bf16.gmra.mrb[0].mxu0 %v8153
      %v8337 = vpop.f32.mrb[0].mxu0
      %v8338 = vadd.f32 0.0, %v8337
      %v8339 = vpop.f32.mrb[0].mxu0
      %v8340 = vpop.f32.mrb[0].mxu0
      %v8341 = vadd.f32 0.0, %v8340
      %v8342 = vpop.f32.mrb[0].mxu0
      %8343 = vmatprep.mubr.bf16.mxu0 0
      %8344 = vmatmul.mubr.bf16.gmra.mrb[0].mxu0 %v8154
      %v8345 = vpop.f32.mrb[0].mxu0
      %v8346 = vadd.f32 0.0, %v8345
      %v8347 = vpop.f32.mrb[0].mxu0
      %v8348 = vpop.f32.mrb[0].mxu0
      %v8349 = vadd.f32 0.0, %v8348
      %v8350 = vpop.f32.mrb[0].mxu0
      %8351 = vmatprep.mubr.bf16.mxu0 0
      %8352 = vmatmul.mubr.bf16.gmra.mrb[0].mxu0 %v8155
      %v8353 = vpop.f32.mrb[0].mxu0
      %v8354 = vadd.f32 0.0, %v8353
      %v8355 = vpop.f32.mrb[0].mxu0
      %v8356 = vpop.f32.mrb[0].mxu0
      %v8357 = vadd.f32 0.0, %v8356
      %v8358 = vpop.f32.mrb[0].mxu0
      %8359 = vmatprep.mubr.bf16.mxu0 0
      %8360 = vmatmul.mubr.bf16.gmra.mrb[0].mxu0 %v8156
      %v8361 = vpop.f32.mrb[0].mxu0
      %v8362 = vadd.f32 0.0, %v8361
      %v8363 = vpop.f32.mrb[0].mxu0
      %v8364 = vpop.f32.mrb[0].mxu0
      %v8365 = vadd.f32 0.0, %v8364
      %v8366 = vpop.f32.mrb[0].mxu0
      %8367 = vmatprep.mubr.bf16.mxu0 0
      %8368 = vmatmul.mubr.bf16.gmra.mrb[0].mxu0 %v8157
      %v8369 = vpop.f32.mrb[0].mxu0
      %v8370 = vadd.f32 0.0, %v8369
      %v8371 = vpop.f32.mrb[0].mxu0
      %v8372 = vpop.f32.mrb[0].mxu0
      %v8373 = vadd.f32 0.0, %v8372
      %v8374 = vpop.f32.mrb[0].mxu0
      %8375 = vmatprep.mubr.bf16.mxu0 0
      %8376 = vmatmul.mubr.bf16.gmra.mrb[0].mxu0 %v8158
      %v8377 = vpop.f32.mrb[0].mxu0
      %v8378 = vadd.f32 0.0, %v8377
      %v8379 = vpop.f32.mrb[0].mxu0
      %v8380 = vpop.f32.mrb[0].mxu0
      %v8381 = vadd.f32 0.0, %v8380
      %v8382 = vpop.f32.mrb[0].mxu0
      %8383 = vdwg.mxu0
      %v8384 = vadd.f32 %v7630, %v8258
      %v8385 = vadd.f32 %v7631, %v8261
      %v8386 = vadd.f32 %v7632, %v8266
      %v8387 = vadd.f32 %v7633, %v8269
      %v8388 = vadd.f32 %v7634, %v8274
      %v8389 = vadd.f32 %v7635, %v8277
      %v8390 = vadd.f32 %v7636, %v8282
      %v8391 = vadd.f32 %v7637, %v8285
      %v8392 = vadd.f32 %v7638, %v8290
      %v8393 = vadd.f32 %v7639, %v8293
      %v8394 = vadd.f32 %v7640, %v8298
      %v8395 = vadd.f32 %v7641, %v8301
      %v8396 = vadd.f32 %v7642, %v8306
      %v8397 = vadd.f32 %v7643, %v8309
      %v8398 = vadd.f32 %v7644, %v8314
      %v8399 = vadd.f32 %v7645, %v8317
      %v8400 = vadd.f32 %v7646, %v8322
      %v8401 = vadd.f32 %v7647, %v8325
      %v8402 = vadd.f32 %v7648, %v8330
      %v8403 = vadd.f32 %v7649, %v8333
      %v8404 = vadd.f32 %v7650, %v8338
      %v8405 = vadd.f32 %v7651, %v8341
      %v8406 = vadd.f32 %v7652, %v8346
      %v8407 = vadd.f32 %v7653, %v8349
      %v8408 = vadd.f32 %v7654, %v8354
      %v8409 = vadd.f32 %v7655, %v8357
      %v8410 = vadd.f32 %v7656, %v8362
      %v8411 = vadd.f32 %v7657, %v8365
      %v8412 = vadd.f32 %v7658, %v8370
      %v8413 = vadd.f32 %v7659, %v8373
      %v8414 = vadd.f32 %v7660, %v8378
      %v8415 = vadd.f32 %v7661, %v8381
      %v8416 = vld [vmem:[%s5633] sm:$0xe]
      %v8417 = vld [vmem:[%s5633 + $0xc] sm:$0xe]
      %v8418 = vld [vmem:[%s5633 + $0x18] sm:$0xe]
      %v8419 = vld [vmem:[%s5633 + $0x24] sm:$0xe]
      %v8420 = vld [vmem:[%s5633 + $0x30] sm:$0xe]
      %v8421 = vld [vmem:[%s5633 + $0x3c] sm:$0xe]
      %v8422 = vld [vmem:[%s5633 + $0x48] sm:$0xe]
      %v8423 = vld [vmem:[%s5633 + $0x54] sm:$0xe]
      %v8424 = vld [vmem:[%s5633 + $0x60] sm:$0xe]
      %v8425 = vld [vmem:[%s5633 + $0x6c] sm:$0xe]
      %v8426 = vld [vmem:[%s5633 + $0x78] sm:$0xe]
      %v8427 = vld [vmem:[%s5633 + $0x84] sm:$0xe]
      %v8428 = vld [vmem:[%s5633 + $0x90] sm:$0xe]
      %v8429 = vld [vmem:[%s5633 + $0x9c] sm:$0xe]
      %v8430 = vld [vmem:[%s5633 + $0xa8] sm:$0xe]
      %v8431 = vld [vmem:[%s5633 + $0xb4] sm:$0xe]
      %v8480 = vrot.slane %v8416, 5
      %v8481 = vrot.slane %v8480, 4
      %v8482 = vrot.slane %v7663, 5
      %v8483 = vsel %vm1376, %v8481, %v8482
      %v8484 = vrot.slane %v8482, 4
      %v8485 = vrot.slane %v7664, 5
      %v8486 = vsel %vm1376, %v8484, %v8485
      %v8487 = vrot.slane %v8417, 5
      %v8488 = vrot.slane %v8487, 4
      %v8489 = vrot.slane %v7666, 5
      %v8490 = vsel %vm1376, %v8488, %v8489
      %v8491 = vrot.slane %v8489, 4
      %v8492 = vrot.slane %v7667, 5
      %v8493 = vsel %vm1376, %v8491, %v8492
      %v8494 = vrot.slane %v8418, 5
      %v8495 = vrot.slane %v8494, 4
      %v8496 = vrot.slane %v7669, 5
      %v8497 = vsel %vm1376, %v8495, %v8496
      %v8498 = vrot.slane %v8496, 4
      %v8499 = vrot.slane %v7670, 5
      %v8500 = vsel %vm1376, %v8498, %v8499
      %v8501 = vrot.slane %v8419, 5
      %v8502 = vrot.slane %v8501, 4
      %v8503 = vrot.slane %v7672, 5
      %v8504 = vsel %vm1376, %v8502, %v8503
      %v8505 = vrot.slane %v8503, 4
      %v8506 = vrot.slane %v7673, 5
      %v8507 = vsel %vm1376, %v8505, %v8506
      %v8508 = vrot.slane %v8420, 5
      %v8509 = vrot.slane %v8508, 4
      %v8510 = vrot.slane %v7675, 5
      %v8511 = vsel %vm1376, %v8509, %v8510
      %v8512 = vrot.slane %v8510, 4
      %v8513 = vrot.slane %v7676, 5
      %v8514 = vsel %vm1376, %v8512, %v8513
      %v8515 = vrot.slane %v8421, 5
      %v8516 = vrot.slane %v8515, 4
      %v8517 = vrot.slane %v7678, 5
      %v8518 = vsel %vm1376, %v8516, %v8517
      %v8519 = vrot.slane %v8517, 4
      %v8520 = vrot.slane %v7679, 5
      %v8521 = vsel %vm1376, %v8519, %v8520
      %v8522 = vrot.slane %v8422, 5
      %v8523 = vrot.slane %v8522, 4
      %v8524 = vrot.slane %v7681, 5
      %v8525 = vsel %vm1376, %v8523, %v8524
      %v8526 = vrot.slane %v8524, 4
      %v8527 = vrot.slane %v7682, 5
      %v8528 = vsel %vm1376, %v8526, %v8527
      %v8529 = vrot.slane %v8423, 5
      %v8530 = vrot.slane %v8529, 4
      %v8531 = vrot.slane %v7684, 5
      %v8532 = vsel %vm1376, %v8530, %v8531
      %v8533 = vrot.slane %v8531, 4
      %v8534 = vrot.slane %v7685, 5
      %v8535 = vsel %vm1376, %v8533, %v8534
      %v8536 = vrot.slane %v8424, 5
      %v8537 = vrot.slane %v8536, 4
      %v8538 = vrot.slane %v7687, 5
      %v8539 = vsel %vm1376, %v8537, %v8538
      %v8540 = vrot.slane %v8538, 4
      %v8541 = vrot.slane %v7688, 5
      %v8542 = vsel %vm1376, %v8540, %v8541
      %v8543 = vrot.slane %v8425, 5
      %v8544 = vrot.slane %v8543, 4
      %v8545 = vrot.slane %v7690, 5
      %v8546 = vsel %vm1376, %v8544, %v8545
      %v8547 = vrot.slane %v8545, 4
      %v8548 = vrot.slane %v7691, 5
      %v8549 = vsel %vm1376, %v8547, %v8548
      %v8550 = vrot.slane %v8426, 5
      %v8551 = vrot.slane %v8550, 4
      %v8552 = vrot.slane %v7693, 5
      %v8553 = vsel %vm1376, %v8551, %v8552
      %v8554 = vrot.slane %v8552, 4
      %v8555 = vrot.slane %v7694, 5
      %v8556 = vsel %vm1376, %v8554, %v8555
      %v8557 = vrot.slane %v8427, 5
      %v8558 = vrot.slane %v8557, 4
      %v8559 = vrot.slane %v7696, 5
      %v8560 = vsel %vm1376, %v8558, %v8559
      %v8561 = vrot.slane %v8559, 4
      %v8562 = vrot.slane %v7697, 5
      %v8563 = vsel %vm1376, %v8561, %v8562
      %v8564 = vrot.slane %v8428, 5
      %v8565 = vrot.slane %v8564, 4
      %v8566 = vrot.slane %v7699, 5
      %v8567 = vsel %vm1376, %v8565, %v8566
      %v8568 = vrot.slane %v8566, 4
      %v8569 = vrot.slane %v7700, 5
      %v8570 = vsel %vm1376, %v8568, %v8569
      %v8571 = vrot.slane %v8429, 5
      %v8572 = vrot.slane %v8571, 4
      %v8573 = vrot.slane %v7702, 5
      %v8574 = vsel %vm1376, %v8572, %v8573
      %v8575 = vrot.slane %v8573, 4
      %v8576 = vrot.slane %v7703, 5
      %v8577 = vsel %vm1376, %v8575, %v8576
      %v8578 = vrot.slane %v8430, 5
      %v8579 = vrot.slane %v8578, 4
      %v8580 = vrot.slane %v7705, 5
      %v8581 = vsel %vm1376, %v8579, %v8580
      %v8582 = vrot.slane %v8580, 4
      %v8583 = vrot.slane %v7706, 5
      %v8584 = vsel %vm1376, %v8582, %v8583
      %v8585 = vrot.slane %v8431, 5
      %v8586 = vrot.slane %v8585, 4
      %v8587 = vrot.slane %v7708, 5
      %v8588 = vsel %vm1376, %v8586, %v8587
      %v8589 = vrot.slane %v8587, 4
      %v8590 = vrot.slane %v7709, 5
      %v8591 = vsel %vm1376, %v8589, %v8590
      %s8592 = scalar_lea.vmem %s3, 320
      %v8593 = vld [vmem:[%s8592] sm:$0xf]
      %v8594 = vld [vmem:[%s8592 + $0x4] sm:$0xf]
      %v8595 = vld [vmem:[%s8592 + $0x8] sm:$0xf]
      %v8596 = vld [vmem:[%s8592 + $0xc] sm:$0xf]
      %v8597 = vld [vmem:[%s8592 + $0x10] sm:$0xf]
      %v8598 = vld [vmem:[%s8592 + $0x14] sm:$0xf]
      %v8599 = vld [vmem:[%s8592 + $0x18] sm:$0xf]
      %v8600 = vld [vmem:[%s8592 + $0x1c] sm:$0xf]
      %v8601 = vld [vmem:[%s8592 + $0x20] sm:$0xf]
      %v8602 = vld [vmem:[%s8592 + $0x24] sm:$0xf]
      %v8603 = vld [vmem:[%s8592 + $0x28] sm:$0xf]
      %v8604 = vld [vmem:[%s8592 + $0x2c] sm:$0xf]
      %v8605 = vld [vmem:[%s8592 + $0x30] sm:$0xf]
      %v8606 = vld [vmem:[%s8592 + $0x34] sm:$0xf]
      %v8607 = vld [vmem:[%s8592 + $0x38] sm:$0xf]
      %v8608 = vld [vmem:[%s8592 + $0x3c] sm:$0xf]
      %v8609 = vunpack.c.l.b16 %v8483
      %v8610 = vunpack.c.l.b16 %v8486
      %v8611 = vunpack.c.l.b16 %v8490
      %v8612 = vunpack.c.l.b16 %v8493
      %v8613 = vunpack.c.l.b16 %v8497
      %v8614 = vunpack.c.l.b16 %v8500
      %v8615 = vunpack.c.l.b16 %v8504
      %v8616 = vunpack.c.l.b16 %v8507
      %v8617 = vunpack.c.l.b16 %v8511
      %v8618 = vunpack.c.l.b16 %v8514
      %v8619 = vunpack.c.l.b16 %v8518
      %v8620 = vunpack.c.l.b16 %v8521
      %v8621 = vunpack.c.l.b16 %v8525
      %v8622 = vunpack.c.l.b16 %v8528
      %v8623 = vunpack.c.l.b16 %v8532
      %v8624 = vunpack.c.l.b16 %v8535
      %v8625 = vunpack.c.l.b16 %v8539
      %v8626 = vunpack.c.l.b16 %v8542
      %v8627 = vunpack.c.l.b16 %v8546
      %v8628 = vunpack.c.l.b16 %v8549
      %v8629 = vunpack.c.l.b16 %v8553
      %v8630 = vunpack.c.l.b16 %v8556
      %v8631 = vunpack.c.l.b16 %v8560
      %v8632 = vunpack.c.l.b16 %v8563
      %v8633 = vunpack.c.l.b16 %v8567
      %v8634 = vunpack.c.l.b16 %v8570
      %v8635 = vunpack.c.l.b16 %v8574
      %v8636 = vunpack.c.l.b16 %v8577
      %v8637 = vunpack.c.l.b16 %v8581
      %v8638 = vunpack.c.l.b16 %v8584
      %v8639 = vunpack.c.l.b16 %v8588
      %v8640 = vunpack.c.l.b16 %v8591
      %v8641 = vpack.c.b16 %v8610, %v8609
      %v8642 = vpack.c.b16 %v8612, %v8611
      %v8643 = vpack.c.b16 %v8614, %v8613
      %v8644 = vpack.c.b16 %v8616, %v8615
      %v8645 = vpack.c.b16 %v8618, %v8617
      %v8646 = vpack.c.b16 %v8620, %v8619
      %v8647 = vpack.c.b16 %v8622, %v8621
      %v8648 = vpack.c.b16 %v8624, %v8623
      %v8649 = vpack.c.b16 %v8626, %v8625
      %v8650 = vpack.c.b16 %v8628, %v8627
      %v8651 = vpack.c.b16 %v8630, %v8629
      %v8652 = vpack.c.b16 %v8632, %v8631
      %v8653 = vpack.c.b16 %v8634, %v8633
      %v8654 = vpack.c.b16 %v8636, %v8635
      %v8655 = vpack.c.b16 %v8638, %v8637
      %v8656 = vpack.c.b16 %v8640, %v8639
      %v8689 = vunpack.c.l.b16 %v8593
      %v8690 = vunpack.c.l.b16 %v8594
      %v8691 = vunpack.c.l.b16 %v8595
      %v8692 = vunpack.c.l.b16 %v8596
      %v8693 = vunpack.c.l.b16 %v8597
      %v8694 = vunpack.c.l.b16 %v8598
      %v8695 = vunpack.c.l.b16 %v8599
      %v8696 = vunpack.c.l.b16 %v8600
      %v8697 = vunpack.c.l.b16 %v8601
      %v8698 = vunpack.c.l.b16 %v8602
      %v8699 = vunpack.c.l.b16 %v8603
      %v8700 = vunpack.c.l.b16 %v8604
      %v8701 = vunpack.c.l.b16 %v8605
      %v8702 = vunpack.c.l.b16 %v8606
      %v8703 = vunpack.c.l.b16 %v8607
      %v8704 = vunpack.c.l.b16 %v8608
      %v8705 = vpack.c.b16 %v8690, %v8689
      %v8706 = vpack.c.b16 %v8692, %v8691
      %v8707 = vpack.c.b16 %v8694, %v8693
      %v8708 = vpack.c.b16 %v8696, %v8695
      %v8709 = vpack.c.b16 %v8698, %v8697
      %v8710 = vpack.c.b16 %v8700, %v8699
      %v8711 = vpack.c.b16 %v8702, %v8701
      %v8712 = vpack.c.b16 %v8704, %v8703
      %8721 = vmatprep.subr.bf16.mxu0 0
      %8722 = vmatpush1.bf16.msra.mxu0 %v8705
      %8723 = vmatprep.subr.bf16.mxu0 0
      %8724 = vmatpush1.bf16.msra.mxu0 %v8706
      %8725 = vmatprep.subr.bf16.mxu0 0
      %8726 = vmatpush1.bf16.msra.mxu0 %v8707
      %8727 = vmatprep.subr.bf16.mxu0 0
      %8728 = vmatpush1.bf16.msra.mxu0 %v8708
      %8729 = vmatprep.subr.bf16.mxu0 0
      %8730 = vmatpush1.bf16.msra.mxu0 %v8709
      %8731 = vmatprep.subr.bf16.mxu0 0
      %8732 = vmatpush1.bf16.msra.mxu0 %v8710
      %8733 = vmatprep.subr.bf16.mxu0 0
      %8734 = vmatpush1.bf16.msra.mxu0 %v8711
      %8735 = vmatprep.subr.bf16.mxu0 0
      %8736 = vmatpush1.bf16.msra.mxu0 %v8712
      %8737 = vmatprep.subr.bf16.mxu0 0
      %8738 = vmatpush1.bf16.msra.mxu0 0
      %8739 = vmatprep.subr.bf16.mxu0 0
      %8740 = vmatpush1.bf16.msra.mxu0 0
      %8741 = vmatprep.subr.bf16.mxu0 0
      %8742 = vmatpush1.bf16.msra.mxu0 0
      %8743 = vmatprep.subr.bf16.mxu0 0
      %8744 = vmatpush1.bf16.msra.mxu0 0
      %8745 = vmatprep.subr.bf16.mxu0 0
      %8746 = vmatpush1.bf16.msra.mxu0 0
      %8747 = vmatprep.subr.bf16.mxu0 0
      %8748 = vmatpush1.bf16.msra.mxu0 0
      %8749 = vmatprep.subr.bf16.mxu0 0
      %8750 = vmatpush1.bf16.msra.mxu0 0
      %8751 = vmatprep.subr.bf16.mxu0 0
      %8752 = vmatpush1.bf16.msra.mxu0 0
      %8753 = vmatprep.mubr.bf16.mxu0 0
      %8754 = vmatmul.mubr.bf16.gmra.mrb[0].mxu0 %v8641
      %v8755 = vpop.f32.mrb[0].mxu0
      %v8756 = vadd.f32 0.0, %v8755
      %v8757 = vpop.f32.mrb[0].mxu0
      %v8758 = vpop.f32.mrb[0].mxu0
      %v8759 = vadd.f32 0.0, %v8758
      %v8760 = vpop.f32.mrb[0].mxu0
      %8761 = vmatprep.mubr.bf16.mxu0 0
      %8762 = vmatmul.mubr.bf16.gmra.mrb[0].mxu0 %v8642
      %v8763 = vpop.f32.mrb[0].mxu0
      %v8764 = vadd.f32 0.0, %v8763
      %v8765 = vpop.f32.mrb[0].mxu0
      %v8766 = vpop.f32.mrb[0].mxu0
      %v8767 = vadd.f32 0.0, %v8766
      %v8768 = vpop.f32.mrb[0].mxu0
      %8769 = vmatprep.mubr.bf16.mxu0 0
      %8770 = vmatmul.mubr.bf16.gmra.mrb[0].mxu0 %v8643
      %v8771 = vpop.f32.mrb[0].mxu0
      %v8772 = vadd.f32 0.0, %v8771
      %v8773 = vpop.f32.mrb[0].mxu0
      %v8774 = vpop.f32.mrb[0].mxu0
      %v8775 = vadd.f32 0.0, %v8774
      %v8776 = vpop.f32.mrb[0].mxu0
      %8777 = vmatprep.mubr.bf16.mxu0 0
      %8778 = vmatmul.mubr.bf16.gmra.mrb[0].mxu0 %v8644
      %v8779 = vpop.f32.mrb[0].mxu0
      %v8780 = vadd.f32 0.0, %v8779
      %v8781 = vpop.f32.mrb[0].mxu0
      %v8782 = vpop.f32.mrb[0].mxu0
      %v8783 = vadd.f32 0.0, %v8782
      %v8784 = vpop.f32.mrb[0].mxu0
      %8785 = vmatprep.mubr.bf16.mxu0 0
      %8786 = vmatmul.mubr.bf16.gmra.mrb[0].mxu0 %v8645
      %v8787 = vpop.f32.mrb[0].mxu0
      %v8788 = vadd.f32 0.0, %v8787
      %v8789 = vpop.f32.mrb[0].mxu0
      %v8790 = vpop.f32.mrb[0].mxu0
      %v8791 = vadd.f32 0.0, %v8790
      %v8792 = vpop.f32.mrb[0].mxu0
      %8793 = vmatprep.mubr.bf16.mxu0 0
      %8794 = vmatmul.mubr.bf16.gmra.mrb[0].mxu0 %v8646
      %v8795 = vpop.f32.mrb[0].mxu0
      %v8796 = vadd.f32 0.0, %v8795
      %v8797 = vpop.f32.mrb[0].mxu0
      %v8798 = vpop.f32.mrb[0].mxu0
      %v8799 = vadd.f32 0.0, %v8798
      %v8800 = vpop.f32.mrb[0].mxu0
      %8801 = vmatprep.mubr.bf16.mxu0 0
      %8802 = vmatmul.mubr.bf16.gmra.mrb[0].mxu0 %v8647
      %v8803 = vpop.f32.mrb[0].mxu0
      %v8804 = vadd.f32 0.0, %v8803
      %v8805 = vpop.f32.mrb[0].mxu0
      %v8806 = vpop.f32.mrb[0].mxu0
      %v8807 = vadd.f32 0.0, %v8806
      %v8808 = vpop.f32.mrb[0].mxu0
      %8809 = vmatprep.mubr.bf16.mxu0 0
      %8810 = vmatmul.mubr.bf16.gmra.mrb[0].mxu0 %v8648
      %v8811 = vpop.f32.mrb[0].mxu0
      %v8812 = vadd.f32 0.0, %v8811
      %v8813 = vpop.f32.mrb[0].mxu0
      %v8814 = vpop.f32.mrb[0].mxu0
      %v8815 = vadd.f32 0.0, %v8814
      %v8816 = vpop.f32.mrb[0].mxu0
      %8817 = vmatprep.mubr.bf16.mxu0 0
      %8818 = vmatmul.mubr.bf16.gmra.mrb[0].mxu0 %v8649
      %v8819 = vpop.f32.mrb[0].mxu0
      %v8820 = vadd.f32 0.0, %v8819
      %v8821 = vpop.f32.mrb[0].mxu0
      %v8822 = vpop.f32.mrb[0].mxu0
      %v8823 = vadd.f32 0.0, %v8822
      %v8824 = vpop.f32.mrb[0].mxu0
      %8825 = vmatprep.mubr.bf16.mxu0 0
      %8826 = vmatmul.mubr.bf16.gmra.mrb[0].mxu0 %v8650
      %v8827 = vpop.f32.mrb[0].mxu0
      %v8828 = vadd.f32 0.0, %v8827
      %v8829 = vpop.f32.mrb[0].mxu0
      %v8830 = vpop.f32.mrb[0].mxu0
      %v8831 = vadd.f32 0.0, %v8830
      %v8832 = vpop.f32.mrb[0].mxu0
      %8833 = vmatprep.mubr.bf16.mxu0 0
      %8834 = vmatmul.mubr.bf16.gmra.mrb[0].mxu0 %v8651
      %v8835 = vpop.f32.mrb[0].mxu0
      %v8836 = vadd.f32 0.0, %v8835
      %v8837 = vpop.f32.mrb[0].mxu0
      %v8838 = vpop.f32.mrb[0].mxu0
      %v8839 = vadd.f32 0.0, %v8838
      %v8840 = vpop.f32.mrb[0].mxu0
      %8841 = vmatprep.mubr.bf16.mxu0 0
      %8842 = vmatmul.mubr.bf16.gmra.mrb[0].mxu0 %v8652
      %v8843 = vpop.f32.mrb[0].mxu0
      %v8844 = vadd.f32 0.0, %v8843
      %v8845 = vpop.f32.mrb[0].mxu0
      %v8846 = vpop.f32.mrb[0].mxu0
      %v8847 = vadd.f32 0.0, %v8846
      %v8848 = vpop.f32.mrb[0].mxu0
      %8849 = vmatprep.mubr.bf16.mxu0 0
      %8850 = vmatmul.mubr.bf16.gmra.mrb[0].mxu0 %v8653
      %v8851 = vpop.f32.mrb[0].mxu0
      %v8852 = vadd.f32 0.0, %v8851
      %v8853 = vpop.f32.mrb[0].mxu0
      %v8854 = vpop.f32.mrb[0].mxu0
      %v8855 = vadd.f32 0.0, %v8854
      %v8856 = vpop.f32.mrb[0].mxu0
      %8857 = vmatprep.mubr.bf16.mxu0 0
      %8858 = vmatmul.mubr.bf16.gmra.mrb[0].mxu0 %v8654
      %v8859 = vpop.f32.mrb[0].mxu0
      %v8860 = vadd.f32 0.0, %v8859
      %v8861 = vpop.f32.mrb[0].mxu0
      %v8862 = vpop.f32.mrb[0].mxu0
      %v8863 = vadd.f32 0.0, %v8862
      %v8864 = vpop.f32.mrb[0].mxu0
      %8865 = vmatprep.mubr.bf16.mxu0 0
      %8866 = vmatmul.mubr.bf16.gmra.mrb[0].mxu0 %v8655
      %v8867 = vpop.f32.mrb[0].mxu0
      %v8868 = vadd.f32 0.0, %v8867
      %v8869 = vpop.f32.mrb[0].mxu0
      %v8870 = vpop.f32.mrb[0].mxu0
      %v8871 = vadd.f32 0.0, %v8870
      %v8872 = vpop.f32.mrb[0].mxu0
      %8873 = vmatprep.mubr.bf16.mxu0 0
      %8874 = vmatmul.mubr.bf16.gmra.mrb[0].mxu0 %v8656
      %v8875 = vpop.f32.mrb[0].mxu0
      %v8876 = vadd.f32 0.0, %v8875
      %v8877 = vpop.f32.mrb[0].mxu0
      %v8878 = vpop.f32.mrb[0].mxu0
      %v8879 = vadd.f32 0.0, %v8878
      %v8880 = vpop.f32.mrb[0].mxu0
      %8881 = vdwg.mxu0
      %v8882 = vadd.f32 %v8384, %v8756
      %v8883 = vadd.f32 %v8385, %v8759
      %v8884 = vadd.f32 %v8386, %v8764
      %v8885 = vadd.f32 %v8387, %v8767
      %v8886 = vadd.f32 %v8388, %v8772
      %v8887 = vadd.f32 %v8389, %v8775
      %v8888 = vadd.f32 %v8390, %v8780
      %v8889 = vadd.f32 %v8391, %v8783
      %v8890 = vadd.f32 %v8392, %v8788
      %v8891 = vadd.f32 %v8393, %v8791
      %v8892 = vadd.f32 %v8394, %v8796
      %v8893 = vadd.f32 %v8395, %v8799
      %v8894 = vadd.f32 %v8396, %v8804
      %v8895 = vadd.f32 %v8397, %v8807
      %v8896 = vadd.f32 %v8398, %v8812
      %v8897 = vadd.f32 %v8399, %v8815
      %v8898 = vadd.f32 %v8400, %v8820
      %v8899 = vadd.f32 %v8401, %v8823
      %v8900 = vadd.f32 %v8402, %v8828
      %v8901 = vadd.f32 %v8403, %v8831
      %v8902 = vadd.f32 %v8404, %v8836
      %v8903 = vadd.f32 %v8405, %v8839
      %v8904 = vadd.f32 %v8406, %v8844
      %v8905 = vadd.f32 %v8407, %v8847
      %v8906 = vadd.f32 %v8408, %v8852
      %v8907 = vadd.f32 %v8409, %v8855
      %v8908 = vadd.f32 %v8410, %v8860
      %v8909 = vadd.f32 %v8411, %v8863
      %v8910 = vadd.f32 %v8412, %v8868
      %v8911 = vadd.f32 %v8413, %v8871
      %v8912 = vadd.f32 %v8414, %v8876
      %v8913 = vadd.f32 %v8415, %v8879
      %s8914 = scalar_lea.vmem [#allocation2], 24
      %v8915 = vld [vmem:[%s8914] sm:$0xf]
      %v8916 = vld [vmem:[%s8914 + $0x4] sm:$0xf]
      %v8917 = vld [vmem:[%s8914 + $0xc] sm:$0xf]
      %v8918 = vld [vmem:[%s8914 + $0x10] sm:$0xf]
      %v8919 = vld [vmem:[%s8914 + $0x18] sm:$0xf]
      %v8920 = vld [vmem:[%s8914 + $0x1c] sm:$0xf]
      %v8921 = vld [vmem:[%s8914 + $0x24] sm:$0xf]
      %v8922 = vld [vmem:[%s8914 + $0x28] sm:$0xf]
      %v8923 = vld [vmem:[%s8914 + $0x30] sm:$0xf]
      %v8924 = vld [vmem:[%s8914 + $0x34] sm:$0xf]
      %v8925 = vld [vmem:[%s8914 + $0x3c] sm:$0xf]
      %v8926 = vld [vmem:[%s8914 + $0x40] sm:$0xf]
      %v8927 = vld [vmem:[%s8914 + $0x48] sm:$0xf]
      %v8928 = vld [vmem:[%s8914 + $0x4c] sm:$0xf]
      %v8929 = vld [vmem:[%s8914 + $0x54] sm:$0xf]
      %v8930 = vld [vmem:[%s8914 + $0x58] sm:$0xf]
      %v8931 = vld [vmem:[%s8914 + $0x60] sm:$0xf]
      %v8932 = vld [vmem:[%s8914 + $0x64] sm:$0xf]
      %v8933 = vld [vmem:[%s8914 + $0x6c] sm:$0xf]
      %v8934 = vld [vmem:[%s8914 + $0x70] sm:$0xf]
      %v8935 = vld [vmem:[%s8914 + $0x78] sm:$0xf]
      %v8936 = vld [vmem:[%s8914 + $0x7c] sm:$0xf]
      %v8937 = vld [vmem:[%s8914 + $0x84] sm:$0xf]
      %v8938 = vld [vmem:[%s8914 + $0x88] sm:$0xf]
      %v8939 = vld [vmem:[%s8914 + $0x90] sm:$0xf]
      %v8940 = vld [vmem:[%s8914 + $0x94] sm:$0xf]
      %v8941 = vld [vmem:[%s8914 + $0x9c] sm:$0xf]
      %v8942 = vld [vmem:[%s8914 + $0xa0] sm:$0xf]
      %v8943 = vld [vmem:[%s8914 + $0xa8] sm:$0xf]
      %v8944 = vld [vmem:[%s8914 + $0xac] sm:$0xf]
      %v8945 = vld [vmem:[%s8914 + $0xb4] sm:$0xf]
      %v8946 = vld [vmem:[%s8914 + $0xb8] sm:$0xf]
      %s8947 = scalar_lea.vmem %s3, 384
      %v8948 = vld [vmem:[%s8947] sm:$0xf]
      %v8949 = vld [vmem:[%s8947 + $0x4] sm:$0xf]
      %v8950 = vld [vmem:[%s8947 + $0x8] sm:$0xf]
      %v8951 = vld [vmem:[%s8947 + $0xc] sm:$0xf]
      %v8952 = vld [vmem:[%s8947 + $0x10] sm:$0xf]
      %v8953 = vld [vmem:[%s8947 + $0x14] sm:$0xf]
      %v8954 = vld [vmem:[%s8947 + $0x18] sm:$0xf]
      %v8955 = vld [vmem:[%s8947 + $0x1c] sm:$0xf]
      %v8956 = vld [vmem:[%s8947 + $0x20] sm:$0xf]
      %v8957 = vld [vmem:[%s8947 + $0x24] sm:$0xf]
      %v8958 = vld [vmem:[%s8947 + $0x28] sm:$0xf]
      %v8959 = vld [vmem:[%s8947 + $0x2c] sm:$0xf]
      %v8960 = vld [vmem:[%s8947 + $0x30] sm:$0xf]
      %v8961 = vld [vmem:[%s8947 + $0x34] sm:$0xf]
      %v8962 = vld [vmem:[%s8947 + $0x38] sm:$0xf]
      %v8963 = vld [vmem:[%s8947 + $0x3c] sm:$0xf]
      %v8996 = vunpack.c.l.b16 %v8915
      %v8997 = vunpack.c.l.b16 %v8916
      %v8998 = vunpack.c.l.b16 %v8917
      %v8999 = vunpack.c.l.b16 %v8918
      %v9000 = vunpack.c.l.b16 %v8919
      %v9001 = vunpack.c.l.b16 %v8920
      %v9002 = vunpack.c.l.b16 %v8921
      %v9003 = vunpack.c.l.b16 %v8922
      %v9004 = vunpack.c.l.b16 %v8923
      %v9005 = vunpack.c.l.b16 %v8924
      %v9006 = vunpack.c.l.b16 %v8925
      %v9007 = vunpack.c.l.b16 %v8926
      %v9008 = vunpack.c.l.b16 %v8927
      %v9009 = vunpack.c.l.b16 %v8928
      %v9010 = vunpack.c.l.b16 %v8929
      %v9011 = vunpack.c.l.b16 %v8930
      %v9012 = vunpack.c.l.b16 %v8931
      %v9013 = vunpack.c.l.b16 %v8932
      %v9014 = vunpack.c.l.b16 %v8933
      %v9015 = vunpack.c.l.b16 %v8934
      %v9016 = vunpack.c.l.b16 %v8935
      %v9017 = vunpack.c.l.b16 %v8936
      %v9018 = vunpack.c.l.b16 %v8937
      %v9019 = vunpack.c.l.b16 %v8938
      %v9020 = vunpack.c.l.b16 %v8939
      %v9021 = vunpack.c.l.b16 %v8940
      %v9022 = vunpack.c.l.b16 %v8941
      %v9023 = vunpack.c.l.b16 %v8942
      %v9024 = vunpack.c.l.b16 %v8943
      %v9025 = vunpack.c.l.b16 %v8944
      %v9026 = vunpack.c.l.b16 %v8945
      %v9027 = vunpack.c.l.b16 %v8946
      %v9028 = vpack.c.b16 %v8997, %v8996
      %v9029 = vpack.c.b16 %v8999, %v8998
      %v9030 = vpack.c.b16 %v9001, %v9000
      %v9031 = vpack.c.b16 %v9003, %v9002
      %v9032 = vpack.c.b16 %v9005, %v9004
      %v9033 = vpack.c.b16 %v9007, %v9006
      %v9034 = vpack.c.b16 %v9009, %v9008
      %v9035 = vpack.c.b16 %v9011, %v9010
      %v9036 = vpack.c.b16 %v9013, %v9012
      %v9037 = vpack.c.b16 %v9015, %v9014
      %v9038 = vpack.c.b16 %v9017, %v9016
      %v9039 = vpack.c.b16 %v9019, %v9018
      %v9040 = vpack.c.b16 %v9021, %v9020
      %v9041 = vpack.c.b16 %v9023, %v9022
      %v9042 = vpack.c.b16 %v9025, %v9024
      %v9043 = vpack.c.b16 %v9027, %v9026
      %v9076 = vunpack.c.l.b16 %v8948
      %v9077 = vunpack.c.l.b16 %v8949
      %v9078 = vunpack.c.l.b16 %v8950
      %v9079 = vunpack.c.l.b16 %v8951
      %v9080 = vunpack.c.l.b16 %v8952
      %v9081 = vunpack.c.l.b16 %v8953
      %v9082 = vunpack.c.l.b16 %v8954
      %v9083 = vunpack.c.l.b16 %v8955
      %v9084 = vunpack.c.l.b16 %v8956
      %v9085 = vunpack.c.l.b16 %v8957
      %v9086 = vunpack.c.l.b16 %v8958
      %v9087 = vunpack.c.l.b16 %v8959
      %v9088 = vunpack.c.l.b16 %v8960
      %v9089 = vunpack.c.l.b16 %v8961
      %v9090 = vunpack.c.l.b16 %v8962
      %v9091 = vunpack.c.l.b16 %v8963
      %v9092 = vpack.c.b16 %v9077, %v9076
      %v9093 = vpack.c.b16 %v9079, %v9078
      %v9094 = vpack.c.b16 %v9081, %v9080
      %v9095 = vpack.c.b16 %v9083, %v9082
      %v9096 = vpack.c.b16 %v9085, %v9084
      %v9097 = vpack.c.b16 %v9087, %v9086
      %v9098 = vpack.c.b16 %v9089, %v9088
      %v9099 = vpack.c.b16 %v9091, %v9090
      %9108 = vmatprep.subr.bf16.mxu0 0
      %9109 = vmatpush1.bf16.msra.mxu0 %v9092
      %9110 = vmatprep.subr.bf16.mxu0 0
      %9111 = vmatpush1.bf16.msra.mxu0 %v9093
      %9112 = vmatprep.subr.bf16.mxu0 0
      %9113 = vmatpush1.bf16.msra.mxu0 %v9094
      %9114 = vmatprep.subr.bf16.mxu0 0
      %9115 = vmatpush1.bf16.msra.mxu0 %v9095
      %9116 = vmatprep.subr.bf16.mxu0 0
      %9117 = vmatpush1.bf16.msra.mxu0 %v9096
      %9118 = vmatprep.subr.bf16.mxu0 0
      %9119 = vmatpush1.bf16.msra.mxu0 %v9097
      %9120 = vmatprep.subr.bf16.mxu0 0
      %9121 = vmatpush1.bf16.msra.mxu0 %v9098
      %9122 = vmatprep.subr.bf16.mxu0 0
      %9123 = vmatpush1.bf16.msra.mxu0 %v9099
      %9124 = vmatprep.subr.bf16.mxu0 0
      %9125 = vmatpush1.bf16.msra.mxu0 0
      %9126 = vmatprep.subr.bf16.mxu0 0
      %9127 = vmatpush1.bf16.msra.mxu0 0
      %9128 = vmatprep.subr.bf16.mxu0 0
      %9129 = vmatpush1.bf16.msra.mxu0 0
      %9130 = vmatprep.subr.bf16.mxu0 0
      %9131 = vmatpush1.bf16.msra.mxu0 0
      %9132 = vmatprep.subr.bf16.mxu0 0
      %9133 = vmatpush1.bf16.msra.mxu0 0
      %9134 = vmatprep.subr.bf16.mxu0 0
      %9135 = vmatpush1.bf16.msra.mxu0 0
      %9136 = vmatprep.subr.bf16.mxu0 0
      %9137 = vmatpush1.bf16.msra.mxu0 0
      %9138 = vmatprep.subr.bf16.mxu0 0
      %9139 = vmatpush1.bf16.msra.mxu0 0
      %9140 = vmatprep.mubr.bf16.mxu0 0
      %9141 = vmatmul.mubr.bf16.gmra.mrb[0].mxu0 %v9028
      %v9142 = vpop.f32.mrb[0].mxu0
      %v9143 = vadd.f32 0.0, %v9142
      %v9144 = vpop.f32.mrb[0].mxu0
      %v9145 = vpop.f32.mrb[0].mxu0
      %v9146 = vadd.f32 0.0, %v9145
      %v9147 = vpop.f32.mrb[0].mxu0
      %9148 = vmatprep.mubr.bf16.mxu0 0
      %9149 = vmatmul.mubr.bf16.gmra.mrb[0].mxu0 %v9029
      %v9150 = vpop.f32.mrb[0].mxu0
      %v9151 = vadd.f32 0.0, %v9150
      %v9152 = vpop.f32.mrb[0].mxu0
      %v9153 = vpop.f32.mrb[0].mxu0
      %v9154 = vadd.f32 0.0, %v9153
      %v9155 = vpop.f32.mrb[0].mxu0
      %9156 = vmatprep.mubr.bf16.mxu0 0
      %9157 = vmatmul.mubr.bf16.gmra.mrb[0].mxu0 %v9030
      %v9158 = vpop.f32.mrb[0].mxu0
      %v9159 = vadd.f32 0.0, %v9158
      %v9160 = vpop.f32.mrb[0].mxu0
      %v9161 = vpop.f32.mrb[0].mxu0
      %v9162 = vadd.f32 0.0, %v9161
      %v9163 = vpop.f32.mrb[0].mxu0
      %9164 = vmatprep.mubr.bf16.mxu0 0
      %9165 = vmatmul.mubr.bf16.gmra.mrb[0].mxu0 %v9031
      %v9166 = vpop.f32.mrb[0].mxu0
      %v9167 = vadd.f32 0.0, %v9166
      %v9168 = vpop.f32.mrb[0].mxu0
      %v9169 = vpop.f32.mrb[0].mxu0
      %v9170 = vadd.f32 0.0, %v9169
      %v9171 = vpop.f32.mrb[0].mxu0
      %9172 = vmatprep.mubr.bf16.mxu0 0
      %9173 = vmatmul.mubr.bf16.gmra.mrb[0].mxu0 %v9032
      %v9174 = vpop.f32.mrb[0].mxu0
      %v9175 = vadd.f32 0.0, %v9174
      %v9176 = vpop.f32.mrb[0].mxu0
      %v9177 = vpop.f32.mrb[0].mxu0
      %v9178 = vadd.f32 0.0, %v9177
      %v9179 = vpop.f32.mrb[0].mxu0
      %9180 = vmatprep.mubr.bf16.mxu0 0
      %9181 = vmatmul.mubr.bf16.gmra.mrb[0].mxu0 %v9033
      %v9182 = vpop.f32.mrb[0].mxu0
      %v9183 = vadd.f32 0.0, %v9182
      %v9184 = vpop.f32.mrb[0].mxu0
      %v9185 = vpop.f32.mrb[0].mxu0
      %v9186 = vadd.f32 0.0, %v9185
      %v9187 = vpop.f32.mrb[0].mxu0
      %9188 = vmatprep.mubr.bf16.mxu0 0
      %9189 = vmatmul.mubr.bf16.gmra.mrb[0].mxu0 %v9034
      %v9190 = vpop.f32.mrb[0].mxu0
      %v9191 = vadd.f32 0.0, %v9190
      %v9192 = vpop.f32.mrb[0].mxu0
      %v9193 = vpop.f32.mrb[0].mxu0
      %v9194 = vadd.f32 0.0, %v9193
      %v9195 = vpop.f32.mrb[0].mxu0
      %9196 = vmatprep.mubr.bf16.mxu0 0
      %9197 = vmatmul.mubr.bf16.gmra.mrb[0].mxu0 %v9035
      %v9198 = vpop.f32.mrb[0].mxu0
      %v9199 = vadd.f32 0.0, %v9198
      %v9200 = vpop.f32.mrb[0].mxu0
      %v9201 = vpop.f32.mrb[0].mxu0
      %v9202 = vadd.f32 0.0, %v9201
      %v9203 = vpop.f32.mrb[0].mxu0
      %9204 = vmatprep.mubr.bf16.mxu0 0
      %9205 = vmatmul.mubr.bf16.gmra.mrb[0].mxu0 %v9036
      %v9206 = vpop.f32.mrb[0].mxu0
      %v9207 = vadd.f32 0.0, %v9206
      %v9208 = vpop.f32.mrb[0].mxu0
      %v9209 = vpop.f32.mrb[0].mxu0
      %v9210 = vadd.f32 0.0, %v9209
      %v9211 = vpop.f32.mrb[0].mxu0
      %9212 = vmatprep.mubr.bf16.mxu0 0
      %9213 = vmatmul.mubr.bf16.gmra.mrb[0].mxu0 %v9037
      %v9214 = vpop.f32.mrb[0].mxu0
      %v9215 = vadd.f32 0.0, %v9214
      %v9216 = vpop.f32.mrb[0].mxu0
      %v9217 = vpop.f32.mrb[0].mxu0
      %v9218 = vadd.f32 0.0, %v9217
      %v9219 = vpop.f32.mrb[0].mxu0
      %9220 = vmatprep.mubr.bf16.mxu0 0
      %9221 = vmatmul.mubr.bf16.gmra.mrb[0].mxu0 %v9038
      %v9222 = vpop.f32.mrb[0].mxu0
      %v9223 = vadd.f32 0.0, %v9222
      %v9224 = vpop.f32.mrb[0].mxu0
      %v9225 = vpop.f32.mrb[0].mxu0
      %v9226 = vadd.f32 0.0, %v9225
      %v9227 = vpop.f32.mrb[0].mxu0
      %9228 = vmatprep.mubr.bf16.mxu0 0
      %9229 = vmatmul.mubr.bf16.gmra.mrb[0].mxu0 %v9039
      %v9230 = vpop.f32.mrb[0].mxu0
      %v9231 = vadd.f32 0.0, %v9230
      %v9232 = vpop.f32.mrb[0].mxu0
      %v9233 = vpop.f32.mrb[0].mxu0
      %v9234 = vadd.f32 0.0, %v9233
      %v9235 = vpop.f32.mrb[0].mxu0
      %9236 = vmatprep.mubr.bf16.mxu0 0
      %9237 = vmatmul.mubr.bf16.gmra.mrb[0].mxu0 %v9040
      %v9238 = vpop.f32.mrb[0].mxu0
      %v9239 = vadd.f32 0.0, %v9238
      %v9240 = vpop.f32.mrb[0].mxu0
      %v9241 = vpop.f32.mrb[0].mxu0
      %v9242 = vadd.f32 0.0, %v9241
      %v9243 = vpop.f32.mrb[0].mxu0
      %9244 = vmatprep.mubr.bf16.mxu0 0
      %9245 = vmatmul.mubr.bf16.gmra.mrb[0].mxu0 %v9041
      %v9246 = vpop.f32.mrb[0].mxu0
      %v9247 = vadd.f32 0.0, %v9246
      %v9248 = vpop.f32.mrb[0].mxu0
      %v9249 = vpop.f32.mrb[0].mxu0
      %v9250 = vadd.f32 0.0, %v9249
      %v9251 = vpop.f32.mrb[0].mxu0
      %9252 = vmatprep.mubr.bf16.mxu0 0
      %9253 = vmatmul.mubr.bf16.gmra.mrb[0].mxu0 %v9042
      %v9254 = vpop.f32.mrb[0].mxu0
      %v9255 = vadd.f32 0.0, %v9254
      %v9256 = vpop.f32.mrb[0].mxu0
      %v9257 = vpop.f32.mrb[0].mxu0
      %v9258 = vadd.f32 0.0, %v9257
      %v9259 = vpop.f32.mrb[0].mxu0
      %9260 = vmatprep.mubr.bf16.mxu0 0
      %9261 = vmatmul.mubr.bf16.gmra.mrb[0].mxu0 %v9043
      %v9262 = vpop.f32.mrb[0].mxu0
      %v9263 = vadd.f32 0.0, %v9262
      %v9264 = vpop.f32.mrb[0].mxu0
      %v9265 = vpop.f32.mrb[0].mxu0
      %v9266 = vadd.f32 0.0, %v9265
      %v9267 = vpop.f32.mrb[0].mxu0
      %9268 = vdwg.mxu0
      %v9269 = vadd.f32 %v8882, %v9143
      %v9270 = vadd.f32 %v8883, %v9146
      %v9271 = vadd.f32 %v8884, %v9151
      %v9272 = vadd.f32 %v8885, %v9154
      %v9273 = vadd.f32 %v8886, %v9159
      %v9274 = vadd.f32 %v8887, %v9162
      %v9275 = vadd.f32 %v8888, %v9167
      %v9276 = vadd.f32 %v8889, %v9170
      %v9277 = vadd.f32 %v8890, %v9175
      %v9278 = vadd.f32 %v8891, %v9178
      %v9279 = vadd.f32 %v8892, %v9183
      %v9280 = vadd.f32 %v8893, %v9186
      %v9281 = vadd.f32 %v8894, %v9191
      %v9282 = vadd.f32 %v8895, %v9194
      %v9283 = vadd.f32 %v8896, %v9199
      %v9284 = vadd.f32 %v8897, %v9202
      %v9285 = vadd.f32 %v8898, %v9207
      %v9286 = vadd.f32 %v8899, %v9210
      %v9287 = vadd.f32 %v8900, %v9215
      %v9288 = vadd.f32 %v8901, %v9218
      %v9289 = vadd.f32 %v8902, %v9223
      %v9290 = vadd.f32 %v8903, %v9226
      %v9291 = vadd.f32 %v8904, %v9231
      %v9292 = vadd.f32 %v8905, %v9234
      %v9293 = vadd.f32 %v8906, %v9239
      %v9294 = vadd.f32 %v8907, %v9242
      %v9295 = vadd.f32 %v8908, %v9247
      %v9296 = vadd.f32 %v8909, %v9250
      %v9297 = vadd.f32 %v8910, %v9255
      %v9298 = vadd.f32 %v8911, %v9258
      %v9299 = vadd.f32 %v8912, %v9263
      %v9300 = vadd.f32 %v8913, %v9266
      %v9301 = vld [vmem:[%s8914] sm:$0xf]
      %v9302 = vld [vmem:[%s8914 + $0x4] sm:$0xf]
      %v9303 = vld [vmem:[%s8914 + $0x8] sm:$0x1]
      %v9304 = vld [vmem:[%s8914 + $0xc] sm:$0xf]
      %v9305 = vld [vmem:[%s8914 + $0x10] sm:$0xf]
      %v9306 = vld [vmem:[%s8914 + $0x14] sm:$0x1]
      %v9307 = vld [vmem:[%s8914 + $0x18] sm:$0xf]
      %v9308 = vld [vmem:[%s8914 + $0x1c] sm:$0xf]
      %v9309 = vld [vmem:[%s8914 + $0x20] sm:$0x1]
      %v9310 = vld [vmem:[%s8914 + $0x24] sm:$0xf]
      %v9311 = vld [vmem:[%s8914 + $0x28] sm:$0xf]
      %v9312 = vld [vmem:[%s8914 + $0x2c] sm:$0x1]
      %v9313 = vld [vmem:[%s8914 + $0x30] sm:$0xf]
      %v9314 = vld [vmem:[%s8914 + $0x34] sm:$0xf]
      %v9315 = vld [vmem:[%s8914 + $0x38] sm:$0x1]
      %v9316 = vld [vmem:[%s8914 + $0x3c] sm:$0xf]
      %v9317 = vld [vmem:[%s8914 + $0x40] sm:$0xf]
      %v9318 = vld [vmem:[%s8914 + $0x44] sm:$0x1]
      %v9319 = vld [vmem:[%s8914 + $0x48] sm:$0xf]
      %v9320 = vld [vmem:[%s8914 + $0x4c] sm:$0xf]
      %v9321 = vld [vmem:[%s8914 + $0x50] sm:$0x1]
      %v9322 = vld [vmem:[%s8914 + $0x54] sm:$0xf]
      %v9323 = vld [vmem:[%s8914 + $0x58] sm:$0xf]
      %v9324 = vld [vmem:[%s8914 + $0x5c] sm:$0x1]
      %v9325 = vld [vmem:[%s8914 + $0x60] sm:$0xf]
      %v9326 = vld [vmem:[%s8914 + $0x64] sm:$0xf]
      %v9327 = vld [vmem:[%s8914 + $0x68] sm:$0x1]
      %v9328 = vld [vmem:[%s8914 + $0x6c] sm:$0xf]
      %v9329 = vld [vmem:[%s8914 + $0x70] sm:$0xf]
      %v9330 = vld [vmem:[%s8914 + $0x74] sm:$0x1]
      %v9331 = vld [vmem:[%s8914 + $0x78] sm:$0xf]
      %v9332 = vld [vmem:[%s8914 + $0x7c] sm:$0xf]
      %v9333 = vld [vmem:[%s8914 + $0x80] sm:$0x1]
      %v9334 = vld [vmem:[%s8914 + $0x84] sm:$0xf]
      %v9335 = vld [vmem:[%s8914 + $0x88] sm:$0xf]
      %v9336 = vld [vmem:[%s8914 + $0x8c] sm:$0x1]
      %v9337 = vld [vmem:[%s8914 + $0x90] sm:$0xf]
      %v9338 = vld [vmem:[%s8914 + $0x94] sm:$0xf]
      %v9339 = vld [vmem:[%s8914 + $0x98] sm:$0x1]
      %v9340 = vld [vmem:[%s8914 + $0x9c] sm:$0xf]
      %v9341 = vld [vmem:[%s8914 + $0xa0] sm:$0xf]
      %v9342 = vld [vmem:[%s8914 + $0xa4] sm:$0x1]
      %v9343 = vld [vmem:[%s8914 + $0xa8] sm:$0xf]
      %v9344 = vld [vmem:[%s8914 + $0xac] sm:$0xf]
      %v9345 = vld [vmem:[%s8914 + $0xb0] sm:$0x1]
      %v9346 = vld [vmem:[%s8914 + $0xb4] sm:$0xf]
      %v9347 = vld [vmem:[%s8914 + $0xb8] sm:$0xf]
      %v9348 = vld [vmem:[%s8914 + $0xbc] sm:$0x1]
      %v9350 = vshrl.u32 %v9301, 16
      %v9352 = vrot.slane %v9350, 4
      %v9353 = vshll.u32 %v9301, 16
      %v9355 = vrot.slane %v9353, 5
      %v9356 = vor.u32 %v9352, %v9355
      %v9357 = vrot.slane %v9356, 4
      %v9359 = vshll.u32 %v9302, 16
      %v9361 = vrot.slane %v9359, 5
      %v9362 = vsel %vm346, %v9357, %v9361
      %v9363 = vshrl.u32 %v9302, 16
      %v9365 = vrot.slane %v9363, 4
      %v9366 = vor.u32 %v9365, %v9361
      %v9367 = vrot.slane %v9366, 4
      %v9369 = vshll.u32 %v9303, 16
      %v9371 = vrot.slane %v9369, 5
      %v9372 = vsel %vm346, %v9367, %v9371
      %v9374 = vshrl.u32 %v9304, 16
      %v9376 = vrot.slane %v9374, 4
      %v9377 = vshll.u32 %v9304, 16
      %v9379 = vrot.slane %v9377, 5
      %v9380 = vor.u32 %v9376, %v9379
      %v9381 = vrot.slane %v9380, 4
      %v9383 = vshll.u32 %v9305, 16
      %v9385 = vrot.slane %v9383, 5
      %v9386 = vsel %vm346, %v9381, %v9385
      %v9387 = vshrl.u32 %v9305, 16
      %v9389 = vrot.slane %v9387, 4
      %v9390 = vor.u32 %v9389, %v9385
      %v9391 = vrot.slane %v9390, 4
      %v9393 = vshll.u32 %v9306, 16
      %v9395 = vrot.slane %v9393, 5
      %v9396 = vsel %vm346, %v9391, %v9395
      %v9398 = vshrl.u32 %v9307, 16
      %v9400 = vrot.slane %v9398, 4
      %v9401 = vshll.u32 %v9307, 16
      %v9403 = vrot.slane %v9401, 5
      %v9404 = vor.u32 %v9400, %v9403
      %v9405 = vrot.slane %v9404, 4
      %v9407 = vshll.u32 %v9308, 16
      %v9409 = vrot.slane %v9407, 5
      %v9410 = vsel %vm346, %v9405, %v9409
      %v9411 = vshrl.u32 %v9308, 16
      %v9413 = vrot.slane %v9411, 4
      %v9414 = vor.u32 %v9413, %v9409
      %v9415 = vrot.slane %v9414, 4
      %v9417 = vshll.u32 %v9309, 16
      %v9419 = vrot.slane %v9417, 5
      %v9420 = vsel %vm346, %v9415, %v9419
      %v9422 = vshrl.u32 %v9310, 16
      %v9424 = vrot.slane %v9422, 4
      %v9425 = vshll.u32 %v9310, 16
      %v9427 = vrot.slane %v9425, 5
      %v9428 = vor.u32 %v9424, %v9427
      %v9429 = vrot.slane %v9428, 4
      %v9431 = vshll.u32 %v9311, 16
      %v9433 = vrot.slane %v9431, 5
      %v9434 = vsel %vm346, %v9429, %v9433
      %v9435 = vshrl.u32 %v9311, 16
      %v9437 = vrot.slane %v9435, 4
      %v9438 = vor.u32 %v9437, %v9433
      %v9439 = vrot.slane %v9438, 4
      %v9441 = vshll.u32 %v9312, 16
      %v9443 = vrot.slane %v9441, 5
      %v9444 = vsel %vm346, %v9439, %v9443
      %v9446 = vshrl.u32 %v9313, 16
      %v9448 = vrot.slane %v9446, 4
      %v9449 = vshll.u32 %v9313, 16
      %v9451 = vrot.slane %v9449, 5
      %v9452 = vor.u32 %v9448, %v9451
      %v9453 = vrot.slane %v9452, 4
      %v9455 = vshll.u32 %v9314, 16
      %v9457 = vrot.slane %v9455, 5
      %v9458 = vsel %vm346, %v9453, %v9457
      %v9459 = vshrl.u32 %v9314, 16
      %v9461 = vrot.slane %v9459, 4
      %v9462 = vor.u32 %v9461, %v9457
      %v9463 = vrot.slane %v9462, 4
      %v9465 = vshll.u32 %v9315, 16
      %v9467 = vrot.slane %v9465, 5
      %v9468 = vsel %vm346, %v9463, %v9467
      %v9470 = vshrl.u32 %v9316, 16
      %v9472 = vrot.slane %v9470, 4
      %v9473 = vshll.u32 %v9316, 16
      %v9475 = vrot.slane %v9473, 5
      %v9476 = vor.u32 %v9472, %v9475
      %v9477 = vrot.slane %v9476, 4
      %v9479 = vshll.u32 %v9317, 16
      %v9481 = vrot.slane %v9479, 5
      %v9482 = vsel %vm346, %v9477, %v9481
      %v9483 = vshrl.u32 %v9317, 16
      %v9485 = vrot.slane %v9483, 4
      %v9486 = vor.u32 %v9485, %v9481
      %v9487 = vrot.slane %v9486, 4
      %v9489 = vshll.u32 %v9318, 16
      %v9491 = vrot.slane %v9489, 5
      %v9492 = vsel %vm346, %v9487, %v9491
      %v9494 = vshrl.u32 %v9319, 16
      %v9496 = vrot.slane %v9494, 4
      %v9497 = vshll.u32 %v9319, 16
      %v9499 = vrot.slane %v9497, 5
      %v9500 = vor.u32 %v9496, %v9499
      %v9501 = vrot.slane %v9500, 4
      %v9503 = vshll.u32 %v9320, 16
      %v9505 = vrot.slane %v9503, 5
      %v9506 = vsel %vm346, %v9501, %v9505
      %v9507 = vshrl.u32 %v9320, 16
      %v9509 = vrot.slane %v9507, 4
      %v9510 = vor.u32 %v9509, %v9505
      %v9511 = vrot.slane %v9510, 4
      %v9513 = vshll.u32 %v9321, 16
      %v9515 = vrot.slane %v9513, 5
      %v9516 = vsel %vm346, %v9511, %v9515
      %v9518 = vshrl.u32 %v9322, 16
      %v9520 = vrot.slane %v9518, 4
      %v9521 = vshll.u32 %v9322, 16
      %v9523 = vrot.slane %v9521, 5
      %v9524 = vor.u32 %v9520, %v9523
      %v9525 = vrot.slane %v9524, 4
      %v9527 = vshll.u32 %v9323, 16
      %v9529 = vrot.slane %v9527, 5
      %v9530 = vsel %vm346, %v9525, %v9529
      %v9531 = vshrl.u32 %v9323, 16
      %v9533 = vrot.slane %v9531, 4
      %v9534 = vor.u32 %v9533, %v9529
      %v9535 = vrot.slane %v9534, 4
      %v9537 = vshll.u32 %v9324, 16
      %v9539 = vrot.slane %v9537, 5
      %v9540 = vsel %vm346, %v9535, %v9539
      %v9542 = vshrl.u32 %v9325, 16
      %v9544 = vrot.slane %v9542, 4
      %v9545 = vshll.u32 %v9325, 16
      %v9547 = vrot.slane %v9545, 5
      %v9548 = vor.u32 %v9544, %v9547
      %v9549 = vrot.slane %v9548, 4
      %v9551 = vshll.u32 %v9326, 16
      %v9553 = vrot.slane %v9551, 5
      %v9554 = vsel %vm346, %v9549, %v9553
      %v9555 = vshrl.u32 %v9326, 16
      %v9557 = vrot.slane %v9555, 4
      %v9558 = vor.u32 %v9557, %v9553
      %v9559 = vrot.slane %v9558, 4
      %v9561 = vshll.u32 %v9327, 16
      %v9563 = vrot.slane %v9561, 5
      %v9564 = vsel %vm346, %v9559, %v9563
      %v9566 = vshrl.u32 %v9328, 16
      %v9568 = vrot.slane %v9566, 4
      %v9569 = vshll.u32 %v9328, 16
      %v9571 = vrot.slane %v9569, 5
      %v9572 = vor.u32 %v9568, %v9571
      %v9573 = vrot.slane %v9572, 4
      %v9575 = vshll.u32 %v9329, 16
      %v9577 = vrot.slane %v9575, 5
      %v9578 = vsel %vm346, %v9573, %v9577
      %v9579 = vshrl.u32 %v9329, 16
      %v9581 = vrot.slane %v9579, 4
      %v9582 = vor.u32 %v9581, %v9577
      %v9583 = vrot.slane %v9582, 4
      %v9585 = vshll.u32 %v9330, 16
      %v9587 = vrot.slane %v9585, 5
      %v9588 = vsel %vm346, %v9583, %v9587
      %v9590 = vshrl.u32 %v9331, 16
      %v9592 = vrot.slane %v9590, 4
      %v9593 = vshll.u32 %v9331, 16
      %v9595 = vrot.slane %v9593, 5
      %v9596 = vor.u32 %v9592, %v9595
      %v9597 = vrot.slane %v9596, 4
      %v9599 = vshll.u32 %v9332, 16
      %v9601 = vrot.slane %v9599, 5
      %v9602 = vsel %vm346, %v9597, %v9601
      %v9603 = vshrl.u32 %v9332, 16
      %v9605 = vrot.slane %v9603, 4
      %v9606 = vor.u32 %v9605, %v9601
      %v9607 = vrot.slane %v9606, 4
      %v9609 = vshll.u32 %v9333, 16
      %v9611 = vrot.slane %v9609, 5
      %v9612 = vsel %vm346, %v9607, %v9611
      %v9614 = vshrl.u32 %v9334, 16
      %v9616 = vrot.slane %v9614, 4
      %v9617 = vshll.u32 %v9334, 16
      %v9619 = vrot.slane %v9617, 5
      %v9620 = vor.u32 %v9616, %v9619
      %v9621 = vrot.slane %v9620, 4
      %v9623 = vshll.u32 %v9335, 16
      %v9625 = vrot.slane %v9623, 5
      %v9626 = vsel %vm346, %v9621, %v9625
      %v9627 = vshrl.u32 %v9335, 16
      %v9629 = vrot.slane %v9627, 4
      %v9630 = vor.u32 %v9629, %v9625
      %v9631 = vrot.slane %v9630, 4
      %v9633 = vshll.u32 %v9336, 16
      %v9635 = vrot.slane %v9633, 5
      %v9636 = vsel %vm346, %v9631, %v9635
      %v9638 = vshrl.u32 %v9337, 16
      %v9640 = vrot.slane %v9638, 4
      %v9641 = vshll.u32 %v9337, 16
      %v9643 = vrot.slane %v9641, 5
      %v9644 = vor.u32 %v9640, %v9643
      %v9645 = vrot.slane %v9644, 4
      %v9647 = vshll.u32 %v9338, 16
      %v9649 = vrot.slane %v9647, 5
      %v9650 = vsel %vm346, %v9645, %v9649
      %v9651 = vshrl.u32 %v9338, 16
      %v9653 = vrot.slane %v9651, 4
      %v9654 = vor.u32 %v9653, %v9649
      %v9655 = vrot.slane %v9654, 4
      %v9657 = vshll.u32 %v9339, 16
      %v9659 = vrot.slane %v9657, 5
      %v9660 = vsel %vm346, %v9655, %v9659
      %v9662 = vshrl.u32 %v9340, 16
      %v9664 = vrot.slane %v9662, 4
      %v9665 = vshll.u32 %v9340, 16
      %v9667 = vrot.slane %v9665, 5
      %v9668 = vor.u32 %v9664, %v9667
      %v9669 = vrot.slane %v9668, 4
      %v9671 = vshll.u32 %v9341, 16
      %v9673 = vrot.slane %v9671, 5
      %v9674 = vsel %vm346, %v9669, %v9673
      %v9675 = vshrl.u32 %v9341, 16
      %v9677 = vrot.slane %v9675, 4
      %v9678 = vor.u32 %v9677, %v9673
      %v9679 = vrot.slane %v9678, 4
      %v9681 = vshll.u32 %v9342, 16
      %v9683 = vrot.slane %v9681, 5
      %v9684 = vsel %vm346, %v9679, %v9683
      %v9686 = vshrl.u32 %v9343, 16
      %v9688 = vrot.slane %v9686, 4
      %v9689 = vshll.u32 %v9343, 16
      %v9691 = vrot.slane %v9689, 5
      %v9692 = vor.u32 %v9688, %v9691
      %v9693 = vrot.slane %v9692, 4
      %v9695 = vshll.u32 %v9344, 16
      %v9697 = vrot.slane %v9695, 5
      %v9698 = vsel %vm346, %v9693, %v9697
      %v9699 = vshrl.u32 %v9344, 16
      %v9701 = vrot.slane %v9699, 4
      %v9702 = vor.u32 %v9701, %v9697
      %v9703 = vrot.slane %v9702, 4
      %v9705 = vshll.u32 %v9345, 16
      %v9707 = vrot.slane %v9705, 5
      %v9708 = vsel %vm346, %v9703, %v9707
      %v9710 = vshrl.u32 %v9346, 16
      %v9712 = vrot.slane %v9710, 4
      %v9713 = vshll.u32 %v9346, 16
      %v9715 = vrot.slane %v9713, 5
      %v9716 = vor.u32 %v9712, %v9715
      %v9717 = vrot.slane %v9716, 4
      %v9719 = vshll.u32 %v9347, 16
      %v9721 = vrot.slane %v9719, 5
      %v9722 = vsel %vm346, %v9717, %v9721
      %v9723 = vshrl.u32 %v9347, 16
      %v9725 = vrot.slane %v9723, 4
      %v9726 = vor.u32 %v9725, %v9721
      %v9727 = vrot.slane %v9726, 4
      %v9729 = vshll.u32 %v9348, 16
      %v9731 = vrot.slane %v9729, 5
      %v9732 = vsel %vm346, %v9727, %v9731
      %s9733 = scalar_lea.vmem %s3, 448
      %v9734 = vld [vmem:[%s9733] sm:$0xf]
      %v9735 = vld [vmem:[%s9733 + $0x4] sm:$0xf]
      %v9736 = vld [vmem:[%s9733 + $0x8] sm:$0xf]
      %v9737 = vld [vmem:[%s9733 + $0xc] sm:$0xf]
      %v9738 = vld [vmem:[%s9733 + $0x10] sm:$0xf]
      %v9739 = vld [vmem:[%s9733 + $0x14] sm:$0xf]
      %v9740 = vld [vmem:[%s9733 + $0x18] sm:$0xf]
      %v9741 = vld [vmem:[%s9733 + $0x1c] sm:$0xf]
      %v9742 = vld [vmem:[%s9733 + $0x20] sm:$0xf]
      %v9743 = vld [vmem:[%s9733 + $0x24] sm:$0xf]
      %v9744 = vld [vmem:[%s9733 + $0x28] sm:$0xf]
      %v9745 = vld [vmem:[%s9733 + $0x2c] sm:$0xf]
      %v9746 = vld [vmem:[%s9733 + $0x30] sm:$0xf]
      %v9747 = vld [vmem:[%s9733 + $0x34] sm:$0xf]
      %v9748 = vld [vmem:[%s9733 + $0x38] sm:$0xf]
      %v9749 = vld [vmem:[%s9733 + $0x3c] sm:$0xf]
      %v9750 = vunpack.c.l.b16 %v9362
      %v9751 = vunpack.c.l.b16 %v9372
      %v9752 = vunpack.c.l.b16 %v9386
      %v9753 = vunpack.c.l.b16 %v9396
      %v9754 = vunpack.c.l.b16 %v9410
      %v9755 = vunpack.c.l.b16 %v9420
      %v9756 = vunpack.c.l.b16 %v9434
      %v9757 = vunpack.c.l.b16 %v9444
      %v9758 = vunpack.c.l.b16 %v9458
      %v9759 = vunpack.c.l.b16 %v9468
      %v9760 = vunpack.c.l.b16 %v9482
      %v9761 = vunpack.c.l.b16 %v9492
      %v9762 = vunpack.c.l.b16 %v9506
      %v9763 = vunpack.c.l.b16 %v9516
      %v9764 = vunpack.c.l.b16 %v9530
      %v9765 = vunpack.c.l.b16 %v9540
      %v9766 = vunpack.c.l.b16 %v9554
      %v9767 = vunpack.c.l.b16 %v9564
      %v9768 = vunpack.c.l.b16 %v9578
      %v9769 = vunpack.c.l.b16 %v9588
      %v9770 = vunpack.c.l.b16 %v9602
      %v9771 = vunpack.c.l.b16 %v9612
      %v9772 = vunpack.c.l.b16 %v9626
      %v9773 = vunpack.c.l.b16 %v9636
      %v9774 = vunpack.c.l.b16 %v9650
      %v9775 = vunpack.c.l.b16 %v9660
      %v9776 = vunpack.c.l.b16 %v9674
      %v9777 = vunpack.c.l.b16 %v9684
      %v9778 = vunpack.c.l.b16 %v9698
      %v9779 = vunpack.c.l.b16 %v9708
      %v9780 = vunpack.c.l.b16 %v9722
      %v9781 = vunpack.c.l.b16 %v9732
      %v9782 = vpack.c.b16 %v9751, %v9750
      %v9783 = vpack.c.b16 %v9753, %v9752
      %v9784 = vpack.c.b16 %v9755, %v9754
      %v9785 = vpack.c.b16 %v9757, %v9756
      %v9786 = vpack.c.b16 %v9759, %v9758
      %v9787 = vpack.c.b16 %v9761, %v9760
      %v9788 = vpack.c.b16 %v9763, %v9762
      %v9789 = vpack.c.b16 %v9765, %v9764
      %v9790 = vpack.c.b16 %v9767, %v9766
      %v9791 = vpack.c.b16 %v9769, %v9768
      %v9792 = vpack.c.b16 %v9771, %v9770
      %v9793 = vpack.c.b16 %v9773, %v9772
      %v9794 = vpack.c.b16 %v9775, %v9774
      %v9795 = vpack.c.b16 %v9777, %v9776
      %v9796 = vpack.c.b16 %v9779, %v9778
      %v9797 = vpack.c.b16 %v9781, %v9780
      %v9830 = vunpack.c.l.b16 %v9734
      %v9831 = vunpack.c.l.b16 %v9735
      %v9832 = vunpack.c.l.b16 %v9736
      %v9833 = vunpack.c.l.b16 %v9737
      %v9834 = vunpack.c.l.b16 %v9738
      %v9835 = vunpack.c.l.b16 %v9739
      %v9836 = vunpack.c.l.b16 %v9740
      %v9837 = vunpack.c.l.b16 %v9741
      %v9838 = vunpack.c.l.b16 %v9742
      %v9839 = vunpack.c.l.b16 %v9743
      %v9840 = vunpack.c.l.b16 %v9744
      %v9841 = vunpack.c.l.b16 %v9745
      %v9842 = vunpack.c.l.b16 %v9746
      %v9843 = vunpack.c.l.b16 %v9747
      %v9844 = vunpack.c.l.b16 %v9748
      %v9845 = vunpack.c.l.b16 %v9749
      %v9846 = vpack.c.b16 %v9831, %v9830
      %v9847 = vpack.c.b16 %v9833, %v9832
      %v9848 = vpack.c.b16 %v9835, %v9834
      %v9849 = vpack.c.b16 %v9837, %v9836
      %v9850 = vpack.c.b16 %v9839, %v9838
      %v9851 = vpack.c.b16 %v9841, %v9840
      %v9852 = vpack.c.b16 %v9843, %v9842
      %v9853 = vpack.c.b16 %v9845, %v9844
      %9862 = vmatprep.subr.bf16.mxu0 0
      %9863 = vmatpush1.bf16.msra.mxu0 %v9846
      %9864 = vmatprep.subr.bf16.mxu0 0
      %9865 = vmatpush1.bf16.msra.mxu0 %v9847
      %9866 = vmatprep.subr.bf16.mxu0 0
      %9867 = vmatpush1.bf16.msra.mxu0 %v9848
      %9868 = vmatprep.subr.bf16.mxu0 0
      %9869 = vmatpush1.bf16.msra.mxu0 %v9849
      %9870 = vmatprep.subr.bf16.mxu0 0
      %9871 = vmatpush1.bf16.msra.mxu0 %v9850
      %9872 = vmatprep.subr.bf16.mxu0 0
      %9873 = vmatpush1.bf16.msra.mxu0 %v9851
      %9874 = vmatprep.subr.bf16.mxu0 0
      %9875 = vmatpush1.bf16.msra.mxu0 %v9852
      %9876 = vmatprep.subr.bf16.mxu0 0
      %9877 = vmatpush1.bf16.msra.mxu0 %v9853
      %9878 = vmatprep.subr.bf16.mxu0 0
      %9879 = vmatpush1.bf16.msra.mxu0 0
      %9880 = vmatprep.subr.bf16.mxu0 0
      %9881 = vmatpush1.bf16.msra.mxu0 0
      %9882 = vmatprep.subr.bf16.mxu0 0
      %9883 = vmatpush1.bf16.msra.mxu0 0
      %9884 = vmatprep.subr.bf16.mxu0 0
      %9885 = vmatpush1.bf16.msra.mxu0 0
      %9886 = vmatprep.subr.bf16.mxu0 0
      %9887 = vmatpush1.bf16.msra.mxu0 0
      %9888 = vmatprep.subr.bf16.mxu0 0
      %9889 = vmatpush1.bf16.msra.mxu0 0
      %9890 = vmatprep.subr.bf16.mxu0 0
      %9891 = vmatpush1.bf16.msra.mxu0 0
      %9892 = vmatprep.subr.bf16.mxu0 0
      %9893 = vmatpush1.bf16.msra.mxu0 0
      %9894 = vmatprep.mubr.bf16.mxu0 0
      %9895 = vmatmul.mubr.bf16.gmra.mrb[0].mxu0 %v9782
      %v9896 = vpop.f32.mrb[0].mxu0
      %v9897 = vadd.f32 0.0, %v9896
      %v9898 = vpop.f32.mrb[0].mxu0
      %v9899 = vpop.f32.mrb[0].mxu0
      %v9900 = vadd.f32 0.0, %v9899
      %v9901 = vpop.f32.mrb[0].mxu0
      %9902 = vmatprep.mubr.bf16.mxu0 0
      %9903 = vmatmul.mubr.bf16.gmra.mrb[0].mxu0 %v9783
      %v9904 = vpop.f32.mrb[0].mxu0
      %v9905 = vadd.f32 0.0, %v9904
      %v9906 = vpop.f32.mrb[0].mxu0
      %v9907 = vpop.f32.mrb[0].mxu0
      %v9908 = vadd.f32 0.0, %v9907
      %v9909 = vpop.f32.mrb[0].mxu0
      %9910 = vmatprep.mubr.bf16.mxu0 0
      %9911 = vmatmul.mubr.bf16.gmra.mrb[0].mxu0 %v9784
      %v9912 = vpop.f32.mrb[0].mxu0
      %v9913 = vadd.f32 0.0, %v9912
      %v9914 = vpop.f32.mrb[0].mxu0
      %v9915 = vpop.f32.mrb[0].mxu0
      %v9916 = vadd.f32 0.0, %v9915
      %v9917 = vpop.f32.mrb[0].mxu0
      %9918 = vmatprep.mubr.bf16.mxu0 0
      %9919 = vmatmul.mubr.bf16.gmra.mrb[0].mxu0 %v9785
      %v9920 = vpop.f32.mrb[0].mxu0
      %v9921 = vadd.f32 0.0, %v9920
      %v9922 = vpop.f32.mrb[0].mxu0
      %v9923 = vpop.f32.mrb[0].mxu0
      %v9924 = vadd.f32 0.0, %v9923
      %v9925 = vpop.f32.mrb[0].mxu0
      %9926 = vmatprep.mubr.bf16.mxu0 0
      %9927 = vmatmul.mubr.bf16.gmra.mrb[0].mxu0 %v9786
      %v9928 = vpop.f32.mrb[0].mxu0
      %v9929 = vadd.f32 0.0, %v9928
      %v9930 = vpop.f32.mrb[0].mxu0
      %v9931 = vpop.f32.mrb[0].mxu0
      %v9932 = vadd.f32 0.0, %v9931
      %v9933 = vpop.f32.mrb[0].mxu0
      %9934 = vmatprep.mubr.bf16.mxu0 0
      %9935 = vmatmul.mubr.bf16.gmra.mrb[0].mxu0 %v9787
      %v9936 = vpop.f32.mrb[0].mxu0
      %v9937 = vadd.f32 0.0, %v9936
      %v9938 = vpop.f32.mrb[0].mxu0
      %v9939 = vpop.f32.mrb[0].mxu0
      %v9940 = vadd.f32 0.0, %v9939
      %v9941 = vpop.f32.mrb[0].mxu0
      %9942 = vmatprep.mubr.bf16.mxu0 0
      %9943 = vmatmul.mubr.bf16.gmra.mrb[0].mxu0 %v9788
      %v9944 = vpop.f32.mrb[0].mxu0
      %v9945 = vadd.f32 0.0, %v9944
      %v9946 = vpop.f32.mrb[0].mxu0
      %v9947 = vpop.f32.mrb[0].mxu0
      %v9948 = vadd.f32 0.0, %v9947
      %v9949 = vpop.f32.mrb[0].mxu0
      %9950 = vmatprep.mubr.bf16.mxu0 0
      %9951 = vmatmul.mubr.bf16.gmra.mrb[0].mxu0 %v9789
      %v9952 = vpop.f32.mrb[0].mxu0
      %v9953 = vadd.f32 0.0, %v9952
      %v9954 = vpop.f32.mrb[0].mxu0
      %v9955 = vpop.f32.mrb[0].mxu0
      %v9956 = vadd.f32 0.0, %v9955
      %v9957 = vpop.f32.mrb[0].mxu0
      %9958 = vmatprep.mubr.bf16.mxu0 0
      %9959 = vmatmul.mubr.bf16.gmra.mrb[0].mxu0 %v9790
      %v9960 = vpop.f32.mrb[0].mxu0
      %v9961 = vadd.f32 0.0, %v9960
      %v9962 = vpop.f32.mrb[0].mxu0
      %v9963 = vpop.f32.mrb[0].mxu0
      %v9964 = vadd.f32 0.0, %v9963
      %v9965 = vpop.f32.mrb[0].mxu0
      %9966 = vmatprep.mubr.bf16.mxu0 0
      %9967 = vmatmul.mubr.bf16.gmra.mrb[0].mxu0 %v9791
      %v9968 = vpop.f32.mrb[0].mxu0
      %v9969 = vadd.f32 0.0, %v9968
      %v9970 = vpop.f32.mrb[0].mxu0
      %v9971 = vpop.f32.mrb[0].mxu0
      %v9972 = vadd.f32 0.0, %v9971
      %v9973 = vpop.f32.mrb[0].mxu0
      %9974 = vmatprep.mubr.bf16.mxu0 0
      %9975 = vmatmul.mubr.bf16.gmra.mrb[0].mxu0 %v9792
      %v9976 = vpop.f32.mrb[0].mxu0
      %v9977 = vadd.f32 0.0, %v9976
      %v9978 = vpop.f32.mrb[0].mxu0
      %v9979 = vpop.f32.mrb[0].mxu0
      %v9980 = vadd.f32 0.0, %v9979
      %v9981 = vpop.f32.mrb[0].mxu0
      %9982 = vmatprep.mubr.bf16.mxu0 0
      %9983 = vmatmul.mubr.bf16.gmra.mrb[0].mxu0 %v9793
      %v9984 = vpop.f32.mrb[0].mxu0
      %v9985 = vadd.f32 0.0, %v9984
      %v9986 = vpop.f32.mrb[0].mxu0
      %v9987 = vpop.f32.mrb[0].mxu0
      %v9988 = vadd.f32 0.0, %v9987
      %v9989 = vpop.f32.mrb[0].mxu0
      %9990 = vmatprep.mubr.bf16.mxu0 0
      %9991 = vmatmul.mubr.bf16.gmra.mrb[0].mxu0 %v9794
      %v9992 = vpop.f32.mrb[0].mxu0
      %v9993 = vadd.f32 0.0, %v9992
      %v9994 = vpop.f32.mrb[0].mxu0
      %v9995 = vpop.f32.mrb[0].mxu0
      %v9996 = vadd.f32 0.0, %v9995
      %v9997 = vpop.f32.mrb[0].mxu0
      %9998 = vmatprep.mubr.bf16.mxu0 0
      %9999 = vmatmul.mubr.bf16.gmra.mrb[0].mxu0 %v9795
      %v10000 = vpop.f32.mrb[0].mxu0
      %v10001 = vadd.f32 0.0, %v10000
      %v10002 = vpop.f32.mrb[0].mxu0
      %v10003 = vpop.f32.mrb[0].mxu0
      %v10004 = vadd.f32 0.0, %v10003
      %v10005 = vpop.f32.mrb[0].mxu0
      %10006 = vmatprep.mubr.bf16.mxu0 0
      %10007 = vmatmul.mubr.bf16.gmra.mrb[0].mxu0 %v9796
      %v10008 = vpop.f32.mrb[0].mxu0
      %v10009 = vadd.f32 0.0, %v10008
      %v10010 = vpop.f32.mrb[0].mxu0
      %v10011 = vpop.f32.mrb[0].mxu0
      %v10012 = vadd.f32 0.0, %v10011
      %v10013 = vpop.f32.mrb[0].mxu0
      %10014 = vmatprep.mubr.bf16.mxu0 0
      %10015 = vmatmul.mubr.bf16.gmra.mrb[0].mxu0 %v9797
      %v10016 = vpop.f32.mrb[0].mxu0
      %v10017 = vadd.f32 0.0, %v10016
      %v10018 = vpop.f32.mrb[0].mxu0
      %v10019 = vpop.f32.mrb[0].mxu0
      %v10020 = vadd.f32 0.0, %v10019
      %v10021 = vpop.f32.mrb[0].mxu0
      %10022 = vdwg.mxu0
      %v10023 = vadd.f32 %v9269, %v9897
      %v10024 = vadd.f32 %v9270, %v9900
      %v10025 = vadd.f32 %v9271, %v9905
      %v10026 = vadd.f32 %v9272, %v9908
      %v10027 = vadd.f32 %v9273, %v9913
      %v10028 = vadd.f32 %v9274, %v9916
      %v10029 = vadd.f32 %v9275, %v9921
      %v10030 = vadd.f32 %v9276, %v9924
      %v10031 = vadd.f32 %v9277, %v9929
      %v10032 = vadd.f32 %v9278, %v9932
      %v10033 = vadd.f32 %v9279, %v9937
      %v10034 = vadd.f32 %v9280, %v9940
      %v10035 = vadd.f32 %v9281, %v9945
      %v10036 = vadd.f32 %v9282, %v9948
      %v10037 = vadd.f32 %v9283, %v9953
      %v10038 = vadd.f32 %v9284, %v9956
      %v10039 = vadd.f32 %v9285, %v9961
      %v10040 = vadd.f32 %v9286, %v9964
      %v10041 = vadd.f32 %v9287, %v9969
      %v10042 = vadd.f32 %v9288, %v9972
      %v10043 = vadd.f32 %v9289, %v9977
      %v10044 = vadd.f32 %v9290, %v9980
      %v10045 = vadd.f32 %v9291, %v9985
      %v10046 = vadd.f32 %v9292, %v9988
      %v10047 = vadd.f32 %v9293, %v9993
      %v10048 = vadd.f32 %v9294, %v9996
      %v10049 = vadd.f32 %v9295, %v10001
      %v10050 = vadd.f32 %v9296, %v10004
      %v10051 = vadd.f32 %v9297, %v10009
      %v10052 = vadd.f32 %v9298, %v10012
      %v10053 = vadd.f32 %v9299, %v10017
      %v10054 = vadd.f32 %v9300, %v10020
      %v10055 = vld [vmem:[%s8914] sm:$0xe]
      %v10056 = vld [vmem:[%s8914 + $0xc] sm:$0xe]
      %v10057 = vld [vmem:[%s8914 + $0x18] sm:$0xe]
      %v10058 = vld [vmem:[%s8914 + $0x24] sm:$0xe]
      %v10059 = vld [vmem:[%s8914 + $0x30] sm:$0xe]
      %v10060 = vld [vmem:[%s8914 + $0x3c] sm:$0xe]
      %v10061 = vld [vmem:[%s8914 + $0x48] sm:$0xe]
      %v10062 = vld [vmem:[%s8914 + $0x54] sm:$0xe]
      %v10063 = vld [vmem:[%s8914 + $0x60] sm:$0xe]
      %v10064 = vld [vmem:[%s8914 + $0x6c] sm:$0xe]
      %v10065 = vld [vmem:[%s8914 + $0x78] sm:$0xe]
      %v10066 = vld [vmem:[%s8914 + $0x84] sm:$0xe]
      %v10067 = vld [vmem:[%s8914 + $0x90] sm:$0xe]
      %v10068 = vld [vmem:[%s8914 + $0x9c] sm:$0xe]
      %v10069 = vld [vmem:[%s8914 + $0xa8] sm:$0xe]
      %v10070 = vld [vmem:[%s8914 + $0xb4] sm:$0xe]
      %v10119 = vrot.slane %v10055, 5
      %v10120 = vrot.slane %v10119, 4
      %v10121 = vrot.slane %v9302, 5
      %v10122 = vsel %vm1376, %v10120, %v10121
      %v10123 = vrot.slane %v10121, 4
      %v10124 = vrot.slane %v9303, 5
      %v10125 = vsel %vm1376, %v10123, %v10124
      %v10126 = vrot.slane %v10056, 5
      %v10127 = vrot.slane %v10126, 4
      %v10128 = vrot.slane %v9305, 5
      %v10129 = vsel %vm1376, %v10127, %v10128
      %v10130 = vrot.slane %v10128, 4
      %v10131 = vrot.slane %v9306, 5
      %v10132 = vsel %vm1376, %v10130, %v10131
      %v10133 = vrot.slane %v10057, 5
      %v10134 = vrot.slane %v10133, 4
      %v10135 = vrot.slane %v9308, 5
      %v10136 = vsel %vm1376, %v10134, %v10135
      %v10137 = vrot.slane %v10135, 4
      %v10138 = vrot.slane %v9309, 5
      %v10139 = vsel %vm1376, %v10137, %v10138
      %v10140 = vrot.slane %v10058, 5
      %v10141 = vrot.slane %v10140, 4
      %v10142 = vrot.slane %v9311, 5
      %v10143 = vsel %vm1376, %v10141, %v10142
      %v10144 = vrot.slane %v10142, 4
      %v10145 = vrot.slane %v9312, 5
      %v10146 = vsel %vm1376, %v10144, %v10145
      %v10147 = vrot.slane %v10059, 5
      %v10148 = vrot.slane %v10147, 4
      %v10149 = vrot.slane %v9314, 5
      %v10150 = vsel %vm1376, %v10148, %v10149
      %v10151 = vrot.slane %v10149, 4
      %v10152 = vrot.slane %v9315, 5
      %v10153 = vsel %vm1376, %v10151, %v10152
      %v10154 = vrot.slane %v10060, 5
      %v10155 = vrot.slane %v10154, 4
      %v10156 = vrot.slane %v9317, 5
      %v10157 = vsel %vm1376, %v10155, %v10156
      %v10158 = vrot.slane %v10156, 4
      %v10159 = vrot.slane %v9318, 5
      %v10160 = vsel %vm1376, %v10158, %v10159
      %v10161 = vrot.slane %v10061, 5
      %v10162 = vrot.slane %v10161, 4
      %v10163 = vrot.slane %v9320, 5
      %v10164 = vsel %vm1376, %v10162, %v10163
      %v10165 = vrot.slane %v10163, 4
      %v10166 = vrot.slane %v9321, 5
      %v10167 = vsel %vm1376, %v10165, %v10166
      %v10168 = vrot.slane %v10062, 5
      %v10169 = vrot.slane %v10168, 4
      %v10170 = vrot.slane %v9323, 5
      %v10171 = vsel %vm1376, %v10169, %v10170
      %v10172 = vrot.slane %v10170, 4
      %v10173 = vrot.slane %v9324, 5
      %v10174 = vsel %vm1376, %v10172, %v10173
      %v10175 = vrot.slane %v10063, 5
      %v10176 = vrot.slane %v10175, 4
      %v10177 = vrot.slane %v9326, 5
      %v10178 = vsel %vm1376, %v10176, %v10177
      %v10179 = vrot.slane %v10177, 4
      %v10180 = vrot.slane %v9327, 5
      %v10181 = vsel %vm1376, %v10179, %v10180
      %v10182 = vrot.slane %v10064, 5
      %v10183 = vrot.slane %v10182, 4
      %v10184 = vrot.slane %v9329, 5
      %v10185 = vsel %vm1376, %v10183, %v10184
      %v10186 = vrot.slane %v10184, 4
      %v10187 = vrot.slane %v9330, 5
      %v10188 = vsel %vm1376, %v10186, %v10187
      %v10189 = vrot.slane %v10065, 5
      %v10190 = vrot.slane %v10189, 4
      %v10191 = vrot.slane %v9332, 5
      %v10192 = vsel %vm1376, %v10190, %v10191
      %v10193 = vrot.slane %v10191, 4
      %v10194 = vrot.slane %v9333, 5
      %v10195 = vsel %vm1376, %v10193, %v10194
      %v10196 = vrot.slane %v10066, 5
      %v10197 = vrot.slane %v10196, 4
      %v10198 = vrot.slane %v9335, 5
      %v10199 = vsel %vm1376, %v10197, %v10198
      %v10200 = vrot.slane %v10198, 4
      %v10201 = vrot.slane %v9336, 5
      %v10202 = vsel %vm1376, %v10200, %v10201
      %v10203 = vrot.slane %v10067, 5
      %v10204 = vrot.slane %v10203, 4
      %v10205 = vrot.slane %v9338, 5
      %v10206 = vsel %vm1376, %v10204, %v10205
      %v10207 = vrot.slane %v10205, 4
      %v10208 = vrot.slane %v9339, 5
      %v10209 = vsel %vm1376, %v10207, %v10208
      %v10210 = vrot.slane %v10068, 5
      %v10211 = vrot.slane %v10210, 4
      %v10212 = vrot.slane %v9341, 5
      %v10213 = vsel %vm1376, %v10211, %v10212
      %v10214 = vrot.slane %v10212, 4
      %v10215 = vrot.slane %v9342, 5
      %v10216 = vsel %vm1376, %v10214, %v10215
      %v10217 = vrot.slane %v10069, 5
      %v10218 = vrot.slane %v10217, 4
      %v10219 = vrot.slane %v9344, 5
      %v10220 = vsel %vm1376, %v10218, %v10219
      %v10221 = vrot.slane %v10219, 4
      %v10222 = vrot.slane %v9345, 5
      %v10223 = vsel %vm1376, %v10221, %v10222
      %v10224 = vrot.slane %v10070, 5
      %v10225 = vrot.slane %v10224, 4
      %v10226 = vrot.slane %v9347, 5
      %v10227 = vsel %vm1376, %v10225, %v10226
      %v10228 = vrot.slane %v10226, 4
      %v10229 = vrot.slane %v9348, 5
      %v10230 = vsel %vm1376, %v10228, %v10229
      %s10231 = scalar_lea.vmem %s3, 512
      %v10232 = vld [vmem:[%s10231] sm:$0xf]
      %v10233 = vld [vmem:[%s10231 + $0x4] sm:$0xf]
      %v10234 = vld [vmem:[%s10231 + $0x8] sm:$0xf]
      %v10235 = vld [vmem:[%s10231 + $0xc] sm:$0xf]
      %v10236 = vld [vmem:[%s10231 + $0x10] sm:$0xf]
      %v10237 = vld [vmem:[%s10231 + $0x14] sm:$0xf]
      %v10238 = vld [vmem:[%s10231 + $0x18] sm:$0xf]
      %v10239 = vld [vmem:[%s10231 + $0x1c] sm:$0xf]
      %v10240 = vld [vmem:[%s10231 + $0x20] sm:$0xf]
      %v10241 = vld [vmem:[%s10231 + $0x24] sm:$0xf]
      %v10242 = vld [vmem:[%s10231 + $0x28] sm:$0xf]
      %v10243 = vld [vmem:[%s10231 + $0x2c] sm:$0xf]
      %v10244 = vld [vmem:[%s10231 + $0x30] sm:$0xf]
      %v10245 = vld [vmem:[%s10231 + $0x34] sm:$0xf]
      %v10246 = vld [vmem:[%s10231 + $0x38] sm:$0xf]
      %v10247 = vld [vmem:[%s10231 + $0x3c] sm:$0xf]
      %v10248 = vunpack.c.l.b16 %v10122
      %v10249 = vunpack.c.l.b16 %v10125
      %v10250 = vunpack.c.l.b16 %v10129
      %v10251 = vunpack.c.l.b16 %v10132
      %v10252 = vunpack.c.l.b16 %v10136
      %v10253 = vunpack.c.l.b16 %v10139
      %v10254 = vunpack.c.l.b16 %v10143
      %v10255 = vunpack.c.l.b16 %v10146
      %v10256 = vunpack.c.l.b16 %v10150
      %v10257 = vunpack.c.l.b16 %v10153
      %v10258 = vunpack.c.l.b16 %v10157
      %v10259 = vunpack.c.l.b16 %v10160
      %v10260 = vunpack.c.l.b16 %v10164
      %v10261 = vunpack.c.l.b16 %v10167
      %v10262 = vunpack.c.l.b16 %v10171
      %v10263 = vunpack.c.l.b16 %v10174
      %v10264 = vunpack.c.l.b16 %v10178
      %v10265 = vunpack.c.l.b16 %v10181
      %v10266 = vunpack.c.l.b16 %v10185
      %v10267 = vunpack.c.l.b16 %v10188
      %v10268 = vunpack.c.l.b16 %v10192
      %v10269 = vunpack.c.l.b16 %v10195
      %v10270 = vunpack.c.l.b16 %v10199
      %v10271 = vunpack.c.l.b16 %v10202
      %v10272 = vunpack.c.l.b16 %v10206
      %v10273 = vunpack.c.l.b16 %v10209
      %v10274 = vunpack.c.l.b16 %v10213
      %v10275 = vunpack.c.l.b16 %v10216
      %v10276 = vunpack.c.l.b16 %v10220
      %v10277 = vunpack.c.l.b16 %v10223
      %v10278 = vunpack.c.l.b16 %v10227
      %v10279 = vunpack.c.l.b16 %v10230
      %v10280 = vpack.c.b16 %v10249, %v10248
      %v10281 = vpack.c.b16 %v10251, %v10250
      %v10282 = vpack.c.b16 %v10253, %v10252
      %v10283 = vpack.c.b16 %v10255, %v10254
      %v10284 = vpack.c.b16 %v10257, %v10256
      %v10285 = vpack.c.b16 %v10259, %v10258
      %v10286 = vpack.c.b16 %v10261, %v10260
      %v10287 = vpack.c.b16 %v10263, %v10262
      %v10288 = vpack.c.b16 %v10265, %v10264
      %v10289 = vpack.c.b16 %v10267, %v10266
      %v10290 = vpack.c.b16 %v10269, %v10268
      %v10291 = vpack.c.b16 %v10271, %v10270
      %v10292 = vpack.c.b16 %v10273, %v10272
      %v10293 = vpack.c.b16 %v10275, %v10274
      %v10294 = vpack.c.b16 %v10277, %v10276
      %v10295 = vpack.c.b16 %v10279, %v10278
      %v10328 = vunpack.c.l.b16 %v10232
      %v10329 = vunpack.c.l.b16 %v10233
      %v10330 = vunpack.c.l.b16 %v10234
      %v10331 = vunpack.c.l.b16 %v10235
      %v10332 = vunpack.c.l.b16 %v10236
      %v10333 = vunpack.c.l.b16 %v10237
      %v10334 = vunpack.c.l.b16 %v10238
      %v10335 = vunpack.c.l.b16 %v10239
      %v10336 = vunpack.c.l.b16 %v10240
      %v10337 = vunpack.c.l.b16 %v10241
      %v10338 = vunpack.c.l.b16 %v10242
      %v10339 = vunpack.c.l.b16 %v10243
      %v10340 = vunpack.c.l.b16 %v10244
      %v10341 = vunpack.c.l.b16 %v10245
      %v10342 = vunpack.c.l.b16 %v10246
      %v10343 = vunpack.c.l.b16 %v10247
      %v10344 = vpack.c.b16 %v10329, %v10328
      %v10345 = vpack.c.b16 %v10331, %v10330
      %v10346 = vpack.c.b16 %v10333, %v10332
      %v10347 = vpack.c.b16 %v10335, %v10334
      %v10348 = vpack.c.b16 %v10337, %v10336
      %v10349 = vpack.c.b16 %v10339, %v10338
      %v10350 = vpack.c.b16 %v10341, %v10340
      %v10351 = vpack.c.b16 %v10343, %v10342
      %10360 = vmatprep.subr.bf16.mxu0 0
      %10361 = vmatpush1.bf16.msra.mxu0 %v10344
      %10362 = vmatprep.subr.bf16.mxu0 0
      %10363 = vmatpush1.bf16.msra.mxu0 %v10345
      %10364 = vmatprep.subr.bf16.mxu0 0
      %10365 = vmatpush1.bf16.msra.mxu0 %v10346
      %10366 = vmatprep.subr.bf16.mxu0 0
      %10367 = vmatpush1.bf16.msra.mxu0 %v10347
      %10368 = vmatprep.subr.bf16.mxu0 0
      %10369 = vmatpush1.bf16.msra.mxu0 %v10348
      %10370 = vmatprep.subr.bf16.mxu0 0
      %10371 = vmatpush1.bf16.msra.mxu0 %v10349
      %10372 = vmatprep.subr.bf16.mxu0 0
      %10373 = vmatpush1.bf16.msra.mxu0 %v10350
      %10374 = vmatprep.subr.bf16.mxu0 0
      %10375 = vmatpush1.bf16.msra.mxu0 %v10351
      %10376 = vmatprep.subr.bf16.mxu0 0
      %10377 = vmatpush1.bf16.msra.mxu0 0
      %10378 = vmatprep.subr.bf16.mxu0 0
      %10379 = vmatpush1.bf16.msra.mxu0 0
      %10380 = vmatprep.subr.bf16.mxu0 0
      %10381 = vmatpush1.bf16.msra.mxu0 0
      %10382 = vmatprep.subr.bf16.mxu0 0
      %10383 = vmatpush1.bf16.msra.mxu0 0
      %10384 = vmatprep.subr.bf16.mxu0 0
      %10385 = vmatpush1.bf16.msra.mxu0 0
      %10386 = vmatprep.subr.bf16.mxu0 0
      %10387 = vmatpush1.bf16.msra.mxu0 0
      %10388 = vmatprep.subr.bf16.mxu0 0
      %10389 = vmatpush1.bf16.msra.mxu0 0
      %10390 = vmatprep.subr.bf16.mxu0 0
      %10391 = vmatpush1.bf16.msra.mxu0 0
      %10392 = vmatprep.mubr.bf16.mxu0 0
      %10393 = vmatmul.mubr.bf16.gmra.mrb[0].mxu0 %v10280
      %v10394 = vpop.f32.mrb[0].mxu0
      %v10395 = vadd.f32 0.0, %v10394
      %v10396 = vpop.f32.mrb[0].mxu0
      %v10397 = vpop.f32.mrb[0].mxu0
      %v10398 = vadd.f32 0.0, %v10397
      %v10399 = vpop.f32.mrb[0].mxu0
      %10400 = vmatprep.mubr.bf16.mxu0 0
      %10401 = vmatmul.mubr.bf16.gmra.mrb[0].mxu0 %v10281
      %v10402 = vpop.f32.mrb[0].mxu0
      %v10403 = vadd.f32 0.0, %v10402
      %v10404 = vpop.f32.mrb[0].mxu0
      %v10405 = vpop.f32.mrb[0].mxu0
      %v10406 = vadd.f32 0.0, %v10405
      %v10407 = vpop.f32.mrb[0].mxu0
      %10408 = vmatprep.mubr.bf16.mxu0 0
      %10409 = vmatmul.mubr.bf16.gmra.mrb[0].mxu0 %v10282
      %v10410 = vpop.f32.mrb[0].mxu0
      %v10411 = vadd.f32 0.0, %v10410
      %v10412 = vpop.f32.mrb[0].mxu0
      %v10413 = vpop.f32.mrb[0].mxu0
      %v10414 = vadd.f32 0.0, %v10413
      %v10415 = vpop.f32.mrb[0].mxu0
      %10416 = vmatprep.mubr.bf16.mxu0 0
      %10417 = vmatmul.mubr.bf16.gmra.mrb[0].mxu0 %v10283
      %v10418 = vpop.f32.mrb[0].mxu0
      %v10419 = vadd.f32 0.0, %v10418
      %v10420 = vpop.f32.mrb[0].mxu0
      %v10421 = vpop.f32.mrb[0].mxu0
      %v10422 = vadd.f32 0.0, %v10421
      %v10423 = vpop.f32.mrb[0].mxu0
      %10424 = vmatprep.mubr.bf16.mxu0 0
      %10425 = vmatmul.mubr.bf16.gmra.mrb[0].mxu0 %v10284
      %v10426 = vpop.f32.mrb[0].mxu0
      %v10427 = vadd.f32 0.0, %v10426
      %v10428 = vpop.f32.mrb[0].mxu0
      %v10429 = vpop.f32.mrb[0].mxu0
      %v10430 = vadd.f32 0.0, %v10429
      %v10431 = vpop.f32.mrb[0].mxu0
      %10432 = vmatprep.mubr.bf16.mxu0 0
      %10433 = vmatmul.mubr.bf16.gmra.mrb[0].mxu0 %v10285
      %v10434 = vpop.f32.mrb[0].mxu0
      %v10435 = vadd.f32 0.0, %v10434
      %v10436 = vpop.f32.mrb[0].mxu0
      %v10437 = vpop.f32.mrb[0].mxu0
      %v10438 = vadd.f32 0.0, %v10437
      %v10439 = vpop.f32.mrb[0].mxu0
      %10440 = vmatprep.mubr.bf16.mxu0 0
      %10441 = vmatmul.mubr.bf16.gmra.mrb[0].mxu0 %v10286
      %v10442 = vpop.f32.mrb[0].mxu0
      %v10443 = vadd.f32 0.0, %v10442
      %v10444 = vpop.f32.mrb[0].mxu0
      %v10445 = vpop.f32.mrb[0].mxu0
      %v10446 = vadd.f32 0.0, %v10445
      %v10447 = vpop.f32.mrb[0].mxu0
      %10448 = vmatprep.mubr.bf16.mxu0 0
      %10449 = vmatmul.mubr.bf16.gmra.mrb[0].mxu0 %v10287
      %v10450 = vpop.f32.mrb[0].mxu0
      %v10451 = vadd.f32 0.0, %v10450
      %v10452 = vpop.f32.mrb[0].mxu0
      %v10453 = vpop.f32.mrb[0].mxu0
      %v10454 = vadd.f32 0.0, %v10453
      %v10455 = vpop.f32.mrb[0].mxu0
      %10456 = vmatprep.mubr.bf16.mxu0 0
      %10457 = vmatmul.mubr.bf16.gmra.mrb[0].mxu0 %v10288
      %v10458 = vpop.f32.mrb[0].mxu0
      %v10459 = vadd.f32 0.0, %v10458
      %v10460 = vpop.f32.mrb[0].mxu0
      %v10461 = vpop.f32.mrb[0].mxu0
      %v10462 = vadd.f32 0.0, %v10461
      %v10463 = vpop.f32.mrb[0].mxu0
      %10464 = vmatprep.mubr.bf16.mxu0 0
      %10465 = vmatmul.mubr.bf16.gmra.mrb[0].mxu0 %v10289
      %v10466 = vpop.f32.mrb[0].mxu0
      %v10467 = vadd.f32 0.0, %v10466
      %v10468 = vpop.f32.mrb[0].mxu0
      %v10469 = vpop.f32.mrb[0].mxu0
      %v10470 = vadd.f32 0.0, %v10469
      %v10471 = vpop.f32.mrb[0].mxu0
      %10472 = vmatprep.mubr.bf16.mxu0 0
      %10473 = vmatmul.mubr.bf16.gmra.mrb[0].mxu0 %v10290
      %v10474 = vpop.f32.mrb[0].mxu0
      %v10475 = vadd.f32 0.0, %v10474
      %v10476 = vpop.f32.mrb[0].mxu0
      %v10477 = vpop.f32.mrb[0].mxu0
      %v10478 = vadd.f32 0.0, %v10477
      %v10479 = vpop.f32.mrb[0].mxu0
      %10480 = vmatprep.mubr.bf16.mxu0 0
      %10481 = vmatmul.mubr.bf16.gmra.mrb[0].mxu0 %v10291
      %v10482 = vpop.f32.mrb[0].mxu0
      %v10483 = vadd.f32 0.0, %v10482
      %v10484 = vpop.f32.mrb[0].mxu0
      %v10485 = vpop.f32.mrb[0].mxu0
      %v10486 = vadd.f32 0.0, %v10485
      %v10487 = vpop.f32.mrb[0].mxu0
      %10488 = vmatprep.mubr.bf16.mxu0 0
      %10489 = vmatmul.mubr.bf16.gmra.mrb[0].mxu0 %v10292
      %v10490 = vpop.f32.mrb[0].mxu0
      %v10491 = vadd.f32 0.0, %v10490
      %v10492 = vpop.f32.mrb[0].mxu0
      %v10493 = vpop.f32.mrb[0].mxu0
      %v10494 = vadd.f32 0.0, %v10493
      %v10495 = vpop.f32.mrb[0].mxu0
      %10496 = vmatprep.mubr.bf16.mxu0 0
      %10497 = vmatmul.mubr.bf16.gmra.mrb[0].mxu0 %v10293
      %v10498 = vpop.f32.mrb[0].mxu0
      %v10499 = vadd.f32 0.0, %v10498
      %v10500 = vpop.f32.mrb[0].mxu0
      %v10501 = vpop.f32.mrb[0].mxu0
      %v10502 = vadd.f32 0.0, %v10501
      %v10503 = vpop.f32.mrb[0].mxu0
      %10504 = vmatprep.mubr.bf16.mxu0 0
      %10505 = vmatmul.mubr.bf16.gmra.mrb[0].mxu0 %v10294
      %v10506 = vpop.f32.mrb[0].mxu0
      %v10507 = vadd.f32 0.0, %v10506
      %v10508 = vpop.f32.mrb[0].mxu0
      %v10509 = vpop.f32.mrb[0].mxu0
      %v10510 = vadd.f32 0.0, %v10509
      %v10511 = vpop.f32.mrb[0].mxu0
      %10512 = vmatprep.mubr.bf16.mxu0 0
      %10513 = vmatmul.mubr.bf16.gmra.mrb[0].mxu0 %v10295
      %v10514 = vpop.f32.mrb[0].mxu0
      %v10515 = vadd.f32 0.0, %v10514
      %v10516 = vpop.f32.mrb[0].mxu0
      %v10517 = vpop.f32.mrb[0].mxu0
      %v10518 = vadd.f32 0.0, %v10517
      %v10519 = vpop.f32.mrb[0].mxu0
      %10520 = vdwg.mxu0
      %v10521 = vadd.f32 %v10023, %v10395
      %v10522 = vadd.f32 %v10024, %v10398
      %v10523 = vadd.f32 %v10025, %v10403
      %v10524 = vadd.f32 %v10026, %v10406
      %v10525 = vadd.f32 %v10027, %v10411
      %v10526 = vadd.f32 %v10028, %v10414
      %v10527 = vadd.f32 %v10029, %v10419
      %v10528 = vadd.f32 %v10030, %v10422
      %v10529 = vadd.f32 %v10031, %v10427
      %v10530 = vadd.f32 %v10032, %v10430
      %v10531 = vadd.f32 %v10033, %v10435
      %v10532 = vadd.f32 %v10034, %v10438
      %v10533 = vadd.f32 %v10035, %v10443
      %v10534 = vadd.f32 %v10036, %v10446
      %v10535 = vadd.f32 %v10037, %v10451
      %v10536 = vadd.f32 %v10038, %v10454
      %v10537 = vadd.f32 %v10039, %v10459
      %v10538 = vadd.f32 %v10040, %v10462
      %v10539 = vadd.f32 %v10041, %v10467
      %v10540 = vadd.f32 %v10042, %v10470
      %v10541 = vadd.f32 %v10043, %v10475
      %v10542 = vadd.f32 %v10044, %v10478
      %v10543 = vadd.f32 %v10045, %v10483
      %v10544 = vadd.f32 %v10046, %v10486
      %v10545 = vadd.f32 %v10047, %v10491
      %v10546 = vadd.f32 %v10048, %v10494
      %v10547 = vadd.f32 %v10049, %v10499
      %v10548 = vadd.f32 %v10050, %v10502
      %v10549 = vadd.f32 %v10051, %v10507
      %v10550 = vadd.f32 %v10052, %v10510
      %v10551 = vadd.f32 %v10053, %v10515
      %v10552 = vadd.f32 %v10054, %v10518
      %v10553 = vld [vmem:[%s4] sm:$0x1]
      %v10555 = vlaneseq
      %v10556 = vshrl.u32 %v10555, 7
      %v10557 = vsub.s32 0, %v10556
      %v10558 = vrot.slane %v10553, %v10557
      %v10560 = vadd.f32 %v10521, %v10558
      %v10561 = vadd.f32 %v10522, %v10558
      %v10562 = vadd.f32 %v10523, %v10558
      %v10563 = vadd.f32 %v10524, %v10558
      %v10564 = vadd.f32 %v10525, %v10558
      %v10565 = vadd.f32 %v10526, %v10558
      %v10566 = vadd.f32 %v10527, %v10558
      %v10567 = vadd.f32 %v10528, %v10558
      %v10568 = vadd.f32 %v10529, %v10558
      %v10569 = vadd.f32 %v10530, %v10558
      %v10570 = vadd.f32 %v10531, %v10558
      %v10571 = vadd.f32 %v10532, %v10558
      %v10572 = vadd.f32 %v10533, %v10558
      %v10573 = vadd.f32 %v10534, %v10558
      %v10574 = vadd.f32 %v10535, %v10558
      %v10575 = vadd.f32 %v10536, %v10558
      %v10576 = vadd.f32 %v10537, %v10558
      %v10577 = vadd.f32 %v10538, %v10558
      %v10578 = vadd.f32 %v10539, %v10558
      %v10579 = vadd.f32 %v10540, %v10558
      %v10580 = vadd.f32 %v10541, %v10558
      %v10581 = vadd.f32 %v10542, %v10558
      %v10582 = vadd.f32 %v10543, %v10558
      %v10583 = vadd.f32 %v10544, %v10558
      %v10584 = vadd.f32 %v10545, %v10558
      %v10585 = vadd.f32 %v10546, %v10558
      %v10586 = vadd.f32 %v10547, %v10558
      %v10587 = vadd.f32 %v10548, %v10558
      %v10588 = vadd.f32 %v10549, %v10558
      %v10589 = vadd.f32 %v10550, %v10558
      %v10590 = vadd.f32 %v10551, %v10558
      %v10591 = vadd.f32 %v10552, %v10558
      %v10592 = vmax.f32 %v10560, 0.0
      %v10593 = vmax.f32 %v10561, 0.0
      %v10594 = vmax.f32 %v10562, 0.0
      %v10595 = vmax.f32 %v10563, 0.0
      %v10596 = vmax.f32 %v10564, 0.0
      %v10597 = vmax.f32 %v10565, 0.0
      %v10598 = vmax.f32 %v10566, 0.0
      %v10599 = vmax.f32 %v10567, 0.0
      %v10600 = vmax.f32 %v10568, 0.0
      %v10601 = vmax.f32 %v10569, 0.0
      %v10602 = vmax.f32 %v10570, 0.0
      %v10603 = vmax.f32 %v10571, 0.0
      %v10604 = vmax.f32 %v10572, 0.0
      %v10605 = vmax.f32 %v10573, 0.0
      %v10606 = vmax.f32 %v10574, 0.0
      %v10607 = vmax.f32 %v10575, 0.0
      %v10608 = vmax.f32 %v10576, 0.0
      %v10609 = vmax.f32 %v10577, 0.0
      %v10610 = vmax.f32 %v10578, 0.0
      %v10611 = vmax.f32 %v10579, 0.0
      %v10612 = vmax.f32 %v10580, 0.0
      %v10613 = vmax.f32 %v10581, 0.0
      %v10614 = vmax.f32 %v10582, 0.0
      %v10615 = vmax.f32 %v10583, 0.0
      %v10616 = vmax.f32 %v10584, 0.0
      %v10617 = vmax.f32 %v10585, 0.0
      %v10618 = vmax.f32 %v10586, 0.0
      %v10619 = vmax.f32 %v10587, 0.0
      %v10620 = vmax.f32 %v10588, 0.0
      %v10621 = vmax.f32 %v10589, 0.0
      %v10622 = vmax.f32 %v10590, 0.0
      %v10623 = vmax.f32 %v10591, 0.0
      %v10624 = vld [vmem:[%s1811] sm:$0xf]
      %v10625 = vld [vmem:[%s1811 + $0x4] sm:$0xf]
      %v10626 = vld [vmem:[%s1811 + $0x8] sm:$0x1]
      %v10627 = vld [vmem:[%s1811 + $0xc] sm:$0xf]
      %v10628 = vld [vmem:[%s1811 + $0x10] sm:$0xf]
      %v10629 = vld [vmem:[%s1811 + $0x14] sm:$0x1]
      %v10630 = vld [vmem:[%s1811 + $0x18] sm:$0xf]
      %v10631 = vld [vmem:[%s1811 + $0x1c] sm:$0xf]
      %v10632 = vld [vmem:[%s1811 + $0x20] sm:$0x1]
      %v10633 = vld [vmem:[%s1811 + $0x24] sm:$0xf]
      %v10634 = vld [vmem:[%s1811 + $0x28] sm:$0xf]
      %v10635 = vld [vmem:[%s1811 + $0x2c] sm:$0x1]
      %v10636 = vld [vmem:[%s1811 + $0x30] sm:$0xf]
      %v10637 = vld [vmem:[%s1811 + $0x34] sm:$0xf]
      %v10638 = vld [vmem:[%s1811 + $0x38] sm:$0x1]
      %v10639 = vld [vmem:[%s1811 + $0x3c] sm:$0xf]
      %v10640 = vld [vmem:[%s1811 + $0x40] sm:$0xf]
      %v10641 = vld [vmem:[%s1811 + $0x44] sm:$0x1]
      %v10642 = vld [vmem:[%s1811 + $0x48] sm:$0xf]
      %v10643 = vld [vmem:[%s1811 + $0x4c] sm:$0xf]
      %v10644 = vld [vmem:[%s1811 + $0x50] sm:$0x1]
      %v10645 = vld [vmem:[%s1811 + $0x54] sm:$0xf]
      %v10646 = vld [vmem:[%s1811 + $0x58] sm:$0xf]
      %v10647 = vld [vmem:[%s1811 + $0x5c] sm:$0x1]
      %v10648 = vld [vmem:[%s1811 + $0x60] sm:$0xf]
      %v10649 = vld [vmem:[%s1811 + $0x64] sm:$0xf]
      %v10650 = vld [vmem:[%s1811 + $0x68] sm:$0x1]
      %v10651 = vld [vmem:[%s1811 + $0x6c] sm:$0xf]
      %v10652 = vld [vmem:[%s1811 + $0x70] sm:$0xf]
      %v10653 = vld [vmem:[%s1811 + $0x74] sm:$0x1]
      %v10654 = vld [vmem:[%s1811 + $0x78] sm:$0xf]
      %v10655 = vld [vmem:[%s1811 + $0x7c] sm:$0xf]
      %v10656 = vld [vmem:[%s1811 + $0x80] sm:$0x1]
      %v10657 = vld [vmem:[%s1811 + $0x84] sm:$0xf]
      %v10658 = vld [vmem:[%s1811 + $0x88] sm:$0xf]
      %v10659 = vld [vmem:[%s1811 + $0x8c] sm:$0x1]
      %v10660 = vld [vmem:[%s1811 + $0x90] sm:$0xf]
      %v10661 = vld [vmem:[%s1811 + $0x94] sm:$0xf]
      %v10662 = vld [vmem:[%s1811 + $0x98] sm:$0x1]
      %v10663 = vld [vmem:[%s1811 + $0x9c] sm:$0xf]
      %v10664 = vld [vmem:[%s1811 + $0xa0] sm:$0xf]
      %v10665 = vld [vmem:[%s1811 + $0xa4] sm:$0x1]
      %v10666 = vld [vmem:[%s1811 + $0xa8] sm:$0xf]
      %v10667 = vld [vmem:[%s1811 + $0xac] sm:$0xf]
      %v10668 = vld [vmem:[%s1811 + $0xb0] sm:$0x1]
      %v10669 = vld [vmem:[%s1811 + $0xb4] sm:$0xf]
      %v10670 = vld [vmem:[%s1811 + $0xb8] sm:$0xf]
      %v10671 = vld [vmem:[%s1811 + $0xbc] sm:$0x1]
      %v10673 = vshrl.u32 %v10624, 16
      %v10675 = vrot.slane %v10673, 4
      %v10676 = vshll.u32 %v10624, 16
      %v10678 = vrot.slane %v10676, 5
      %v10679 = vor.u32 %v10675, %v10678
      %v10680 = vrot.slane %v10679, 4
      %v10682 = vshll.u32 %v10625, 16
      %v10684 = vrot.slane %v10682, 5
      %v10685 = vsel %vm346, %v10680, %v10684
      %v10686 = vshrl.u32 %v10625, 16
      %v10688 = vrot.slane %v10686, 4
      %v10689 = vor.u32 %v10688, %v10684
      %v10690 = vrot.slane %v10689, 4
      %v10692 = vshll.u32 %v10626, 16
      %v10694 = vrot.slane %v10692, 5
      %v10695 = vsel %vm346, %v10690, %v10694
      %v10697 = vshrl.u32 %v10627, 16
      %v10699 = vrot.slane %v10697, 4
      %v10700 = vshll.u32 %v10627, 16
      %v10702 = vrot.slane %v10700, 5
      %v10703 = vor.u32 %v10699, %v10702
      %v10704 = vrot.slane %v10703, 4
      %v10706 = vshll.u32 %v10628, 16
      %v10708 = vrot.slane %v10706, 5
      %v10709 = vsel %vm346, %v10704, %v10708
      %v10710 = vshrl.u32 %v10628, 16
      %v10712 = vrot.slane %v10710, 4
      %v10713 = vor.u32 %v10712, %v10708
      %v10714 = vrot.slane %v10713, 4
      %v10716 = vshll.u32 %v10629, 16
      %v10718 = vrot.slane %v10716, 5
      %v10719 = vsel %vm346, %v10714, %v10718
      %v10721 = vshrl.u32 %v10630, 16
      %v10723 = vrot.slane %v10721, 4
      %v10724 = vshll.u32 %v10630, 16
      %v10726 = vrot.slane %v10724, 5
      %v10727 = vor.u32 %v10723, %v10726
      %v10728 = vrot.slane %v10727, 4
      %v10730 = vshll.u32 %v10631, 16
      %v10732 = vrot.slane %v10730, 5
      %v10733 = vsel %vm346, %v10728, %v10732
      %v10734 = vshrl.u32 %v10631, 16
      %v10736 = vrot.slane %v10734, 4
      %v10737 = vor.u32 %v10736, %v10732
      %v10738 = vrot.slane %v10737, 4
      %v10740 = vshll.u32 %v10632, 16
      %v10742 = vrot.slane %v10740, 5
      %v10743 = vsel %vm346, %v10738, %v10742
      %v10745 = vshrl.u32 %v10633, 16
      %v10747 = vrot.slane %v10745, 4
      %v10748 = vshll.u32 %v10633, 16
      %v10750 = vrot.slane %v10748, 5
      %v10751 = vor.u32 %v10747, %v10750
      %v10752 = vrot.slane %v10751, 4
      %v10754 = vshll.u32 %v10634, 16
      %v10756 = vrot.slane %v10754, 5
      %v10757 = vsel %vm346, %v10752, %v10756
      %v10758 = vshrl.u32 %v10634, 16
      %v10760 = vrot.slane %v10758, 4
      %v10761 = vor.u32 %v10760, %v10756
      %v10762 = vrot.slane %v10761, 4
      %v10764 = vshll.u32 %v10635, 16
      %v10766 = vrot.slane %v10764, 5
      %v10767 = vsel %vm346, %v10762, %v10766
      %v10769 = vshrl.u32 %v10636, 16
      %v10771 = vrot.slane %v10769, 4
      %v10772 = vshll.u32 %v10636, 16
      %v10774 = vrot.slane %v10772, 5
      %v10775 = vor.u32 %v10771, %v10774
      %v10776 = vrot.slane %v10775, 4
      %v10778 = vshll.u32 %v10637, 16
      %v10780 = vrot.slane %v10778, 5
      %v10781 = vsel %vm346, %v10776, %v10780
      %v10782 = vshrl.u32 %v10637, 16
      %v10784 = vrot.slane %v10782, 4
      %v10785 = vor.u32 %v10784, %v10780
      %v10786 = vrot.slane %v10785, 4
      %v10788 = vshll.u32 %v10638, 16
      %v10790 = vrot.slane %v10788, 5
      %v10791 = vsel %vm346, %v10786, %v10790
      %v10793 = vshrl.u32 %v10639, 16
      %v10795 = vrot.slane %v10793, 4
      %v10796 = vshll.u32 %v10639, 16
      %v10798 = vrot.slane %v10796, 5
      %v10799 = vor.u32 %v10795, %v10798
      %v10800 = vrot.slane %v10799, 4
      %v10802 = vshll.u32 %v10640, 16
      %v10804 = vrot.slane %v10802, 5
      %v10805 = vsel %vm346, %v10800, %v10804
      %v10806 = vshrl.u32 %v10640, 16
      %v10808 = vrot.slane %v10806, 4
      %v10809 = vor.u32 %v10808, %v10804
      %v10810 = vrot.slane %v10809, 4
      %v10812 = vshll.u32 %v10641, 16
      %v10814 = vrot.slane %v10812, 5
      %v10815 = vsel %vm346, %v10810, %v10814
      %v10817 = vshrl.u32 %v10642, 16
      %v10819 = vrot.slane %v10817, 4
      %v10820 = vshll.u32 %v10642, 16
      %v10822 = vrot.slane %v10820, 5
      %v10823 = vor.u32 %v10819, %v10822
      %v10824 = vrot.slane %v10823, 4
      %v10826 = vshll.u32 %v10643, 16
      %v10828 = vrot.slane %v10826, 5
      %v10829 = vsel %vm346, %v10824, %v10828
      %v10830 = vshrl.u32 %v10643, 16
      %v10832 = vrot.slane %v10830, 4
      %v10833 = vor.u32 %v10832, %v10828
      %v10834 = vrot.slane %v10833, 4
      %v10836 = vshll.u32 %v10644, 16
      %v10838 = vrot.slane %v10836, 5
      %v10839 = vsel %vm346, %v10834, %v10838
      %v10841 = vshrl.u32 %v10645, 16
      %v10843 = vrot.slane %v10841, 4
      %v10844 = vshll.u32 %v10645, 16
      %v10846 = vrot.slane %v10844, 5
      %v10847 = vor.u32 %v10843, %v10846
      %v10848 = vrot.slane %v10847, 4
      %v10850 = vshll.u32 %v10646, 16
      %v10852 = vrot.slane %v10850, 5
      %v10853 = vsel %vm346, %v10848, %v10852
      %v10854 = vshrl.u32 %v10646, 16
      %v10856 = vrot.slane %v10854, 4
      %v10857 = vor.u32 %v10856, %v10852
      %v10858 = vrot.slane %v10857, 4
      %v10860 = vshll.u32 %v10647, 16
      %v10862 = vrot.slane %v10860, 5
      %v10863 = vsel %vm346, %v10858, %v10862
      %v10865 = vshrl.u32 %v10648, 16
      %v10867 = vrot.slane %v10865, 4
      %v10868 = vshll.u32 %v10648, 16
      %v10870 = vrot.slane %v10868, 5
      %v10871 = vor.u32 %v10867, %v10870
      %v10872 = vrot.slane %v10871, 4
      %v10874 = vshll.u32 %v10649, 16
      %v10876 = vrot.slane %v10874, 5
      %v10877 = vsel %vm346, %v10872, %v10876
      %v10878 = vshrl.u32 %v10649, 16
      %v10880 = vrot.slane %v10878, 4
      %v10881 = vor.u32 %v10880, %v10876
      %v10882 = vrot.slane %v10881, 4
      %v10884 = vshll.u32 %v10650, 16
      %v10886 = vrot.slane %v10884, 5
      %v10887 = vsel %vm346, %v10882, %v10886
      %v10889 = vshrl.u32 %v10651, 16
      %v10891 = vrot.slane %v10889, 4
      %v10892 = vshll.u32 %v10651, 16
      %v10894 = vrot.slane %v10892, 5
      %v10895 = vor.u32 %v10891, %v10894
      %v10896 = vrot.slane %v10895, 4
      %v10898 = vshll.u32 %v10652, 16
      %v10900 = vrot.slane %v10898, 5
      %v10901 = vsel %vm346, %v10896, %v10900
      %v10902 = vshrl.u32 %v10652, 16
      %v10904 = vrot.slane %v10902, 4
      %v10905 = vor.u32 %v10904, %v10900
      %v10906 = vrot.slane %v10905, 4
      %v10908 = vshll.u32 %v10653, 16
      %v10910 = vrot.slane %v10908, 5
      %v10911 = vsel %vm346, %v10906, %v10910
      %v10913 = vshrl.u32 %v10654, 16
      %v10915 = vrot.slane %v10913, 4
      %v10916 = vshll.u32 %v10654, 16
      %v10918 = vrot.slane %v10916, 5
      %v10919 = vor.u32 %v10915, %v10918
      %v10920 = vrot.slane %v10919, 4
      %v10922 = vshll.u32 %v10655, 16
      %v10924 = vrot.slane %v10922, 5
      %v10925 = vsel %vm346, %v10920, %v10924
      %v10926 = vshrl.u32 %v10655, 16
      %v10928 = vrot.slane %v10926, 4
      %v10929 = vor.u32 %v10928, %v10924
      %v10930 = vrot.slane %v10929, 4
      %v10932 = vshll.u32 %v10656, 16
      %v10934 = vrot.slane %v10932, 5
      %v10935 = vsel %vm346, %v10930, %v10934
      %v10937 = vshrl.u32 %v10657, 16
      %v10939 = vrot.slane %v10937, 4
      %v10940 = vshll.u32 %v10657, 16
      %v10942 = vrot.slane %v10940, 5
      %v10943 = vor.u32 %v10939, %v10942
      %v10944 = vrot.slane %v10943, 4
      %v10946 = vshll.u32 %v10658, 16
      %v10948 = vrot.slane %v10946, 5
      %v10949 = vsel %vm346, %v10944, %v10948
      %v10950 = vshrl.u32 %v10658, 16
      %v10952 = vrot.slane %v10950, 4
      %v10953 = vor.u32 %v10952, %v10948
      %v10954 = vrot.slane %v10953, 4
      %v10956 = vshll.u32 %v10659, 16
      %v10958 = vrot.slane %v10956, 5
      %v10959 = vsel %vm346, %v10954, %v10958
      %v10961 = vshrl.u32 %v10660, 16
      %v10963 = vrot.slane %v10961, 4
      %v10964 = vshll.u32 %v10660, 16
      %v10966 = vrot.slane %v10964, 5
      %v10967 = vor.u32 %v10963, %v10966
      %v10968 = vrot.slane %v10967, 4
      %v10970 = vshll.u32 %v10661, 16
      %v10972 = vrot.slane %v10970, 5
      %v10973 = vsel %vm346, %v10968, %v10972
      %v10974 = vshrl.u32 %v10661, 16
      %v10976 = vrot.slane %v10974, 4
      %v10977 = vor.u32 %v10976, %v10972
      %v10978 = vrot.slane %v10977, 4
      %v10980 = vshll.u32 %v10662, 16
      %v10982 = vrot.slane %v10980, 5
      %v10983 = vsel %vm346, %v10978, %v10982
      %v10985 = vshrl.u32 %v10663, 16
      %v10987 = vrot.slane %v10985, 4
      %v10988 = vshll.u32 %v10663, 16
      %v10990 = vrot.slane %v10988, 5
      %v10991 = vor.u32 %v10987, %v10990
      %v10992 = vrot.slane %v10991, 4
      %v10994 = vshll.u32 %v10664, 16
      %v10996 = vrot.slane %v10994, 5
      %v10997 = vsel %vm346, %v10992, %v10996
      %v10998 = vshrl.u32 %v10664, 16
      %v11000 = vrot.slane %v10998, 4
      %v11001 = vor.u32 %v11000, %v10996
      %v11002 = vrot.slane %v11001, 4
      %v11004 = vshll.u32 %v10665, 16
      %v11006 = vrot.slane %v11004, 5
      %v11007 = vsel %vm346, %v11002, %v11006
      %v11009 = vshrl.u32 %v10666, 16
      %v11011 = vrot.slane %v11009, 4
      %v11012 = vshll.u32 %v10666, 16
      %v11014 = vrot.slane %v11012, 5
      %v11015 = vor.u32 %v11011, %v11014
      %v11016 = vrot.slane %v11015, 4
      %v11018 = vshll.u32 %v10667, 16
      %v11020 = vrot.slane %v11018, 5
      %v11021 = vsel %vm346, %v11016, %v11020
      %v11022 = vshrl.u32 %v10667, 16
      %v11024 = vrot.slane %v11022, 4
      %v11025 = vor.u32 %v11024, %v11020
      %v11026 = vrot.slane %v11025, 4
      %v11028 = vshll.u32 %v10668, 16
      %v11030 = vrot.slane %v11028, 5
      %v11031 = vsel %vm346, %v11026, %v11030
      %v11033 = vshrl.u32 %v10669, 16
      %v11035 = vrot.slane %v11033, 4
      %v11036 = vshll.u32 %v10669, 16
      %v11038 = vrot.slane %v11036, 5
      %v11039 = vor.u32 %v11035, %v11038
      %v11040 = vrot.slane %v11039, 4
      %v11042 = vshll.u32 %v10670, 16
      %v11044 = vrot.slane %v11042, 5
      %v11045 = vsel %vm346, %v11040, %v11044
      %v11046 = vshrl.u32 %v10670, 16
      %v11048 = vrot.slane %v11046, 4
      %v11049 = vor.u32 %v11048, %v11044
      %v11050 = vrot.slane %v11049, 4
      %v11052 = vshll.u32 %v10671, 16
      %v11054 = vrot.slane %v11052, 5
      %v11055 = vsel %vm346, %v11050, %v11054
      %v11056 = vld [vmem:[%s5] sm:$0xf]
      %v11057 = vld [vmem:[%s5 + $0x4] sm:$0xf]
      %v11058 = vld [vmem:[%s5 + $0x8] sm:$0xf]
      %v11059 = vld [vmem:[%s5 + $0xc] sm:$0xf]
      %v11060 = vld [vmem:[%s5 + $0x10] sm:$0xf]
      %v11061 = vld [vmem:[%s5 + $0x14] sm:$0xf]
      %v11062 = vld [vmem:[%s5 + $0x18] sm:$0xf]
      %v11063 = vld [vmem:[%s5 + $0x1c] sm:$0xf]
      %v11064 = vld [vmem:[%s5 + $0x20] sm:$0xf]
      %v11065 = vld [vmem:[%s5 + $0x24] sm:$0xf]
      %v11066 = vld [vmem:[%s5 + $0x28] sm:$0xf]
      %v11067 = vld [vmem:[%s5 + $0x2c] sm:$0xf]
      %v11068 = vld [vmem:[%s5 + $0x30] sm:$0xf]
      %v11069 = vld [vmem:[%s5 + $0x34] sm:$0xf]
      %v11070 = vld [vmem:[%s5 + $0x38] sm:$0xf]
      %v11071 = vld [vmem:[%s5 + $0x3c] sm:$0xf]
      %v11072 = vld [vmem:[%s6] sm:$0x1]
      %v11074 = vlaneseq
      %v11075 = vshrl.u32 %v11074, 7
      %v11076 = vsub.s32 0, %v11075
      %v11077 = vrot.slane %v11072, %v11076
      %v11079 = vunpack.c.l.b16 %v10685
      %v11080 = vunpack.c.l.b16 %v10695
      %v11081 = vunpack.c.l.b16 %v10709
      %v11082 = vunpack.c.l.b16 %v10719
      %v11083 = vunpack.c.l.b16 %v10733
      %v11084 = vunpack.c.l.b16 %v10743
      %v11085 = vunpack.c.l.b16 %v10757
      %v11086 = vunpack.c.l.b16 %v10767
      %v11087 = vunpack.c.l.b16 %v10781
      %v11088 = vunpack.c.l.b16 %v10791
      %v11089 = vunpack.c.l.b16 %v10805
      %v11090 = vunpack.c.l.b16 %v10815
      %v11091 = vunpack.c.l.b16 %v10829
      %v11092 = vunpack.c.l.b16 %v10839
      %v11093 = vunpack.c.l.b16 %v10853
      %v11094 = vunpack.c.l.b16 %v10863
      %v11095 = vunpack.c.l.b16 %v10877
      %v11096 = vunpack.c.l.b16 %v10887
      %v11097 = vunpack.c.l.b16 %v10901
      %v11098 = vunpack.c.l.b16 %v10911
      %v11099 = vunpack.c.l.b16 %v10925
      %v11100 = vunpack.c.l.b16 %v10935
      %v11101 = vunpack.c.l.b16 %v10949
      %v11102 = vunpack.c.l.b16 %v10959
      %v11103 = vunpack.c.l.b16 %v10973
      %v11104 = vunpack.c.l.b16 %v10983
      %v11105 = vunpack.c.l.b16 %v10997
      %v11106 = vunpack.c.l.b16 %v11007
      %v11107 = vunpack.c.l.b16 %v11021
      %v11108 = vunpack.c.l.b16 %v11031
      %v11109 = vunpack.c.l.b16 %v11045
      %v11110 = vunpack.c.l.b16 %v11055
      %v11111 = vpack.c.b16 %v11080, %v11079
      %v11112 = vpack.c.b16 %v11082, %v11081
      %v11113 = vpack.c.b16 %v11084, %v11083
      %v11114 = vpack.c.b16 %v11086, %v11085
      %v11115 = vpack.c.b16 %v11088, %v11087
      %v11116 = vpack.c.b16 %v11090, %v11089
      %v11117 = vpack.c.b16 %v11092, %v11091
      %v11118 = vpack.c.b16 %v11094, %v11093
      %v11119 = vpack.c.b16 %v11096, %v11095
      %v11120 = vpack.c.b16 %v11098, %v11097
      %v11121 = vpack.c.b16 %v11100, %v11099
      %v11122 = vpack.c.b16 %v11102, %v11101
      %v11123 = vpack.c.b16 %v11104, %v11103
      %v11124 = vpack.c.b16 %v11106, %v11105
      %v11125 = vpack.c.b16 %v11108, %v11107
      %v11126 = vpack.c.b16 %v11110, %v11109
      %v11159 = vunpack.c.l.b16 %v11056
      %v11160 = vunpack.c.l.b16 %v11057
      %v11161 = vunpack.c.l.b16 %v11058
      %v11162 = vunpack.c.l.b16 %v11059
      %v11163 = vunpack.c.l.b16 %v11060
      %v11164 = vunpack.c.l.b16 %v11061
      %v11165 = vunpack.c.l.b16 %v11062
      %v11166 = vunpack.c.l.b16 %v11063
      %v11167 = vunpack.c.l.b16 %v11064
      %v11168 = vunpack.c.l.b16 %v11065
      %v11169 = vunpack.c.l.b16 %v11066
      %v11170 = vunpack.c.l.b16 %v11067
      %v11171 = vunpack.c.l.b16 %v11068
      %v11172 = vunpack.c.l.b16 %v11069
      %v11173 = vunpack.c.l.b16 %v11070
      %v11174 = vunpack.c.l.b16 %v11071
      %v11175 = vpack.c.b16 %v11160, %v11159
      %v11176 = vpack.c.b16 %v11162, %v11161
      %v11177 = vpack.c.b16 %v11164, %v11163
      %v11178 = vpack.c.b16 %v11166, %v11165
      %v11179 = vpack.c.b16 %v11168, %v11167
      %v11180 = vpack.c.b16 %v11170, %v11169
      %v11181 = vpack.c.b16 %v11172, %v11171
      %v11182 = vpack.c.b16 %v11174, %v11173
      %11191 = vmatprep.subr.bf16.mxu0 0
      %11192 = vmatpush1.bf16.msra.mxu0 %v11175
      %11193 = vmatprep.subr.bf16.mxu0 0
      %11194 = vmatpush1.bf16.msra.mxu0 %v11176
      %11195 = vmatprep.subr.bf16.mxu0 0
      %11196 = vmatpush1.bf16.msra.mxu0 %v11177
      %11197 = vmatprep.subr.bf16.mxu0 0
      %11198 = vmatpush1.bf16.msra.mxu0 %v11178
      %11199 = vmatprep.subr.bf16.mxu0 0
      %11200 = vmatpush1.bf16.msra.mxu0 %v11179
      %11201 = vmatprep.subr.bf16.mxu0 0
      %11202 = vmatpush1.bf16.msra.mxu0 %v11180
      %11203 = vmatprep.subr.bf16.mxu0 0
      %11204 = vmatpush1.bf16.msra.mxu0 %v11181
      %11205 = vmatprep.subr.bf16.mxu0 0
      %11206 = vmatpush1.bf16.msra.mxu0 %v11182
      %11207 = vmatprep.subr.bf16.mxu0 0
      %11208 = vmatpush1.bf16.msra.mxu0 0
      %11209 = vmatprep.subr.bf16.mxu0 0
      %11210 = vmatpush1.bf16.msra.mxu0 0
      %11211 = vmatprep.subr.bf16.mxu0 0
      %11212 = vmatpush1.bf16.msra.mxu0 0
      %11213 = vmatprep.subr.bf16.mxu0 0
      %11214 = vmatpush1.bf16.msra.mxu0 0
      %11215 = vmatprep.subr.bf16.mxu0 0
      %11216 = vmatpush1.bf16.msra.mxu0 0
      %11217 = vmatprep.subr.bf16.mxu0 0
      %11218 = vmatpush1.bf16.msra.mxu0 0
      %11219 = vmatprep.subr.bf16.mxu0 0
      %11220 = vmatpush1.bf16.msra.mxu0 0
      %11221 = vmatprep.subr.bf16.mxu0 0
      %11222 = vmatpush1.bf16.msra.mxu0 0
      %11223 = vmatprep.mubr.bf16.mxu0 0
      %11224 = vmatmul.mubr.bf16.gmra.mrb[0].mxu0 %v11111
      %v11225 = vpop.f32.mrb[0].mxu0
      %v11226 = vadd.f32 %v11077, %v11225
      %v11227 = vpop.f32.mrb[0].mxu0
      %v11228 = vpop.f32.mrb[0].mxu0
      %v11229 = vadd.f32 %v11077, %v11228
      %v11230 = vpop.f32.mrb[0].mxu0
      %11231 = vmatprep.mubr.bf16.mxu0 0
      %11232 = vmatmul.mubr.bf16.gmra.mrb[0].mxu0 %v11112
      %v11233 = vpop.f32.mrb[0].mxu0
      %v11234 = vadd.f32 %v11077, %v11233
      %v11235 = vpop.f32.mrb[0].mxu0
      %v11236 = vpop.f32.mrb[0].mxu0
      %v11237 = vadd.f32 %v11077, %v11236
      %v11238 = vpop.f32.mrb[0].mxu0
      %11239 = vmatprep.mubr.bf16.mxu0 0
      %11240 = vmatmul.mubr.bf16.gmra.mrb[0].mxu0 %v11113
      %v11241 = vpop.f32.mrb[0].mxu0
      %v11242 = vadd.f32 %v11077, %v11241
      %v11243 = vpop.f32.mrb[0].mxu0
      %v11244 = vpop.f32.mrb[0].mxu0
      %v11245 = vadd.f32 %v11077, %v11244
      %v11246 = vpop.f32.mrb[0].mxu0
      %11247 = vmatprep.mubr.bf16.mxu0 0
      %11248 = vmatmul.mubr.bf16.gmra.mrb[0].mxu0 %v11114
      %v11249 = vpop.f32.mrb[0].mxu0
      %v11250 = vadd.f32 %v11077, %v11249
      %v11251 = vpop.f32.mrb[0].mxu0
      %v11252 = vpop.f32.mrb[0].mxu0
      %v11253 = vadd.f32 %v11077, %v11252
      %v11254 = vpop.f32.mrb[0].mxu0
      %11255 = vmatprep.mubr.bf16.mxu0 0
      %11256 = vmatmul.mubr.bf16.gmra.mrb[0].mxu0 %v11115
      %v11257 = vpop.f32.mrb[0].mxu0
      %v11258 = vadd.f32 %v11077, %v11257
      %v11259 = vpop.f32.mrb[0].mxu0
      %v11260 = vpop.f32.mrb[0].mxu0
      %v11261 = vadd.f32 %v11077, %v11260
      %v11262 = vpop.f32.mrb[0].mxu0
      %11263 = vmatprep.mubr.bf16.mxu0 0
      %11264 = vmatmul.mubr.bf16.gmra.mrb[0].mxu0 %v11116
      %v11265 = vpop.f32.mrb[0].mxu0
      %v11266 = vadd.f32 %v11077, %v11265
      %v11267 = vpop.f32.mrb[0].mxu0
      %v11268 = vpop.f32.mrb[0].mxu0
      %v11269 = vadd.f32 %v11077, %v11268
      %v11270 = vpop.f32.mrb[0].mxu0
      %11271 = vmatprep.mubr.bf16.mxu0 0
      %11272 = vmatmul.mubr.bf16.gmra.mrb[0].mxu0 %v11117
      %v11273 = vpop.f32.mrb[0].mxu0
      %v11274 = vadd.f32 %v11077, %v11273
      %v11275 = vpop.f32.mrb[0].mxu0
      %v11276 = vpop.f32.mrb[0].mxu0
      %v11277 = vadd.f32 %v11077, %v11276
      %v11278 = vpop.f32.mrb[0].mxu0
      %11279 = vmatprep.mubr.bf16.mxu0 0
      %11280 = vmatmul.mubr.bf16.gmra.mrb[0].mxu0 %v11118
      %v11281 = vpop.f32.mrb[0].mxu0
      %v11282 = vadd.f32 %v11077, %v11281
      %v11283 = vpop.f32.mrb[0].mxu0
      %v11284 = vpop.f32.mrb[0].mxu0
      %v11285 = vadd.f32 %v11077, %v11284
      %v11286 = vpop.f32.mrb[0].mxu0
      %11287 = vmatprep.mubr.bf16.mxu0 0
      %11288 = vmatmul.mubr.bf16.gmra.mrb[0].mxu0 %v11119
      %v11289 = vpop.f32.mrb[0].mxu0
      %v11290 = vadd.f32 %v11077, %v11289
      %v11291 = vpop.f32.mrb[0].mxu0
      %v11292 = vpop.f32.mrb[0].mxu0
      %v11293 = vadd.f32 %v11077, %v11292
      %v11294 = vpop.f32.mrb[0].mxu0
      %11295 = vmatprep.mubr.bf16.mxu0 0
      %11296 = vmatmul.mubr.bf16.gmra.mrb[0].mxu0 %v11120
      %v11297 = vpop.f32.mrb[0].mxu0
      %v11298 = vadd.f32 %v11077, %v11297
      %v11299 = vpop.f32.mrb[0].mxu0
      %v11300 = vpop.f32.mrb[0].mxu0
      %v11301 = vadd.f32 %v11077, %v11300
      %v11302 = vpop.f32.mrb[0].mxu0
      %11303 = vmatprep.mubr.bf16.mxu0 0
      %11304 = vmatmul.mubr.bf16.gmra.mrb[0].mxu0 %v11121
      %v11305 = vpop.f32.mrb[0].mxu0
      %v11306 = vadd.f32 %v11077, %v11305
      %v11307 = vpop.f32.mrb[0].mxu0
      %v11308 = vpop.f32.mrb[0].mxu0
      %v11309 = vadd.f32 %v11077, %v11308
      %v11310 = vpop.f32.mrb[0].mxu0
      %11311 = vmatprep.mubr.bf16.mxu0 0
      %11312 = vmatmul.mubr.bf16.gmra.mrb[0].mxu0 %v11122
      %v11313 = vpop.f32.mrb[0].mxu0
      %v11314 = vadd.f32 %v11077, %v11313
      %v11315 = vpop.f32.mrb[0].mxu0
      %v11316 = vpop.f32.mrb[0].mxu0
      %v11317 = vadd.f32 %v11077, %v11316
      %v11318 = vpop.f32.mrb[0].mxu0
      %11319 = vmatprep.mubr.bf16.mxu0 0
      %11320 = vmatmul.mubr.bf16.gmra.mrb[0].mxu0 %v11123
      %v11321 = vpop.f32.mrb[0].mxu0
      %v11322 = vadd.f32 %v11077, %v11321
      %v11323 = vpop.f32.mrb[0].mxu0
      %v11324 = vpop.f32.mrb[0].mxu0
      %v11325 = vadd.f32 %v11077, %v11324
      %v11326 = vpop.f32.mrb[0].mxu0
      %11327 = vmatprep.mubr.bf16.mxu0 0
      %11328 = vmatmul.mubr.bf16.gmra.mrb[0].mxu0 %v11124
      %v11329 = vpop.f32.mrb[0].mxu0
      %v11330 = vadd.f32 %v11077, %v11329
      %v11331 = vpop.f32.mrb[0].mxu0
      %v11332 = vpop.f32.mrb[0].mxu0
      %v11333 = vadd.f32 %v11077, %v11332
      %v11334 = vpop.f32.mrb[0].mxu0
      %11335 = vmatprep.mubr.bf16.mxu0 0
      %11336 = vmatmul.mubr.bf16.gmra.mrb[0].mxu0 %v11125
      %v11337 = vpop.f32.mrb[0].mxu0
      %v11338 = vadd.f32 %v11077, %v11337
      %v11339 = vpop.f32.mrb[0].mxu0
      %v11340 = vpop.f32.mrb[0].mxu0
      %v11341 = vadd.f32 %v11077, %v11340
      %v11342 = vpop.f32.mrb[0].mxu0
      %11343 = vmatprep.mubr.bf16.mxu0 0
      %11344 = vmatmul.mubr.bf16.gmra.mrb[0].mxu0 %v11126
      %v11345 = vpop.f32.mrb[0].mxu0
      %v11346 = vadd.f32 %v11077, %v11345
      %v11347 = vpop.f32.mrb[0].mxu0
      %v11348 = vpop.f32.mrb[0].mxu0
      %v11349 = vadd.f32 %v11077, %v11348
      %v11350 = vpop.f32.mrb[0].mxu0
      %11351 = vdwg.mxu0
      %v11352 = vadd.f32 %v10592, %v11226
      %v11353 = vadd.f32 %v10593, %v11229
      %v11354 = vadd.f32 %v10594, %v11234
      %v11355 = vadd.f32 %v10595, %v11237
      %v11356 = vadd.f32 %v10596, %v11242
      %v11357 = vadd.f32 %v10597, %v11245
      %v11358 = vadd.f32 %v10598, %v11250
      %v11359 = vadd.f32 %v10599, %v11253
      %v11360 = vadd.f32 %v10600, %v11258
      %v11361 = vadd.f32 %v10601, %v11261
      %v11362 = vadd.f32 %v10602, %v11266
      %v11363 = vadd.f32 %v10603, %v11269
      %v11364 = vadd.f32 %v10604, %v11274
      %v11365 = vadd.f32 %v10605, %v11277
      %v11366 = vadd.f32 %v10606, %v11282
      %v11367 = vadd.f32 %v10607, %v11285
      %v11368 = vadd.f32 %v10608, %v11290
      %v11369 = vadd.f32 %v10609, %v11293
      %v11370 = vadd.f32 %v10610, %v11298
      %v11371 = vadd.f32 %v10611, %v11301
      %v11372 = vadd.f32 %v10612, %v11306
      %v11373 = vadd.f32 %v10613, %v11309
      %v11374 = vadd.f32 %v10614, %v11314
      %v11375 = vadd.f32 %v10615, %v11317
      %v11376 = vadd.f32 %v10616, %v11322
      %v11377 = vadd.f32 %v10617, %v11325
      %v11378 = vadd.f32 %v10618, %v11330
      %v11379 = vadd.f32 %v10619, %v11333
      %v11380 = vadd.f32 %v10620, %v11338
      %v11381 = vadd.f32 %v10621, %v11341
      %v11382 = vadd.f32 %v10622, %v11346
      %v11383 = vadd.f32 %v10623, %v11349
      %v11384 = vpack.c.bf16 %v11353, %v11352
      %v11385 = vpack.c.bf16 %v11355, %v11354
      %v11386 = vpack.c.bf16 %v11357, %v11356
      %v11387 = vpack.c.bf16 %v11359, %v11358
      %v11388 = vpack.c.bf16 %v11361, %v11360
      %v11389 = vpack.c.bf16 %v11363, %v11362
      %v11390 = vpack.c.bf16 %v11365, %v11364
      %v11391 = vpack.c.bf16 %v11367, %v11366
      %v11392 = vpack.c.bf16 %v11369, %v11368
      %v11393 = vpack.c.bf16 %v11371, %v11370
      %v11394 = vpack.c.bf16 %v11373, %v11372
      %v11395 = vpack.c.bf16 %v11375, %v11374
      %v11396 = vpack.c.bf16 %v11377, %v11376
      %v11397 = vpack.c.bf16 %v11379, %v11378
      %v11398 = vpack.c.bf16 %v11381, %v11380
      %v11399 = vpack.c.bf16 %v11383, %v11382
      %v11416 = vunpack.c.l.b16 %v11384
      %v11417 = vunpack.c.h.b16 %v11384
      %v11418 = vunpack.c.l.b16 %v11385
      %v11419 = vunpack.c.h.b16 %v11385
      %v11420 = vunpack.c.l.b16 %v11386
      %v11421 = vunpack.c.h.b16 %v11386
      %v11422 = vunpack.c.l.b16 %v11387
      %v11423 = vunpack.c.h.b16 %v11387
      %v11424 = vunpack.c.l.b16 %v11388
      %v11425 = vunpack.c.h.b16 %v11388
      %v11426 = vunpack.c.l.b16 %v11389
      %v11427 = vunpack.c.h.b16 %v11389
      %v11428 = vunpack.c.l.b16 %v11390
      %v11429 = vunpack.c.h.b16 %v11390
      %v11430 = vunpack.c.l.b16 %v11391
      %v11431 = vunpack.c.h.b16 %v11391
      %v11432 = vunpack.c.l.b16 %v11392
      %v11433 = vunpack.c.h.b16 %v11392
      %v11434 = vunpack.c.l.b16 %v11393
      %v11435 = vunpack.c.h.b16 %v11393
      %v11436 = vunpack.c.l.b16 %v11394
      %v11437 = vunpack.c.h.b16 %v11394
      %v11438 = vunpack.c.l.b16 %v11395
      %v11439 = vunpack.c.h.b16 %v11395
      %v11440 = vunpack.c.l.b16 %v11396
      %v11441 = vunpack.c.h.b16 %v11396
      %v11442 = vunpack.c.l.b16 %v11397
      %v11443 = vunpack.c.h.b16 %v11397
      %v11444 = vunpack.c.l.b16 %v11398
      %v11445 = vunpack.c.h.b16 %v11398
      %v11446 = vunpack.c.l.b16 %v11399
      %v11447 = vunpack.c.h.b16 %v11399
      %v11448 = vpack.c.b16 %v11416, %v11416
      %v11449 = vpack.c.b16 %v11417, %v11417
      %v11450 = vpack.c.b16 %v11418, %v11418
      %v11451 = vpack.c.b16 %v11419, %v11419
      %v11452 = vpack.c.b16 %v11420, %v11420
      %v11453 = vpack.c.b16 %v11421, %v11421
      %v11454 = vpack.c.b16 %v11422, %v11422
      %v11455 = vpack.c.b16 %v11423, %v11423
      %v11456 = vpack.c.b16 %v11424, %v11424
      %v11457 = vpack.c.b16 %v11425, %v11425
      %v11458 = vpack.c.b16 %v11426, %v11426
      %v11459 = vpack.c.b16 %v11427, %v11427
      %v11460 = vpack.c.b16 %v11428, %v11428
      %v11461 = vpack.c.b16 %v11429, %v11429
      %v11462 = vpack.c.b16 %v11430, %v11430
      %v11463 = vpack.c.b16 %v11431, %v11431
      %v11464 = vpack.c.b16 %v11432, %v11432
      %v11465 = vpack.c.b16 %v11433, %v11433
      %v11466 = vpack.c.b16 %v11434, %v11434
      %v11467 = vpack.c.b16 %v11435, %v11435
      %v11468 = vpack.c.b16 %v11436, %v11436
      %v11469 = vpack.c.b16 %v11437, %v11437
      %v11470 = vpack.c.b16 %v11438, %v11438
      %v11471 = vpack.c.b16 %v11439, %v11439
      %v11472 = vpack.c.b16 %v11440, %v11440
      %v11473 = vpack.c.b16 %v11441, %v11441
      %v11474 = vpack.c.b16 %v11442, %v11442
      %v11475 = vpack.c.b16 %v11443, %v11443
      %v11476 = vpack.c.b16 %v11444, %v11444
      %v11477 = vpack.c.b16 %v11445, %v11445
      %v11478 = vpack.c.b16 %v11446, %v11446
      %v11479 = vpack.c.b16 %v11447, %v11447
      %11512 = vst [vmem:[%s278] sm:$0xf] %v11448
      %11513 = vst [vmem:[%s278 + $0x4] sm:$0xf] %v11449
      %11514 = vst [vmem:[%s278 + $0x8] sm:$0xf] %v11450
      %11515 = vst [vmem:[%s278 + $0xc] sm:$0xf] %v11451
      %11516 = vst [vmem:[%s278 + $0x10] sm:$0xf] %v11452
      %11517 = vst [vmem:[%s278 + $0x14] sm:$0xf] %v11453
      %11518 = vst [vmem:[%s278 + $0x18] sm:$0xf] %v11454
      %11519 = vst [vmem:[%s278 + $0x1c] sm:$0xf] %v11455
      %11520 = vst [vmem:[%s278 + $0x20] sm:$0xf] %v11456
      %11521 = vst [vmem:[%s278 + $0x24] sm:$0xf] %v11457
      %11522 = vst [vmem:[%s278 + $0x28] sm:$0xf] %v11458
      %11523 = vst [vmem:[%s278 + $0x2c] sm:$0xf] %v11459
      %11524 = vst [vmem:[%s278 + $0x30] sm:$0xf] %v11460
      %11525 = vst [vmem:[%s278 + $0x34] sm:$0xf] %v11461
      %11526 = vst [vmem:[%s278 + $0x38] sm:$0xf] %v11462
      %11527 = vst [vmem:[%s278 + $0x3c] sm:$0xf] %v11463
      %11528 = vst [vmem:[%s278 + $0x40] sm:$0xf] %v11464
      %11529 = vst [vmem:[%s278 + $0x44] sm:$0xf] %v11465
      %11530 = vst [vmem:[%s278 + $0x48] sm:$0xf] %v11466
      %11531 = vst [vmem:[%s278 + $0x4c] sm:$0xf] %v11467
      %11532 = vst [vmem:[%s278 + $0x50] sm:$0xf] %v11468
      %11533 = vst [vmem:[%s278 + $0x54] sm:$0xf] %v11469
      %11534 = vst [vmem:[%s278 + $0x58] sm:$0xf] %v11470
      %11535 = vst [vmem:[%s278 + $0x5c] sm:$0xf] %v11471
      %11536 = vst [vmem:[%s278 + $0x60] sm:$0xf] %v11472
      %11537 = vst [vmem:[%s278 + $0x64] sm:$0xf] %v11473
      %11538 = vst [vmem:[%s278 + $0x68] sm:$0xf] %v11474
      %11539 = vst [vmem:[%s278 + $0x6c] sm:$0xf] %v11475
      %11540 = vst [vmem:[%s278 + $0x70] sm:$0xf] %v11476
      %11541 = vst [vmem:[%s278 + $0x74] sm:$0xf] %v11477
      %11542 = vst [vmem:[%s278 + $0x78] sm:$0xf] %v11478
      %11543 = vst [vmem:[%s278 + $0x7c] sm:$0xf] %v11479
      %p11544 = scmp.lt.s32.totalorder %s18, 1
      %s11545 = scalar_select %p11544, %s18, 1
      %s11546 = smul.addr %s11545, 32
      %s11547 = smul.addr %s11546, 4
      %s11548 = scalar_lea.vmem %s7, %s11547
      // Predicated region
      $region49: #{residual_block_apply.1} parent=47 // pred_check
        %p11549 = pneg %p188
      $region50: #{residual_block_apply.1} parent=47 // pred_check_branch
        %11551 = sbr.rel (%p11549) target = $region52
      $region51: #{residual_block_apply.1} parent=47 // pred_region
        _
      $region52: #{residual_block_apply.1} parent=47 // pred_fallthru
        _
    $region48: #{residual_block_apply.1} parent=5 // pred_fallthru
      _
    %p11552 = scmp.le.s32.totalorder 2, %s13
    // Predicated region
    $region53: #{residual_block_apply.1} parent=5 // pred_check
      %p11553 = pneg %p11552
    $region54: #{residual_block_apply.1} parent=5 // pred_check_branch
      %11555 = sbr.rel (%p11553) target = $region56
    $region55: #{residual_block_apply.1} parent=5 // pred_region
      %s11556 = ssub.s32 %s13, 2
      // Predicated region
      $region57: #{residual_block_apply.1} parent=55 // pred_check
        %p11557 = pneg %p194
      $region58: #{residual_block_apply.1} parent=55 // pred_check_branch
        %11559 = sbr.rel (%p11557) target = $region60
      $region59: #{residual_block_apply.1} parent=55 // pred_region
        %p11560 = scmp.lt.s32.totalorder %s19, 1
        %s11561 = scalar_select %p11560, %s19, 1
        %s11562 = smul.addr %s11561, 32
        %s11563 = smul.addr %s11562, 4
        %s11564 = scalar_lea.vmem %s7, %s11563
      $region60: #{residual_block_apply.1} parent=55 // pred_fallthru
        _
    $region56: #{residual_block_apply.1} parent=5 // pred_fallthru
      _
  $region6: #{residual_block_apply.1} parent=0 // loop_footer
    %s17 = sadd.s32 1, %s13
  $region7: #{residual_block_apply.1} parent=0 // loop_footer_branch
    %12 = sbr.rel target = $region3
  $region8: #{residual_block_apply.1} parent=0 // loop_exit
    _

</llo_original>
